<compile_context>
chip_gen: v7x
topology: tpu7x:2x2x1
jax: 0.10.0
libtpu: 0.0.40
codegen_flags: <defaults>
</compile_context>

<pallas_src>
import functools

import jax
import jax.numpy as jnp
from jax.experimental import pallas as pl
from jax.experimental.pallas import tpu as pltpu

latent_dim = 100
img_channels = 1
BN_EPS = 1e-5

LANE = 128
CIN1_PAD = 128                      # latent 100 -> 128 (lane-dense K)
C1, C2, C3 = 256, 128, 64
C3_PAD, C4_PAD = 128, 128           # lane-dense stores; padded cols stay exactly 0

# Output-pixel parities (ry, rx) -- fixed phase order used everywhere below.
PHASES = ((0, 0), (0, 1), (1, 0), (1, 1))


# ----------------------------- Pallas kernels ------------------------------ #

def _dense_bn_relu_kernel(x_ref, w_ref, g_ref, b_ref, o_ref, *, inv_m):
    """Layer 1: y[p,n,c] = sum_k x[p,n,k] * w[p,k,c]; BN over (p,n); ReLU."""
    y = jnp.einsum("pnk,pkc->pnc", x_ref[...], w_ref[...],
                   preferred_element_type=jnp.float32)
    mean = jnp.sum(y, axis=(0, 1), keepdims=True) * inv_m
    d = y - mean
    var = jnp.sum(d * d, axis=(0, 1), keepdims=True) * inv_m      # centered variance
    scale = g_ref[...] * jax.lax.rsqrt(var + BN_EPS)               # EUP rsqrt
    o_ref[...] = jnp.maximum(d * scale + b_ref[...], 0.0).astype(o_ref.dtype)


def _phase_mm_bn_relu_kernel(p0, p1, p2, p3, w0, w1, w2, w3, g_ref, b_ref,
                             o0, o1, o2, o3, *, inv_m):
    """One ConvTranspose layer: 4 phase matmuls + global-batch BN + ReLU."""
    ys = [jnp.dot(p[...], w[...], preferred_element_type=jnp.float32)
          for p, w in ((p0, w0), (p1, w1), (p2, w2), (p3, w3))]
    mean = sum(jnp.sum(y, axis=0, keepdims=True) for y in ys) * inv_m
    ds = [y - mean for y in ys]
    var = sum(jnp.sum(d * d, axis=0, keepdims=True) for d in ds) * inv_m
    scale = g_ref[...] * jax.lax.rsqrt(var + BN_EPS)
    bias = b_ref[...]
    for d, o in zip(ds, (o0, o1, o2, o3)):
        o[...] = jnp.maximum(d * scale + bias, 0.0).astype(o.dtype)


def _phase_mm_tanh_kernel(p0, p1, p2, p3, w0, w1, w2, w3, o0, o1, o2, o3):
    """Final ConvTranspose layer: 4 phase matmuls + tanh, bf16 out."""
    for p, w, o in ((p0, w0, o0), (p1, w1, o1), (p2, w2, o2), (p3, w3, o3)):
        y = jnp.dot(p[...], w[...], preferred_element_type=jnp.float32)
        o[...] = jnp.tanh(y).astype(o.dtype)


# ------------------------------ pallas_call wrappers ------------------------ #

def _cparams():
    return pltpu.CompilerParams(dimension_semantics=("parallel",))


def dense_bn_relu(xb, w, gamma, beta, *, c_tile=LANE):
    p, n, k = xb.shape
    cp = w.shape[-1]
    kernel = functools.partial(_dense_bn_relu_kernel, inv_m=1.0 / (p * n))
    return pl.pallas_call(
        kernel,
        grid=(cp // c_tile,),
        in_specs=[
            pl.BlockSpec((p, n, k), lambda j: (0, 0, 0)),
            pl.BlockSpec((p, k, c_tile), lambda j: (0, 0, j)),
            pl.BlockSpec((1, c_tile), lambda j: (0, j)),
            pl.BlockSpec((1, c_tile), lambda j: (0, j)),
        ],
        out_specs=pl.BlockSpec((p, n, c_tile), lambda j: (0, 0, j)),
        out_shape=jax.ShapeDtypeStruct((p, n, cp), jnp.bfloat16),
        compiler_params=_cparams(),
    )(xb, w, gamma, beta)


def phase_mm_bn_relu(patches, weights, gamma, beta, *, c_tile=LANE):
    cp = weights[0].shape[-1]
    total_m = sum(int(pch.shape[0]) for pch in patches)
    kernel = functools.partial(_phase_mm_bn_relu_kernel, inv_m=1.0 / total_m)
    in_specs = (
        [pl.BlockSpec(pch.shape, lambda j: (0, 0)) for pch in patches]
        + [pl.BlockSpec((wt.shape[0], c_tile), lambda j: (0, j)) for wt in weights]
        + [pl.BlockSpec((1, c_tile), lambda j: (0, j))] * 2
    )
    out_specs = tuple(pl.BlockSpec((pch.shape[0], c_tile), lambda j: (0, j))
                      for pch in patches)
    out_shape = tuple(jax.ShapeDtypeStruct((pch.shape[0], cp), jnp.bfloat16)
                      for pch in patches)
    return pl.pallas_call(
        kernel, grid=(cp // c_tile,), in_specs=in_specs, out_specs=out_specs,
        out_shape=out_shape, compiler_params=_cparams(),
    )(*patches, *weights, gamma, beta)


def phase_mm_tanh(patches, weights, *, c_tile=LANE):
    cp = weights[0].shape[-1]
    in_specs = (
        [pl.BlockSpec(pch.shape, lambda j: (0, 0)) for pch in patches]
        + [pl.BlockSpec((wt.shape[0], c_tile), lambda j: (0, j)) for wt in weights]
    )
    out_specs = tuple(pl.BlockSpec((pch.shape[0], c_tile), lambda j: (0, j))
                      for pch in patches)
    out_shape = tuple(jax.ShapeDtypeStruct((pch.shape[0], cp), jnp.bfloat16)
                      for pch in patches)
    return pl.pallas_call(
        _phase_mm_tanh_kernel, grid=(cp // c_tile,), in_specs=in_specs,
        out_specs=out_specs, out_shape=out_shape, compiler_params=_cparams(),
    )(*patches, *weights)


# ------------------------ XLA glue: phase patches / interleave -------------- #
# ConvTranspose(k,s,p): y[oy,ox] += x[iy,ix] w[ky,kx] with oy = s*iy - p + ky.
# Splitting outputs by parity (ry, rx) = (oy mod 2, ox mod 2) turns each layer
# into 4 small dense convs on the *undilated* input (no structural zeros).

def _l2_phase_patches(h):
    """Layer 2 (k=3, s=2, p=1) phase patches from h: (N,4,4,256) -> 7x7 out."""
    n, _, _, c = h.shape
    p00 = h.reshape(n * 16, c)                                   # tap (1,1)
    p01 = jnp.concatenate([h[:, :, 1:4, :], h[:, :, 0:3, :]],
                          -1).reshape(n * 12, 2 * c)             # taps (1,0),(1,2)
    p10 = jnp.concatenate([h[:, 1:4, :, :], h[:, 0:3, :, :]],
                          -1).reshape(n * 12, 2 * c)             # taps (0,1),(2,1)
    p11 = jnp.concatenate([h[:, 1:4, 1:4, :], h[:, 1:4, 0:3, :],
                           h[:, 0:3, 1:4, :], h[:, 0:3, 0:3, :]],
                          -1).reshape(n * 9, 4 * c)              # (0,0)(0,2)(2,0)(2,2)
    return p00, p01, p10, p11


def _k4s2_phase_patches(h):
    """k=4, s=2, p=1 phase patches from h: (N,H,W,C) -> 4 x (N*H*W, 4C)."""
    n, hh, ww, c = h.shape
    hp = jnp.pad(h, ((0, 0), (1, 1), (1, 1), (0, 0)))            # zero border = OOB taps
    out = []
    for ry, rx in PHASES:
        slices = [hp[:, oy:oy + hh, ox:ox + ww, :]
                  for oy in (ry + 1, ry) for ox in (rx + 1, rx)]
        out.append(jnp.concatenate(slices, -1).reshape(n * hh * ww, 4 * c))
    return tuple(out)


def _interleave(ys, n, shapes, c):
    """Scatter per-phase row blocks back onto the interleaved NHWC map."""
    oh = shapes[0][0] + shapes[-1][0]
    ow = shapes[0][1] + shapes[-1][1]
    out = jnp.zeros((n, oh, ow, c), ys[0].dtype)
    for (ry, rx), (ho, wo), y in zip(PHASES, shapes, ys):
        out = out.at[:, ry::2, rx::2, :].set(y.reshape(n, ho, wo, c))
    return out


# --------------------------------- params ----------------------------------- #

def init_params(key):
    """Returns (pallas-ready bf16 params, raw f32 weights for the reference)."""
    k1, k2, k3, k4 = jax.random.split(key, 4)

    def rnd(k, shape):
        w = 0.02 * jax.random.normal(k, shape, jnp.float32)
        return w.astype(jnp.bfloat16).astype(jnp.float32)        # bf16-representable

    raw = dict(
        w1=rnd(k1, (latent_dim, C1, 4, 4)),
        w2=rnd(k2, (C1, C2, 3, 3)),
        w3=rnd(k3, (C2, C3, 4, 4)),
        w4=rnd(k4, (C3, img_channels, 4, 4)),
    )

    # Layer 1: (Cin,Cout,ky,kx) -> (ky*kx, Cin_pad, Cout): one matrix per pixel.
    w1p = jnp.zeros((CIN1_PAD, C1, 4, 4), jnp.float32).at[:latent_dim].set(raw["w1"])
    w1p = w1p.transpose(2, 3, 0, 1).reshape(16, CIN1_PAD, C1).astype(jnp.bfloat16)

    # Layer 2 phase weights; tap order matches _l2_phase_patches.
    w2 = raw["w2"]
    w2p = tuple(w.astype(jnp.bfloat16) for w in (
        w2[:, :, 1, 1],
        jnp.concatenate([w2[:, :, 1, 0], w2[:, :, 1, 2]], 0),
        jnp.concatenate([w2[:, :, 0, 1], w2[:, :, 2, 1]], 0),
        jnp.concatenate([w2[:, :, 0, 0], w2[:, :, 0, 2],
                         w2[:, :, 2, 0], w2[:, :, 2, 2]], 0),
    ))

    # Layers 3/4 (k=4,s=2,p=1): tap order matches _k4s2_phase_patches slices.
    def k4_phase_w(w, ry, rx, cout_pad):
        taps = [(1 - ry, 1 - rx), (1 - ry, 3 - rx), (3 - ry, 1 - rx), (3 - ry, 3 - rx)]
        wm = jnp.concatenate([w[:, :, ky, kx] for ky, kx in taps], 0)
        wm = jnp.pad(wm, ((0, 0), (0, cout_pad - wm.shape[1])))
        return wm.astype(jnp.bfloat16)

    w3p = tuple(k4_phase_w(raw["w3"], ry, rx, C3_PAD) for ry, rx in PHASES)
    w4p = tuple(k4_phase_w(raw["w4"], ry, rx, C4_PAD) for ry, rx in PHASES)

    def bn(c, c_pad):   # padded channels: gamma = 0 -> outputs stay exactly zero
        g = jnp.zeros((1, c_pad), jnp.float32).at[:, :c].set(1.0)
        return g, jnp.zeros((1, c_pad), jnp.float32)

    g1, b1 = bn(C1, C1)
    g2, b2 = bn(C2, C2)
    g3, b3 = bn(C3, C3_PAD)
    params = dict(w1=w1p, g1=g1, b1=b1, w2=w2p, g2=g2, b2=b2,
                  w3=w3p, g3=g3, b3=b3, w4=w4p)
    return params, raw


# --------------------------------- forward ---------------------------------- #

def generator_forward(params, x):
    """x: (N, latent_dim, 1, 1) NCHW f32 -> (N, 1, 28, 28) NCHW f32."""
    n = x.shape[0]

    # Layer 1: dense per-pixel matmul (1x1 input -> im2col would be 15/16 zeros).
    z = x.reshape(n, latent_dim).astype(jnp.bfloat16)
    z = jnp.pad(z, ((0, 0), (0, CIN1_PAD - latent_dim)))
    zb = jnp.broadcast_to(z[None], (16, n, CIN1_PAD))            # tiny (8 KB @ N=2)
    y1 = dense_bn_relu(zb, params["w1"], params["g1"], params["b1"])
    h = y1.transpose(1, 0, 2).reshape(n, 4, 4, C1)               # (N,4,4,256)

    # Layer 2: k=3, s=2, p=1 -> (N,7,7,128)
    y = phase_mm_bn_relu(_l2_phase_patches(h), params["w2"], params["g2"], params["b2"])
    h = _interleave(y, n, ((4, 4), (4, 3), (3, 4), (3, 3)), C2)

    # Layer 3: k=4, s=2, p=1 -> (N,14,14,64); drop channel padding before layer 4.
    y = phase_mm_bn_relu(_k4s2_phase_patches(h), params["w3"], params["g3"], params["b3"])
    h = _interleave(y, n, ((7, 7),) * 4, C3_PAD)[..., :C3]

    # Layer 4: k=4, s=2, p=1 + tanh -> (N,28,28,1)
    y = phase_mm_tanh(_k4s2_phase_patches(h), params["w4"])
    y = tuple(pch[:, :img_channels] for pch in y)                # keep the real channel
    img = _interleave(y, n, ((14, 14),) * 4, img_channels)
    return img.transpose(0, 3, 1, 2).astype(jnp.float32)


# ------------------------------ pure-XLA reference -------------------------- #

def reference_forward(raw, x):
    """f32 reference: lax.conv_general_dilated == PyTorch ConvTranspose2d."""
    def convT(h, w, s, p):
        k = w.shape[-1]
        return jax.lax.conv_general_dilated(
            h, jnp.flip(w, (-2, -1)), window_strides=(1, 1),
            padding=[(k - 1 - p, k - 1 - p)] * 2, lhs_dilation=(s, s),
            dimension_numbers=("NCHW", "IOHW", "NCHW"))

    def bn_relu(y):
        mean = jnp.mean(y, axis=(0, 2, 3), keepdims=True)
        var = jnp.mean((y - mean) ** 2, axis=(0, 2, 3), keepdims=True)
        return jnp.maximum((y - mean) * jax.lax.rsqrt(var + BN_EPS), 0.0)

    h = x.astype(jnp.bfloat16).astype(jnp.float32)               # match kernel input
    h = bn_relu(convT(h, raw["w1"], 1, 0))
    h = bn_relu(convT(h, raw["w2"], 2, 1))
    h = bn_relu(convT(h, raw["w3"], 2, 1))
    return jnp.tanh(convT(h, raw["w4"], 2, 1))


if __name__ == "__main__":
    key = jax.random.PRNGKey(0)
    pkey, xkey = jax.random.split(key)
    params, raw = init_params(pkey)
    x = jax.random.normal(xkey, (2, latent_dim, 1, 1), jnp.float32)

    fwd = jax.jit(generator_forward)
    out = jax.block_until_ready(fwd(params, x))

    assert out.shape == (2, img_channels, 28, 28), out.shape
    assert out.dtype == jnp.float32
    assert bool(jnp.all(jnp.isfinite(out)))
    assert bool(jnp.all(jnp.abs(out) <= 1.0 + 1e-6))             # tanh range

    ref = jax.block_until_ready(jax.jit(reference_forward)(raw, x))
    err = float(jnp.max(jnp.abs(out - ref)))
    assert err < 5e-2, f"max |pallas - reference| = {err}"
    print("KERNEL_OK")
</pallas_src>

<mosaic_0001>
module attributes {stable_mosaic.version = 11 : i64} {
  func.func @_dense_bn_relu_kernel(%arg0: i32, %arg1: memref<16x2x128xbf16, #tpu.memory_space<vmem>>, %arg2: memref<16x128x128xbf16, #tpu.memory_space<vmem>>, %arg3: memref<1x128xf32, #tpu.memory_space<vmem>>, %arg4: memref<1x128xf32, #tpu.memory_space<vmem>>, %arg5: memref<16x2x128xbf16, #tpu.memory_space<vmem>>) attributes {dimension_semantics = [#tpu.dimension_semantics<parallel>], iteration_bounds = array<i64: 2>, scalar_prefetch = 0 : i64, scratch_operands = 0 : i64, tpu.core_type = #tpu.core_type<tc>, window_params = [{pipeline_mode = #tpu.pipeline_mode<synchronous>, transform_indices = @transform_0, window_bounds = array<i64: 16, 2, 128>}, {transform_indices = @transform_1, window_bounds = array<i64: 16, 128, 128>}, {transform_indices = @transform_2, window_bounds = array<i64: 1, 128>}, {transform_indices = @transform_3, window_bounds = array<i64: 1, 128>}, {transform_indices = @transform_4, window_bounds = array<i64: 16, 2, 128>}]} {
    %c0 = arith.constant 0 : index
    %c0_0 = arith.constant 0 : index
    %c0_1 = arith.constant 0 : index
    %0 = vector.load %arg1[%c0, %c0_0, %c0_1] : memref<16x2x128xbf16, #tpu.memory_space<vmem>>, vector<16x2x128xbf16>
    %c0_2 = arith.constant 0 : index
    %c0_3 = arith.constant 0 : index
    %c0_4 = arith.constant 0 : index
    %1 = vector.load %arg2[%c0_2, %c0_3, %c0_4] : memref<16x128x128xbf16, #tpu.memory_space<vmem>>, vector<16x128x128xbf16>
    "tpu.trace_start"() <{level = 10 : i32, message = "pnk,pkc->pnc"}> : () -> ()
    %cst = arith.constant dense<0.000000e+00> : vector<16x2x128xf32>
    %2 = tpu.matmul %0, %1, %cst {dimension_numbers = #tpu.dot_dimension_numbers<[2], [1], [1], [2], [0, 0, 0, 1, 1, 2], [0], [0]>} : vector<16x2x128xbf16>, vector<16x128x128xbf16>, vector<16x2x128xf32> -> vector<16x2x128xf32>
    "tpu.trace_stop"() : () -> ()
    %cst_5 = arith.constant dense<0.000000e+00> : vector<128xf32>
    %3 = vector.multi_reduction <add>, %2, %cst_5 [0, 1] : vector<16x2x128xf32> to vector<128xf32>
    %4 = vector.shape_cast %3 : vector<128xf32> to vector<1x1x128xf32>
    %cst_6 = arith.constant 3.125000e-02 : f32
    %5 = vector.broadcast %cst_6 : f32 to vector<1x1x128xf32>
    %6 = arith.mulf %4, %5 : vector<1x1x128xf32>
    %7 = vector.broadcast %6 : vector<1x1x128xf32> to vector<16x2x128xf32>
    %8 = arith.subf %2, %7 : vector<16x2x128xf32>
    %9 = arith.mulf %8, %8 : vector<16x2x128xf32>
    %cst_7 = arith.constant dense<0.000000e+00> : vector<128xf32>
    %10 = vector.multi_reduction <add>, %9, %cst_7 [0, 1] : vector<16x2x128xf32> to vector<128xf32>
    %11 = vector.shape_cast %10 : vector<128xf32> to vector<1x1x128xf32>
    %cst_8 = arith.constant 3.125000e-02 : f32
    %12 = vector.broadcast %cst_8 : f32 to vector<1x1x128xf32>
    %13 = arith.mulf %11, %12 : vector<1x1x128xf32>
    %c0_9 = arith.constant 0 : index
    %c0_10 = arith.constant 0 : index
    %14 = vector.load %arg3[%c0_9, %c0_10] : memref<1x128xf32, #tpu.memory_space<vmem>>, vector<1x128xf32>
    %cst_11 = arith.constant 9.99999974E-6 : f32
    %15 = vector.broadcast %cst_11 : f32 to vector<1x1x128xf32>
    %16 = arith.addf %13, %15 : vector<1x1x128xf32>
    %17 = math.rsqrt %16 : vector<1x1x128xf32>
    %18 = vector.shape_cast %14 : vector<1x128xf32> to vector<1x1x128xf32>
    %19 = arith.mulf %18, %17 : vector<1x1x128xf32>
    %20 = vector.broadcast %19 : vector<1x1x128xf32> to vector<16x2x128xf32>
    %21 = arith.mulf %8, %20 : vector<16x2x128xf32>
    %c0_12 = arith.constant 0 : index
    %c0_13 = arith.constant 0 : index
    %22 = vector.load %arg4[%c0_12, %c0_13] : memref<1x128xf32, #tpu.memory_space<vmem>>, vector<1x128xf32>
    %23 = vector.shape_cast %22 : vector<1x128xf32> to vector<1x1x128xf32>
    %24 = vector.broadcast %23 : vector<1x1x128xf32> to vector<16x2x128xf32>
    %25 = arith.addf %21, %24 : vector<16x2x128xf32>
    %cst_14 = arith.constant 0.000000e+00 : f32
    %26 = vector.broadcast %cst_14 : f32 to vector<16x2x128xf32>
    %27 = arith.maximumf %25, %26 : vector<16x2x128xf32>
    %28 = arith.truncf %27 : vector<16x2x128xf32> to vector<16x2x128xbf16>
    %c0_15 = arith.constant 0 : index
    %c0_16 = arith.constant 0 : index
    %c0_17 = arith.constant 0 : index
    %29 = vector.load %arg5[%c0_15, %c0_16, %c0_17] : memref<16x2x128xbf16, #tpu.memory_space<vmem>>, vector<16x2x128xbf16>
    tpu.vector_store %arg5[%c0_15, %c0_16, %c0_17], %28 {strides = array<i32>} : memref<16x2x128xbf16, #tpu.memory_space<vmem>>, vector<16x2x128xbf16>,
    return
  }
  func.func @transform_0(%arg0: i32) -> (i32, i32, i32) {
    %c0_i32 = arith.constant 0 : i32
    %c0_i32_0 = arith.constant 0 : i32
    %c0_i32_1 = arith.constant 0 : i32
    %c0_i32_2 = arith.constant 0 : i32
    return %c0_i32, %c0_i32_0, %c0_i32_1 : i32, i32, i32
  }
  func.func @transform_1(%arg0: i32) -> (i32, i32, i32) {
    %c0_i32 = arith.constant 0 : i32
    %c0_i32_0 = arith.constant 0 : i32
    %c0_i32_1 = arith.constant 0 : i32
    return %c0_i32, %c0_i32_0, %arg0 : i32, i32, i32
  }
  func.func @transform_2(%arg0: i32) -> (i32, i32) {
    %c0_i32 = arith.constant 0 : i32
    %c0_i32_0 = arith.constant 0 : i32
    return %c0_i32, %arg0 : i32, i32
  }
  func.func @transform_3(%arg0: i32) -> (i32, i32) {
    %c0_i32 = arith.constant 0 : i32
    %c0_i32_0 = arith.constant 0 : i32
    return %c0_i32, %arg0 : i32, i32
  }
  func.func @transform_4(%arg0: i32) -> (i32, i32, i32) {
    %c0_i32 = arith.constant 0 : i32
    %c0_i32_0 = arith.constant 0 : i32
    %c0_i32_1 = arith.constant 0 : i32
    return %c0_i32, %c0_i32_0, %arg0 : i32, i32, i32
  }
}

module attributes {stable_mosaic.version = 11 : i64} {
  func.func @_phase_mm_bn_relu_kernel(%arg0: i32, %arg1: memref<32x256xbf16, #tpu.memory_space<vmem>>, %arg2: memref<24x512xbf16, #tpu.memory_space<vmem>>, %arg3: memref<24x512xbf16, #tpu.memory_space<vmem>>, %arg4: memref<18x1024xbf16, #tpu.memory_space<vmem>>, %arg5: memref<256x128xbf16, #tpu.memory_space<vmem>>, %arg6: memref<512x128xbf16, #tpu.memory_space<vmem>>, %arg7: memref<512x128xbf16, #tpu.memory_space<vmem>>, %arg8: memref<1024x128xbf16, #tpu.memory_space<vmem>>, %arg9: memref<1x128xf32, #tpu.memory_space<vmem>>, %arg10: memref<1x128xf32, #tpu.memory_space<vmem>>, %arg11: memref<32x128xbf16, #tpu.memory_space<vmem>>, %arg12: memref<24x128xbf16, #tpu.memory_space<vmem>>, %arg13: memref<24x128xbf16, #tpu.memory_space<vmem>>, %arg14: memref<18x128xbf16, #tpu.memory_space<vmem>>) attributes {dimension_semantics = [#tpu.dimension_semantics<parallel>], iteration_bounds = array<i64: 1>, scalar_prefetch = 0 : i64, scratch_operands = 0 : i64, tpu.core_type = #tpu.core_type<tc>, window_params = [{pipeline_mode = #tpu.pipeline_mode<synchronous>, transform_indices = @transform_0, window_bounds = array<i64: 32, 256>}, {pipeline_mode = #tpu.pipeline_mode<synchronous>, transform_indices = @transform_1, window_bounds = array<i64: 24, 512>}, {pipeline_mode = #tpu.pipeline_mode<synchronous>, transform_indices = @transform_2, window_bounds = array<i64: 24, 512>}, {pipeline_mode = #tpu.pipeline_mode<synchronous>, transform_indices = @transform_3, window_bounds = array<i64: 18, 1024>}, {transform_indices = @transform_4, window_bounds = array<i64: 256, 128>}, {transform_indices = @transform_5, window_bounds = array<i64: 512, 128>}, {transform_indices = @transform_6, window_bounds = array<i64: 512, 128>}, {transform_indices = @transform_7, window_bounds = array<i64: 1024, 128>}, {transform_indices = @transform_8, window_bounds = array<i64: 1, 128>}, {transform_indices = @transform_9, window_bounds = array<i64: 1, 128>}, {transform_indices = @transform_10, window_bounds = array<i64: 32, 128>}, {transform_indices = @transform_11, window_bounds = array<i64: 24, 128>}, {transform_indices = @transform_12, window_bounds = array<i64: 24, 128>}, {transform_indices = @transform_13, window_bounds = array<i64: 18, 128>}]} {
    %c0 = arith.constant 0 : index
    %c0_0 = arith.constant 0 : index
    %0 = vector.load %arg1[%c0, %c0_0] : memref<32x256xbf16, #tpu.memory_space<vmem>>, vector<32x256xbf16>
    %c0_1 = arith.constant 0 : index
    %c0_2 = arith.constant 0 : index
    %1 = vector.load %arg5[%c0_1, %c0_2] : memref<256x128xbf16, #tpu.memory_space<vmem>>, vector<256x128xbf16>
    %cst = arith.constant dense<0.000000e+00> : vector<32x128xf32>
    %2 = tpu.matmul %0, %1, %cst {dimension_numbers = #tpu.dot_dimension_numbers<[1], [0], [0], [1], [0, 0, 1, 1], [], []>} : vector<32x256xbf16>, vector<256x128xbf16>, vector<32x128xf32> -> vector<32x128xf32>
    %c0_3 = arith.constant 0 : index
    %c0_4 = arith.constant 0 : index
    %3 = vector.load %arg2[%c0_3, %c0_4] : memref<24x512xbf16, #tpu.memory_space<vmem>>, vector<24x512xbf16>
    %c0_5 = arith.constant 0 : index
    %c0_6 = arith.constant 0 : index
    %4 = vector.load %arg6[%c0_5, %c0_6] : memref<512x128xbf16, #tpu.memory_space<vmem>>, vector<512x128xbf16>
    %cst_7 = arith.constant dense<0.000000e+00> : vector<24x128xf32>
    %5 = tpu.matmul %3, %4, %cst_7 {dimension_numbers = #tpu.dot_dimension_numbers<[1], [0], [0], [1], [0, 0, 1, 1], [], []>} : vector<24x512xbf16>, vector<512x128xbf16>, vector<24x128xf32> -> vector<24x128xf32>
    %c0_8 = arith.constant 0 : index
    %c0_9 = arith.constant 0 : index
    %6 = vector.load %arg3[%c0_8, %c0_9] : memref<24x512xbf16, #tpu.memory_space<vmem>>, vector<24x512xbf16>
    %c0_10 = arith.constant 0 : index
    %c0_11 = arith.constant 0 : index
    %7 = vector.load %arg7[%c0_10, %c0_11] : memref<512x128xbf16, #tpu.memory_space<vmem>>, vector<512x128xbf16>
    %cst_12 = arith.constant dense<0.000000e+00> : vector<24x128xf32>
    %8 = tpu.matmul %6, %7, %cst_12 {dimension_numbers = #tpu.dot_dimension_numbers<[1], [0], [0], [1], [0, 0, 1, 1], [], []>} : vector<24x512xbf16>, vector<512x128xbf16>, vector<24x128xf32> -> vector<24x128xf32>
    %c0_13 = arith.constant 0 : index
    %c0_14 = arith.constant 0 : index
    %9 = vector.load %arg4[%c0_13, %c0_14] : memref<18x1024xbf16, #tpu.memory_space<vmem>>, vector<18x1024xbf16>
    %c0_15 = arith.constant 0 : index
    %c0_16 = arith.constant 0 : index
    %10 = vector.load %arg8[%c0_15, %c0_16] : memref<1024x128xbf16, #tpu.memory_space<vmem>>, vector<1024x128xbf16>
    %cst_17 = arith.constant dense<0.000000e+00> : vector<18x128xf32>
    %11 = tpu.matmul %9, %10, %cst_17 {dimension_numbers = #tpu.dot_dimension_numbers<[1], [0], [0], [1], [0, 0, 1, 1], [], []>} : vector<18x1024xbf16>, vector<1024x128xbf16>, vector<18x128xf32> -> vector<18x128xf32>
    %cst_18 = arith.constant dense<0.000000e+00> : vector<128xf32>
    %12 = vector.multi_reduction <add>, %2, %cst_18 [0] : vector<32x128xf32> to vector<128xf32>
    %13 = vector.shape_cast %12 : vector<128xf32> to vector<1x128xf32>
    %cst_19 = arith.constant 0.000000e+00 : f32
    %14 = vector.broadcast %cst_19 : f32 to vector<1x128xf32>
    %15 = arith.addf %14, %13 : vector<1x128xf32>
    %cst_20 = arith.constant dense<0.000000e+00> : vector<128xf32>
    %16 = vector.multi_reduction <add>, %5, %cst_20 [0] : vector<24x128xf32> to vector<128xf32>
    %17 = vector.shape_cast %16 : vector<128xf32> to vector<1x128xf32>
    %18 = arith.addf %15, %17 : vector<1x128xf32>
    %cst_21 = arith.constant dense<0.000000e+00> : vector<128xf32>
    %19 = vector.multi_reduction <add>, %8, %cst_21 [0] : vector<24x128xf32> to vector<128xf32>
    %20 = vector.shape_cast %19 : vector<128xf32> to vector<1x128xf32>
    %21 = arith.addf %18, %20 : vector<1x128xf32>
    %cst_22 = arith.constant dense<0.000000e+00> : vector<128xf32>
    %22 = vector.multi_reduction <add>, %11, %cst_22 [0] : vector<18x128xf32> to vector<128xf32>
    %23 = vector.shape_cast %22 : vector<128xf32> to vector<1x128xf32>
    %24 = arith.addf %21, %23 : vector<1x128xf32>
    %cst_23 = arith.constant 0.0102040814 : f32
    %25 = vector.broadcast %cst_23 : f32 to vector<1x128xf32>
    %26 = arith.mulf %24, %25 : vector<1x128xf32>
    %27 = vector.broadcast %26 : vector<1x128xf32> to vector<32x128xf32>
    %28 = arith.subf %2, %27 : vector<32x128xf32>
    %29 = vector.broadcast %26 : vector<1x128xf32> to vector<24x128xf32>
    %30 = arith.subf %5, %29 : vector<24x128xf32>
    %31 = vector.broadcast %26 : vector<1x128xf32> to vector<24x128xf32>
    %32 = arith.subf %8, %31 : vector<24x128xf32>
    %33 = vector.broadcast %26 : vector<1x128xf32> to vector<18x128xf32>
    %34 = arith.subf %11, %33 : vector<18x128xf32>
    %35 = arith.mulf %28, %28 : vector<32x128xf32>
    %cst_24 = arith.constant dense<0.000000e+00> : vector<128xf32>
    %36 = vector.multi_reduction <add>, %35, %cst_24 [0] : vector<32x128xf32> to vector<128xf32>
    %37 = vector.shape_cast %36 : vector<128xf32> to vector<1x128xf32>
    %cst_25 = arith.constant 0.000000e+00 : f32
    %38 = vector.broadcast %cst_25 : f32 to vector<1x128xf32>
    %39 = arith.addf %38, %37 : vector<1x128xf32>
    %40 = arith.mulf %30, %30 : vector<24x128xf32>
    %cst_26 = arith.constant dense<0.000000e+00> : vector<128xf32>
    %41 = vector.multi_reduction <add>, %40, %cst_26 [0] : vector<24x128xf32> to vector<128xf32>
    %42 = vector.shape_cast %41 : vector<128xf32> to vector<1x128xf32>
    %43 = arith.addf %39, %42 : vector<1x128xf32>
    %44 = arith.mulf %32, %32 : vector<24x128xf32>
    %cst_27 = arith.constant dense<0.000000e+00> : vector<128xf32>
    %45 = vector.multi_reduction <add>, %44, %cst_27 [0] : vector<24x128xf32> to vector<128xf32>
    %46 = vector.shape_cast %45 : vector<128xf32> to vector<1x128xf32>
    %47 = arith.addf %43, %46 : vector<1x128xf32>
    %48 = arith.mulf %34, %34 : vector<18x128xf32>
    %cst_28 = arith.constant dense<0.000000e+00> : vector<128xf32>
    %49 = vector.multi_reduction <add>, %48, %cst_28 [0] : vector<18x128xf32> to vector<128xf32>
    %50 = vector.shape_cast %49 : vector<128xf32> to vector<1x128xf32>
    %51 = arith.addf %47, %50 : vector<1x128xf32>
    %cst_29 = arith.constant 0.0102040814 : f32
    %52 = vector.broadcast %cst_29 : f32 to vector<1x128xf32>
    %53 = arith.mulf %51, %52 : vector<1x128xf32>
    %c0_30 = arith.constant 0 : index
    %c0_31 = arith.constant 0 : index
    %54 = vector.load %arg9[%c0_30, %c0_31] : memref<1x128xf32, #tpu.memory_space<vmem>>, vector<1x128xf32>
    %cst_32 = arith.constant 9.99999974E-6 : f32
    %55 = vector.broadcast %cst_32 : f32 to vector<1x128xf32>
    %56 = arith.addf %53, %55 : vector<1x128xf32>
    %57 = math.rsqrt %56 : vector<1x128xf32>
    %58 = arith.mulf %54, %57 : vector<1x128xf32>
    %c0_33 = arith.constant 0 : index
    %c0_34 = arith.constant 0 : index
    %59 = vector.load %arg10[%c0_33, %c0_34] : memref<1x128xf32, #tpu.memory_space<vmem>>, vector<1x128xf32>
    %60 = vector.broadcast %58 : vector<1x128xf32> to vector<32x128xf32>
    %61 = arith.mulf %28, %60 : vector<32x128xf32>
    %62 = vector.broadcast %59 : vector<1x128xf32> to vector<32x128xf32>
    %63 = arith.addf %61, %62 : vector<32x128xf32>
    %cst_35 = arith.constant 0.000000e+00 : f32
    %64 = vector.broadcast %cst_35 : f32 to vector<32x128xf32>
    %65 = arith.maximumf %63, %64 : vector<32x128xf32>
    %66 = arith.truncf %65 : vector<32x128xf32> to vector<32x128xbf16>
    %c0_36 = arith.constant 0 : index
    %c0_37 = arith.constant 0 : index
    %67 = vector.load %arg11[%c0_36, %c0_37] : memref<32x128xbf16, #tpu.memory_space<vmem>>, vector<32x128xbf16>
    tpu.vector_store %arg11[%c0_36, %c0_37], %66 {strides = array<i32>} : memref<32x128xbf16, #tpu.memory_space<vmem>>, vector<32x128xbf16>,
    %68 = vector.broadcast %58 : vector<1x128xf32> to vector<24x128xf32>
    %69 = arith.mulf %30, %68 : vector<24x128xf32>
    %70 = vector.broadcast %59 : vector<1x128xf32> to vector<24x128xf32>
    %71 = arith.addf %69, %70 : vector<24x128xf32>
    %cst_38 = arith.constant 0.000000e+00 : f32
    %72 = vector.broadcast %cst_38 : f32 to vector<24x128xf32>
    %73 = arith.maximumf %71, %72 : vector<24x128xf32>
    %74 = arith.truncf %73 : vector<24x128xf32> to vector<24x128xbf16>
    %c0_39 = arith.constant 0 : index
    %c0_40 = arith.constant 0 : index
    %75 = vector.load %arg12[%c0_39, %c0_40] : memref<24x128xbf16, #tpu.memory_space<vmem>>, vector<24x128xbf16>
    tpu.vector_store %arg12[%c0_39, %c0_40], %74 {strides = array<i32>} : memref<24x128xbf16, #tpu.memory_space<vmem>>, vector<24x128xbf16>,
    %76 = vector.broadcast %58 : vector<1x128xf32> to vector<24x128xf32>
    %77 = arith.mulf %32, %76 : vector<24x128xf32>
    %78 = vector.broadcast %59 : vector<1x128xf32> to vector<24x128xf32>
    %79 = arith.addf %77, %78 : vector<24x128xf32>
    %cst_41 = arith.constant 0.000000e+00 : f32
    %80 = vector.broadcast %cst_41 : f32 to vector<24x128xf32>
    %81 = arith.maximumf %79, %80 : vector<24x128xf32>
    %82 = arith.truncf %81 : vector<24x128xf32> to vector<24x128xbf16>
    %c0_42 = arith.constant 0 : index
    %c0_43 = arith.constant 0 : index
    %83 = vector.load %arg13[%c0_42, %c0_43] : memref<24x128xbf16, #tpu.memory_space<vmem>>, vector<24x128xbf16>
    tpu.vector_store %arg13[%c0_42, %c0_43], %82 {strides = array<i32>} : memref<24x128xbf16, #tpu.memory_space<vmem>>, vector<24x128xbf16>,
    %84 = vector.broadcast %58 : vector<1x128xf32> to vector<18x128xf32>
    %85 = arith.mulf %34, %84 : vector<18x128xf32>
    %86 = vector.broadcast %59 : vector<1x128xf32> to vector<18x128xf32>
    %87 = arith.addf %85, %86 : vector<18x128xf32>
    %cst_44 = arith.constant 0.000000e+00 : f32
    %88 = vector.broadcast %cst_44 : f32 to vector<18x128xf32>
    %89 = arith.maximumf %87, %88 : vector<18x128xf32>
    %90 = arith.truncf %89 : vector<18x128xf32> to vector<18x128xbf16>
    %c0_45 = arith.constant 0 : index
    %c0_46 = arith.constant 0 : index
    %91 = vector.load %arg14[%c0_45, %c0_46] : memref<18x128xbf16, #tpu.memory_space<vmem>>, vector<18x128xbf16>
    tpu.vector_store %arg14[%c0_45, %c0_46], %90 {strides = array<i32>} : memref<18x128xbf16, #tpu.memory_space<vmem>>, vector<18x128xbf16>,
    return
  }
  func.func @transform_0(%arg0: i32) -> (i32, i32) {
    %c0_i32 = arith.constant 0 : i32
    %c0_i32_0 = arith.constant 0 : i32
    %c0_i32_1 = arith.constant 0 : i32
    return %c0_i32, %c0_i32_0 : i32, i32
  }
  func.func @transform_1(%arg0: i32) -> (i32, i32) {
    %c0_i32 = arith.constant 0 : i32
    %c0_i32_0 = arith.constant 0 : i32
    %c0_i32_1 = arith.constant 0 : i32
    return %c0_i32, %c0_i32_0 : i32, i32
  }
  func.func @transform_2(%arg0: i32) -> (i32, i32) {
    %c0_i32 = arith.constant 0 : i32
    %c0_i32_0 = arith.constant 0 : i32
    %c0_i32_1 = arith.constant 0 : i32
    return %c0_i32, %c0_i32_0 : i32, i32
  }
  func.func @transform_3(%arg0: i32) -> (i32, i32) {
    %c0_i32 = arith.constant 0 : i32
    %c0_i32_0 = arith.constant 0 : i32
    %c0_i32_1 = arith.constant 0 : i32
    return %c0_i32, %c0_i32_0 : i32, i32
  }
  func.func @transform_4(%arg0: i32) -> (i32, i32) {
    %c0_i32 = arith.constant 0 : i32
    %c0_i32_0 = arith.constant 0 : i32
    return %c0_i32, %arg0 : i32, i32
  }
  func.func @transform_5(%arg0: i32) -> (i32, i32) {
    %c0_i32 = arith.constant 0 : i32
    %c0_i32_0 = arith.constant 0 : i32
    return %c0_i32, %arg0 : i32, i32
  }
  func.func @transform_6(%arg0: i32) -> (i32, i32) {
    %c0_i32 = arith.constant 0 : i32
    %c0_i32_0 = arith.constant 0 : i32
    return %c0_i32, %arg0 : i32, i32
  }
  func.func @transform_7(%arg0: i32) -> (i32, i32) {
    %c0_i32 = arith.constant 0 : i32
    %c0_i32_0 = arith.constant 0 : i32
    return %c0_i32, %arg0 : i32, i32
  }
  func.func @transform_8(%arg0: i32) -> (i32, i32) {
    %c0_i32 = arith.constant 0 : i32
    %c0_i32_0 = arith.constant 0 : i32
    return %c0_i32, %arg0 : i32, i32
  }
  func.func @transform_9(%arg0: i32) -> (i32, i32) {
    %c0_i32 = arith.constant 0 : i32
    %c0_i32_0 = arith.constant 0 : i32
    return %c0_i32, %arg0 : i32, i32
  }
  func.func @transform_10(%arg0: i32) -> (i32, i32) {
    %c0_i32 = arith.constant 0 : i32
    %c0_i32_0 = arith.constant 0 : i32
    return %c0_i32, %arg0 : i32, i32
  }
  func.func @transform_11(%arg0: i32) -> (i32, i32) {
    %c0_i32 = arith.constant 0 : i32
    %c0_i32_0 = arith.constant 0 : i32
    return %c0_i32, %arg0 : i32, i32
  }
  func.func @transform_12(%arg0: i32) -> (i32, i32) {
    %c0_i32 = arith.constant 0 : i32
    %c0_i32_0 = arith.constant 0 : i32
    return %c0_i32, %arg0 : i32, i32
  }
  func.func @transform_13(%arg0: i32) -> (i32, i32) {
    %c0_i32 = arith.constant 0 : i32
    %c0_i32_0 = arith.constant 0 : i32
    return %c0_i32, %arg0 : i32, i32
  }
}

module attributes {stable_mosaic.version = 11 : i64} {
  func.func @_phase_mm_bn_relu_kernel(%arg0: i32, %arg1: memref<98x512xbf16, #tpu.memory_space<vmem>>, %arg2: memref<98x512xbf16, #tpu.memory_space<vmem>>, %arg3: memref<98x512xbf16, #tpu.memory_space<vmem>>, %arg4: memref<98x512xbf16, #tpu.memory_space<vmem>>, %arg5: memref<512x128xbf16, #tpu.memory_space<vmem>>, %arg6: memref<512x128xbf16, #tpu.memory_space<vmem>>, %arg7: memref<512x128xbf16, #tpu.memory_space<vmem>>, %arg8: memref<512x128xbf16, #tpu.memory_space<vmem>>, %arg9: memref<1x128xf32, #tpu.memory_space<vmem>>, %arg10: memref<1x128xf32, #tpu.memory_space<vmem>>, %arg11: memref<98x128xbf16, #tpu.memory_space<vmem>>, %arg12: memref<98x128xbf16, #tpu.memory_space<vmem>>, %arg13: memref<98x128xbf16, #tpu.memory_space<vmem>>, %arg14: memref<98x128xbf16, #tpu.memory_space<vmem>>) attributes {dimension_semantics = [#tpu.dimension_semantics<parallel>], iteration_bounds = array<i64: 1>, scalar_prefetch = 0 : i64, scratch_operands = 0 : i64, tpu.core_type = #tpu.core_type<tc>, window_params = [{pipeline_mode = #tpu.pipeline_mode<synchronous>, transform_indices = @transform_0, window_bounds = array<i64: 98, 512>}, {pipeline_mode = #tpu.pipeline_mode<synchronous>, transform_indices = @transform_1, window_bounds = array<i64: 98, 512>}, {pipeline_mode = #tpu.pipeline_mode<synchronous>, transform_indices = @transform_2, window_bounds = array<i64: 98, 512>}, {pipeline_mode = #tpu.pipeline_mode<synchronous>, transform_indices = @transform_3, window_bounds = array<i64: 98, 512>}, {transform_indices = @transform_4, window_bounds = array<i64: 512, 128>}, {transform_indices = @transform_5, window_bounds = array<i64: 512, 128>}, {transform_indices = @transform_6, window_bounds = array<i64: 512, 128>}, {transform_indices = @transform_7, window_bounds = array<i64: 512, 128>}, {transform_indices = @transform_8, window_bounds = array<i64: 1, 128>}, {transform_indices = @transform_9, window_bounds = array<i64: 1, 128>}, {transform_indices = @transform_10, window_bounds = array<i64: 98, 128>}, {transform_indices = @transform_11, window_bounds = array<i64: 98, 128>}, {transform_indices = @transform_12, window_bounds = array<i64: 98, 128>}, {transform_indices = @transform_13, window_bounds = array<i64: 98, 128>}]} {
    %c0 = arith.constant 0 : index
    %c0_0 = arith.constant 0 : index
    %0 = vector.load %arg1[%c0, %c0_0] : memref<98x512xbf16, #tpu.memory_space<vmem>>, vector<98x512xbf16>
    %c0_1 = arith.constant 0 : index
    %c0_2 = arith.constant 0 : index
    %1 = vector.load %arg5[%c0_1, %c0_2] : memref<512x128xbf16, #tpu.memory_space<vmem>>, vector<512x128xbf16>
    %cst = arith.constant dense<0.000000e+00> : vector<98x128xf32>
    %2 = tpu.matmul %0, %1, %cst {dimension_numbers = #tpu.dot_dimension_numbers<[1], [0], [0], [1], [0, 0, 1, 1], [], []>} : vector<98x512xbf16>, vector<512x128xbf16>, vector<98x128xf32> -> vector<98x128xf32>
    %c0_3 = arith.constant 0 : index
    %c0_4 = arith.constant 0 : index
    %3 = vector.load %arg2[%c0_3, %c0_4] : memref<98x512xbf16, #tpu.memory_space<vmem>>, vector<98x512xbf16>
    %c0_5 = arith.constant 0 : index
    %c0_6 = arith.constant 0 : index
    %4 = vector.load %arg6[%c0_5, %c0_6] : memref<512x128xbf16, #tpu.memory_space<vmem>>, vector<512x128xbf16>
    %cst_7 = arith.constant dense<0.000000e+00> : vector<98x128xf32>
    %5 = tpu.matmul %3, %4, %cst_7 {dimension_numbers = #tpu.dot_dimension_numbers<[1], [0], [0], [1], [0, 0, 1, 1], [], []>} : vector<98x512xbf16>, vector<512x128xbf16>, vector<98x128xf32> -> vector<98x128xf32>
    %c0_8 = arith.constant 0 : index
    %c0_9 = arith.constant 0 : index
    %6 = vector.load %arg3[%c0_8, %c0_9] : memref<98x512xbf16, #tpu.memory_space<vmem>>, vector<98x512xbf16>
    %c0_10 = arith.constant 0 : index
    %c0_11 = arith.constant 0 : index
    %7 = vector.load %arg7[%c0_10, %c0_11] : memref<512x128xbf16, #tpu.memory_space<vmem>>, vector<512x128xbf16>
    %cst_12 = arith.constant dense<0.000000e+00> : vector<98x128xf32>
    %8 = tpu.matmul %6, %7, %cst_12 {dimension_numbers = #tpu.dot_dimension_numbers<[1], [0], [0], [1], [0, 0, 1, 1], [], []>} : vector<98x512xbf16>, vector<512x128xbf16>, vector<98x128xf32> -> vector<98x128xf32>
    %c0_13 = arith.constant 0 : index
    %c0_14 = arith.constant 0 : index
    %9 = vector.load %arg4[%c0_13, %c0_14] : memref<98x512xbf16, #tpu.memory_space<vmem>>, vector<98x512xbf16>
    %c0_15 = arith.constant 0 : index
    %c0_16 = arith.constant 0 : index
    %10 = vector.load %arg8[%c0_15, %c0_16] : memref<512x128xbf16, #tpu.memory_space<vmem>>, vector<512x128xbf16>
    %cst_17 = arith.constant dense<0.000000e+00> : vector<98x128xf32>
    %11 = tpu.matmul %9, %10, %cst_17 {dimension_numbers = #tpu.dot_dimension_numbers<[1], [0], [0], [1], [0, 0, 1, 1], [], []>} : vector<98x512xbf16>, vector<512x128xbf16>, vector<98x128xf32> -> vector<98x128xf32>
    %cst_18 = arith.constant dense<0.000000e+00> : vector<128xf32>
    %12 = vector.multi_reduction <add>, %2, %cst_18 [0] : vector<98x128xf32> to vector<128xf32>
    %13 = vector.shape_cast %12 : vector<128xf32> to vector<1x128xf32>
    %cst_19 = arith.constant 0.000000e+00 : f32
    %14 = vector.broadcast %cst_19 : f32 to vector<1x128xf32>
    %15 = arith.addf %14, %13 : vector<1x128xf32>
    %cst_20 = arith.constant dense<0.000000e+00> : vector<128xf32>
    %16 = vector.multi_reduction <add>, %5, %cst_20 [0] : vector<98x128xf32> to vector<128xf32>
    %17 = vector.shape_cast %16 : vector<128xf32> to vector<1x128xf32>
    %18 = arith.addf %15, %17 : vector<1x128xf32>
    %cst_21 = arith.constant dense<0.000000e+00> : vector<128xf32>
    %19 = vector.multi_reduction <add>, %8, %cst_21 [0] : vector<98x128xf32> to vector<128xf32>
    %20 = vector.shape_cast %19 : vector<128xf32> to vector<1x128xf32>
    %21 = arith.addf %18, %20 : vector<1x128xf32>
    %cst_22 = arith.constant dense<0.000000e+00> : vector<128xf32>
    %22 = vector.multi_reduction <add>, %11, %cst_22 [0] : vector<98x128xf32> to vector<128xf32>
    %23 = vector.shape_cast %22 : vector<128xf32> to vector<1x128xf32>
    %24 = arith.addf %21, %23 : vector<1x128xf32>
    %cst_23 = arith.constant 0.00255102036 : f32
    %25 = vector.broadcast %cst_23 : f32 to vector<1x128xf32>
    %26 = arith.mulf %24, %25 : vector<1x128xf32>
    %27 = vector.broadcast %26 : vector<1x128xf32> to vector<98x128xf32>
    %28 = arith.subf %2, %27 : vector<98x128xf32>
    %29 = vector.broadcast %26 : vector<1x128xf32> to vector<98x128xf32>
    %30 = arith.subf %5, %29 : vector<98x128xf32>
    %31 = vector.broadcast %26 : vector<1x128xf32> to vector<98x128xf32>
    %32 = arith.subf %8, %31 : vector<98x128xf32>
    %33 = vector.broadcast %26 : vector<1x128xf32> to vector<98x128xf32>
    %34 = arith.subf %11, %33 : vector<98x128xf32>
    %35 = arith.mulf %28, %28 : vector<98x128xf32>
    %cst_24 = arith.constant dense<0.000000e+00> : vector<128xf32>
    %36 = vector.multi_reduction <add>, %35, %cst_24 [0] : vector<98x128xf32> to vector<128xf32>
    %37 = vector.shape_cast %36 : vector<128xf32> to vector<1x128xf32>
    %cst_25 = arith.constant 0.000000e+00 : f32
    %38 = vector.broadcast %cst_25 : f32 to vector<1x128xf32>
    %39 = arith.addf %38, %37 : vector<1x128xf32>
    %40 = arith.mulf %30, %30 : vector<98x128xf32>
    %cst_26 = arith.constant dense<0.000000e+00> : vector<128xf32>
    %41 = vector.multi_reduction <add>, %40, %cst_26 [0] : vector<98x128xf32> to vector<128xf32>
    %42 = vector.shape_cast %41 : vector<128xf32> to vector<1x128xf32>
    %43 = arith.addf %39, %42 : vector<1x128xf32>
    %44 = arith.mulf %32, %32 : vector<98x128xf32>
    %cst_27 = arith.constant dense<0.000000e+00> : vector<128xf32>
    %45 = vector.multi_reduction <add>, %44, %cst_27 [0] : vector<98x128xf32> to vector<128xf32>
    %46 = vector.shape_cast %45 : vector<128xf32> to vector<1x128xf32>
    %47 = arith.addf %43, %46 : vector<1x128xf32>
    %48 = arith.mulf %34, %34 : vector<98x128xf32>
    %cst_28 = arith.constant dense<0.000000e+00> : vector<128xf32>
    %49 = vector.multi_reduction <add>, %48, %cst_28 [0] : vector<98x128xf32> to vector<128xf32>
    %50 = vector.shape_cast %49 : vector<128xf32> to vector<1x128xf32>
    %51 = arith.addf %47, %50 : vector<1x128xf32>
    %cst_29 = arith.constant 0.00255102036 : f32
    %52 = vector.broadcast %cst_29 : f32 to vector<1x128xf32>
    %53 = arith.mulf %51, %52 : vector<1x128xf32>
    %c0_30 = arith.constant 0 : index
    %c0_31 = arith.constant 0 : index
    %54 = vector.load %arg9[%c0_30, %c0_31] : memref<1x128xf32, #tpu.memory_space<vmem>>, vector<1x128xf32>
    %cst_32 = arith.constant 9.99999974E-6 : f32
    %55 = vector.broadcast %cst_32 : f32 to vector<1x128xf32>
    %56 = arith.addf %53, %55 : vector<1x128xf32>
    %57 = math.rsqrt %56 : vector<1x128xf32>
    %58 = arith.mulf %54, %57 : vector<1x128xf32>
    %c0_33 = arith.constant 0 : index
    %c0_34 = arith.constant 0 : index
    %59 = vector.load %arg10[%c0_33, %c0_34] : memref<1x128xf32, #tpu.memory_space<vmem>>, vector<1x128xf32>
    %60 = vector.broadcast %58 : vector<1x128xf32> to vector<98x128xf32>
    %61 = arith.mulf %28, %60 : vector<98x128xf32>
    %62 = vector.broadcast %59 : vector<1x128xf32> to vector<98x128xf32>
    %63 = arith.addf %61, %62 : vector<98x128xf32>
    %cst_35 = arith.constant 0.000000e+00 : f32
    %64 = vector.broadcast %cst_35 : f32 to vector<98x128xf32>
    %65 = arith.maximumf %63, %64 : vector<98x128xf32>
    %66 = arith.truncf %65 : vector<98x128xf32> to vector<98x128xbf16>
    %c0_36 = arith.constant 0 : index
    %c0_37 = arith.constant 0 : index
    %67 = vector.load %arg11[%c0_36, %c0_37] : memref<98x128xbf16, #tpu.memory_space<vmem>>, vector<98x128xbf16>
    tpu.vector_store %arg11[%c0_36, %c0_37], %66 {strides = array<i32>} : memref<98x128xbf16, #tpu.memory_space<vmem>>, vector<98x128xbf16>,
    %68 = vector.broadcast %58 : vector<1x128xf32> to vector<98x128xf32>
    %69 = arith.mulf %30, %68 : vector<98x128xf32>
    %70 = vector.broadcast %59 : vector<1x128xf32> to vector<98x128xf32>
    %71 = arith.addf %69, %70 : vector<98x128xf32>
    %cst_38 = arith.constant 0.000000e+00 : f32
    %72 = vector.broadcast %cst_38 : f32 to vector<98x128xf32>
    %73 = arith.maximumf %71, %72 : vector<98x128xf32>
    %74 = arith.truncf %73 : vector<98x128xf32> to vector<98x128xbf16>
    %c0_39 = arith.constant 0 : index
    %c0_40 = arith.constant 0 : index
    %75 = vector.load %arg12[%c0_39, %c0_40] : memref<98x128xbf16, #tpu.memory_space<vmem>>, vector<98x128xbf16>
    tpu.vector_store %arg12[%c0_39, %c0_40], %74 {strides = array<i32>} : memref<98x128xbf16, #tpu.memory_space<vmem>>, vector<98x128xbf16>,
    %76 = vector.broadcast %58 : vector<1x128xf32> to vector<98x128xf32>
    %77 = arith.mulf %32, %76 : vector<98x128xf32>
    %78 = vector.broadcast %59 : vector<1x128xf32> to vector<98x128xf32>
    %79 = arith.addf %77, %78 : vector<98x128xf32>
    %cst_41 = arith.constant 0.000000e+00 : f32
    %80 = vector.broadcast %cst_41 : f32 to vector<98x128xf32>
    %81 = arith.maximumf %79, %80 : vector<98x128xf32>
    %82 = arith.truncf %81 : vector<98x128xf32> to vector<98x128xbf16>
    %c0_42 = arith.constant 0 : index
    %c0_43 = arith.constant 0 : index
    %83 = vector.load %arg13[%c0_42, %c0_43] : memref<98x128xbf16, #tpu.memory_space<vmem>>, vector<98x128xbf16>
    tpu.vector_store %arg13[%c0_42, %c0_43], %82 {strides = array<i32>} : memref<98x128xbf16, #tpu.memory_space<vmem>>, vector<98x128xbf16>,
    %84 = vector.broadcast %58 : vector<1x128xf32> to vector<98x128xf32>
    %85 = arith.mulf %34, %84 : vector<98x128xf32>
    %86 = vector.broadcast %59 : vector<1x128xf32> to vector<98x128xf32>
    %87 = arith.addf %85, %86 : vector<98x128xf32>
    %cst_44 = arith.constant 0.000000e+00 : f32
    %88 = vector.broadcast %cst_44 : f32 to vector<98x128xf32>
    %89 = arith.maximumf %87, %88 : vector<98x128xf32>
    %90 = arith.truncf %89 : vector<98x128xf32> to vector<98x128xbf16>
    %c0_45 = arith.constant 0 : index
    %c0_46 = arith.constant 0 : index
    %91 = vector.load %arg14[%c0_45, %c0_46] : memref<98x128xbf16, #tpu.memory_space<vmem>>, vector<98x128xbf16>
    tpu.vector_store %arg14[%c0_45, %c0_46], %90 {strides = array<i32>} : memref<98x128xbf16, #tpu.memory_space<vmem>>, vector<98x128xbf16>,
    return
  }
  func.func @transform_0(%arg0: i32) -> (i32, i32) {
    %c0_i32 = arith.constant 0 : i32
    %c0_i32_0 = arith.constant 0 : i32
    %c0_i32_1 = arith.constant 0 : i32
    return %c0_i32, %c0_i32_0 : i32, i32
  }
  func.func @transform_1(%arg0: i32) -> (i32, i32) {
    %c0_i32 = arith.constant 0 : i32
    %c0_i32_0 = arith.constant 0 : i32
    %c0_i32_1 = arith.constant 0 : i32
    return %c0_i32, %c0_i32_0 : i32, i32
  }
  func.func @transform_2(%arg0: i32) -> (i32, i32) {
    %c0_i32 = arith.constant 0 : i32
    %c0_i32_0 = arith.constant 0 : i32
    %c0_i32_1 = arith.constant 0 : i32
    return %c0_i32, %c0_i32_0 : i32, i32
  }
  func.func @transform_3(%arg0: i32) -> (i32, i32) {
    %c0_i32 = arith.constant 0 : i32
    %c0_i32_0 = arith.constant 0 : i32
    %c0_i32_1 = arith.constant 0 : i32
    return %c0_i32, %c0_i32_0 : i32, i32
  }
  func.func @transform_4(%arg0: i32) -> (i32, i32) {
    %c0_i32 = arith.constant 0 : i32
    %c0_i32_0 = arith.constant 0 : i32
    return %c0_i32, %arg0 : i32, i32
  }
  func.func @transform_5(%arg0: i32) -> (i32, i32) {
    %c0_i32 = arith.constant 0 : i32
    %c0_i32_0 = arith.constant 0 : i32
    return %c0_i32, %arg0 : i32, i32
  }
  func.func @transform_6(%arg0: i32) -> (i32, i32) {
    %c0_i32 = arith.constant 0 : i32
    %c0_i32_0 = arith.constant 0 : i32
    return %c0_i32, %arg0 : i32, i32
  }
  func.func @transform_7(%arg0: i32) -> (i32, i32) {
    %c0_i32 = arith.constant 0 : i32
    %c0_i32_0 = arith.constant 0 : i32
    return %c0_i32, %arg0 : i32, i32
  }
  func.func @transform_8(%arg0: i32) -> (i32, i32) {
    %c0_i32 = arith.constant 0 : i32
    %c0_i32_0 = arith.constant 0 : i32
    return %c0_i32, %arg0 : i32, i32
  }
  func.func @transform_9(%arg0: i32) -> (i32, i32) {
    %c0_i32 = arith.constant 0 : i32
    %c0_i32_0 = arith.constant 0 : i32
    return %c0_i32, %arg0 : i32, i32
  }
  func.func @transform_10(%arg0: i32) -> (i32, i32) {
    %c0_i32 = arith.constant 0 : i32
    %c0_i32_0 = arith.constant 0 : i32
    return %c0_i32, %arg0 : i32, i32
  }
  func.func @transform_11(%arg0: i32) -> (i32, i32) {
    %c0_i32 = arith.constant 0 : i32
    %c0_i32_0 = arith.constant 0 : i32
    return %c0_i32, %arg0 : i32, i32
  }
  func.func @transform_12(%arg0: i32) -> (i32, i32) {
    %c0_i32 = arith.constant 0 : i32
    %c0_i32_0 = arith.constant 0 : i32
    return %c0_i32, %arg0 : i32, i32
  }
  func.func @transform_13(%arg0: i32) -> (i32, i32) {
    %c0_i32 = arith.constant 0 : i32
    %c0_i32_0 = arith.constant 0 : i32
    return %c0_i32, %arg0 : i32, i32
  }
}

module attributes {stable_mosaic.version = 11 : i64} {
  func.func @_phase_mm_tanh_kernel(%arg0: i32, %arg1: memref<392x256xbf16, #tpu.memory_space<vmem>>, %arg2: memref<392x256xbf16, #tpu.memory_space<vmem>>, %arg3: memref<392x256xbf16, #tpu.memory_space<vmem>>, %arg4: memref<392x256xbf16, #tpu.memory_space<vmem>>, %arg5: memref<256x128xbf16, #tpu.memory_space<vmem>>, %arg6: memref<256x128xbf16, #tpu.memory_space<vmem>>, %arg7: memref<256x128xbf16, #tpu.memory_space<vmem>>, %arg8: memref<256x128xbf16, #tpu.memory_space<vmem>>, %arg9: memref<392x128xbf16, #tpu.memory_space<vmem>>, %arg10: memref<392x128xbf16, #tpu.memory_space<vmem>>, %arg11: memref<392x128xbf16, #tpu.memory_space<vmem>>, %arg12: memref<392x128xbf16, #tpu.memory_space<vmem>>) attributes {dimension_semantics = [#tpu.dimension_semantics<parallel>], iteration_bounds = array<i64: 1>, scalar_prefetch = 0 : i64, scratch_operands = 0 : i64, tpu.core_type = #tpu.core_type<tc>, window_params = [{pipeline_mode = #tpu.pipeline_mode<synchronous>, transform_indices = @transform_0, window_bounds = array<i64: 392, 256>}, {pipeline_mode = #tpu.pipeline_mode<synchronous>, transform_indices = @transform_1, window_bounds = array<i64: 392, 256>}, {pipeline_mode = #tpu.pipeline_mode<synchronous>, transform_indices = @transform_2, window_bounds = array<i64: 392, 256>}, {pipeline_mode = #tpu.pipeline_mode<synchronous>, transform_indices = @transform_3, window_bounds = array<i64: 392, 256>}, {transform_indices = @transform_4, window_bounds = array<i64: 256, 128>}, {transform_indices = @transform_5, window_bounds = array<i64: 256, 128>}, {transform_indices = @transform_6, window_bounds = array<i64: 256, 128>}, {transform_indices = @transform_7, window_bounds = array<i64: 256, 128>}, {transform_indices = @transform_8, window_bounds = array<i64: 392, 128>}, {transform_indices = @transform_9, window_bounds = array<i64: 392, 128>}, {transform_indices = @transform_10, window_bounds = array<i64: 392, 128>}, {transform_indices = @transform_11, window_bounds = array<i64: 392, 128>}]} {
    %c0 = arith.constant 0 : index
    %c0_0 = arith.constant 0 : index
    %0 = vector.load %arg1[%c0, %c0_0] : memref<392x256xbf16, #tpu.memory_space<vmem>>, vector<392x256xbf16>
    %c0_1 = arith.constant 0 : index
    %c0_2 = arith.constant 0 : index
    %1 = vector.load %arg5[%c0_1, %c0_2] : memref<256x128xbf16, #tpu.memory_space<vmem>>, vector<256x128xbf16>
    %cst = arith.constant dense<0.000000e+00> : vector<392x128xf32>
    %2 = tpu.matmul %0, %1, %cst {dimension_numbers = #tpu.dot_dimension_numbers<[1], [0], [0], [1], [0, 0, 1, 1], [], []>} : vector<392x256xbf16>, vector<256x128xbf16>, vector<392x128xf32> -> vector<392x128xf32>
    %3 = math.tanh %2 : vector<392x128xf32>
    %4 = arith.truncf %3 : vector<392x128xf32> to vector<392x128xbf16>
    %c0_3 = arith.constant 0 : index
    %c0_4 = arith.constant 0 : index
    %5 = vector.load %arg9[%c0_3, %c0_4] : memref<392x128xbf16, #tpu.memory_space<vmem>>, vector<392x128xbf16>
    tpu.vector_store %arg9[%c0_3, %c0_4], %4 {strides = array<i32>} : memref<392x128xbf16, #tpu.memory_space<vmem>>, vector<392x128xbf16>,
    %c0_5 = arith.constant 0 : index
    %c0_6 = arith.constant 0 : index
    %6 = vector.load %arg2[%c0_5, %c0_6] : memref<392x256xbf16, #tpu.memory_space<vmem>>, vector<392x256xbf16>
    %c0_7 = arith.constant 0 : index
    %c0_8 = arith.constant 0 : index
    %7 = vector.load %arg6[%c0_7, %c0_8] : memref<256x128xbf16, #tpu.memory_space<vmem>>, vector<256x128xbf16>
    %cst_9 = arith.constant dense<0.000000e+00> : vector<392x128xf32>
    %8 = tpu.matmul %6, %7, %cst_9 {dimension_numbers = #tpu.dot_dimension_numbers<[1], [0], [0], [1], [0, 0, 1, 1], [], []>} : vector<392x256xbf16>, vector<256x128xbf16>, vector<392x128xf32> -> vector<392x128xf32>
    %9 = math.tanh %8 : vector<392x128xf32>
    %10 = arith.truncf %9 : vector<392x128xf32> to vector<392x128xbf16>
    %c0_10 = arith.constant 0 : index
    %c0_11 = arith.constant 0 : index
    %11 = vector.load %arg10[%c0_10, %c0_11] : memref<392x128xbf16, #tpu.memory_space<vmem>>, vector<392x128xbf16>
    tpu.vector_store %arg10[%c0_10, %c0_11], %10 {strides = array<i32>} : memref<392x128xbf16, #tpu.memory_space<vmem>>, vector<392x128xbf16>,
    %c0_12 = arith.constant 0 : index
    %c0_13 = arith.constant 0 : index
    %12 = vector.load %arg3[%c0_12, %c0_13] : memref<392x256xbf16, #tpu.memory_space<vmem>>, vector<392x256xbf16>
    %c0_14 = arith.constant 0 : index
    %c0_15 = arith.constant 0 : index
    %13 = vector.load %arg7[%c0_14, %c0_15] : memref<256x128xbf16, #tpu.memory_space<vmem>>, vector<256x128xbf16>
    %cst_16 = arith.constant dense<0.000000e+00> : vector<392x128xf32>
    %14 = tpu.matmul %12, %13, %cst_16 {dimension_numbers = #tpu.dot_dimension_numbers<[1], [0], [0], [1], [0, 0, 1, 1], [], []>} : vector<392x256xbf16>, vector<256x128xbf16>, vector<392x128xf32> -> vector<392x128xf32>
    %15 = math.tanh %14 : vector<392x128xf32>
    %16 = arith.truncf %15 : vector<392x128xf32> to vector<392x128xbf16>
    %c0_17 = arith.constant 0 : index
    %c0_18 = arith.constant 0 : index
    %17 = vector.load %arg11[%c0_17, %c0_18] : memref<392x128xbf16, #tpu.memory_space<vmem>>, vector<392x128xbf16>
    tpu.vector_store %arg11[%c0_17, %c0_18], %16 {strides = array<i32>} : memref<392x128xbf16, #tpu.memory_space<vmem>>, vector<392x128xbf16>,
    %c0_19 = arith.constant 0 : index
    %c0_20 = arith.constant 0 : index
    %18 = vector.load %arg4[%c0_19, %c0_20] : memref<392x256xbf16, #tpu.memory_space<vmem>>, vector<392x256xbf16>
    %c0_21 = arith.constant 0 : index
    %c0_22 = arith.constant 0 : index
    %19 = vector.load %arg8[%c0_21, %c0_22] : memref<256x128xbf16, #tpu.memory_space<vmem>>, vector<256x128xbf16>
    %cst_23 = arith.constant dense<0.000000e+00> : vector<392x128xf32>
    %20 = tpu.matmul %18, %19, %cst_23 {dimension_numbers = #tpu.dot_dimension_numbers<[1], [0], [0], [1], [0, 0, 1, 1], [], []>} : vector<392x256xbf16>, vector<256x128xbf16>, vector<392x128xf32> -> vector<392x128xf32>
    %21 = math.tanh %20 : vector<392x128xf32>
    %22 = arith.truncf %21 : vector<392x128xf32> to vector<392x128xbf16>
    %c0_24 = arith.constant 0 : index
    %c0_25 = arith.constant 0 : index
    %23 = vector.load %arg12[%c0_24, %c0_25] : memref<392x128xbf16, #tpu.memory_space<vmem>>, vector<392x128xbf16>
    tpu.vector_store %arg12[%c0_24, %c0_25], %22 {strides = array<i32>} : memref<392x128xbf16, #tpu.memory_space<vmem>>, vector<392x128xbf16>,
    return
  }
  func.func @transform_0(%arg0: i32) -> (i32, i32) {
    %c0_i32 = arith.constant 0 : i32
    %c0_i32_0 = arith.constant 0 : i32
    %c0_i32_1 = arith.constant 0 : i32
    return %c0_i32, %c0_i32_0 : i32, i32
  }
  func.func @transform_1(%arg0: i32) -> (i32, i32) {
    %c0_i32 = arith.constant 0 : i32
    %c0_i32_0 = arith.constant 0 : i32
    %c0_i32_1 = arith.constant 0 : i32
    return %c0_i32, %c0_i32_0 : i32, i32
  }
  func.func @transform_2(%arg0: i32) -> (i32, i32) {
    %c0_i32 = arith.constant 0 : i32
    %c0_i32_0 = arith.constant 0 : i32
    %c0_i32_1 = arith.constant 0 : i32
    return %c0_i32, %c0_i32_0 : i32, i32
  }
  func.func @transform_3(%arg0: i32) -> (i32, i32) {
    %c0_i32 = arith.constant 0 : i32
    %c0_i32_0 = arith.constant 0 : i32
    %c0_i32_1 = arith.constant 0 : i32
    return %c0_i32, %c0_i32_0 : i32, i32
  }
  func.func @transform_4(%arg0: i32) -> (i32, i32) {
    %c0_i32 = arith.constant 0 : i32
    %c0_i32_0 = arith.constant 0 : i32
    return %c0_i32, %arg0 : i32, i32
  }
  func.func @transform_5(%arg0: i32) -> (i32, i32) {
    %c0_i32 = arith.constant 0 : i32
    %c0_i32_0 = arith.constant 0 : i32
    return %c0_i32, %arg0 : i32, i32
  }
  func.func @transform_6(%arg0: i32) -> (i32, i32) {
    %c0_i32 = arith.constant 0 : i32
    %c0_i32_0 = arith.constant 0 : i32
    return %c0_i32, %arg0 : i32, i32
  }
  func.func @transform_7(%arg0: i32) -> (i32, i32) {
    %c0_i32 = arith.constant 0 : i32
    %c0_i32_0 = arith.constant 0 : i32
    return %c0_i32, %arg0 : i32, i32
  }
  func.func @transform_8(%arg0: i32) -> (i32, i32) {
    %c0_i32 = arith.constant 0 : i32
    %c0_i32_0 = arith.constant 0 : i32
    return %c0_i32, %arg0 : i32, i32
  }
  func.func @transform_9(%arg0: i32) -> (i32, i32) {
    %c0_i32 = arith.constant 0 : i32
    %c0_i32_0 = arith.constant 0 : i32
    return %c0_i32, %arg0 : i32, i32
  }
  func.func @transform_10(%arg0: i32) -> (i32, i32) {
    %c0_i32 = arith.constant 0 : i32
    %c0_i32_0 = arith.constant 0 : i32
    return %c0_i32, %arg0 : i32, i32
  }
  func.func @transform_11(%arg0: i32) -> (i32, i32) {
    %c0_i32 = arith.constant 0 : i32
    %c0_i32_0 = arith.constant 0 : i32
    return %c0_i32, %arg0 : i32, i32
  }
}

</mosaic_0001>

<llo_original>
// kernel: generator_forward.4
$region0: #{generator_forward.4}
  #allocation0 [shape = 'u32[]', space=smem, size = 0x4, offset = 0x4, fixed_abs, tag = 'smem constant byte address 0x4 - core index']
  #allocation1 [shape = 'u32[144,128]{1,0:T(1,128)}', space=vmem, size = 0x12000, scoped, tag = 'internal scratch']
  %s0 = inlined_call_operand.vmem [shape: bf16[16,2,128], index: 0, kind: input, shape index: {}]
  %s1 = inlined_call_operand.hbm [shape: bf16[16,128,256], index: 1, kind: input, shape index: {}]
  %s2 = inlined_call_operand.vmem [shape: f32[1,256], index: 2, kind: input, shape index: {}]
  %s3 = inlined_call_operand.vmem [shape: f32[1,256], index: 3, kind: input, shape index: {}]
  %s4 = inlined_call_operand.vmem [shape: bf16[16,2,256], index: 4, kind: output, shape index: {}]
  %s5 = sld [smem:[#allocation0]]
  $region90: #{generator_forward.4} parent=0
    _
  %s7 = ssub.s32 1, %s5
  %s8 = scalar_select 0, %s7, %s5
  $region1: #{generator_forward.4} parent=0
    #allocation2 [shape = 'u8[1048576]{0}', space=vmem, size = 0x100000, scoped, tag = 'input window, operand 1']
    #allocation3 [shape = 's32[2]{0}', space=sflag, size = 0x8, scoped, tag = 'scoped memory for generator_forward.4']
    #allocation4 [shape = 'u8[16384]{0}', space=vmem, size = 0x4000, scoped, tag = 'output window, operand 0']
    %9 = vsyncpa [#allocation3], 0
    %s10 = scalar_lea.sflag [#allocation3], 1
    %11 = vsyncpa %s10, 0
    loop: start=0, step=1, limit=4
    $region2: #{generator_forward.4} parent=1 // loop_pre_header
      _
    $region3: #{generator_forward.4} parent=1 // loop_header
      %s13 = sphi 0, %s17
      %p14 = scmp.ge.s32.totalorder %s13, 4
      %s21 = sphi 0, %s21
      %s23 = sphi 0, %s21
      %s24 = sphi 0, %s23
      %s38 = sphi 0, %s24
      %s44 = sphi 0, %s46
      %s47 = sphi 0, %s44
      %s48 = sphi 0, %s47
      %s64 = sphi 0, %s48
      %s70 = sphi 0, %s72
      %s73 = sphi 0, %s70
      %s74 = sphi 0, %s73
      %s90 = sphi 0, %s74
      %s96 = sphi 0, %s98
      %s99 = sphi 0, %s96
      %s100 = sphi 0, %s99
      %s116 = sphi 0, %s100
      %s122 = sphi 0, %s124
      %s125 = sphi 0, %s122
      %s126 = sphi 0, %s125
      %s142 = sphi 0, %s126
    $region4: #{generator_forward.4} parent=1 // loop_header_branch
      %16 = sbr.rel (%p14) target = $region8
    $region5: #{generator_forward.4} parent=1 // loop_body
      %s18 = ssub.s32 %s13, 1
      %s19 = ssub.s32 %s13, 2
      %s20 = sadd.s32 %s13, 1
      %s22 = sadd.s32 %s21, 1
      %p25 = scmp.eq.s32.totalorder %s13, 1
      %p26 = scmp.ne.s32.totalorder %s21, %s23
      %p27 = scmp.eq.s32.totalorder %s13, 0
      %p28 = por %p26, %p27
      %p29 = scmp.ne.s32.totalorder %s21, %s23
      %p30 = scmp.eq.s32.totalorder %s18, 1
      %p31 = por %p29, %p30
      %p32 = scmp.ne.s32.totalorder %s23, %s24
      %p33 = scmp.eq.s32.totalorder %s18, 0
      %p34 = por %p32, %p33
      %p35 = scmp.ne.s32.totalorder %s23, %s24
      %p36 = scmp.eq.s32.totalorder %s19, 1
      %p37 = por %p35, %p36
      %p39 = scmp.ne.s32.totalorder %s24, %s38
      %p40 = scmp.eq.s32.totalorder %s19, 0
      %p41 = por %p39, %p40
      %s42 = ssub.s32 %s13, %s20
      %p43 = scmp.eq.s32.totalorder %s42, 0
      %s45 = sadd.s32 %s44, 1
      %s46 = scalar_select %p43, %s44, %s45
      %p49 = pneg %p43
      %p50 = scmp.eq.s32.totalorder %s13, 1
      %p51 = por %p49, %p50
      %p52 = scmp.ne.s32.totalorder %s44, %s47
      %p53 = scmp.eq.s32.totalorder %s13, 0
      %p54 = por %p52, %p53
      %p55 = scmp.ne.s32.totalorder %s44, %s47
      %p56 = scmp.eq.s32.totalorder %s18, 1
      %p57 = por %p55, %p56
      %p58 = scmp.ne.s32.totalorder %s47, %s48
      %p59 = scmp.eq.s32.totalorder %s18, 0
      %p60 = por %p58, %p59
      %p61 = scmp.ne.s32.totalorder %s47, %s48
      %p62 = scmp.eq.s32.totalorder %s19, 1
      %p63 = por %p61, %p62
      %p65 = scmp.ne.s32.totalorder %s48, %s64
      %p66 = scmp.eq.s32.totalorder %s19, 0
      %p67 = por %p65, %p66
      %s68 = ssub.s32 %s13, %s20
      %p69 = scmp.eq.s32.totalorder %s68, 0
      %s71 = sadd.s32 %s70, 1
      %s72 = scalar_select %p69, %s70, %s71
      %p75 = pneg %p69
      %p76 = scmp.eq.s32.totalorder %s13, 1
      %p77 = por %p75, %p76
      %p78 = scmp.ne.s32.totalorder %s70, %s73
      %p79 = scmp.eq.s32.totalorder %s13, 0
      %p80 = por %p78, %p79
      %p81 = scmp.ne.s32.totalorder %s70, %s73
      %p82 = scmp.eq.s32.totalorder %s18, 1
      %p83 = por %p81, %p82
      %p84 = scmp.ne.s32.totalorder %s73, %s74
      %p85 = scmp.eq.s32.totalorder %s18, 0
      %p86 = por %p84, %p85
      %p87 = scmp.ne.s32.totalorder %s73, %s74
      %p88 = scmp.eq.s32.totalorder %s19, 1
      %p89 = por %p87, %p88
      %p91 = scmp.ne.s32.totalorder %s74, %s90
      %p92 = scmp.eq.s32.totalorder %s19, 0
      %p93 = por %p91, %p92
      %s94 = ssub.s32 %s13, %s20
      %p95 = scmp.eq.s32.totalorder %s94, 0
      %s97 = sadd.s32 %s96, 1
      %s98 = scalar_select %p95, %s96, %s97
      %p101 = pneg %p95
      %p102 = scmp.eq.s32.totalorder %s13, 1
      %p103 = por %p101, %p102
      %p104 = scmp.ne.s32.totalorder %s96, %s99
      %p105 = scmp.eq.s32.totalorder %s13, 0
      %p106 = por %p104, %p105
      %p107 = scmp.ne.s32.totalorder %s96, %s99
      %p108 = scmp.eq.s32.totalorder %s18, 1
      %p109 = por %p107, %p108
      %p110 = scmp.ne.s32.totalorder %s99, %s100
      %p111 = scmp.eq.s32.totalorder %s18, 0
      %p112 = por %p110, %p111
      %p113 = scmp.ne.s32.totalorder %s99, %s100
      %p114 = scmp.eq.s32.totalorder %s19, 1
      %p115 = por %p113, %p114
      %p117 = scmp.ne.s32.totalorder %s100, %s116
      %p118 = scmp.eq.s32.totalorder %s19, 0
      %p119 = por %p117, %p118
      %s120 = ssub.s32 %s13, %s20
      %p121 = scmp.eq.s32.totalorder %s120, 0
      %s123 = sadd.s32 %s122, 1
      %s124 = scalar_select %p121, %s122, %s123
      %p127 = pneg %p121
      %p128 = scmp.eq.s32.totalorder %s13, 1
      %p129 = por %p127, %p128
      %p130 = scmp.ne.s32.totalorder %s122, %s125
      %p131 = scmp.eq.s32.totalorder %s13, 0
      %p132 = por %p130, %p131
      %p133 = scmp.ne.s32.totalorder %s122, %s125
      %p134 = scmp.eq.s32.totalorder %s18, 1
      %p135 = por %p133, %p134
      %p136 = scmp.ne.s32.totalorder %s125, %s126
      %p137 = scmp.eq.s32.totalorder %s18, 0
      %p138 = por %p136, %p137
      %p139 = scmp.ne.s32.totalorder %s125, %s126
      %p140 = scmp.eq.s32.totalorder %s19, 1
      %p141 = por %p139, %p140
      %p143 = scmp.ne.s32.totalorder %s126, %s142
      %p144 = scmp.eq.s32.totalorder %s19, 0
      %p145 = por %p143, %p144
      %p146 = scmp.le.s32.totalorder 1, %s13
      %p147 = scmp.lt.s32.totalorder %s13, 3
      %p148 = pnand %p146, %p147
      %p149 = pneg %p148
      // Predicated region
      $region9: #{generator_forward.4} parent=5 // pred_check
        _
      $region10: #{generator_forward.4} parent=5 // pred_check_branch
        %151 = sbr.rel (%p148) target = $region12
      $region11: #{generator_forward.4} parent=5 // pred_region
        %s152 = ssub.s32 %s13, 1
        // Predicated region
        $region13: #{generator_forward.4} parent=11 // pred_check
          %p153 = pneg %p34
        $region14: #{generator_forward.4} parent=11 // pred_check_branch
          %155 = sbr.rel (%p153) target = $region16
        $region15: #{generator_forward.4} parent=11 // pred_region
          _
        $region16: #{generator_forward.4} parent=11 // pred_fallthru
          _
      $region12: #{generator_forward.4} parent=5 // pred_fallthru
        _
      %p156 = scmp.lt.s32.totalorder %s13, 2
      // Predicated region
      $region17: #{generator_forward.4} parent=5 // pred_check
        %p157 = pneg %p156
      $region18: #{generator_forward.4} parent=5 // pred_check_branch
        %159 = sbr.rel (%p157) target = $region20
      $region19: #{generator_forward.4} parent=5 // pred_region
        // Predicated region
        $region21: #{generator_forward.4} parent=19 // pred_check
          %p160 = pneg %p54
        $region22: #{generator_forward.4} parent=19 // pred_check_branch
          %162 = sbr.rel (%p160) target = $region24
        $region23: #{generator_forward.4} parent=19 // pred_region
          %s163 = sand.u32 %s44, 1
          %s164 = scalar_lea.sflag [#allocation3], %s163
          %s165 = sand.u32 %s44, 1
          %s166 = smul.addr %s165, 1024
          %s167 = scalar_lea.vmem [#allocation2], %s166
          %s169 = ssub.s32 16384, 16384
          %170 = vsyncadd %s164, %s169
          %s171 = smul.addr %s13, 64
          %s172 = scalar_lea.hbm %s1, %s171
          %s173 = sshll.u32 %s167, 4
          %s174 = int_to_ptr.vmem [resolvable:$true] %s173
          %179 = dma.hbm_to_vmem [thread:$0]  %s172, 16384, %s174, %s164, 128, 64, 4
        $region24: #{generator_forward.4} parent=19 // pred_fallthru
          _
        // Predicated region
        $region25: #{generator_forward.4} parent=19 // pred_check
          %p180 = pneg %p80
        $region26: #{generator_forward.4} parent=19 // pred_check_branch
          %182 = sbr.rel (%p180) target = $region28
        $region27: #{generator_forward.4} parent=19 // pred_region
          %p183 = scmp.lt.s32.totalorder %s13, 1
          %s184 = scalar_select %p183, %s13, 1
          %s185 = scalar_lea.vmem %s2, %s184
        $region28: #{generator_forward.4} parent=19 // pred_fallthru
          _
        // Predicated region
        $region29: #{generator_forward.4} parent=19 // pred_check
          %p186 = pneg %p106
        $region30: #{generator_forward.4} parent=19 // pred_check_branch
          %188 = sbr.rel (%p186) target = $region32
        $region31: #{generator_forward.4} parent=19 // pred_region
          %p189 = scmp.lt.s32.totalorder %s13, 1
          %s190 = scalar_select %p189, %s13, 1
          %s191 = scalar_lea.vmem %s3, %s190
        $region32: #{generator_forward.4} parent=19 // pred_fallthru
          _
      $region20: #{generator_forward.4} parent=5 // pred_fallthru
        _
      %p192 = scmp.le.s32.totalorder 1, %s13
      %p193 = scmp.lt.s32.totalorder %s13, 3
      %p194 = pnand %p192, %p193
      %p195 = pneg %p194
      // Predicated region
      $region33: #{generator_forward.4} parent=5 // pred_check
        _
      $region34: #{generator_forward.4} parent=5 // pred_check_branch
        %197 = sbr.rel (%p194) target = $region36
      $region35: #{generator_forward.4} parent=5 // pred_region
        %s198 = ssub.s32 %s13, 1
        %s199 = sand.u32 %s47, 1
        %s200 = scalar_lea.sflag [#allocation3], %s199
        %s201 = sand.u32 %s47, 1
        %s202 = smul.addr %s201, 1024
        %s203 = scalar_lea.vmem [#allocation2], %s202
        // Predicated region
        $region37: #{generator_forward.4} parent=35 // pred_check
          %p204 = pneg %p60
        $region38: #{generator_forward.4} parent=35 // pred_check_branch
          %206 = sbr.rel (%p204) target = $region40
        $region39: #{generator_forward.4} parent=35 // pred_region
          %207 = dma.done %s200, 16384
        $region40: #{generator_forward.4} parent=35 // pred_fallthru
          _
        %p208 = pneg %p34
        %p209 = pneg %p31
        %s210 = sand.u32 %s47, 1
        %s211 = scalar_lea.sflag [#allocation3], %s210
        %s212 = sand.u32 %s47, 1
        %s213 = smul.addr %s212, 1024
        %s214 = scalar_lea.vmem [#allocation2], %s213
        %p215 = pneg %p60
        %p216 = pneg %p57
        %p217 = scmp.lt.s32.totalorder %s18, 1
        %s218 = scalar_select %p217, %s18, 1
        %s219 = scalar_lea.vmem %s2, %s218
        %p220 = pneg %p86
        %p221 = pneg %p83
        %p222 = scmp.lt.s32.totalorder %s18, 1
        %s223 = scalar_select %p222, %s18, 1
        %s224 = scalar_lea.vmem %s3, %s223
        %p225 = pneg %p112
        %p226 = pneg %p109
        %p227 = pneg %p138
        %p228 = pneg %p135
        %s229 = sand.u32 %s125, 1
        %s230 = sand.u32 %s125, 1
        %s231 = smul.addr %s230, 16
        %s232 = scalar_lea.vmem [#allocation4], %s231
        %p233 = scmp.lt.s32.totalorder %s18, 1
        %s234 = scalar_select %p233, %s18, 1
        %s235 = scalar_lea.vmem %s2, %s234
        %p236 = scmp.lt.s32.totalorder %s18, 1
        %s237 = scalar_select %p236, %s18, 1
        %s238 = scalar_lea.vmem %s3, %s237
        %v240 = vld [vmem:[%s0] sm:$0x1]
        %v241 = vld [vmem:[%s0 + $0x1] sm:$0x1]
        %v242 = vld [vmem:[%s0 + $0x2] sm:$0x1]
        %v243 = vld [vmem:[%s0 + $0x3] sm:$0x1]
        %v244 = vld [vmem:[%s0 + $0x4] sm:$0x1]
        %v245 = vld [vmem:[%s0 + $0x5] sm:$0x1]
        %v246 = vld [vmem:[%s0 + $0x6] sm:$0x1]
        %v247 = vld [vmem:[%s0 + $0x7] sm:$0x1]
        %v248 = vld [vmem:[%s0 + $0x8] sm:$0x1]
        %v249 = vld [vmem:[%s0 + $0x9] sm:$0x1]
        %v250 = vld [vmem:[%s0 + $0xa] sm:$0x1]
        %v251 = vld [vmem:[%s0 + $0xb] sm:$0x1]
        %v252 = vld [vmem:[%s0 + $0xc] sm:$0x1]
        %v253 = vld [vmem:[%s0 + $0xd] sm:$0x1]
        %v254 = vld [vmem:[%s0 + $0xe] sm:$0x1]
        %v255 = vld [vmem:[%s0 + $0xf] sm:$0x1]
        %v256 = vld [vmem:[%s203] sm:$0xf]
        %v257 = vld [vmem:[%s203 + $0x4] sm:$0xf]
        %v258 = vld [vmem:[%s203 + $0x8] sm:$0xf]
        %v259 = vld [vmem:[%s203 + $0xc] sm:$0xf]
        %v260 = vld [vmem:[%s203 + $0x10] sm:$0xf]
        %v261 = vld [vmem:[%s203 + $0x14] sm:$0xf]
        %v262 = vld [vmem:[%s203 + $0x18] sm:$0xf]
        %v263 = vld [vmem:[%s203 + $0x1c] sm:$0xf]
        %v264 = vld [vmem:[%s203 + $0x20] sm:$0xf]
        %v265 = vld [vmem:[%s203 + $0x24] sm:$0xf]
        %v266 = vld [vmem:[%s203 + $0x28] sm:$0xf]
        %v267 = vld [vmem:[%s203 + $0x2c] sm:$0xf]
        %v268 = vld [vmem:[%s203 + $0x30] sm:$0xf]
        %v269 = vld [vmem:[%s203 + $0x34] sm:$0xf]
        %v270 = vld [vmem:[%s203 + $0x38] sm:$0xf]
        %v271 = vld [vmem:[%s203 + $0x3c] sm:$0xf]
        %v272 = vld [vmem:[%s203 + $0x40] sm:$0xf]
        %v273 = vld [vmem:[%s203 + $0x44] sm:$0xf]
        %v274 = vld [vmem:[%s203 + $0x48] sm:$0xf]
        %v275 = vld [vmem:[%s203 + $0x4c] sm:$0xf]
        %v276 = vld [vmem:[%s203 + $0x50] sm:$0xf]
        %v277 = vld [vmem:[%s203 + $0x54] sm:$0xf]
        %v278 = vld [vmem:[%s203 + $0x58] sm:$0xf]
        %v279 = vld [vmem:[%s203 + $0x5c] sm:$0xf]
        %v280 = vld [vmem:[%s203 + $0x60] sm:$0xf]
        %v281 = vld [vmem:[%s203 + $0x64] sm:$0xf]
        %v282 = vld [vmem:[%s203 + $0x68] sm:$0xf]
        %v283 = vld [vmem:[%s203 + $0x6c] sm:$0xf]
        %v284 = vld [vmem:[%s203 + $0x70] sm:$0xf]
        %v285 = vld [vmem:[%s203 + $0x74] sm:$0xf]
        %v286 = vld [vmem:[%s203 + $0x78] sm:$0xf]
        %v287 = vld [vmem:[%s203 + $0x7c] sm:$0xf]
        %v288 = vld [vmem:[%s203 + $0x80] sm:$0xf]
        %v289 = vld [vmem:[%s203 + $0x84] sm:$0xf]
        %v290 = vld [vmem:[%s203 + $0x88] sm:$0xf]
        %v291 = vld [vmem:[%s203 + $0x8c] sm:$0xf]
        %v292 = vld [vmem:[%s203 + $0x90] sm:$0xf]
        %v293 = vld [vmem:[%s203 + $0x94] sm:$0xf]
        %v294 = vld [vmem:[%s203 + $0x98] sm:$0xf]
        %v295 = vld [vmem:[%s203 + $0x9c] sm:$0xf]
        %v296 = vld [vmem:[%s203 + $0xa0] sm:$0xf]
        %v297 = vld [vmem:[%s203 + $0xa4] sm:$0xf]
        %v298 = vld [vmem:[%s203 + $0xa8] sm:$0xf]
        %v299 = vld [vmem:[%s203 + $0xac] sm:$0xf]
        %v300 = vld [vmem:[%s203 + $0xb0] sm:$0xf]
        %v301 = vld [vmem:[%s203 + $0xb4] sm:$0xf]
        %v302 = vld [vmem:[%s203 + $0xb8] sm:$0xf]
        %v303 = vld [vmem:[%s203 + $0xbc] sm:$0xf]
        %v304 = vld [vmem:[%s203 + $0xc0] sm:$0xf]
        %v305 = vld [vmem:[%s203 + $0xc4] sm:$0xf]
        %v306 = vld [vmem:[%s203 + $0xc8] sm:$0xf]
        %v307 = vld [vmem:[%s203 + $0xcc] sm:$0xf]
        %v308 = vld [vmem:[%s203 + $0xd0] sm:$0xf]
        %v309 = vld [vmem:[%s203 + $0xd4] sm:$0xf]
        %v310 = vld [vmem:[%s203 + $0xd8] sm:$0xf]
        %v311 = vld [vmem:[%s203 + $0xdc] sm:$0xf]
        %v312 = vld [vmem:[%s203 + $0xe0] sm:$0xf]
        %v313 = vld [vmem:[%s203 + $0xe4] sm:$0xf]
        %v314 = vld [vmem:[%s203 + $0xe8] sm:$0xf]
        %v315 = vld [vmem:[%s203 + $0xec] sm:$0xf]
        %v316 = vld [vmem:[%s203 + $0xf0] sm:$0xf]
        %v317 = vld [vmem:[%s203 + $0xf4] sm:$0xf]
        %v318 = vld [vmem:[%s203 + $0xf8] sm:$0xf]
        %v319 = vld [vmem:[%s203 + $0xfc] sm:$0xf]
        %v320 = vld [vmem:[%s203 + $0x100] sm:$0xf]
        %v321 = vld [vmem:[%s203 + $0x104] sm:$0xf]
        %v322 = vld [vmem:[%s203 + $0x108] sm:$0xf]
        %v323 = vld [vmem:[%s203 + $0x10c] sm:$0xf]
        %v324 = vld [vmem:[%s203 + $0x110] sm:$0xf]
        %v325 = vld [vmem:[%s203 + $0x114] sm:$0xf]
        %v326 = vld [vmem:[%s203 + $0x118] sm:$0xf]
        %v327 = vld [vmem:[%s203 + $0x11c] sm:$0xf]
        %v328 = vld [vmem:[%s203 + $0x120] sm:$0xf]
        %v329 = vld [vmem:[%s203 + $0x124] sm:$0xf]
        %v330 = vld [vmem:[%s203 + $0x128] sm:$0xf]
        %v331 = vld [vmem:[%s203 + $0x12c] sm:$0xf]
        %v332 = vld [vmem:[%s203 + $0x130] sm:$0xf]
        %v333 = vld [vmem:[%s203 + $0x134] sm:$0xf]
        %v334 = vld [vmem:[%s203 + $0x138] sm:$0xf]
        %v335 = vld [vmem:[%s203 + $0x13c] sm:$0xf]
        %v336 = vld [vmem:[%s203 + $0x140] sm:$0xf]
        %v337 = vld [vmem:[%s203 + $0x144] sm:$0xf]
        %v338 = vld [vmem:[%s203 + $0x148] sm:$0xf]
        %v339 = vld [vmem:[%s203 + $0x14c] sm:$0xf]
        %v340 = vld [vmem:[%s203 + $0x150] sm:$0xf]
        %v341 = vld [vmem:[%s203 + $0x154] sm:$0xf]
        %v342 = vld [vmem:[%s203 + $0x158] sm:$0xf]
        %v343 = vld [vmem:[%s203 + $0x15c] sm:$0xf]
        %v344 = vld [vmem:[%s203 + $0x160] sm:$0xf]
        %v345 = vld [vmem:[%s203 + $0x164] sm:$0xf]
        %v346 = vld [vmem:[%s203 + $0x168] sm:$0xf]
        %v347 = vld [vmem:[%s203 + $0x16c] sm:$0xf]
        %v348 = vld [vmem:[%s203 + $0x170] sm:$0xf]
        %v349 = vld [vmem:[%s203 + $0x174] sm:$0xf]
        %v350 = vld [vmem:[%s203 + $0x178] sm:$0xf]
        %v351 = vld [vmem:[%s203 + $0x17c] sm:$0xf]
        %v352 = vld [vmem:[%s203 + $0x180] sm:$0xf]
        %v353 = vld [vmem:[%s203 + $0x184] sm:$0xf]
        %v354 = vld [vmem:[%s203 + $0x188] sm:$0xf]
        %v355 = vld [vmem:[%s203 + $0x18c] sm:$0xf]
        %v356 = vld [vmem:[%s203 + $0x190] sm:$0xf]
        %v357 = vld [vmem:[%s203 + $0x194] sm:$0xf]
        %v358 = vld [vmem:[%s203 + $0x198] sm:$0xf]
        %v359 = vld [vmem:[%s203 + $0x19c] sm:$0xf]
        %v360 = vld [vmem:[%s203 + $0x1a0] sm:$0xf]
        %v361 = vld [vmem:[%s203 + $0x1a4] sm:$0xf]
        %v362 = vld [vmem:[%s203 + $0x1a8] sm:$0xf]
        %v363 = vld [vmem:[%s203 + $0x1ac] sm:$0xf]
        %v364 = vld [vmem:[%s203 + $0x1b0] sm:$0xf]
        %v365 = vld [vmem:[%s203 + $0x1b4] sm:$0xf]
        %v366 = vld [vmem:[%s203 + $0x1b8] sm:$0xf]
        %v367 = vld [vmem:[%s203 + $0x1bc] sm:$0xf]
        %v368 = vld [vmem:[%s203 + $0x1c0] sm:$0xf]
        %v369 = vld [vmem:[%s203 + $0x1c4] sm:$0xf]
        %v370 = vld [vmem:[%s203 + $0x1c8] sm:$0xf]
        %v371 = vld [vmem:[%s203 + $0x1cc] sm:$0xf]
        %v372 = vld [vmem:[%s203 + $0x1d0] sm:$0xf]
        %v373 = vld [vmem:[%s203 + $0x1d4] sm:$0xf]
        %v374 = vld [vmem:[%s203 + $0x1d8] sm:$0xf]
        %v375 = vld [vmem:[%s203 + $0x1dc] sm:$0xf]
        %v376 = vld [vmem:[%s203 + $0x1e0] sm:$0xf]
        %v377 = vld [vmem:[%s203 + $0x1e4] sm:$0xf]
        %v378 = vld [vmem:[%s203 + $0x1e8] sm:$0xf]
        %v379 = vld [vmem:[%s203 + $0x1ec] sm:$0xf]
        %v380 = vld [vmem:[%s203 + $0x1f0] sm:$0xf]
        %v381 = vld [vmem:[%s203 + $0x1f4] sm:$0xf]
        %v382 = vld [vmem:[%s203 + $0x1f8] sm:$0xf]
        %v383 = vld [vmem:[%s203 + $0x1fc] sm:$0xf]
        %v384 = vld [vmem:[%s203 + $0x200] sm:$0xf]
        %v385 = vld [vmem:[%s203 + $0x204] sm:$0xf]
        %v386 = vld [vmem:[%s203 + $0x208] sm:$0xf]
        %v387 = vld [vmem:[%s203 + $0x20c] sm:$0xf]
        %v388 = vld [vmem:[%s203 + $0x210] sm:$0xf]
        %v389 = vld [vmem:[%s203 + $0x214] sm:$0xf]
        %v390 = vld [vmem:[%s203 + $0x218] sm:$0xf]
        %v391 = vld [vmem:[%s203 + $0x21c] sm:$0xf]
        %v392 = vld [vmem:[%s203 + $0x220] sm:$0xf]
        %v393 = vld [vmem:[%s203 + $0x224] sm:$0xf]
        %v394 = vld [vmem:[%s203 + $0x228] sm:$0xf]
        %v395 = vld [vmem:[%s203 + $0x22c] sm:$0xf]
        %v396 = vld [vmem:[%s203 + $0x230] sm:$0xf]
        %v397 = vld [vmem:[%s203 + $0x234] sm:$0xf]
        %v398 = vld [vmem:[%s203 + $0x238] sm:$0xf]
        %v399 = vld [vmem:[%s203 + $0x23c] sm:$0xf]
        %v400 = vld [vmem:[%s203 + $0x240] sm:$0xf]
        %v401 = vld [vmem:[%s203 + $0x244] sm:$0xf]
        %v402 = vld [vmem:[%s203 + $0x248] sm:$0xf]
        %v403 = vld [vmem:[%s203 + $0x24c] sm:$0xf]
        %v404 = vld [vmem:[%s203 + $0x250] sm:$0xf]
        %v405 = vld [vmem:[%s203 + $0x254] sm:$0xf]
        %v406 = vld [vmem:[%s203 + $0x258] sm:$0xf]
        %v407 = vld [vmem:[%s203 + $0x25c] sm:$0xf]
        %v408 = vld [vmem:[%s203 + $0x260] sm:$0xf]
        %v409 = vld [vmem:[%s203 + $0x264] sm:$0xf]
        %v410 = vld [vmem:[%s203 + $0x268] sm:$0xf]
        %v411 = vld [vmem:[%s203 + $0x26c] sm:$0xf]
        %v412 = vld [vmem:[%s203 + $0x270] sm:$0xf]
        %v413 = vld [vmem:[%s203 + $0x274] sm:$0xf]
        %v414 = vld [vmem:[%s203 + $0x278] sm:$0xf]
        %v415 = vld [vmem:[%s203 + $0x27c] sm:$0xf]
        %v416 = vld [vmem:[%s203 + $0x280] sm:$0xf]
        %v417 = vld [vmem:[%s203 + $0x284] sm:$0xf]
        %v418 = vld [vmem:[%s203 + $0x288] sm:$0xf]
        %v419 = vld [vmem:[%s203 + $0x28c] sm:$0xf]
        %v420 = vld [vmem:[%s203 + $0x290] sm:$0xf]
        %v421 = vld [vmem:[%s203 + $0x294] sm:$0xf]
        %v422 = vld [vmem:[%s203 + $0x298] sm:$0xf]
        %v423 = vld [vmem:[%s203 + $0x29c] sm:$0xf]
        %v424 = vld [vmem:[%s203 + $0x2a0] sm:$0xf]
        %v425 = vld [vmem:[%s203 + $0x2a4] sm:$0xf]
        %v426 = vld [vmem:[%s203 + $0x2a8] sm:$0xf]
        %v427 = vld [vmem:[%s203 + $0x2ac] sm:$0xf]
        %v428 = vld [vmem:[%s203 + $0x2b0] sm:$0xf]
        %v429 = vld [vmem:[%s203 + $0x2b4] sm:$0xf]
        %v430 = vld [vmem:[%s203 + $0x2b8] sm:$0xf]
        %v431 = vld [vmem:[%s203 + $0x2bc] sm:$0xf]
        %v432 = vld [vmem:[%s203 + $0x2c0] sm:$0xf]
        %v433 = vld [vmem:[%s203 + $0x2c4] sm:$0xf]
        %v434 = vld [vmem:[%s203 + $0x2c8] sm:$0xf]
        %v435 = vld [vmem:[%s203 + $0x2cc] sm:$0xf]
        %v436 = vld [vmem:[%s203 + $0x2d0] sm:$0xf]
        %v437 = vld [vmem:[%s203 + $0x2d4] sm:$0xf]
        %v438 = vld [vmem:[%s203 + $0x2d8] sm:$0xf]
        %v439 = vld [vmem:[%s203 + $0x2dc] sm:$0xf]
        %v440 = vld [vmem:[%s203 + $0x2e0] sm:$0xf]
        %v441 = vld [vmem:[%s203 + $0x2e4] sm:$0xf]
        %v442 = vld [vmem:[%s203 + $0x2e8] sm:$0xf]
        %v443 = vld [vmem:[%s203 + $0x2ec] sm:$0xf]
        %v444 = vld [vmem:[%s203 + $0x2f0] sm:$0xf]
        %v445 = vld [vmem:[%s203 + $0x2f4] sm:$0xf]
        %v446 = vld [vmem:[%s203 + $0x2f8] sm:$0xf]
        %v447 = vld [vmem:[%s203 + $0x2fc] sm:$0xf]
        %v448 = vld [vmem:[%s203 + $0x300] sm:$0xf]
        %v449 = vld [vmem:[%s203 + $0x304] sm:$0xf]
        %v450 = vld [vmem:[%s203 + $0x308] sm:$0xf]
        %v451 = vld [vmem:[%s203 + $0x30c] sm:$0xf]
        %v452 = vld [vmem:[%s203 + $0x310] sm:$0xf]
        %v453 = vld [vmem:[%s203 + $0x314] sm:$0xf]
        %v454 = vld [vmem:[%s203 + $0x318] sm:$0xf]
        %v455 = vld [vmem:[%s203 + $0x31c] sm:$0xf]
        %v456 = vld [vmem:[%s203 + $0x320] sm:$0xf]
        %v457 = vld [vmem:[%s203 + $0x324] sm:$0xf]
        %v458 = vld [vmem:[%s203 + $0x328] sm:$0xf]
        %v459 = vld [vmem:[%s203 + $0x32c] sm:$0xf]
        %v460 = vld [vmem:[%s203 + $0x330] sm:$0xf]
        %v461 = vld [vmem:[%s203 + $0x334] sm:$0xf]
        %v462 = vld [vmem:[%s203 + $0x338] sm:$0xf]
        %v463 = vld [vmem:[%s203 + $0x33c] sm:$0xf]
        %v464 = vld [vmem:[%s203 + $0x340] sm:$0xf]
        %v465 = vld [vmem:[%s203 + $0x344] sm:$0xf]
        %v466 = vld [vmem:[%s203 + $0x348] sm:$0xf]
        %v467 = vld [vmem:[%s203 + $0x34c] sm:$0xf]
        %v468 = vld [vmem:[%s203 + $0x350] sm:$0xf]
        %v469 = vld [vmem:[%s203 + $0x354] sm:$0xf]
        %v470 = vld [vmem:[%s203 + $0x358] sm:$0xf]
        %v471 = vld [vmem:[%s203 + $0x35c] sm:$0xf]
        %v472 = vld [vmem:[%s203 + $0x360] sm:$0xf]
        %v473 = vld [vmem:[%s203 + $0x364] sm:$0xf]
        %v474 = vld [vmem:[%s203 + $0x368] sm:$0xf]
        %v475 = vld [vmem:[%s203 + $0x36c] sm:$0xf]
        %v476 = vld [vmem:[%s203 + $0x370] sm:$0xf]
        %v477 = vld [vmem:[%s203 + $0x374] sm:$0xf]
        %v478 = vld [vmem:[%s203 + $0x378] sm:$0xf]
        %v479 = vld [vmem:[%s203 + $0x37c] sm:$0xf]
        %v480 = vld [vmem:[%s203 + $0x380] sm:$0xf]
        %v481 = vld [vmem:[%s203 + $0x384] sm:$0xf]
        %v482 = vld [vmem:[%s203 + $0x388] sm:$0xf]
        %v483 = vld [vmem:[%s203 + $0x38c] sm:$0xf]
        %v484 = vld [vmem:[%s203 + $0x390] sm:$0xf]
        %v485 = vld [vmem:[%s203 + $0x394] sm:$0xf]
        %v486 = vld [vmem:[%s203 + $0x398] sm:$0xf]
        %v487 = vld [vmem:[%s203 + $0x39c] sm:$0xf]
        %v488 = vld [vmem:[%s203 + $0x3a0] sm:$0xf]
        %v489 = vld [vmem:[%s203 + $0x3a4] sm:$0xf]
        %v490 = vld [vmem:[%s203 + $0x3a8] sm:$0xf]
        %v491 = vld [vmem:[%s203 + $0x3ac] sm:$0xf]
        %v492 = vld [vmem:[%s203 + $0x3b0] sm:$0xf]
        %v493 = vld [vmem:[%s203 + $0x3b4] sm:$0xf]
        %v494 = vld [vmem:[%s203 + $0x3b8] sm:$0xf]
        %v495 = vld [vmem:[%s203 + $0x3bc] sm:$0xf]
        %v496 = vld [vmem:[%s203 + $0x3c0] sm:$0xf]
        %v497 = vld [vmem:[%s203 + $0x3c4] sm:$0xf]
        %v498 = vld [vmem:[%s203 + $0x3c8] sm:$0xf]
        %v499 = vld [vmem:[%s203 + $0x3cc] sm:$0xf]
        %v500 = vld [vmem:[%s203 + $0x3d0] sm:$0xf]
        %v501 = vld [vmem:[%s203 + $0x3d4] sm:$0xf]
        %v502 = vld [vmem:[%s203 + $0x3d8] sm:$0xf]
        %v503 = vld [vmem:[%s203 + $0x3dc] sm:$0xf]
        %v504 = vld [vmem:[%s203 + $0x3e0] sm:$0xf]
        %v505 = vld [vmem:[%s203 + $0x3e4] sm:$0xf]
        %v506 = vld [vmem:[%s203 + $0x3e8] sm:$0xf]
        %v507 = vld [vmem:[%s203 + $0x3ec] sm:$0xf]
        %v508 = vld [vmem:[%s203 + $0x3f0] sm:$0xf]
        %v509 = vld [vmem:[%s203 + $0x3f4] sm:$0xf]
        %v510 = vld [vmem:[%s203 + $0x3f8] sm:$0xf]
        %v511 = vld [vmem:[%s203 + $0x3fc] sm:$0xf]
        %v528 = vunpack.c.l.b16 %v256
        %v529 = vunpack.c.l.b16 %v257
        %v530 = vunpack.c.l.b16 %v258
        %v531 = vunpack.c.l.b16 %v259
        %v532 = vunpack.c.l.b16 %v260
        %v533 = vunpack.c.l.b16 %v261
        %v534 = vunpack.c.l.b16 %v262
        %v535 = vunpack.c.l.b16 %v263
        %v536 = vunpack.c.l.b16 %v264
        %v537 = vunpack.c.l.b16 %v265
        %v538 = vunpack.c.l.b16 %v266
        %v539 = vunpack.c.l.b16 %v267
        %v540 = vunpack.c.l.b16 %v268
        %v541 = vunpack.c.l.b16 %v269
        %v542 = vunpack.c.l.b16 %v270
        %v543 = vunpack.c.l.b16 %v271
        %v544 = vpack.c.b16 %v529, %v528
        %v545 = vpack.c.b16 %v531, %v530
        %v546 = vpack.c.b16 %v533, %v532
        %v547 = vpack.c.b16 %v535, %v534
        %v548 = vpack.c.b16 %v537, %v536
        %v549 = vpack.c.b16 %v539, %v538
        %v550 = vpack.c.b16 %v541, %v540
        %v551 = vpack.c.b16 %v543, %v542
        %560 = vmatprep.subr.bf16.mxu0 0
        %561 = vmatpush1.bf16.msra.mxu0 %v544
        %562 = vmatprep.subr.bf16.mxu0 0
        %563 = vmatpush1.bf16.msra.mxu0 %v545
        %564 = vmatprep.subr.bf16.mxu0 0
        %565 = vmatpush1.bf16.msra.mxu0 %v546
        %566 = vmatprep.subr.bf16.mxu0 0
        %567 = vmatpush1.bf16.msra.mxu0 %v547
        %568 = vmatprep.subr.bf16.mxu0 0
        %569 = vmatpush1.bf16.msra.mxu0 %v548
        %570 = vmatprep.subr.bf16.mxu0 0
        %571 = vmatpush1.bf16.msra.mxu0 %v549
        %572 = vmatprep.subr.bf16.mxu0 0
        %573 = vmatpush1.bf16.msra.mxu0 %v550
        %574 = vmatprep.subr.bf16.mxu0 0
        %575 = vmatpush1.bf16.msra.mxu0 %v551
        %576 = vmatprep.subr.bf16.mxu0 0
        %577 = vmatpush1.bf16.msra.mxu0 0
        %578 = vmatprep.subr.bf16.mxu0 0
        %579 = vmatpush1.bf16.msra.mxu0 0
        %580 = vmatprep.subr.bf16.mxu0 0
        %581 = vmatpush1.bf16.msra.mxu0 0
        %582 = vmatprep.subr.bf16.mxu0 0
        %583 = vmatpush1.bf16.msra.mxu0 0
        %584 = vmatprep.subr.bf16.mxu0 0
        %585 = vmatpush1.bf16.msra.mxu0 0
        %586 = vmatprep.subr.bf16.mxu0 0
        %587 = vmatpush1.bf16.msra.mxu0 0
        %588 = vmatprep.subr.bf16.mxu0 0
        %589 = vmatpush1.bf16.msra.mxu0 0
        %590 = vmatprep.subr.bf16.mxu0 0
        %591 = vmatpush1.bf16.msra.mxu0 0
        %592 = vmatprep.mubr.bf16.mxu0 0
        %593 = vmatmul.mubr.bf16.gmra.mrb[0].mxu0 %v240
        %v594 = vpop.f32.mrb[0].mxu0
        %v595 = vadd.f32 0.0, %v594
        %v596 = vpop.f32.mrb[0].mxu0
        %v597 = vpop.f32.mrb[0].mxu0
        %v598 = vpop.f32.mrb[0].mxu0
        %599 = vdwg.mxu0
        %v616 = vunpack.c.l.b16 %v272
        %v617 = vunpack.c.l.b16 %v273
        %v618 = vunpack.c.l.b16 %v274
        %v619 = vunpack.c.l.b16 %v275
        %v620 = vunpack.c.l.b16 %v276
        %v621 = vunpack.c.l.b16 %v277
        %v622 = vunpack.c.l.b16 %v278
        %v623 = vunpack.c.l.b16 %v279
        %v624 = vunpack.c.l.b16 %v280
        %v625 = vunpack.c.l.b16 %v281
        %v626 = vunpack.c.l.b16 %v282
        %v627 = vunpack.c.l.b16 %v283
        %v628 = vunpack.c.l.b16 %v284
        %v629 = vunpack.c.l.b16 %v285
        %v630 = vunpack.c.l.b16 %v286
        %v631 = vunpack.c.l.b16 %v287
        %v632 = vpack.c.b16 %v617, %v616
        %v633 = vpack.c.b16 %v619, %v618
        %v634 = vpack.c.b16 %v621, %v620
        %v635 = vpack.c.b16 %v623, %v622
        %v636 = vpack.c.b16 %v625, %v624
        %v637 = vpack.c.b16 %v627, %v626
        %v638 = vpack.c.b16 %v629, %v628
        %v639 = vpack.c.b16 %v631, %v630
        %648 = vmatprep.subr.bf16.mxu0 0
        %649 = vmatpush1.bf16.msra.mxu0 %v632
        %650 = vmatprep.subr.bf16.mxu0 0
        %651 = vmatpush1.bf16.msra.mxu0 %v633
        %652 = vmatprep.subr.bf16.mxu0 0
        %653 = vmatpush1.bf16.msra.mxu0 %v634
        %654 = vmatprep.subr.bf16.mxu0 0
        %655 = vmatpush1.bf16.msra.mxu0 %v635
        %656 = vmatprep.subr.bf16.mxu0 0
        %657 = vmatpush1.bf16.msra.mxu0 %v636
        %658 = vmatprep.subr.bf16.mxu0 0
        %659 = vmatpush1.bf16.msra.mxu0 %v637
        %660 = vmatprep.subr.bf16.mxu0 0
        %661 = vmatpush1.bf16.msra.mxu0 %v638
        %662 = vmatprep.subr.bf16.mxu0 0
        %663 = vmatpush1.bf16.msra.mxu0 %v639
        %664 = vmatprep.subr.bf16.mxu0 0
        %665 = vmatpush1.bf16.msra.mxu0 0
        %666 = vmatprep.subr.bf16.mxu0 0
        %667 = vmatpush1.bf16.msra.mxu0 0
        %668 = vmatprep.subr.bf16.mxu0 0
        %669 = vmatpush1.bf16.msra.mxu0 0
        %670 = vmatprep.subr.bf16.mxu0 0
        %671 = vmatpush1.bf16.msra.mxu0 0
        %672 = vmatprep.subr.bf16.mxu0 0
        %673 = vmatpush1.bf16.msra.mxu0 0
        %674 = vmatprep.subr.bf16.mxu0 0
        %675 = vmatpush1.bf16.msra.mxu0 0
        %676 = vmatprep.subr.bf16.mxu0 0
        %677 = vmatpush1.bf16.msra.mxu0 0
        %678 = vmatprep.subr.bf16.mxu0 0
        %679 = vmatpush1.bf16.msra.mxu0 0
        %680 = vmatprep.mubr.bf16.mxu0 0
        %681 = vmatmul.mubr.bf16.gmra.mrb[0].mxu0 %v241
        %v682 = vpop.f32.mrb[0].mxu0
        %v683 = vadd.f32 0.0, %v682
        %v684 = vpop.f32.mrb[0].mxu0
        %v685 = vpop.f32.mrb[0].mxu0
        %v686 = vpop.f32.mrb[0].mxu0
        %687 = vdwg.mxu0
        %v704 = vunpack.c.l.b16 %v288
        %v705 = vunpack.c.l.b16 %v289
        %v706 = vunpack.c.l.b16 %v290
        %v707 = vunpack.c.l.b16 %v291
        %v708 = vunpack.c.l.b16 %v292
        %v709 = vunpack.c.l.b16 %v293
        %v710 = vunpack.c.l.b16 %v294
        %v711 = vunpack.c.l.b16 %v295
        %v712 = vunpack.c.l.b16 %v296
        %v713 = vunpack.c.l.b16 %v297
        %v714 = vunpack.c.l.b16 %v298
        %v715 = vunpack.c.l.b16 %v299
        %v716 = vunpack.c.l.b16 %v300
        %v717 = vunpack.c.l.b16 %v301
        %v718 = vunpack.c.l.b16 %v302
        %v719 = vunpack.c.l.b16 %v303
        %v720 = vpack.c.b16 %v705, %v704
        %v721 = vpack.c.b16 %v707, %v706
        %v722 = vpack.c.b16 %v709, %v708
        %v723 = vpack.c.b16 %v711, %v710
        %v724 = vpack.c.b16 %v713, %v712
        %v725 = vpack.c.b16 %v715, %v714
        %v726 = vpack.c.b16 %v717, %v716
        %v727 = vpack.c.b16 %v719, %v718
        %736 = vmatprep.subr.bf16.mxu0 0
        %737 = vmatpush1.bf16.msra.mxu0 %v720
        %738 = vmatprep.subr.bf16.mxu0 0
        %739 = vmatpush1.bf16.msra.mxu0 %v721
        %740 = vmatprep.subr.bf16.mxu0 0
        %741 = vmatpush1.bf16.msra.mxu0 %v722
        %742 = vmatprep.subr.bf16.mxu0 0
        %743 = vmatpush1.bf16.msra.mxu0 %v723
        %744 = vmatprep.subr.bf16.mxu0 0
        %745 = vmatpush1.bf16.msra.mxu0 %v724
        %746 = vmatprep.subr.bf16.mxu0 0
        %747 = vmatpush1.bf16.msra.mxu0 %v725
        %748 = vmatprep.subr.bf16.mxu0 0
        %749 = vmatpush1.bf16.msra.mxu0 %v726
        %750 = vmatprep.subr.bf16.mxu0 0
        %751 = vmatpush1.bf16.msra.mxu0 %v727
        %752 = vmatprep.subr.bf16.mxu0 0
        %753 = vmatpush1.bf16.msra.mxu0 0
        %754 = vmatprep.subr.bf16.mxu0 0
        %755 = vmatpush1.bf16.msra.mxu0 0
        %756 = vmatprep.subr.bf16.mxu0 0
        %757 = vmatpush1.bf16.msra.mxu0 0
        %758 = vmatprep.subr.bf16.mxu0 0
        %759 = vmatpush1.bf16.msra.mxu0 0
        %760 = vmatprep.subr.bf16.mxu0 0
        %761 = vmatpush1.bf16.msra.mxu0 0
        %762 = vmatprep.subr.bf16.mxu0 0
        %763 = vmatpush1.bf16.msra.mxu0 0
        %764 = vmatprep.subr.bf16.mxu0 0
        %765 = vmatpush1.bf16.msra.mxu0 0
        %766 = vmatprep.subr.bf16.mxu0 0
        %767 = vmatpush1.bf16.msra.mxu0 0
        %768 = vmatprep.mubr.bf16.mxu0 0
        %769 = vmatmul.mubr.bf16.gmra.mrb[0].mxu0 %v242
        %v770 = vpop.f32.mrb[0].mxu0
        %v771 = vadd.f32 0.0, %v770
        %v772 = vpop.f32.mrb[0].mxu0
        %v773 = vpop.f32.mrb[0].mxu0
        %v774 = vpop.f32.mrb[0].mxu0
        %775 = vdwg.mxu0
        %v792 = vunpack.c.l.b16 %v304
        %v793 = vunpack.c.l.b16 %v305
        %v794 = vunpack.c.l.b16 %v306
        %v795 = vunpack.c.l.b16 %v307
        %v796 = vunpack.c.l.b16 %v308
        %v797 = vunpack.c.l.b16 %v309
        %v798 = vunpack.c.l.b16 %v310
        %v799 = vunpack.c.l.b16 %v311
        %v800 = vunpack.c.l.b16 %v312
        %v801 = vunpack.c.l.b16 %v313
        %v802 = vunpack.c.l.b16 %v314
        %v803 = vunpack.c.l.b16 %v315
        %v804 = vunpack.c.l.b16 %v316
        %v805 = vunpack.c.l.b16 %v317
        %v806 = vunpack.c.l.b16 %v318
        %v807 = vunpack.c.l.b16 %v319
        %v808 = vpack.c.b16 %v793, %v792
        %v809 = vpack.c.b16 %v795, %v794
        %v810 = vpack.c.b16 %v797, %v796
        %v811 = vpack.c.b16 %v799, %v798
        %v812 = vpack.c.b16 %v801, %v800
        %v813 = vpack.c.b16 %v803, %v802
        %v814 = vpack.c.b16 %v805, %v804
        %v815 = vpack.c.b16 %v807, %v806
        %824 = vmatprep.subr.bf16.mxu0 0
        %825 = vmatpush1.bf16.msra.mxu0 %v808
        %826 = vmatprep.subr.bf16.mxu0 0
        %827 = vmatpush1.bf16.msra.mxu0 %v809
        %828 = vmatprep.subr.bf16.mxu0 0
        %829 = vmatpush1.bf16.msra.mxu0 %v810
        %830 = vmatprep.subr.bf16.mxu0 0
        %831 = vmatpush1.bf16.msra.mxu0 %v811
        %832 = vmatprep.subr.bf16.mxu0 0
        %833 = vmatpush1.bf16.msra.mxu0 %v812
        %834 = vmatprep.subr.bf16.mxu0 0
        %835 = vmatpush1.bf16.msra.mxu0 %v813
        %836 = vmatprep.subr.bf16.mxu0 0
        %837 = vmatpush1.bf16.msra.mxu0 %v814
        %838 = vmatprep.subr.bf16.mxu0 0
        %839 = vmatpush1.bf16.msra.mxu0 %v815
        %840 = vmatprep.subr.bf16.mxu0 0
        %841 = vmatpush1.bf16.msra.mxu0 0
        %842 = vmatprep.subr.bf16.mxu0 0
        %843 = vmatpush1.bf16.msra.mxu0 0
        %844 = vmatprep.subr.bf16.mxu0 0
        %845 = vmatpush1.bf16.msra.mxu0 0
        %846 = vmatprep.subr.bf16.mxu0 0
        %847 = vmatpush1.bf16.msra.mxu0 0
        %848 = vmatprep.subr.bf16.mxu0 0
        %849 = vmatpush1.bf16.msra.mxu0 0
        %850 = vmatprep.subr.bf16.mxu0 0
        %851 = vmatpush1.bf16.msra.mxu0 0
        %852 = vmatprep.subr.bf16.mxu0 0
        %853 = vmatpush1.bf16.msra.mxu0 0
        %854 = vmatprep.subr.bf16.mxu0 0
        %855 = vmatpush1.bf16.msra.mxu0 0
        %856 = vmatprep.mubr.bf16.mxu0 0
        %857 = vmatmul.mubr.bf16.gmra.mrb[0].mxu0 %v243
        %v858 = vpop.f32.mrb[0].mxu0
        %v859 = vadd.f32 0.0, %v858
        %v860 = vpop.f32.mrb[0].mxu0
        %v861 = vpop.f32.mrb[0].mxu0
        %v862 = vpop.f32.mrb[0].mxu0
        %863 = vdwg.mxu0
        %v880 = vunpack.c.l.b16 %v320
        %v881 = vunpack.c.l.b16 %v321
        %v882 = vunpack.c.l.b16 %v322
        %v883 = vunpack.c.l.b16 %v323
        %v884 = vunpack.c.l.b16 %v324
        %v885 = vunpack.c.l.b16 %v325
        %v886 = vunpack.c.l.b16 %v326
        %v887 = vunpack.c.l.b16 %v327
        %v888 = vunpack.c.l.b16 %v328
        %v889 = vunpack.c.l.b16 %v329
        %v890 = vunpack.c.l.b16 %v330
        %v891 = vunpack.c.l.b16 %v331
        %v892 = vunpack.c.l.b16 %v332
        %v893 = vunpack.c.l.b16 %v333
        %v894 = vunpack.c.l.b16 %v334
        %v895 = vunpack.c.l.b16 %v335
        %v896 = vpack.c.b16 %v881, %v880
        %v897 = vpack.c.b16 %v883, %v882
        %v898 = vpack.c.b16 %v885, %v884
        %v899 = vpack.c.b16 %v887, %v886
        %v900 = vpack.c.b16 %v889, %v888
        %v901 = vpack.c.b16 %v891, %v890
        %v902 = vpack.c.b16 %v893, %v892
        %v903 = vpack.c.b16 %v895, %v894
        %912 = vmatprep.subr.bf16.mxu0 0
        %913 = vmatpush1.bf16.msra.mxu0 %v896
        %914 = vmatprep.subr.bf16.mxu0 0
        %915 = vmatpush1.bf16.msra.mxu0 %v897
        %916 = vmatprep.subr.bf16.mxu0 0
        %917 = vmatpush1.bf16.msra.mxu0 %v898
        %918 = vmatprep.subr.bf16.mxu0 0
        %919 = vmatpush1.bf16.msra.mxu0 %v899
        %920 = vmatprep.subr.bf16.mxu0 0
        %921 = vmatpush1.bf16.msra.mxu0 %v900
        %922 = vmatprep.subr.bf16.mxu0 0
        %923 = vmatpush1.bf16.msra.mxu0 %v901
        %924 = vmatprep.subr.bf16.mxu0 0
        %925 = vmatpush1.bf16.msra.mxu0 %v902
        %926 = vmatprep.subr.bf16.mxu0 0
        %927 = vmatpush1.bf16.msra.mxu0 %v903
        %928 = vmatprep.subr.bf16.mxu0 0
        %929 = vmatpush1.bf16.msra.mxu0 0
        %930 = vmatprep.subr.bf16.mxu0 0
        %931 = vmatpush1.bf16.msra.mxu0 0
        %932 = vmatprep.subr.bf16.mxu0 0
        %933 = vmatpush1.bf16.msra.mxu0 0
        %934 = vmatprep.subr.bf16.mxu0 0
        %935 = vmatpush1.bf16.msra.mxu0 0
        %936 = vmatprep.subr.bf16.mxu0 0
        %937 = vmatpush1.bf16.msra.mxu0 0
        %938 = vmatprep.subr.bf16.mxu0 0
        %939 = vmatpush1.bf16.msra.mxu0 0
        %940 = vmatprep.subr.bf16.mxu0 0
        %941 = vmatpush1.bf16.msra.mxu0 0
        %942 = vmatprep.subr.bf16.mxu0 0
        %943 = vmatpush1.bf16.msra.mxu0 0
        %944 = vmatprep.mubr.bf16.mxu0 0
        %945 = vmatmul.mubr.bf16.gmra.mrb[0].mxu0 %v244
        %v946 = vpop.f32.mrb[0].mxu0
        %v947 = vadd.f32 0.0, %v946
        %v948 = vpop.f32.mrb[0].mxu0
        %v949 = vpop.f32.mrb[0].mxu0
        %v950 = vpop.f32.mrb[0].mxu0
        %951 = vdwg.mxu0
        %v968 = vunpack.c.l.b16 %v336
        %v969 = vunpack.c.l.b16 %v337
        %v970 = vunpack.c.l.b16 %v338
        %v971 = vunpack.c.l.b16 %v339
        %v972 = vunpack.c.l.b16 %v340
        %v973 = vunpack.c.l.b16 %v341
        %v974 = vunpack.c.l.b16 %v342
        %v975 = vunpack.c.l.b16 %v343
        %v976 = vunpack.c.l.b16 %v344
        %v977 = vunpack.c.l.b16 %v345
        %v978 = vunpack.c.l.b16 %v346
        %v979 = vunpack.c.l.b16 %v347
        %v980 = vunpack.c.l.b16 %v348
        %v981 = vunpack.c.l.b16 %v349
        %v982 = vunpack.c.l.b16 %v350
        %v983 = vunpack.c.l.b16 %v351
        %v984 = vpack.c.b16 %v969, %v968
        %v985 = vpack.c.b16 %v971, %v970
        %v986 = vpack.c.b16 %v973, %v972
        %v987 = vpack.c.b16 %v975, %v974
        %v988 = vpack.c.b16 %v977, %v976
        %v989 = vpack.c.b16 %v979, %v978
        %v990 = vpack.c.b16 %v981, %v980
        %v991 = vpack.c.b16 %v983, %v982
        %1000 = vmatprep.subr.bf16.mxu0 0
        %1001 = vmatpush1.bf16.msra.mxu0 %v984
        %1002 = vmatprep.subr.bf16.mxu0 0
        %1003 = vmatpush1.bf16.msra.mxu0 %v985
        %1004 = vmatprep.subr.bf16.mxu0 0
        %1005 = vmatpush1.bf16.msra.mxu0 %v986
        %1006 = vmatprep.subr.bf16.mxu0 0
        %1007 = vmatpush1.bf16.msra.mxu0 %v987
        %1008 = vmatprep.subr.bf16.mxu0 0
        %1009 = vmatpush1.bf16.msra.mxu0 %v988
        %1010 = vmatprep.subr.bf16.mxu0 0
        %1011 = vmatpush1.bf16.msra.mxu0 %v989
        %1012 = vmatprep.subr.bf16.mxu0 0
        %1013 = vmatpush1.bf16.msra.mxu0 %v990
        %1014 = vmatprep.subr.bf16.mxu0 0
        %1015 = vmatpush1.bf16.msra.mxu0 %v991
        %1016 = vmatprep.subr.bf16.mxu0 0
        %1017 = vmatpush1.bf16.msra.mxu0 0
        %1018 = vmatprep.subr.bf16.mxu0 0
        %1019 = vmatpush1.bf16.msra.mxu0 0
        %1020 = vmatprep.subr.bf16.mxu0 0
        %1021 = vmatpush1.bf16.msra.mxu0 0
        %1022 = vmatprep.subr.bf16.mxu0 0
        %1023 = vmatpush1.bf16.msra.mxu0 0
        %1024 = vmatprep.subr.bf16.mxu0 0
        %1025 = vmatpush1.bf16.msra.mxu0 0
        %1026 = vmatprep.subr.bf16.mxu0 0
        %1027 = vmatpush1.bf16.msra.mxu0 0
        %1028 = vmatprep.subr.bf16.mxu0 0
        %1029 = vmatpush1.bf16.msra.mxu0 0
        %1030 = vmatprep.subr.bf16.mxu0 0
        %1031 = vmatpush1.bf16.msra.mxu0 0
        %1032 = vmatprep.mubr.bf16.mxu0 0
        %1033 = vmatmul.mubr.bf16.gmra.mrb[0].mxu0 %v245
        %v1034 = vpop.f32.mrb[0].mxu0
        %v1035 = vadd.f32 0.0, %v1034
        %v1036 = vpop.f32.mrb[0].mxu0
        %v1037 = vpop.f32.mrb[0].mxu0
        %v1038 = vpop.f32.mrb[0].mxu0
        %1039 = vdwg.mxu0
        %v1056 = vunpack.c.l.b16 %v352
        %v1057 = vunpack.c.l.b16 %v353
        %v1058 = vunpack.c.l.b16 %v354
        %v1059 = vunpack.c.l.b16 %v355
        %v1060 = vunpack.c.l.b16 %v356
        %v1061 = vunpack.c.l.b16 %v357
        %v1062 = vunpack.c.l.b16 %v358
        %v1063 = vunpack.c.l.b16 %v359
        %v1064 = vunpack.c.l.b16 %v360
        %v1065 = vunpack.c.l.b16 %v361
        %v1066 = vunpack.c.l.b16 %v362
        %v1067 = vunpack.c.l.b16 %v363
        %v1068 = vunpack.c.l.b16 %v364
        %v1069 = vunpack.c.l.b16 %v365
        %v1070 = vunpack.c.l.b16 %v366
        %v1071 = vunpack.c.l.b16 %v367
        %v1072 = vpack.c.b16 %v1057, %v1056
        %v1073 = vpack.c.b16 %v1059, %v1058
        %v1074 = vpack.c.b16 %v1061, %v1060
        %v1075 = vpack.c.b16 %v1063, %v1062
        %v1076 = vpack.c.b16 %v1065, %v1064
        %v1077 = vpack.c.b16 %v1067, %v1066
        %v1078 = vpack.c.b16 %v1069, %v1068
        %v1079 = vpack.c.b16 %v1071, %v1070
        %1088 = vmatprep.subr.bf16.mxu0 0
        %1089 = vmatpush1.bf16.msra.mxu0 %v1072
        %1090 = vmatprep.subr.bf16.mxu0 0
        %1091 = vmatpush1.bf16.msra.mxu0 %v1073
        %1092 = vmatprep.subr.bf16.mxu0 0
        %1093 = vmatpush1.bf16.msra.mxu0 %v1074
        %1094 = vmatprep.subr.bf16.mxu0 0
        %1095 = vmatpush1.bf16.msra.mxu0 %v1075
        %1096 = vmatprep.subr.bf16.mxu0 0
        %1097 = vmatpush1.bf16.msra.mxu0 %v1076
        %1098 = vmatprep.subr.bf16.mxu0 0
        %1099 = vmatpush1.bf16.msra.mxu0 %v1077
        %1100 = vmatprep.subr.bf16.mxu0 0
        %1101 = vmatpush1.bf16.msra.mxu0 %v1078
        %1102 = vmatprep.subr.bf16.mxu0 0
        %1103 = vmatpush1.bf16.msra.mxu0 %v1079
        %1104 = vmatprep.subr.bf16.mxu0 0
        %1105 = vmatpush1.bf16.msra.mxu0 0
        %1106 = vmatprep.subr.bf16.mxu0 0
        %1107 = vmatpush1.bf16.msra.mxu0 0
        %1108 = vmatprep.subr.bf16.mxu0 0
        %1109 = vmatpush1.bf16.msra.mxu0 0
        %1110 = vmatprep.subr.bf16.mxu0 0
        %1111 = vmatpush1.bf16.msra.mxu0 0
        %1112 = vmatprep.subr.bf16.mxu0 0
        %1113 = vmatpush1.bf16.msra.mxu0 0
        %1114 = vmatprep.subr.bf16.mxu0 0
        %1115 = vmatpush1.bf16.msra.mxu0 0
        %1116 = vmatprep.subr.bf16.mxu0 0
        %1117 = vmatpush1.bf16.msra.mxu0 0
        %1118 = vmatprep.subr.bf16.mxu0 0
        %1119 = vmatpush1.bf16.msra.mxu0 0
        %1120 = vmatprep.mubr.bf16.mxu0 0
        %1121 = vmatmul.mubr.bf16.gmra.mrb[0].mxu0 %v246
        %v1122 = vpop.f32.mrb[0].mxu0
        %v1123 = vadd.f32 0.0, %v1122
        %v1124 = vpop.f32.mrb[0].mxu0
        %v1125 = vpop.f32.mrb[0].mxu0
        %v1126 = vpop.f32.mrb[0].mxu0
        %1127 = vdwg.mxu0
        %v1144 = vunpack.c.l.b16 %v368
        %v1145 = vunpack.c.l.b16 %v369
        %v1146 = vunpack.c.l.b16 %v370
        %v1147 = vunpack.c.l.b16 %v371
        %v1148 = vunpack.c.l.b16 %v372
        %v1149 = vunpack.c.l.b16 %v373
        %v1150 = vunpack.c.l.b16 %v374
        %v1151 = vunpack.c.l.b16 %v375
        %v1152 = vunpack.c.l.b16 %v376
        %v1153 = vunpack.c.l.b16 %v377
        %v1154 = vunpack.c.l.b16 %v378
        %v1155 = vunpack.c.l.b16 %v379
        %v1156 = vunpack.c.l.b16 %v380
        %v1157 = vunpack.c.l.b16 %v381
        %v1158 = vunpack.c.l.b16 %v382
        %v1159 = vunpack.c.l.b16 %v383
        %v1160 = vpack.c.b16 %v1145, %v1144
        %v1161 = vpack.c.b16 %v1147, %v1146
        %v1162 = vpack.c.b16 %v1149, %v1148
        %v1163 = vpack.c.b16 %v1151, %v1150
        %v1164 = vpack.c.b16 %v1153, %v1152
        %v1165 = vpack.c.b16 %v1155, %v1154
        %v1166 = vpack.c.b16 %v1157, %v1156
        %v1167 = vpack.c.b16 %v1159, %v1158
        %1176 = vmatprep.subr.bf16.mxu0 0
        %1177 = vmatpush1.bf16.msra.mxu0 %v1160
        %1178 = vmatprep.subr.bf16.mxu0 0
        %1179 = vmatpush1.bf16.msra.mxu0 %v1161
        %1180 = vmatprep.subr.bf16.mxu0 0
        %1181 = vmatpush1.bf16.msra.mxu0 %v1162
        %1182 = vmatprep.subr.bf16.mxu0 0
        %1183 = vmatpush1.bf16.msra.mxu0 %v1163
        %1184 = vmatprep.subr.bf16.mxu0 0
        %1185 = vmatpush1.bf16.msra.mxu0 %v1164
        %1186 = vmatprep.subr.bf16.mxu0 0
        %1187 = vmatpush1.bf16.msra.mxu0 %v1165
        %1188 = vmatprep.subr.bf16.mxu0 0
        %1189 = vmatpush1.bf16.msra.mxu0 %v1166
        %1190 = vmatprep.subr.bf16.mxu0 0
        %1191 = vmatpush1.bf16.msra.mxu0 %v1167
        %1192 = vmatprep.subr.bf16.mxu0 0
        %1193 = vmatpush1.bf16.msra.mxu0 0
        %1194 = vmatprep.subr.bf16.mxu0 0
        %1195 = vmatpush1.bf16.msra.mxu0 0
        %1196 = vmatprep.subr.bf16.mxu0 0
        %1197 = vmatpush1.bf16.msra.mxu0 0
        %1198 = vmatprep.subr.bf16.mxu0 0
        %1199 = vmatpush1.bf16.msra.mxu0 0
        %1200 = vmatprep.subr.bf16.mxu0 0
        %1201 = vmatpush1.bf16.msra.mxu0 0
        %1202 = vmatprep.subr.bf16.mxu0 0
        %1203 = vmatpush1.bf16.msra.mxu0 0
        %1204 = vmatprep.subr.bf16.mxu0 0
        %1205 = vmatpush1.bf16.msra.mxu0 0
        %1206 = vmatprep.subr.bf16.mxu0 0
        %1207 = vmatpush1.bf16.msra.mxu0 0
        %1208 = vmatprep.mubr.bf16.mxu0 0
        %1209 = vmatmul.mubr.bf16.gmra.mrb[0].mxu0 %v247
        %v1210 = vpop.f32.mrb[0].mxu0
        %v1211 = vadd.f32 0.0, %v1210
        %v1212 = vpop.f32.mrb[0].mxu0
        %v1213 = vpop.f32.mrb[0].mxu0
        %v1214 = vpop.f32.mrb[0].mxu0
        %1215 = vdwg.mxu0
        %v1232 = vunpack.c.l.b16 %v384
        %v1233 = vunpack.c.l.b16 %v385
        %v1234 = vunpack.c.l.b16 %v386
        %v1235 = vunpack.c.l.b16 %v387
        %v1236 = vunpack.c.l.b16 %v388
        %v1237 = vunpack.c.l.b16 %v389
        %v1238 = vunpack.c.l.b16 %v390
        %v1239 = vunpack.c.l.b16 %v391
        %v1240 = vunpack.c.l.b16 %v392
        %v1241 = vunpack.c.l.b16 %v393
        %v1242 = vunpack.c.l.b16 %v394
        %v1243 = vunpack.c.l.b16 %v395
        %v1244 = vunpack.c.l.b16 %v396
        %v1245 = vunpack.c.l.b16 %v397
        %v1246 = vunpack.c.l.b16 %v398
        %v1247 = vunpack.c.l.b16 %v399
        %v1248 = vpack.c.b16 %v1233, %v1232
        %v1249 = vpack.c.b16 %v1235, %v1234
        %v1250 = vpack.c.b16 %v1237, %v1236
        %v1251 = vpack.c.b16 %v1239, %v1238
        %v1252 = vpack.c.b16 %v1241, %v1240
        %v1253 = vpack.c.b16 %v1243, %v1242
        %v1254 = vpack.c.b16 %v1245, %v1244
        %v1255 = vpack.c.b16 %v1247, %v1246
        %1264 = vmatprep.subr.bf16.mxu0 0
        %1265 = vmatpush1.bf16.msra.mxu0 %v1248
        %1266 = vmatprep.subr.bf16.mxu0 0
        %1267 = vmatpush1.bf16.msra.mxu0 %v1249
        %1268 = vmatprep.subr.bf16.mxu0 0
        %1269 = vmatpush1.bf16.msra.mxu0 %v1250
        %1270 = vmatprep.subr.bf16.mxu0 0
        %1271 = vmatpush1.bf16.msra.mxu0 %v1251
        %1272 = vmatprep.subr.bf16.mxu0 0
        %1273 = vmatpush1.bf16.msra.mxu0 %v1252
        %1274 = vmatprep.subr.bf16.mxu0 0
        %1275 = vmatpush1.bf16.msra.mxu0 %v1253
        %1276 = vmatprep.subr.bf16.mxu0 0
        %1277 = vmatpush1.bf16.msra.mxu0 %v1254
        %1278 = vmatprep.subr.bf16.mxu0 0
        %1279 = vmatpush1.bf16.msra.mxu0 %v1255
        %1280 = vmatprep.subr.bf16.mxu0 0
        %1281 = vmatpush1.bf16.msra.mxu0 0
        %1282 = vmatprep.subr.bf16.mxu0 0
        %1283 = vmatpush1.bf16.msra.mxu0 0
        %1284 = vmatprep.subr.bf16.mxu0 0
        %1285 = vmatpush1.bf16.msra.mxu0 0
        %1286 = vmatprep.subr.bf16.mxu0 0
        %1287 = vmatpush1.bf16.msra.mxu0 0
        %1288 = vmatprep.subr.bf16.mxu0 0
        %1289 = vmatpush1.bf16.msra.mxu0 0
        %1290 = vmatprep.subr.bf16.mxu0 0
        %1291 = vmatpush1.bf16.msra.mxu0 0
        %1292 = vmatprep.subr.bf16.mxu0 0
        %1293 = vmatpush1.bf16.msra.mxu0 0
        %1294 = vmatprep.subr.bf16.mxu0 0
        %1295 = vmatpush1.bf16.msra.mxu0 0
        %1296 = vmatprep.mubr.bf16.mxu0 0
        %1297 = vmatmul.mubr.bf16.gmra.mrb[0].mxu0 %v248
        %v1298 = vpop.f32.mrb[0].mxu0
        %v1299 = vadd.f32 0.0, %v1298
        %v1300 = vpop.f32.mrb[0].mxu0
        %v1301 = vpop.f32.mrb[0].mxu0
        %v1302 = vpop.f32.mrb[0].mxu0
        %1303 = vdwg.mxu0
        %v1320 = vunpack.c.l.b16 %v400
        %v1321 = vunpack.c.l.b16 %v401
        %v1322 = vunpack.c.l.b16 %v402
        %v1323 = vunpack.c.l.b16 %v403
        %v1324 = vunpack.c.l.b16 %v404
        %v1325 = vunpack.c.l.b16 %v405
        %v1326 = vunpack.c.l.b16 %v406
        %v1327 = vunpack.c.l.b16 %v407
        %v1328 = vunpack.c.l.b16 %v408
        %v1329 = vunpack.c.l.b16 %v409
        %v1330 = vunpack.c.l.b16 %v410
        %v1331 = vunpack.c.l.b16 %v411
        %v1332 = vunpack.c.l.b16 %v412
        %v1333 = vunpack.c.l.b16 %v413
        %v1334 = vunpack.c.l.b16 %v414
        %v1335 = vunpack.c.l.b16 %v415
        %v1336 = vpack.c.b16 %v1321, %v1320
        %v1337 = vpack.c.b16 %v1323, %v1322
        %v1338 = vpack.c.b16 %v1325, %v1324
        %v1339 = vpack.c.b16 %v1327, %v1326
        %v1340 = vpack.c.b16 %v1329, %v1328
        %v1341 = vpack.c.b16 %v1331, %v1330
        %v1342 = vpack.c.b16 %v1333, %v1332
        %v1343 = vpack.c.b16 %v1335, %v1334
        %1352 = vmatprep.subr.bf16.mxu0 0
        %1353 = vmatpush1.bf16.msra.mxu0 %v1336
        %1354 = vmatprep.subr.bf16.mxu0 0
        %1355 = vmatpush1.bf16.msra.mxu0 %v1337
        %1356 = vmatprep.subr.bf16.mxu0 0
        %1357 = vmatpush1.bf16.msra.mxu0 %v1338
        %1358 = vmatprep.subr.bf16.mxu0 0
        %1359 = vmatpush1.bf16.msra.mxu0 %v1339
        %1360 = vmatprep.subr.bf16.mxu0 0
        %1361 = vmatpush1.bf16.msra.mxu0 %v1340
        %1362 = vmatprep.subr.bf16.mxu0 0
        %1363 = vmatpush1.bf16.msra.mxu0 %v1341
        %1364 = vmatprep.subr.bf16.mxu0 0
        %1365 = vmatpush1.bf16.msra.mxu0 %v1342
        %1366 = vmatprep.subr.bf16.mxu0 0
        %1367 = vmatpush1.bf16.msra.mxu0 %v1343
        %1368 = vmatprep.subr.bf16.mxu0 0
        %1369 = vmatpush1.bf16.msra.mxu0 0
        %1370 = vmatprep.subr.bf16.mxu0 0
        %1371 = vmatpush1.bf16.msra.mxu0 0
        %1372 = vmatprep.subr.bf16.mxu0 0
        %1373 = vmatpush1.bf16.msra.mxu0 0
        %1374 = vmatprep.subr.bf16.mxu0 0
        %1375 = vmatpush1.bf16.msra.mxu0 0
        %1376 = vmatprep.subr.bf16.mxu0 0
        %1377 = vmatpush1.bf16.msra.mxu0 0
        %1378 = vmatprep.subr.bf16.mxu0 0
        %1379 = vmatpush1.bf16.msra.mxu0 0
        %1380 = vmatprep.subr.bf16.mxu0 0
        %1381 = vmatpush1.bf16.msra.mxu0 0
        %1382 = vmatprep.subr.bf16.mxu0 0
        %1383 = vmatpush1.bf16.msra.mxu0 0
        %1384 = vmatprep.mubr.bf16.mxu0 0
        %1385 = vmatmul.mubr.bf16.gmra.mrb[0].mxu0 %v249
        %v1386 = vpop.f32.mrb[0].mxu0
        %v1387 = vadd.f32 0.0, %v1386
        %v1388 = vpop.f32.mrb[0].mxu0
        %v1389 = vpop.f32.mrb[0].mxu0
        %v1390 = vpop.f32.mrb[0].mxu0
        %1391 = vdwg.mxu0
        %v1408 = vunpack.c.l.b16 %v416
        %v1409 = vunpack.c.l.b16 %v417
        %v1410 = vunpack.c.l.b16 %v418
        %v1411 = vunpack.c.l.b16 %v419
        %v1412 = vunpack.c.l.b16 %v420
        %v1413 = vunpack.c.l.b16 %v421
        %v1414 = vunpack.c.l.b16 %v422
        %v1415 = vunpack.c.l.b16 %v423
        %v1416 = vunpack.c.l.b16 %v424
        %v1417 = vunpack.c.l.b16 %v425
        %v1418 = vunpack.c.l.b16 %v426
        %v1419 = vunpack.c.l.b16 %v427
        %v1420 = vunpack.c.l.b16 %v428
        %v1421 = vunpack.c.l.b16 %v429
        %v1422 = vunpack.c.l.b16 %v430
        %v1423 = vunpack.c.l.b16 %v431
        %v1424 = vpack.c.b16 %v1409, %v1408
        %v1425 = vpack.c.b16 %v1411, %v1410
        %v1426 = vpack.c.b16 %v1413, %v1412
        %v1427 = vpack.c.b16 %v1415, %v1414
        %v1428 = vpack.c.b16 %v1417, %v1416
        %v1429 = vpack.c.b16 %v1419, %v1418
        %v1430 = vpack.c.b16 %v1421, %v1420
        %v1431 = vpack.c.b16 %v1423, %v1422
        %1440 = vmatprep.subr.bf16.mxu0 0
        %1441 = vmatpush1.bf16.msra.mxu0 %v1424
        %1442 = vmatprep.subr.bf16.mxu0 0
        %1443 = vmatpush1.bf16.msra.mxu0 %v1425
        %1444 = vmatprep.subr.bf16.mxu0 0
        %1445 = vmatpush1.bf16.msra.mxu0 %v1426
        %1446 = vmatprep.subr.bf16.mxu0 0
        %1447 = vmatpush1.bf16.msra.mxu0 %v1427
        %1448 = vmatprep.subr.bf16.mxu0 0
        %1449 = vmatpush1.bf16.msra.mxu0 %v1428
        %1450 = vmatprep.subr.bf16.mxu0 0
        %1451 = vmatpush1.bf16.msra.mxu0 %v1429
        %1452 = vmatprep.subr.bf16.mxu0 0
        %1453 = vmatpush1.bf16.msra.mxu0 %v1430
        %1454 = vmatprep.subr.bf16.mxu0 0
        %1455 = vmatpush1.bf16.msra.mxu0 %v1431
        %1456 = vmatprep.subr.bf16.mxu0 0
        %1457 = vmatpush1.bf16.msra.mxu0 0
        %1458 = vmatprep.subr.bf16.mxu0 0
        %1459 = vmatpush1.bf16.msra.mxu0 0
        %1460 = vmatprep.subr.bf16.mxu0 0
        %1461 = vmatpush1.bf16.msra.mxu0 0
        %1462 = vmatprep.subr.bf16.mxu0 0
        %1463 = vmatpush1.bf16.msra.mxu0 0
        %1464 = vmatprep.subr.bf16.mxu0 0
        %1465 = vmatpush1.bf16.msra.mxu0 0
        %1466 = vmatprep.subr.bf16.mxu0 0
        %1467 = vmatpush1.bf16.msra.mxu0 0
        %1468 = vmatprep.subr.bf16.mxu0 0
        %1469 = vmatpush1.bf16.msra.mxu0 0
        %1470 = vmatprep.subr.bf16.mxu0 0
        %1471 = vmatpush1.bf16.msra.mxu0 0
        %1472 = vmatprep.mubr.bf16.mxu0 0
        %1473 = vmatmul.mubr.bf16.gmra.mrb[0].mxu0 %v250
        %v1474 = vpop.f32.mrb[0].mxu0
        %v1475 = vadd.f32 0.0, %v1474
        %v1476 = vpop.f32.mrb[0].mxu0
        %v1477 = vpop.f32.mrb[0].mxu0
        %v1478 = vpop.f32.mrb[0].mxu0
        %1479 = vdwg.mxu0
        %v1496 = vunpack.c.l.b16 %v432
        %v1497 = vunpack.c.l.b16 %v433
        %v1498 = vunpack.c.l.b16 %v434
        %v1499 = vunpack.c.l.b16 %v435
        %v1500 = vunpack.c.l.b16 %v436
        %v1501 = vunpack.c.l.b16 %v437
        %v1502 = vunpack.c.l.b16 %v438
        %v1503 = vunpack.c.l.b16 %v439
        %v1504 = vunpack.c.l.b16 %v440
        %v1505 = vunpack.c.l.b16 %v441
        %v1506 = vunpack.c.l.b16 %v442
        %v1507 = vunpack.c.l.b16 %v443
        %v1508 = vunpack.c.l.b16 %v444
        %v1509 = vunpack.c.l.b16 %v445
        %v1510 = vunpack.c.l.b16 %v446
        %v1511 = vunpack.c.l.b16 %v447
        %v1512 = vpack.c.b16 %v1497, %v1496
        %v1513 = vpack.c.b16 %v1499, %v1498
        %v1514 = vpack.c.b16 %v1501, %v1500
        %v1515 = vpack.c.b16 %v1503, %v1502
        %v1516 = vpack.c.b16 %v1505, %v1504
        %v1517 = vpack.c.b16 %v1507, %v1506
        %v1518 = vpack.c.b16 %v1509, %v1508
        %v1519 = vpack.c.b16 %v1511, %v1510
        %1528 = vmatprep.subr.bf16.mxu0 0
        %1529 = vmatpush1.bf16.msra.mxu0 %v1512
        %1530 = vmatprep.subr.bf16.mxu0 0
        %1531 = vmatpush1.bf16.msra.mxu0 %v1513
        %1532 = vmatprep.subr.bf16.mxu0 0
        %1533 = vmatpush1.bf16.msra.mxu0 %v1514
        %1534 = vmatprep.subr.bf16.mxu0 0
        %1535 = vmatpush1.bf16.msra.mxu0 %v1515
        %1536 = vmatprep.subr.bf16.mxu0 0
        %1537 = vmatpush1.bf16.msra.mxu0 %v1516
        %1538 = vmatprep.subr.bf16.mxu0 0
        %1539 = vmatpush1.bf16.msra.mxu0 %v1517
        %1540 = vmatprep.subr.bf16.mxu0 0
        %1541 = vmatpush1.bf16.msra.mxu0 %v1518
        %1542 = vmatprep.subr.bf16.mxu0 0
        %1543 = vmatpush1.bf16.msra.mxu0 %v1519
        %1544 = vmatprep.subr.bf16.mxu0 0
        %1545 = vmatpush1.bf16.msra.mxu0 0
        %1546 = vmatprep.subr.bf16.mxu0 0
        %1547 = vmatpush1.bf16.msra.mxu0 0
        %1548 = vmatprep.subr.bf16.mxu0 0
        %1549 = vmatpush1.bf16.msra.mxu0 0
        %1550 = vmatprep.subr.bf16.mxu0 0
        %1551 = vmatpush1.bf16.msra.mxu0 0
        %1552 = vmatprep.subr.bf16.mxu0 0
        %1553 = vmatpush1.bf16.msra.mxu0 0
        %1554 = vmatprep.subr.bf16.mxu0 0
        %1555 = vmatpush1.bf16.msra.mxu0 0
        %1556 = vmatprep.subr.bf16.mxu0 0
        %1557 = vmatpush1.bf16.msra.mxu0 0
        %1558 = vmatprep.subr.bf16.mxu0 0
        %1559 = vmatpush1.bf16.msra.mxu0 0
        %1560 = vmatprep.mubr.bf16.mxu0 0
        %1561 = vmatmul.mubr.bf16.gmra.mrb[0].mxu0 %v251
        %v1562 = vpop.f32.mrb[0].mxu0
        %v1563 = vadd.f32 0.0, %v1562
        %v1564 = vpop.f32.mrb[0].mxu0
        %v1565 = vpop.f32.mrb[0].mxu0
        %v1566 = vpop.f32.mrb[0].mxu0
        %1567 = vdwg.mxu0
        %v1584 = vunpack.c.l.b16 %v448
        %v1585 = vunpack.c.l.b16 %v449
        %v1586 = vunpack.c.l.b16 %v450
        %v1587 = vunpack.c.l.b16 %v451
        %v1588 = vunpack.c.l.b16 %v452
        %v1589 = vunpack.c.l.b16 %v453
        %v1590 = vunpack.c.l.b16 %v454
        %v1591 = vunpack.c.l.b16 %v455
        %v1592 = vunpack.c.l.b16 %v456
        %v1593 = vunpack.c.l.b16 %v457
        %v1594 = vunpack.c.l.b16 %v458
        %v1595 = vunpack.c.l.b16 %v459
        %v1596 = vunpack.c.l.b16 %v460
        %v1597 = vunpack.c.l.b16 %v461
        %v1598 = vunpack.c.l.b16 %v462
        %v1599 = vunpack.c.l.b16 %v463
        %v1600 = vpack.c.b16 %v1585, %v1584
        %v1601 = vpack.c.b16 %v1587, %v1586
        %v1602 = vpack.c.b16 %v1589, %v1588
        %v1603 = vpack.c.b16 %v1591, %v1590
        %v1604 = vpack.c.b16 %v1593, %v1592
        %v1605 = vpack.c.b16 %v1595, %v1594
        %v1606 = vpack.c.b16 %v1597, %v1596
        %v1607 = vpack.c.b16 %v1599, %v1598
        %1616 = vmatprep.subr.bf16.mxu0 0
        %1617 = vmatpush1.bf16.msra.mxu0 %v1600
        %1618 = vmatprep.subr.bf16.mxu0 0
        %1619 = vmatpush1.bf16.msra.mxu0 %v1601
        %1620 = vmatprep.subr.bf16.mxu0 0
        %1621 = vmatpush1.bf16.msra.mxu0 %v1602
        %1622 = vmatprep.subr.bf16.mxu0 0
        %1623 = vmatpush1.bf16.msra.mxu0 %v1603
        %1624 = vmatprep.subr.bf16.mxu0 0
        %1625 = vmatpush1.bf16.msra.mxu0 %v1604
        %1626 = vmatprep.subr.bf16.mxu0 0
        %1627 = vmatpush1.bf16.msra.mxu0 %v1605
        %1628 = vmatprep.subr.bf16.mxu0 0
        %1629 = vmatpush1.bf16.msra.mxu0 %v1606
        %1630 = vmatprep.subr.bf16.mxu0 0
        %1631 = vmatpush1.bf16.msra.mxu0 %v1607
        %1632 = vmatprep.subr.bf16.mxu0 0
        %1633 = vmatpush1.bf16.msra.mxu0 0
        %1634 = vmatprep.subr.bf16.mxu0 0
        %1635 = vmatpush1.bf16.msra.mxu0 0
        %1636 = vmatprep.subr.bf16.mxu0 0
        %1637 = vmatpush1.bf16.msra.mxu0 0
        %1638 = vmatprep.subr.bf16.mxu0 0
        %1639 = vmatpush1.bf16.msra.mxu0 0
        %1640 = vmatprep.subr.bf16.mxu0 0
        %1641 = vmatpush1.bf16.msra.mxu0 0
        %1642 = vmatprep.subr.bf16.mxu0 0
        %1643 = vmatpush1.bf16.msra.mxu0 0
        %1644 = vmatprep.subr.bf16.mxu0 0
        %1645 = vmatpush1.bf16.msra.mxu0 0
        %1646 = vmatprep.subr.bf16.mxu0 0
        %1647 = vmatpush1.bf16.msra.mxu0 0
        %1648 = vmatprep.mubr.bf16.mxu0 0
        %1649 = vmatmul.mubr.bf16.gmra.mrb[0].mxu0 %v252
        %v1650 = vpop.f32.mrb[0].mxu0
        %v1651 = vadd.f32 0.0, %v1650
        %v1652 = vpop.f32.mrb[0].mxu0
        %v1653 = vpop.f32.mrb[0].mxu0
        %v1654 = vpop.f32.mrb[0].mxu0
        %1655 = vdwg.mxu0
        %v1672 = vunpack.c.l.b16 %v464
        %v1673 = vunpack.c.l.b16 %v465
        %v1674 = vunpack.c.l.b16 %v466
        %v1675 = vunpack.c.l.b16 %v467
        %v1676 = vunpack.c.l.b16 %v468
        %v1677 = vunpack.c.l.b16 %v469
        %v1678 = vunpack.c.l.b16 %v470
        %v1679 = vunpack.c.l.b16 %v471
        %v1680 = vunpack.c.l.b16 %v472
        %v1681 = vunpack.c.l.b16 %v473
        %v1682 = vunpack.c.l.b16 %v474
        %v1683 = vunpack.c.l.b16 %v475
        %v1684 = vunpack.c.l.b16 %v476
        %v1685 = vunpack.c.l.b16 %v477
        %v1686 = vunpack.c.l.b16 %v478
        %v1687 = vunpack.c.l.b16 %v479
        %v1688 = vpack.c.b16 %v1673, %v1672
        %v1689 = vpack.c.b16 %v1675, %v1674
        %v1690 = vpack.c.b16 %v1677, %v1676
        %v1691 = vpack.c.b16 %v1679, %v1678
        %v1692 = vpack.c.b16 %v1681, %v1680
        %v1693 = vpack.c.b16 %v1683, %v1682
        %v1694 = vpack.c.b16 %v1685, %v1684
        %v1695 = vpack.c.b16 %v1687, %v1686
        %1704 = vmatprep.subr.bf16.mxu0 0
        %1705 = vmatpush1.bf16.msra.mxu0 %v1688
        %1706 = vmatprep.subr.bf16.mxu0 0
        %1707 = vmatpush1.bf16.msra.mxu0 %v1689
        %1708 = vmatprep.subr.bf16.mxu0 0
        %1709 = vmatpush1.bf16.msra.mxu0 %v1690
        %1710 = vmatprep.subr.bf16.mxu0 0
        %1711 = vmatpush1.bf16.msra.mxu0 %v1691
        %1712 = vmatprep.subr.bf16.mxu0 0
        %1713 = vmatpush1.bf16.msra.mxu0 %v1692
        %1714 = vmatprep.subr.bf16.mxu0 0
        %1715 = vmatpush1.bf16.msra.mxu0 %v1693
        %1716 = vmatprep.subr.bf16.mxu0 0
        %1717 = vmatpush1.bf16.msra.mxu0 %v1694
        %1718 = vmatprep.subr.bf16.mxu0 0
        %1719 = vmatpush1.bf16.msra.mxu0 %v1695
        %1720 = vmatprep.subr.bf16.mxu0 0
        %1721 = vmatpush1.bf16.msra.mxu0 0
        %1722 = vmatprep.subr.bf16.mxu0 0
        %1723 = vmatpush1.bf16.msra.mxu0 0
        %1724 = vmatprep.subr.bf16.mxu0 0
        %1725 = vmatpush1.bf16.msra.mxu0 0
        %1726 = vmatprep.subr.bf16.mxu0 0
        %1727 = vmatpush1.bf16.msra.mxu0 0
        %1728 = vmatprep.subr.bf16.mxu0 0
        %1729 = vmatpush1.bf16.msra.mxu0 0
        %1730 = vmatprep.subr.bf16.mxu0 0
        %1731 = vmatpush1.bf16.msra.mxu0 0
        %1732 = vmatprep.subr.bf16.mxu0 0
        %1733 = vmatpush1.bf16.msra.mxu0 0
        %1734 = vmatprep.subr.bf16.mxu0 0
        %1735 = vmatpush1.bf16.msra.mxu0 0
        %1736 = vmatprep.mubr.bf16.mxu0 0
        %1737 = vmatmul.mubr.bf16.gmra.mrb[0].mxu0 %v253
        %v1738 = vpop.f32.mrb[0].mxu0
        %v1739 = vadd.f32 0.0, %v1738
        %v1740 = vpop.f32.mrb[0].mxu0
        %v1741 = vpop.f32.mrb[0].mxu0
        %v1742 = vpop.f32.mrb[0].mxu0
        %1743 = vdwg.mxu0
        %v1760 = vunpack.c.l.b16 %v480
        %v1761 = vunpack.c.l.b16 %v481
        %v1762 = vunpack.c.l.b16 %v482
        %v1763 = vunpack.c.l.b16 %v483
        %v1764 = vunpack.c.l.b16 %v484
        %v1765 = vunpack.c.l.b16 %v485
        %v1766 = vunpack.c.l.b16 %v486
        %v1767 = vunpack.c.l.b16 %v487
        %v1768 = vunpack.c.l.b16 %v488
        %v1769 = vunpack.c.l.b16 %v489
        %v1770 = vunpack.c.l.b16 %v490
        %v1771 = vunpack.c.l.b16 %v491
        %v1772 = vunpack.c.l.b16 %v492
        %v1773 = vunpack.c.l.b16 %v493
        %v1774 = vunpack.c.l.b16 %v494
        %v1775 = vunpack.c.l.b16 %v495
        %v1776 = vpack.c.b16 %v1761, %v1760
        %v1777 = vpack.c.b16 %v1763, %v1762
        %v1778 = vpack.c.b16 %v1765, %v1764
        %v1779 = vpack.c.b16 %v1767, %v1766
        %v1780 = vpack.c.b16 %v1769, %v1768
        %v1781 = vpack.c.b16 %v1771, %v1770
        %v1782 = vpack.c.b16 %v1773, %v1772
        %v1783 = vpack.c.b16 %v1775, %v1774
        %1792 = vmatprep.subr.bf16.mxu0 0
        %1793 = vmatpush1.bf16.msra.mxu0 %v1776
        %1794 = vmatprep.subr.bf16.mxu0 0
        %1795 = vmatpush1.bf16.msra.mxu0 %v1777
        %1796 = vmatprep.subr.bf16.mxu0 0
        %1797 = vmatpush1.bf16.msra.mxu0 %v1778
        %1798 = vmatprep.subr.bf16.mxu0 0
        %1799 = vmatpush1.bf16.msra.mxu0 %v1779
        %1800 = vmatprep.subr.bf16.mxu0 0
        %1801 = vmatpush1.bf16.msra.mxu0 %v1780
        %1802 = vmatprep.subr.bf16.mxu0 0
        %1803 = vmatpush1.bf16.msra.mxu0 %v1781
        %1804 = vmatprep.subr.bf16.mxu0 0
        %1805 = vmatpush1.bf16.msra.mxu0 %v1782
        %1806 = vmatprep.subr.bf16.mxu0 0
        %1807 = vmatpush1.bf16.msra.mxu0 %v1783
        %1808 = vmatprep.subr.bf16.mxu0 0
        %1809 = vmatpush1.bf16.msra.mxu0 0
        %1810 = vmatprep.subr.bf16.mxu0 0
        %1811 = vmatpush1.bf16.msra.mxu0 0
        %1812 = vmatprep.subr.bf16.mxu0 0
        %1813 = vmatpush1.bf16.msra.mxu0 0
        %1814 = vmatprep.subr.bf16.mxu0 0
        %1815 = vmatpush1.bf16.msra.mxu0 0
        %1816 = vmatprep.subr.bf16.mxu0 0
        %1817 = vmatpush1.bf16.msra.mxu0 0
        %1818 = vmatprep.subr.bf16.mxu0 0
        %1819 = vmatpush1.bf16.msra.mxu0 0
        %1820 = vmatprep.subr.bf16.mxu0 0
        %1821 = vmatpush1.bf16.msra.mxu0 0
        %1822 = vmatprep.subr.bf16.mxu0 0
        %1823 = vmatpush1.bf16.msra.mxu0 0
        %1824 = vmatprep.mubr.bf16.mxu0 0
        %1825 = vmatmul.mubr.bf16.gmra.mrb[0].mxu0 %v254
        %v1826 = vpop.f32.mrb[0].mxu0
        %v1827 = vadd.f32 0.0, %v1826
        %v1828 = vpop.f32.mrb[0].mxu0
        %v1829 = vpop.f32.mrb[0].mxu0
        %v1830 = vpop.f32.mrb[0].mxu0
        %1831 = vdwg.mxu0
        %v1848 = vunpack.c.l.b16 %v496
        %v1849 = vunpack.c.l.b16 %v497
        %v1850 = vunpack.c.l.b16 %v498
        %v1851 = vunpack.c.l.b16 %v499
        %v1852 = vunpack.c.l.b16 %v500
        %v1853 = vunpack.c.l.b16 %v501
        %v1854 = vunpack.c.l.b16 %v502
        %v1855 = vunpack.c.l.b16 %v503
        %v1856 = vunpack.c.l.b16 %v504
        %v1857 = vunpack.c.l.b16 %v505
        %v1858 = vunpack.c.l.b16 %v506
        %v1859 = vunpack.c.l.b16 %v507
        %v1860 = vunpack.c.l.b16 %v508
        %v1861 = vunpack.c.l.b16 %v509
        %v1862 = vunpack.c.l.b16 %v510
        %v1863 = vunpack.c.l.b16 %v511
        %v1864 = vpack.c.b16 %v1849, %v1848
        %v1865 = vpack.c.b16 %v1851, %v1850
        %v1866 = vpack.c.b16 %v1853, %v1852
        %v1867 = vpack.c.b16 %v1855, %v1854
        %v1868 = vpack.c.b16 %v1857, %v1856
        %v1869 = vpack.c.b16 %v1859, %v1858
        %v1870 = vpack.c.b16 %v1861, %v1860
        %v1871 = vpack.c.b16 %v1863, %v1862
        %1880 = vmatprep.subr.bf16.mxu0 0
        %1881 = vmatpush1.bf16.msra.mxu0 %v1864
        %1882 = vmatprep.subr.bf16.mxu0 0
        %1883 = vmatpush1.bf16.msra.mxu0 %v1865
        %1884 = vmatprep.subr.bf16.mxu0 0
        %1885 = vmatpush1.bf16.msra.mxu0 %v1866
        %1886 = vmatprep.subr.bf16.mxu0 0
        %1887 = vmatpush1.bf16.msra.mxu0 %v1867
        %1888 = vmatprep.subr.bf16.mxu0 0
        %1889 = vmatpush1.bf16.msra.mxu0 %v1868
        %1890 = vmatprep.subr.bf16.mxu0 0
        %1891 = vmatpush1.bf16.msra.mxu0 %v1869
        %1892 = vmatprep.subr.bf16.mxu0 0
        %1893 = vmatpush1.bf16.msra.mxu0 %v1870
        %1894 = vmatprep.subr.bf16.mxu0 0
        %1895 = vmatpush1.bf16.msra.mxu0 %v1871
        %1896 = vmatprep.subr.bf16.mxu0 0
        %1897 = vmatpush1.bf16.msra.mxu0 0
        %1898 = vmatprep.subr.bf16.mxu0 0
        %1899 = vmatpush1.bf16.msra.mxu0 0
        %1900 = vmatprep.subr.bf16.mxu0 0
        %1901 = vmatpush1.bf16.msra.mxu0 0
        %1902 = vmatprep.subr.bf16.mxu0 0
        %1903 = vmatpush1.bf16.msra.mxu0 0
        %1904 = vmatprep.subr.bf16.mxu0 0
        %1905 = vmatpush1.bf16.msra.mxu0 0
        %1906 = vmatprep.subr.bf16.mxu0 0
        %1907 = vmatpush1.bf16.msra.mxu0 0
        %1908 = vmatprep.subr.bf16.mxu0 0
        %1909 = vmatpush1.bf16.msra.mxu0 0
        %1910 = vmatprep.subr.bf16.mxu0 0
        %1911 = vmatpush1.bf16.msra.mxu0 0
        %1912 = vmatprep.mubr.bf16.mxu0 0
        %1913 = vmatmul.mubr.bf16.gmra.mrb[0].mxu0 %v255
        %v1914 = vpop.f32.mrb[0].mxu0
        %v1915 = vadd.f32 0.0, %v1914
        %v1916 = vpop.f32.mrb[0].mxu0
        %v1917 = vpop.f32.mrb[0].mxu0
        %v1918 = vpop.f32.mrb[0].mxu0
        %1919 = vdwg.mxu0
        %vm1920 = vcmask 1041408
        %v1921 = vsel %vm1920, %v595, 0.0
        %v1922 = vsel %vm1920, %v683, 0.0
        %v1923 = vadd.f32 %v1921, %v1922
        %v1924 = vsel %vm1920, %v771, 0.0
        %v1925 = vadd.f32 %v1923, %v1924
        %v1926 = vsel %vm1920, %v859, 0.0
        %v1927 = vadd.f32 %v1925, %v1926
        %v1928 = vsel %vm1920, %v947, 0.0
        %v1929 = vadd.f32 %v1927, %v1928
        %v1930 = vsel %vm1920, %v1035, 0.0
        %v1931 = vadd.f32 %v1929, %v1930
        %v1932 = vsel %vm1920, %v1123, 0.0
        %v1933 = vadd.f32 %v1931, %v1932
        %v1934 = vsel %vm1920, %v1211, 0.0
        %v1935 = vadd.f32 %v1933, %v1934
        %v1936 = vsel %vm1920, %v1299, 0.0
        %v1937 = vadd.f32 %v1935, %v1936
        %v1938 = vsel %vm1920, %v1387, 0.0
        %v1939 = vadd.f32 %v1937, %v1938
        %v1940 = vsel %vm1920, %v1475, 0.0
        %v1941 = vadd.f32 %v1939, %v1940
        %v1942 = vsel %vm1920, %v1563, 0.0
        %v1943 = vadd.f32 %v1941, %v1942
        %v1944 = vsel %vm1920, %v1651, 0.0
        %v1945 = vadd.f32 %v1943, %v1944
        %v1946 = vsel %vm1920, %v1739, 0.0
        %v1947 = vadd.f32 %v1945, %v1946
        %v1948 = vsel %vm1920, %v1827, 0.0
        %v1949 = vadd.f32 %v1947, %v1948
        %v1950 = vsel %vm1920, %v1915, 0.0
        %v1951 = vadd.f32 %v1949, %v1950
        %v1952 = vrot.slane %v1951, 4
        %v1953 = vadd.f32 %v1951, %v1952
        %v1954 = vrot.slane %v1953, 2
        %v1955 = vadd.f32 %v1953, %v1954
        %v1956 = vrot.slane %v1955, 1
        %v1957 = vadd.f32 %v1955, %v1956
        %v1958 = vmul.f32 %v1957, 0.03125
        %v1959 = vsub.f32 %v595, %v1958
        %v1960 = vsub.f32 %v683, %v1958
        %v1961 = vsub.f32 %v771, %v1958
        %v1962 = vsub.f32 %v859, %v1958
        %v1963 = vsub.f32 %v947, %v1958
        %v1964 = vsub.f32 %v1035, %v1958
        %v1965 = vsub.f32 %v1123, %v1958
        %v1966 = vsub.f32 %v1211, %v1958
        %v1967 = vsub.f32 %v1299, %v1958
        %v1968 = vsub.f32 %v1387, %v1958
        %v1969 = vsub.f32 %v1475, %v1958
        %v1970 = vsub.f32 %v1563, %v1958
        %v1971 = vsub.f32 %v1651, %v1958
        %v1972 = vsub.f32 %v1739, %v1958
        %v1973 = vsub.f32 %v1827, %v1958
        %v1974 = vsub.f32 %v1915, %v1958
        %v1975 = vmul.f32 %v1959, %v1959
        %v1976 = vmul.f32 %v1960, %v1960
        %v1977 = vmul.f32 %v1961, %v1961
        %v1978 = vmul.f32 %v1962, %v1962
        %v1979 = vmul.f32 %v1963, %v1963
        %v1980 = vmul.f32 %v1964, %v1964
        %v1981 = vmul.f32 %v1965, %v1965
        %v1982 = vmul.f32 %v1966, %v1966
        %v1983 = vmul.f32 %v1967, %v1967
        %v1984 = vmul.f32 %v1968, %v1968
        %v1985 = vmul.f32 %v1969, %v1969
        %v1986 = vmul.f32 %v1970, %v1970
        %v1987 = vmul.f32 %v1971, %v1971
        %v1988 = vmul.f32 %v1972, %v1972
        %v1989 = vmul.f32 %v1973, %v1973
        %v1990 = vmul.f32 %v1974, %v1974
        %v1991 = vsel %vm1920, %v1975, 0.0
        %v1992 = vsel %vm1920, %v1976, 0.0
        %v1993 = vadd.f32 %v1991, %v1992
        %v1994 = vsel %vm1920, %v1977, 0.0
        %v1995 = vadd.f32 %v1993, %v1994
        %v1996 = vsel %vm1920, %v1978, 0.0
        %v1997 = vadd.f32 %v1995, %v1996
        %v1998 = vsel %vm1920, %v1979, 0.0
        %v1999 = vadd.f32 %v1997, %v1998
        %v2000 = vsel %vm1920, %v1980, 0.0
        %v2001 = vadd.f32 %v1999, %v2000
        %v2002 = vsel %vm1920, %v1981, 0.0
        %v2003 = vadd.f32 %v2001, %v2002
        %v2004 = vsel %vm1920, %v1982, 0.0
        %v2005 = vadd.f32 %v2003, %v2004
        %v2006 = vsel %vm1920, %v1983, 0.0
        %v2007 = vadd.f32 %v2005, %v2006
        %v2008 = vsel %vm1920, %v1984, 0.0
        %v2009 = vadd.f32 %v2007, %v2008
        %v2010 = vsel %vm1920, %v1985, 0.0
        %v2011 = vadd.f32 %v2009, %v2010
        %v2012 = vsel %vm1920, %v1986, 0.0
        %v2013 = vadd.f32 %v2011, %v2012
        %v2014 = vsel %vm1920, %v1987, 0.0
        %v2015 = vadd.f32 %v2013, %v2014
        %v2016 = vsel %vm1920, %v1988, 0.0
        %v2017 = vadd.f32 %v2015, %v2016
        %v2018 = vsel %vm1920, %v1989, 0.0
        %v2019 = vadd.f32 %v2017, %v2018
        %v2020 = vsel %vm1920, %v1990, 0.0
        %v2021 = vadd.f32 %v2019, %v2020
        %v2022 = vrot.slane %v2021, 4
        %v2023 = vadd.f32 %v2021, %v2022
        %v2024 = vrot.slane %v2023, 2
        %v2025 = vadd.f32 %v2023, %v2024
        %v2026 = vrot.slane %v2025, 1
        %v2027 = vadd.f32 %v2025, %v2026
        %v2028 = vmul.f32 %v2027, 0.03125
        %v2029 = vld [vmem:[%s235] sm:$0x1]
        %v2030 = vadd.f32 %v2028, 1e-05
        %v2031 = vrsqrt.pop %v2030
        %v2032 = vmul.f32 %v2029, %v2031
        %v2034 = vlaneseq
        %v2035 = vshrl.u32 %v2034, 7
        %v2036 = vsub.s32 0, %v2035
        %v2037 = vrot.slane %v2032, %v2036
        %v2039 = vmul.f32 %v1959, %v2037
        %v2040 = vmul.f32 %v1960, %v2037
        %v2041 = vmul.f32 %v1961, %v2037
        %v2042 = vmul.f32 %v1962, %v2037
        %v2043 = vmul.f32 %v1963, %v2037
        %v2044 = vmul.f32 %v1964, %v2037
        %v2045 = vmul.f32 %v1965, %v2037
        %v2046 = vmul.f32 %v1966, %v2037
        %v2047 = vmul.f32 %v1967, %v2037
        %v2048 = vmul.f32 %v1968, %v2037
        %v2049 = vmul.f32 %v1969, %v2037
        %v2050 = vmul.f32 %v1970, %v2037
        %v2051 = vmul.f32 %v1971, %v2037
        %v2052 = vmul.f32 %v1972, %v2037
        %v2053 = vmul.f32 %v1973, %v2037
        %v2054 = vmul.f32 %v1974, %v2037
        %v2055 = vld [vmem:[%s238] sm:$0x1]
        %v2057 = vlaneseq
        %v2058 = vshrl.u32 %v2057, 7
        %v2059 = vsub.s32 0, %v2058
        %v2060 = vrot.slane %v2055, %v2059
        %v2062 = vadd.f32 %v2039, %v2060
        %v2063 = vadd.f32 %v2040, %v2060
        %v2064 = vadd.f32 %v2041, %v2060
        %v2065 = vadd.f32 %v2042, %v2060
        %v2066 = vadd.f32 %v2043, %v2060
        %v2067 = vadd.f32 %v2044, %v2060
        %v2068 = vadd.f32 %v2045, %v2060
        %v2069 = vadd.f32 %v2046, %v2060
        %v2070 = vadd.f32 %v2047, %v2060
        %v2071 = vadd.f32 %v2048, %v2060
        %v2072 = vadd.f32 %v2049, %v2060
        %v2073 = vadd.f32 %v2050, %v2060
        %v2074 = vadd.f32 %v2051, %v2060
        %v2075 = vadd.f32 %v2052, %v2060
        %v2076 = vadd.f32 %v2053, %v2060
        %v2077 = vadd.f32 %v2054, %v2060
        %v2078 = vmax.f32 %v2062, 0.0
        %v2079 = vmax.f32 %v2063, 0.0
        %v2080 = vmax.f32 %v2064, 0.0
        %v2081 = vmax.f32 %v2065, 0.0
        %v2082 = vmax.f32 %v2066, 0.0
        %v2083 = vmax.f32 %v2067, 0.0
        %v2084 = vmax.f32 %v2068, 0.0
        %v2085 = vmax.f32 %v2069, 0.0
        %v2086 = vmax.f32 %v2070, 0.0
        %v2087 = vmax.f32 %v2071, 0.0
        %v2088 = vmax.f32 %v2072, 0.0
        %v2089 = vmax.f32 %v2073, 0.0
        %v2090 = vmax.f32 %v2074, 0.0
        %v2091 = vmax.f32 %v2075, 0.0
        %v2092 = vmax.f32 %v2076, 0.0
        %v2093 = vmax.f32 %v2077, 0.0
        %v2094 = vpack.c.bf16 %v2078, %v2078
        %v2095 = vpack.c.bf16 %v2079, %v2079
        %v2096 = vpack.c.bf16 %v2080, %v2080
        %v2097 = vpack.c.bf16 %v2081, %v2081
        %v2098 = vpack.c.bf16 %v2082, %v2082
        %v2099 = vpack.c.bf16 %v2083, %v2083
        %v2100 = vpack.c.bf16 %v2084, %v2084
        %v2101 = vpack.c.bf16 %v2085, %v2085
        %v2102 = vpack.c.bf16 %v2086, %v2086
        %v2103 = vpack.c.bf16 %v2087, %v2087
        %v2104 = vpack.c.bf16 %v2088, %v2088
        %v2105 = vpack.c.bf16 %v2089, %v2089
        %v2106 = vpack.c.bf16 %v2090, %v2090
        %v2107 = vpack.c.bf16 %v2091, %v2091
        %v2108 = vpack.c.bf16 %v2092, %v2092
        %v2109 = vpack.c.bf16 %v2093, %v2093
        %2110 = vst [vmem:[%s232] sm:$0x1] %v2094
        %2111 = vst [vmem:[%s232 + $0x1] sm:$0x1] %v2095
        %2112 = vst [vmem:[%s232 + $0x2] sm:$0x1] %v2096
        %2113 = vst [vmem:[%s232 + $0x3] sm:$0x1] %v2097
        %2114 = vst [vmem:[%s232 + $0x4] sm:$0x1] %v2098
        %2115 = vst [vmem:[%s232 + $0x5] sm:$0x1] %v2099
        %2116 = vst [vmem:[%s232 + $0x6] sm:$0x1] %v2100
        %2117 = vst [vmem:[%s232 + $0x7] sm:$0x1] %v2101
        %2118 = vst [vmem:[%s232 + $0x8] sm:$0x1] %v2102
        %2119 = vst [vmem:[%s232 + $0x9] sm:$0x1] %v2103
        %2120 = vst [vmem:[%s232 + $0xa] sm:$0x1] %v2104
        %2121 = vst [vmem:[%s232 + $0xb] sm:$0x1] %v2105
        %2122 = vst [vmem:[%s232 + $0xc] sm:$0x1] %v2106
        %2123 = vst [vmem:[%s232 + $0xd] sm:$0x1] %v2107
        %2124 = vst [vmem:[%s232 + $0xe] sm:$0x1] %v2108
        %2125 = vst [vmem:[%s232 + $0xf] sm:$0x1] %v2109
        %s2126 = sand.u32 %s125, 1
        %s2127 = sand.u32 %s125, 1
        %s2128 = smul.addr %s2127, 16
        %s2129 = scalar_lea.vmem [#allocation4], %s2128
        // Predicated region
        $region41: #{generator_forward.4} parent=35 // pred_check
          %p2130 = pneg %p135
        $region42: #{generator_forward.4} parent=35 // pred_check_branch
          %2132 = sbr.rel (%p2130) target = $region44
        $region43: #{generator_forward.4} parent=35 // pred_region
          %s2133 = scalar_lea.vmem %s4, %s18
          // Predicated region
          $region45: #{generator_forward.4} parent=43 // pred_check
            _
          $region46: #{generator_forward.4} parent=43 // pred_check_branch
            %2135 = sbr.rel (0) target = $region48
          $region47: #{generator_forward.4} parent=43 // pred_region
            // Predicated region
            $region49: #{generator_forward.4} parent=47 // pred_check
              _
            $region50: #{generator_forward.4} parent=47 // pred_check_branch
              %2137 = sbr.rel target = $region52
            $region51: #{generator_forward.4} parent=47 // pred_region
              // Predicated region
              $region64: #{generator_forward.4} parent=51 // pred_check
                _
              $region65: #{generator_forward.4} parent=51 // pred_check_branch
                %2182 = sbr.rel (0) target = $region67
              $region66: #{generator_forward.4} parent=51 // pred_region
                loop: start=0, step=1, limit=1
                $region68: #{generator_forward.4} parent=66 // loop_pre_header
                  _
                $region69: #{generator_forward.4} parent=66 // loop_header
                  %s2184 = sphi 0, %s2188
                  %p2185 = scmp.ge.s32.totalorder %s2184, 1
                  %s2189 = sphi %s2129, %s2129
                  %s2190 = sphi %s2133, %s2133
                $region70: #{generator_forward.4} parent=66 // loop_header_branch
                  %2187 = sbr.rel (%p2185) target = $region74
                $region71: #{generator_forward.4} parent=66 // loop_body
                  _
                $region72: #{generator_forward.4} parent=66 // loop_footer
                  %s2188 = sadd.s32 1, %s2184
                $region73: #{generator_forward.4} parent=66 // loop_footer_branch
                  %2183 = sbr.rel target = $region69
                $region74: #{generator_forward.4} parent=66 // loop_exit
                  _
                loop: start=0, step=1, limit=1
                $region75: #{generator_forward.4} parent=66 // loop_pre_header
                  _
                $region76: #{generator_forward.4} parent=66 // loop_header
                  %s2193 = sphi 0, %s2197
                  %p2194 = scmp.ge.s32.totalorder %s2193, 1
                  %s2198 = sphi %s2129, %s2129
                  %s2199 = sphi %s2133, %s2133
                $region77: #{generator_forward.4} parent=66 // loop_header_branch
                  %2196 = sbr.rel (%p2194) target = $region81
                $region78: #{generator_forward.4} parent=66 // loop_body
                  %v2200 = vld [vmem:[%s2198] sm:$0x1]
                  %2201 = vst [vmem:[%s2199] sm:$0x1] %v2200
                  %v2202 = vld [vmem:[%s2198 + $0x1] sm:$0x1]
                  %2203 = vst [vmem:[%s2199 + $0x2] sm:$0x1] %v2202
                  %v2204 = vld [vmem:[%s2198 + $0x2] sm:$0x1]
                  %2205 = vst [vmem:[%s2199 + $0x4] sm:$0x1] %v2204
                  %v2206 = vld [vmem:[%s2198 + $0x3] sm:$0x1]
                  %2207 = vst [vmem:[%s2199 + $0x6] sm:$0x1] %v2206
                  %v2208 = vld [vmem:[%s2198 + $0x4] sm:$0x1]
                  %2209 = vst [vmem:[%s2199 + $0x8] sm:$0x1] %v2208
                  %v2210 = vld [vmem:[%s2198 + $0x5] sm:$0x1]
                  %2211 = vst [vmem:[%s2199 + $0xa] sm:$0x1] %v2210
                  %v2212 = vld [vmem:[%s2198 + $0x6] sm:$0x1]
                  %2213 = vst [vmem:[%s2199 + $0xc] sm:$0x1] %v2212
                  %v2214 = vld [vmem:[%s2198 + $0x7] sm:$0x1]
                  %2215 = vst [vmem:[%s2199 + $0xe] sm:$0x1] %v2214
                  %v2216 = vld [vmem:[%s2198 + $0x8] sm:$0x1]
                  %2217 = vst [vmem:[%s2199 + $0x10] sm:$0x1] %v2216
                  %v2218 = vld [vmem:[%s2198 + $0x9] sm:$0x1]
                  %2219 = vst [vmem:[%s2199 + $0x12] sm:$0x1] %v2218
                  %v2220 = vld [vmem:[%s2198 + $0xa] sm:$0x1]
                  %2221 = vst [vmem:[%s2199 + $0x14] sm:$0x1] %v2220
                  %v2222 = vld [vmem:[%s2198 + $0xb] sm:$0x1]
                  %2223 = vst [vmem:[%s2199 + $0x16] sm:$0x1] %v2222
                  %v2224 = vld [vmem:[%s2198 + $0xc] sm:$0x1]
                  %2225 = vst [vmem:[%s2199 + $0x18] sm:$0x1] %v2224
                  %v2226 = vld [vmem:[%s2198 + $0xd] sm:$0x1]
                  %2227 = vst [vmem:[%s2199 + $0x1a] sm:$0x1] %v2226
                  %v2228 = vld [vmem:[%s2198 + $0xe] sm:$0x1]
                  %2229 = vst [vmem:[%s2199 + $0x1c] sm:$0x1] %v2228
                  %v2230 = vld [vmem:[%s2198 + $0xf] sm:$0x1]
                  %2231 = vst [vmem:[%s2199 + $0x1e] sm:$0x1] %v2230
                $region79: #{generator_forward.4} parent=66 // loop_footer
                  %s2197 = sadd.s32 1, %s2193
                $region80: #{generator_forward.4} parent=66 // loop_footer_branch
                  %2192 = sbr.rel target = $region76
                $region81: #{generator_forward.4} parent=66 // loop_exit
                  _
              $region67: #{generator_forward.4} parent=51 // pred_fallthru
                _
            $region52: #{generator_forward.4} parent=47 // pred_fallthru
              _
            // Predicated region
            $region53: #{generator_forward.4} parent=47 // pred_check
              _
            $region54: #{generator_forward.4} parent=47 // pred_check_branch
              %2139 = sbr.rel (0) target = $region56
            $region55: #{generator_forward.4} parent=47 // pred_region
              loop: start=0, step=1, limit=1
              $region57: #{generator_forward.4} parent=55 // loop_pre_header
                _
              $region58: #{generator_forward.4} parent=55 // loop_header
                %s2142 = sphi 0, %s2146
                %p2143 = scmp.ge.s32.totalorder %s2142, 1
                %s2147 = sphi %s2129, %s2129
                %s2148 = sphi %s2133, %s2133
              $region59: #{generator_forward.4} parent=55 // loop_header_branch
                %2145 = sbr.rel (%p2143) target = $region63
              $region60: #{generator_forward.4} parent=55 // loop_body
                %v2149 = vld [vmem:[%s2147] sm:$0x1]
                %2150 = vst [vmem:[%s2148] sm:$0x1] %v2149
                %v2151 = vld [vmem:[%s2147 + $0x1] sm:$0x1]
                %2152 = vst [vmem:[%s2148 + $0x2] sm:$0x1] %v2151
                %v2153 = vld [vmem:[%s2147 + $0x2] sm:$0x1]
                %2154 = vst [vmem:[%s2148 + $0x4] sm:$0x1] %v2153
                %v2155 = vld [vmem:[%s2147 + $0x3] sm:$0x1]
                %2156 = vst [vmem:[%s2148 + $0x6] sm:$0x1] %v2155
                %v2157 = vld [vmem:[%s2147 + $0x4] sm:$0x1]
                %2158 = vst [vmem:[%s2148 + $0x8] sm:$0x1] %v2157
                %v2159 = vld [vmem:[%s2147 + $0x5] sm:$0x1]
                %2160 = vst [vmem:[%s2148 + $0xa] sm:$0x1] %v2159
                %v2161 = vld [vmem:[%s2147 + $0x6] sm:$0x1]
                %2162 = vst [vmem:[%s2148 + $0xc] sm:$0x1] %v2161
                %v2163 = vld [vmem:[%s2147 + $0x7] sm:$0x1]
                %2164 = vst [vmem:[%s2148 + $0xe] sm:$0x1] %v2163
                %v2165 = vld [vmem:[%s2147 + $0x8] sm:$0x1]
                %2166 = vst [vmem:[%s2148 + $0x10] sm:$0x1] %v2165
                %v2167 = vld [vmem:[%s2147 + $0x9] sm:$0x1]
                %2168 = vst [vmem:[%s2148 + $0x12] sm:$0x1] %v2167
                %v2169 = vld [vmem:[%s2147 + $0xa] sm:$0x1]
                %2170 = vst [vmem:[%s2148 + $0x14] sm:$0x1] %v2169
                %v2171 = vld [vmem:[%s2147 + $0xb] sm:$0x1]
                %2172 = vst [vmem:[%s2148 + $0x16] sm:$0x1] %v2171
                %v2173 = vld [vmem:[%s2147 + $0xc] sm:$0x1]
                %2174 = vst [vmem:[%s2148 + $0x18] sm:$0x1] %v2173
                %v2175 = vld [vmem:[%s2147 + $0xd] sm:$0x1]
                %2176 = vst [vmem:[%s2148 + $0x1a] sm:$0x1] %v2175
                %v2177 = vld [vmem:[%s2147 + $0xe] sm:$0x1]
                %2178 = vst [vmem:[%s2148 + $0x1c] sm:$0x1] %v2177
                %v2179 = vld [vmem:[%s2147 + $0xf] sm:$0x1]
                %2180 = vst [vmem:[%s2148 + $0x1e] sm:$0x1] %v2179
              $region61: #{generator_forward.4} parent=55 // loop_footer
                %s2146 = sadd.s32 1, %s2142
              $region62: #{generator_forward.4} parent=55 // loop_footer_branch
                %2141 = sbr.rel target = $region58
              $region63: #{generator_forward.4} parent=55 // loop_exit
                _
            $region56: #{generator_forward.4} parent=47 // pred_fallthru
              _
          $region48: #{generator_forward.4} parent=43 // pred_fallthru
            _
          %2232 = vnop
        $region44: #{generator_forward.4} parent=35 // pred_fallthru
          _
      $region36: #{generator_forward.4} parent=5 // pred_fallthru
        _
      %p2233 = scmp.le.s32.totalorder 2, %s13
      // Predicated region
      $region82: #{generator_forward.4} parent=5 // pred_check
        %p2234 = pneg %p2233
      $region83: #{generator_forward.4} parent=5 // pred_check_branch
        %2236 = sbr.rel (%p2234) target = $region85
      $region84: #{generator_forward.4} parent=5 // pred_region
        %s2237 = ssub.s32 %s13, 2
        // Predicated region
        $region86: #{generator_forward.4} parent=84 // pred_check
          %p2238 = pneg %p141
        $region87: #{generator_forward.4} parent=84 // pred_check_branch
          %2240 = sbr.rel (%p2238) target = $region89
        $region88: #{generator_forward.4} parent=84 // pred_region
          %s2241 = sand.u32 %s126, 1
          %s2242 = sand.u32 %s126, 1
          %s2243 = smul.addr %s2242, 16
          %s2244 = scalar_lea.vmem [#allocation4], %s2243
        $region89: #{generator_forward.4} parent=84 // pred_fallthru
          _
      $region85: #{generator_forward.4} parent=5 // pred_fallthru
        _
    $region6: #{generator_forward.4} parent=1 // loop_footer
      %s17 = sadd.s32 1, %s13
    $region7: #{generator_forward.4} parent=1 // loop_footer_branch
      %12 = sbr.rel target = $region3
    $region8: #{generator_forward.4} parent=1 // loop_exit
      _
    %2245 = vsyncpa [#allocation3], 1
    %s2246 = scalar_lea.sflag [#allocation3], 1
    %2247 = vsyncpa %s2246, 1

// kernel: generator_forward.5
$region0: #{generator_forward.5}
  #allocation0 [shape = 'u32[]', space=smem, size = 0x4, offset = 0x4, fixed_abs, tag = 'smem constant byte address 0x4 - core index']
  #allocation1 [shape = 'u32[144,128]{1,0:T(1,128)}', space=vmem, size = 0x12000, scoped, tag = 'internal scratch']
  %s0 = inlined_call_operand.vmem [shape: bf16[32,256], index: 0, kind: input, shape index: {}]
  %s1 = inlined_call_operand.vmem [shape: bf16[24,512], index: 1, kind: input, shape index: {}]
  %s2 = inlined_call_operand.vmem [shape: bf16[24,512], index: 2, kind: input, shape index: {}]
  %s3 = inlined_call_operand.vmem [shape: bf16[18,1024], index: 3, kind: input, shape index: {}]
  %s4 = inlined_call_operand.vmem [shape: bf16[256,128], index: 4, kind: input, shape index: {}]
  %s5 = inlined_call_operand.vmem [shape: bf16[512,128], index: 5, kind: input, shape index: {}]
  %s6 = inlined_call_operand.vmem [shape: bf16[512,128], index: 6, kind: input, shape index: {}]
  %s7 = inlined_call_operand.vmem [shape: bf16[1024,128], index: 7, kind: input, shape index: {}]
  %s8 = inlined_call_operand.vmem [shape: f32[1,128], index: 8, kind: input, shape index: {}]
  %s9 = inlined_call_operand.vmem [shape: f32[1,128], index: 9, kind: input, shape index: {}]
  %s10 = inlined_call_operand.vmem [shape: bf16[32,128], index: 10, kind: output, shape index: {0}]
  %s11 = inlined_call_operand.vmem [shape: bf16[24,128], index: 11, kind: output, shape index: {1}]
  %s12 = inlined_call_operand.vmem [shape: bf16[24,128], index: 12, kind: output, shape index: {2}]
  %s13 = inlined_call_operand.vmem [shape: bf16[18,128], index: 13, kind: output, shape index: {3}]
  %14 = xla_tuple %s10, %s11, %s12, %s13
  %s15 = sld [smem:[#allocation0]]
  $region74: #{generator_forward.5} parent=0
    _
  %s17 = ssub.s32 1, %s15
  %s18 = scalar_select 0, %s17, %s15
  // Predicated region
  $region2: #{generator_forward.5} parent=0 // pred_check
    _
  $region3: #{generator_forward.5} parent=0 // pred_check_branch
    %20 = sbr.rel (0) target = $region5
  $region4: #{generator_forward.5} parent=0 // pred_region
    _
  $region5: #{generator_forward.5} parent=0 // pred_fallthru
    _
  // Predicated region
  $region6: #{generator_forward.5} parent=0 // pred_check
    _
  $region7: #{generator_forward.5} parent=0 // pred_check_branch
    %22 = sbr.rel (0) target = $region9
  $region8: #{generator_forward.5} parent=0 // pred_region
    _
  $region9: #{generator_forward.5} parent=0 // pred_fallthru
    _
  // Predicated region
  $region10: #{generator_forward.5} parent=0 // pred_check
    _
  $region11: #{generator_forward.5} parent=0 // pred_check_branch
    %24 = sbr.rel (0) target = $region13
  $region12: #{generator_forward.5} parent=0 // pred_region
    _
  $region13: #{generator_forward.5} parent=0 // pred_fallthru
    _
  // Predicated region
  $region14: #{generator_forward.5} parent=0 // pred_check
    _
  $region15: #{generator_forward.5} parent=0 // pred_check_branch
    %26 = sbr.rel (0) target = $region17
  $region16: #{generator_forward.5} parent=0 // pred_region
    _
  $region17: #{generator_forward.5} parent=0 // pred_fallthru
    _
  // Predicated region
  $region18: #{generator_forward.5} parent=0 // pred_check
    _
  $region19: #{generator_forward.5} parent=0 // pred_check_branch
    %28 = sbr.rel (0) target = $region21
  $region20: #{generator_forward.5} parent=0 // pred_region
    _
  $region21: #{generator_forward.5} parent=0 // pred_fallthru
    _
  // Predicated region
  $region22: #{generator_forward.5} parent=0 // pred_check
    _
  $region23: #{generator_forward.5} parent=0 // pred_check_branch
    %30 = sbr.rel (0) target = $region25
  $region24: #{generator_forward.5} parent=0 // pred_region
    _
  $region25: #{generator_forward.5} parent=0 // pred_fallthru
    _
  // Predicated region
  $region26: #{generator_forward.5} parent=0 // pred_check
    _
  $region27: #{generator_forward.5} parent=0 // pred_check_branch
    %32 = sbr.rel (0) target = $region29
  $region28: #{generator_forward.5} parent=0 // pred_region
    _
  $region29: #{generator_forward.5} parent=0 // pred_fallthru
    _
  // Predicated region
  $region30: #{generator_forward.5} parent=0 // pred_check
    _
  $region31: #{generator_forward.5} parent=0 // pred_check_branch
    %34 = sbr.rel (0) target = $region33
  $region32: #{generator_forward.5} parent=0 // pred_region
    _
  $region33: #{generator_forward.5} parent=0 // pred_fallthru
    _
  // Predicated region
  $region34: #{generator_forward.5} parent=0 // pred_check
    _
  $region35: #{generator_forward.5} parent=0 // pred_check_branch
    %36 = sbr.rel (0) target = $region37
  $region36: #{generator_forward.5} parent=0 // pred_region
    _
  $region37: #{generator_forward.5} parent=0 // pred_fallthru
    _
  // Predicated region
  $region38: #{generator_forward.5} parent=0 // pred_check
    _
  $region39: #{generator_forward.5} parent=0 // pred_check_branch
    %38 = sbr.rel (0) target = $region41
  $region40: #{generator_forward.5} parent=0 // pred_region
    _
  $region41: #{generator_forward.5} parent=0 // pred_fallthru
    _
  %v40 = vld [vmem:[%s0] sm:$0xff]
  %v41 = vld [vmem:[%s0 + $0x8] sm:$0xff]
  %v42 = vld [vmem:[%s0 + $0x10] sm:$0xff]
  %v43 = vld [vmem:[%s0 + $0x18] sm:$0xff]
  %v44 = vld [vmem:[%s4] sm:$0xf]
  %v45 = vld [vmem:[%s4 + $0x4] sm:$0xf]
  %v46 = vld [vmem:[%s4 + $0x8] sm:$0xf]
  %v47 = vld [vmem:[%s4 + $0xc] sm:$0xf]
  %v48 = vld [vmem:[%s4 + $0x10] sm:$0xf]
  %v49 = vld [vmem:[%s4 + $0x14] sm:$0xf]
  %v50 = vld [vmem:[%s4 + $0x18] sm:$0xf]
  %v51 = vld [vmem:[%s4 + $0x1c] sm:$0xf]
  %v52 = vld [vmem:[%s4 + $0x20] sm:$0xf]
  %v53 = vld [vmem:[%s4 + $0x24] sm:$0xf]
  %v54 = vld [vmem:[%s4 + $0x28] sm:$0xf]
  %v55 = vld [vmem:[%s4 + $0x2c] sm:$0xf]
  %v56 = vld [vmem:[%s4 + $0x30] sm:$0xf]
  %v57 = vld [vmem:[%s4 + $0x34] sm:$0xf]
  %v58 = vld [vmem:[%s4 + $0x38] sm:$0xf]
  %v59 = vld [vmem:[%s4 + $0x3c] sm:$0xf]
  %v60 = vld [vmem:[%s4 + $0x40] sm:$0xf]
  %v61 = vld [vmem:[%s4 + $0x44] sm:$0xf]
  %v62 = vld [vmem:[%s4 + $0x48] sm:$0xf]
  %v63 = vld [vmem:[%s4 + $0x4c] sm:$0xf]
  %v64 = vld [vmem:[%s4 + $0x50] sm:$0xf]
  %v65 = vld [vmem:[%s4 + $0x54] sm:$0xf]
  %v66 = vld [vmem:[%s4 + $0x58] sm:$0xf]
  %v67 = vld [vmem:[%s4 + $0x5c] sm:$0xf]
  %v68 = vld [vmem:[%s4 + $0x60] sm:$0xf]
  %v69 = vld [vmem:[%s4 + $0x64] sm:$0xf]
  %v70 = vld [vmem:[%s4 + $0x68] sm:$0xf]
  %v71 = vld [vmem:[%s4 + $0x6c] sm:$0xf]
  %v72 = vld [vmem:[%s4 + $0x70] sm:$0xf]
  %v73 = vld [vmem:[%s4 + $0x74] sm:$0xf]
  %v74 = vld [vmem:[%s4 + $0x78] sm:$0xf]
  %v75 = vld [vmem:[%s4 + $0x7c] sm:$0xf]
  %v80 = vunpack.c.l.b16 %v40
  %v81 = vunpack.c.h.b16 %v40
  %v82 = vunpack.c.l.b16 %v41
  %v83 = vunpack.c.h.b16 %v41
  %v84 = vunpack.c.l.b16 %v42
  %v85 = vunpack.c.h.b16 %v42
  %v86 = vunpack.c.l.b16 %v43
  %v87 = vunpack.c.h.b16 %v43
  %v88 = vpack.c.b16 %v82, %v80
  %v89 = vpack.c.b16 %v83, %v81
  %v90 = vpack.c.b16 %v86, %v84
  %v91 = vpack.c.b16 %v87, %v85
  %v128 = vunpack.c.l.b16 %v44
  %v129 = vunpack.c.l.b16 %v45
  %v130 = vunpack.c.l.b16 %v46
  %v131 = vunpack.c.l.b16 %v47
  %v132 = vunpack.c.l.b16 %v48
  %v133 = vunpack.c.l.b16 %v49
  %v134 = vunpack.c.l.b16 %v50
  %v135 = vunpack.c.l.b16 %v51
  %v136 = vunpack.c.l.b16 %v52
  %v137 = vunpack.c.l.b16 %v53
  %v138 = vunpack.c.l.b16 %v54
  %v139 = vunpack.c.l.b16 %v55
  %v140 = vunpack.c.l.b16 %v56
  %v141 = vunpack.c.l.b16 %v57
  %v142 = vunpack.c.l.b16 %v58
  %v143 = vunpack.c.l.b16 %v59
  %v144 = vunpack.c.l.b16 %v60
  %v145 = vunpack.c.l.b16 %v61
  %v146 = vunpack.c.l.b16 %v62
  %v147 = vunpack.c.l.b16 %v63
  %v148 = vunpack.c.l.b16 %v64
  %v149 = vunpack.c.l.b16 %v65
  %v150 = vunpack.c.l.b16 %v66
  %v151 = vunpack.c.l.b16 %v67
  %v152 = vunpack.c.l.b16 %v68
  %v153 = vunpack.c.l.b16 %v69
  %v154 = vunpack.c.l.b16 %v70
  %v155 = vunpack.c.l.b16 %v71
  %v156 = vunpack.c.l.b16 %v72
  %v157 = vunpack.c.l.b16 %v73
  %v158 = vunpack.c.l.b16 %v74
  %v159 = vunpack.c.l.b16 %v75
  %v160 = vpack.c.b16 %v129, %v128
  %v161 = vpack.c.b16 %v131, %v130
  %v162 = vpack.c.b16 %v133, %v132
  %v163 = vpack.c.b16 %v135, %v134
  %v164 = vpack.c.b16 %v137, %v136
  %v165 = vpack.c.b16 %v139, %v138
  %v166 = vpack.c.b16 %v141, %v140
  %v167 = vpack.c.b16 %v143, %v142
  %v168 = vpack.c.b16 %v145, %v144
  %v169 = vpack.c.b16 %v147, %v146
  %v170 = vpack.c.b16 %v149, %v148
  %v171 = vpack.c.b16 %v151, %v150
  %v172 = vpack.c.b16 %v153, %v152
  %v173 = vpack.c.b16 %v155, %v154
  %v174 = vpack.c.b16 %v157, %v156
  %v175 = vpack.c.b16 %v159, %v158
  %192 = vmatprep.subr.bf16.mxu0 0
  %193 = vmatpush1.bf16.msra.mxu0 %v160
  %194 = vmatprep.subr.bf16.mxu0 0
  %195 = vmatpush1.bf16.msra.mxu0 %v161
  %196 = vmatprep.subr.bf16.mxu0 0
  %197 = vmatpush1.bf16.msra.mxu0 %v162
  %198 = vmatprep.subr.bf16.mxu0 0
  %199 = vmatpush1.bf16.msra.mxu0 %v163
  %200 = vmatprep.subr.bf16.mxu0 0
  %201 = vmatpush1.bf16.msra.mxu0 %v164
  %202 = vmatprep.subr.bf16.mxu0 0
  %203 = vmatpush1.bf16.msra.mxu0 %v165
  %204 = vmatprep.subr.bf16.mxu0 0
  %205 = vmatpush1.bf16.msra.mxu0 %v166
  %206 = vmatprep.subr.bf16.mxu0 0
  %207 = vmatpush1.bf16.msra.mxu0 %v167
  %208 = vmatprep.subr.bf16.mxu0 0
  %209 = vmatpush1.bf16.msra.mxu0 %v168
  %210 = vmatprep.subr.bf16.mxu0 0
  %211 = vmatpush1.bf16.msra.mxu0 %v169
  %212 = vmatprep.subr.bf16.mxu0 0
  %213 = vmatpush1.bf16.msra.mxu0 %v170
  %214 = vmatprep.subr.bf16.mxu0 0
  %215 = vmatpush1.bf16.msra.mxu0 %v171
  %216 = vmatprep.subr.bf16.mxu0 0
  %217 = vmatpush1.bf16.msra.mxu0 %v172
  %218 = vmatprep.subr.bf16.mxu0 0
  %219 = vmatpush1.bf16.msra.mxu0 %v173
  %220 = vmatprep.subr.bf16.mxu0 0
  %221 = vmatpush1.bf16.msra.mxu0 %v174
  %222 = vmatprep.subr.bf16.mxu0 0
  %223 = vmatpush1.bf16.msra.mxu0 %v175
  %224 = vmatprep.mubr.bf16.mxu0 %v89
  %225 = vmatmul.mubr.bf16.gmra.mrb[0].mxu0 %v88
  %v226 = vpop.f32.mrb[0].mxu0
  %v227 = vadd.f32 0.0, %v226
  %v228 = vpop.f32.mrb[0].mxu0
  %v229 = vpop.f32.mrb[0].mxu0
  %v230 = vadd.f32 0.0, %v229
  %v231 = vpop.f32.mrb[0].mxu0
  %232 = vmatprep.mubr.bf16.mxu0 %v91
  %233 = vmatmul.mubr.bf16.gmra.mrb[0].mxu0 %v90
  %v234 = vpop.f32.mrb[0].mxu0
  %v235 = vadd.f32 0.0, %v234
  %v236 = vpop.f32.mrb[0].mxu0
  %v237 = vpop.f32.mrb[0].mxu0
  %v238 = vadd.f32 0.0, %v237
  %v239 = vpop.f32.mrb[0].mxu0
  %240 = vdwg.mxu0
  %v241 = vld [vmem:[%s1] sm:$0xff]
  %v242 = vld [vmem:[%s1 + $0x8] sm:$0xff]
  %v243 = vld [vmem:[%s1 + $0x10] sm:$0xff]
  %v244 = vld [vmem:[%s1 + $0x18] sm:$0xff]
  %v245 = vld [vmem:[%s1 + $0x20] sm:$0xff]
  %v246 = vld [vmem:[%s1 + $0x28] sm:$0xff]
  %v247 = vld [vmem:[%s5] sm:$0xf]
  %v248 = vld [vmem:[%s5 + $0x4] sm:$0xf]
  %v249 = vld [vmem:[%s5 + $0x8] sm:$0xf]
  %v250 = vld [vmem:[%s5 + $0xc] sm:$0xf]
  %v251 = vld [vmem:[%s5 + $0x10] sm:$0xf]
  %v252 = vld [vmem:[%s5 + $0x14] sm:$0xf]
  %v253 = vld [vmem:[%s5 + $0x18] sm:$0xf]
  %v254 = vld [vmem:[%s5 + $0x1c] sm:$0xf]
  %v255 = vld [vmem:[%s5 + $0x20] sm:$0xf]
  %v256 = vld [vmem:[%s5 + $0x24] sm:$0xf]
  %v257 = vld [vmem:[%s5 + $0x28] sm:$0xf]
  %v258 = vld [vmem:[%s5 + $0x2c] sm:$0xf]
  %v259 = vld [vmem:[%s5 + $0x30] sm:$0xf]
  %v260 = vld [vmem:[%s5 + $0x34] sm:$0xf]
  %v261 = vld [vmem:[%s5 + $0x38] sm:$0xf]
  %v262 = vld [vmem:[%s5 + $0x3c] sm:$0xf]
  %v263 = vld [vmem:[%s5 + $0x40] sm:$0xf]
  %v264 = vld [vmem:[%s5 + $0x44] sm:$0xf]
  %v265 = vld [vmem:[%s5 + $0x48] sm:$0xf]
  %v266 = vld [vmem:[%s5 + $0x4c] sm:$0xf]
  %v267 = vld [vmem:[%s5 + $0x50] sm:$0xf]
  %v268 = vld [vmem:[%s5 + $0x54] sm:$0xf]
  %v269 = vld [vmem:[%s5 + $0x58] sm:$0xf]
  %v270 = vld [vmem:[%s5 + $0x5c] sm:$0xf]
  %v271 = vld [vmem:[%s5 + $0x60] sm:$0xf]
  %v272 = vld [vmem:[%s5 + $0x64] sm:$0xf]
  %v273 = vld [vmem:[%s5 + $0x68] sm:$0xf]
  %v274 = vld [vmem:[%s5 + $0x6c] sm:$0xf]
  %v275 = vld [vmem:[%s5 + $0x70] sm:$0xf]
  %v276 = vld [vmem:[%s5 + $0x74] sm:$0xf]
  %v277 = vld [vmem:[%s5 + $0x78] sm:$0xf]
  %v278 = vld [vmem:[%s5 + $0x7c] sm:$0xf]
  %v279 = vld [vmem:[%s5 + $0x80] sm:$0xf]
  %v280 = vld [vmem:[%s5 + $0x84] sm:$0xf]
  %v281 = vld [vmem:[%s5 + $0x88] sm:$0xf]
  %v282 = vld [vmem:[%s5 + $0x8c] sm:$0xf]
  %v283 = vld [vmem:[%s5 + $0x90] sm:$0xf]
  %v284 = vld [vmem:[%s5 + $0x94] sm:$0xf]
  %v285 = vld [vmem:[%s5 + $0x98] sm:$0xf]
  %v286 = vld [vmem:[%s5 + $0x9c] sm:$0xf]
  %v287 = vld [vmem:[%s5 + $0xa0] sm:$0xf]
  %v288 = vld [vmem:[%s5 + $0xa4] sm:$0xf]
  %v289 = vld [vmem:[%s5 + $0xa8] sm:$0xf]
  %v290 = vld [vmem:[%s5 + $0xac] sm:$0xf]
  %v291 = vld [vmem:[%s5 + $0xb0] sm:$0xf]
  %v292 = vld [vmem:[%s5 + $0xb4] sm:$0xf]
  %v293 = vld [vmem:[%s5 + $0xb8] sm:$0xf]
  %v294 = vld [vmem:[%s5 + $0xbc] sm:$0xf]
  %v295 = vld [vmem:[%s5 + $0xc0] sm:$0xf]
  %v296 = vld [vmem:[%s5 + $0xc4] sm:$0xf]
  %v297 = vld [vmem:[%s5 + $0xc8] sm:$0xf]
  %v298 = vld [vmem:[%s5 + $0xcc] sm:$0xf]
  %v299 = vld [vmem:[%s5 + $0xd0] sm:$0xf]
  %v300 = vld [vmem:[%s5 + $0xd4] sm:$0xf]
  %v301 = vld [vmem:[%s5 + $0xd8] sm:$0xf]
  %v302 = vld [vmem:[%s5 + $0xdc] sm:$0xf]
  %v303 = vld [vmem:[%s5 + $0xe0] sm:$0xf]
  %v304 = vld [vmem:[%s5 + $0xe4] sm:$0xf]
  %v305 = vld [vmem:[%s5 + $0xe8] sm:$0xf]
  %v306 = vld [vmem:[%s5 + $0xec] sm:$0xf]
  %v307 = vld [vmem:[%s5 + $0xf0] sm:$0xf]
  %v308 = vld [vmem:[%s5 + $0xf4] sm:$0xf]
  %v309 = vld [vmem:[%s5 + $0xf8] sm:$0xf]
  %v310 = vld [vmem:[%s5 + $0xfc] sm:$0xf]
  %v317 = vunpack.c.l.b16 %v241
  %v318 = vunpack.c.h.b16 %v241
  %v319 = vunpack.c.l.b16 %v242
  %v320 = vunpack.c.h.b16 %v242
  %v321 = vunpack.c.l.b16 %v243
  %v322 = vunpack.c.h.b16 %v243
  %v323 = vunpack.c.l.b16 %v244
  %v324 = vunpack.c.h.b16 %v244
  %v325 = vunpack.c.l.b16 %v245
  %v326 = vunpack.c.h.b16 %v245
  %v327 = vunpack.c.l.b16 %v246
  %v328 = vunpack.c.h.b16 %v246
  %v329 = vpack.c.b16 %v321, %v317
  %v330 = vpack.c.b16 %v322, %v318
  %v331 = vpack.c.b16 %v323, %v319
  %v332 = vpack.c.b16 %v324, %v320
  %v333 = vpack.c.b16 %v325, %v325
  %v334 = vpack.c.b16 %v326, %v326
  %v335 = vpack.c.b16 %v327, %v327
  %v336 = vpack.c.b16 %v328, %v328
  %v409 = vunpack.c.l.b16 %v247
  %v410 = vunpack.c.l.b16 %v248
  %v411 = vunpack.c.l.b16 %v249
  %v412 = vunpack.c.l.b16 %v250
  %v413 = vunpack.c.l.b16 %v251
  %v414 = vunpack.c.l.b16 %v252
  %v415 = vunpack.c.l.b16 %v253
  %v416 = vunpack.c.l.b16 %v254
  %v417 = vunpack.c.l.b16 %v255
  %v418 = vunpack.c.l.b16 %v256
  %v419 = vunpack.c.l.b16 %v257
  %v420 = vunpack.c.l.b16 %v258
  %v421 = vunpack.c.l.b16 %v259
  %v422 = vunpack.c.l.b16 %v260
  %v423 = vunpack.c.l.b16 %v261
  %v424 = vunpack.c.l.b16 %v262
  %v425 = vunpack.c.l.b16 %v263
  %v426 = vunpack.c.l.b16 %v264
  %v427 = vunpack.c.l.b16 %v265
  %v428 = vunpack.c.l.b16 %v266
  %v429 = vunpack.c.l.b16 %v267
  %v430 = vunpack.c.l.b16 %v268
  %v431 = vunpack.c.l.b16 %v269
  %v432 = vunpack.c.l.b16 %v270
  %v433 = vunpack.c.l.b16 %v271
  %v434 = vunpack.c.l.b16 %v272
  %v435 = vunpack.c.l.b16 %v273
  %v436 = vunpack.c.l.b16 %v274
  %v437 = vunpack.c.l.b16 %v275
  %v438 = vunpack.c.l.b16 %v276
  %v439 = vunpack.c.l.b16 %v277
  %v440 = vunpack.c.l.b16 %v278
  %v441 = vunpack.c.l.b16 %v279
  %v442 = vunpack.c.l.b16 %v280
  %v443 = vunpack.c.l.b16 %v281
  %v444 = vunpack.c.l.b16 %v282
  %v445 = vunpack.c.l.b16 %v283
  %v446 = vunpack.c.l.b16 %v284
  %v447 = vunpack.c.l.b16 %v285
  %v448 = vunpack.c.l.b16 %v286
  %v449 = vunpack.c.l.b16 %v287
  %v450 = vunpack.c.l.b16 %v288
  %v451 = vunpack.c.l.b16 %v289
  %v452 = vunpack.c.l.b16 %v290
  %v453 = vunpack.c.l.b16 %v291
  %v454 = vunpack.c.l.b16 %v292
  %v455 = vunpack.c.l.b16 %v293
  %v456 = vunpack.c.l.b16 %v294
  %v457 = vunpack.c.l.b16 %v295
  %v458 = vunpack.c.l.b16 %v296
  %v459 = vunpack.c.l.b16 %v297
  %v460 = vunpack.c.l.b16 %v298
  %v461 = vunpack.c.l.b16 %v299
  %v462 = vunpack.c.l.b16 %v300
  %v463 = vunpack.c.l.b16 %v301
  %v464 = vunpack.c.l.b16 %v302
  %v465 = vunpack.c.l.b16 %v303
  %v466 = vunpack.c.l.b16 %v304
  %v467 = vunpack.c.l.b16 %v305
  %v468 = vunpack.c.l.b16 %v306
  %v469 = vunpack.c.l.b16 %v307
  %v470 = vunpack.c.l.b16 %v308
  %v471 = vunpack.c.l.b16 %v309
  %v472 = vunpack.c.l.b16 %v310
  %v473 = vpack.c.b16 %v410, %v409
  %v474 = vpack.c.b16 %v412, %v411
  %v475 = vpack.c.b16 %v414, %v413
  %v476 = vpack.c.b16 %v416, %v415
  %v477 = vpack.c.b16 %v418, %v417
  %v478 = vpack.c.b16 %v420, %v419
  %v479 = vpack.c.b16 %v422, %v421
  %v480 = vpack.c.b16 %v424, %v423
  %v481 = vpack.c.b16 %v426, %v425
  %v482 = vpack.c.b16 %v428, %v427
  %v483 = vpack.c.b16 %v430, %v429
  %v484 = vpack.c.b16 %v432, %v431
  %v485 = vpack.c.b16 %v434, %v433
  %v486 = vpack.c.b16 %v436, %v435
  %v487 = vpack.c.b16 %v438, %v437
  %v488 = vpack.c.b16 %v440, %v439
  %v489 = vpack.c.b16 %v442, %v441
  %v490 = vpack.c.b16 %v444, %v443
  %v491 = vpack.c.b16 %v446, %v445
  %v492 = vpack.c.b16 %v448, %v447
  %v493 = vpack.c.b16 %v450, %v449
  %v494 = vpack.c.b16 %v452, %v451
  %v495 = vpack.c.b16 %v454, %v453
  %v496 = vpack.c.b16 %v456, %v455
  %v497 = vpack.c.b16 %v458, %v457
  %v498 = vpack.c.b16 %v460, %v459
  %v499 = vpack.c.b16 %v462, %v461
  %v500 = vpack.c.b16 %v464, %v463
  %v501 = vpack.c.b16 %v466, %v465
  %v502 = vpack.c.b16 %v468, %v467
  %v503 = vpack.c.b16 %v470, %v469
  %v504 = vpack.c.b16 %v472, %v471
  %537 = vmatprep.subr.bf16.mxu0 0
  %538 = vmatpush1.bf16.msra.mxu0 %v473
  %539 = vmatprep.subr.bf16.mxu0 0
  %540 = vmatpush1.bf16.msra.mxu0 %v474
  %541 = vmatprep.subr.bf16.mxu0 0
  %542 = vmatpush1.bf16.msra.mxu0 %v475
  %543 = vmatprep.subr.bf16.mxu0 0
  %544 = vmatpush1.bf16.msra.mxu0 %v476
  %545 = vmatprep.subr.bf16.mxu0 0
  %546 = vmatpush1.bf16.msra.mxu0 %v477
  %547 = vmatprep.subr.bf16.mxu0 0
  %548 = vmatpush1.bf16.msra.mxu0 %v478
  %549 = vmatprep.subr.bf16.mxu0 0
  %550 = vmatpush1.bf16.msra.mxu0 %v479
  %551 = vmatprep.subr.bf16.mxu0 0
  %552 = vmatpush1.bf16.msra.mxu0 %v480
  %553 = vmatprep.subr.bf16.mxu0 0
  %554 = vmatpush1.bf16.msra.mxu0 %v481
  %555 = vmatprep.subr.bf16.mxu0 0
  %556 = vmatpush1.bf16.msra.mxu0 %v482
  %557 = vmatprep.subr.bf16.mxu0 0
  %558 = vmatpush1.bf16.msra.mxu0 %v483
  %559 = vmatprep.subr.bf16.mxu0 0
  %560 = vmatpush1.bf16.msra.mxu0 %v484
  %561 = vmatprep.subr.bf16.mxu0 0
  %562 = vmatpush1.bf16.msra.mxu0 %v485
  %563 = vmatprep.subr.bf16.mxu0 0
  %564 = vmatpush1.bf16.msra.mxu0 %v486
  %565 = vmatprep.subr.bf16.mxu0 0
  %566 = vmatpush1.bf16.msra.mxu0 %v487
  %567 = vmatprep.subr.bf16.mxu0 0
  %568 = vmatpush1.bf16.msra.mxu0 %v488
  %569 = vmatprep.mubr.bf16.mxu0 %v330
  %570 = vmatmul.mubr.bf16.gmra.mrb[0].mxu0 %v329
  %v571 = vpop.f32.mrb[0].mxu0
  %v572 = vadd.f32 0.0, %v571
  %v573 = vpop.f32.mrb[0].mxu0
  %v574 = vpop.f32.mrb[0].mxu0
  %v575 = vadd.f32 0.0, %v574
  %v576 = vpop.f32.mrb[0].mxu0
  %577 = vmatprep.mubr.bf16.mxu0 %v334
  %578 = vmatmul.mubr.bf16.gmra.mrb[0].mxu0 %v333
  %v579 = vpop.f32.mrb[0].mxu0
  %v580 = vadd.f32 0.0, %v579
  %v581 = vpop.f32.mrb[0].mxu0
  %v582 = vpop.f32.mrb[0].mxu0
  %v583 = vpop.f32.mrb[0].mxu0
  %584 = vdwg.mxu0
  %585 = vmatprep.subr.bf16.mxu0 0
  %586 = vmatpush1.bf16.msra.mxu0 %v489
  %587 = vmatprep.subr.bf16.mxu0 0
  %588 = vmatpush1.bf16.msra.mxu0 %v490
  %589 = vmatprep.subr.bf16.mxu0 0
  %590 = vmatpush1.bf16.msra.mxu0 %v491
  %591 = vmatprep.subr.bf16.mxu0 0
  %592 = vmatpush1.bf16.msra.mxu0 %v492
  %593 = vmatprep.subr.bf16.mxu0 0
  %594 = vmatpush1.bf16.msra.mxu0 %v493
  %595 = vmatprep.subr.bf16.mxu0 0
  %596 = vmatpush1.bf16.msra.mxu0 %v494
  %597 = vmatprep.subr.bf16.mxu0 0
  %598 = vmatpush1.bf16.msra.mxu0 %v495
  %599 = vmatprep.subr.bf16.mxu0 0
  %600 = vmatpush1.bf16.msra.mxu0 %v496
  %601 = vmatprep.subr.bf16.mxu0 0
  %602 = vmatpush1.bf16.msra.mxu0 %v497
  %603 = vmatprep.subr.bf16.mxu0 0
  %604 = vmatpush1.bf16.msra.mxu0 %v498
  %605 = vmatprep.subr.bf16.mxu0 0
  %606 = vmatpush1.bf16.msra.mxu0 %v499
  %607 = vmatprep.subr.bf16.mxu0 0
  %608 = vmatpush1.bf16.msra.mxu0 %v500
  %609 = vmatprep.subr.bf16.mxu0 0
  %610 = vmatpush1.bf16.msra.mxu0 %v501
  %611 = vmatprep.subr.bf16.mxu0 0
  %612 = vmatpush1.bf16.msra.mxu0 %v502
  %613 = vmatprep.subr.bf16.mxu0 0
  %614 = vmatpush1.bf16.msra.mxu0 %v503
  %615 = vmatprep.subr.bf16.mxu0 0
  %616 = vmatpush1.bf16.msra.mxu0 %v504
  %617 = vmatprep.mubr.bf16.mxu0 %v332
  %618 = vmatmul.mubr.bf16.gmra.mrb[0].mxu0 %v331
  %v619 = vpop.f32.mrb[0].mxu0
  %v620 = vadd.f32 %v572, %v619
  %v621 = vpop.f32.mrb[0].mxu0
  %v622 = vpop.f32.mrb[0].mxu0
  %v623 = vadd.f32 %v575, %v622
  %v624 = vpop.f32.mrb[0].mxu0
  %625 = vmatprep.mubr.bf16.mxu0 %v336
  %626 = vmatmul.mubr.bf16.gmra.mrb[0].mxu0 %v335
  %v627 = vpop.f32.mrb[0].mxu0
  %v628 = vadd.f32 %v580, %v627
  %v629 = vpop.f32.mrb[0].mxu0
  %v630 = vpop.f32.mrb[0].mxu0
  %v631 = vpop.f32.mrb[0].mxu0
  %632 = vdwg.mxu0
  %v633 = vld [vmem:[%s2] sm:$0xff]
  %v634 = vld [vmem:[%s2 + $0x8] sm:$0xff]
  %v635 = vld [vmem:[%s2 + $0x10] sm:$0xff]
  %v636 = vld [vmem:[%s2 + $0x18] sm:$0xff]
  %v637 = vld [vmem:[%s2 + $0x20] sm:$0xff]
  %v638 = vld [vmem:[%s2 + $0x28] sm:$0xff]
  %v639 = vld [vmem:[%s6] sm:$0xf]
  %v640 = vld [vmem:[%s6 + $0x4] sm:$0xf]
  %v641 = vld [vmem:[%s6 + $0x8] sm:$0xf]
  %v642 = vld [vmem:[%s6 + $0xc] sm:$0xf]
  %v643 = vld [vmem:[%s6 + $0x10] sm:$0xf]
  %v644 = vld [vmem:[%s6 + $0x14] sm:$0xf]
  %v645 = vld [vmem:[%s6 + $0x18] sm:$0xf]
  %v646 = vld [vmem:[%s6 + $0x1c] sm:$0xf]
  %v647 = vld [vmem:[%s6 + $0x20] sm:$0xf]
  %v648 = vld [vmem:[%s6 + $0x24] sm:$0xf]
  %v649 = vld [vmem:[%s6 + $0x28] sm:$0xf]
  %v650 = vld [vmem:[%s6 + $0x2c] sm:$0xf]
  %v651 = vld [vmem:[%s6 + $0x30] sm:$0xf]
  %v652 = vld [vmem:[%s6 + $0x34] sm:$0xf]
  %v653 = vld [vmem:[%s6 + $0x38] sm:$0xf]
  %v654 = vld [vmem:[%s6 + $0x3c] sm:$0xf]
  %v655 = vld [vmem:[%s6 + $0x40] sm:$0xf]
  %v656 = vld [vmem:[%s6 + $0x44] sm:$0xf]
  %v657 = vld [vmem:[%s6 + $0x48] sm:$0xf]
  %v658 = vld [vmem:[%s6 + $0x4c] sm:$0xf]
  %v659 = vld [vmem:[%s6 + $0x50] sm:$0xf]
  %v660 = vld [vmem:[%s6 + $0x54] sm:$0xf]
  %v661 = vld [vmem:[%s6 + $0x58] sm:$0xf]
  %v662 = vld [vmem:[%s6 + $0x5c] sm:$0xf]
  %v663 = vld [vmem:[%s6 + $0x60] sm:$0xf]
  %v664 = vld [vmem:[%s6 + $0x64] sm:$0xf]
  %v665 = vld [vmem:[%s6 + $0x68] sm:$0xf]
  %v666 = vld [vmem:[%s6 + $0x6c] sm:$0xf]
  %v667 = vld [vmem:[%s6 + $0x70] sm:$0xf]
  %v668 = vld [vmem:[%s6 + $0x74] sm:$0xf]
  %v669 = vld [vmem:[%s6 + $0x78] sm:$0xf]
  %v670 = vld [vmem:[%s6 + $0x7c] sm:$0xf]
  %v671 = vld [vmem:[%s6 + $0x80] sm:$0xf]
  %v672 = vld [vmem:[%s6 + $0x84] sm:$0xf]
  %v673 = vld [vmem:[%s6 + $0x88] sm:$0xf]
  %v674 = vld [vmem:[%s6 + $0x8c] sm:$0xf]
  %v675 = vld [vmem:[%s6 + $0x90] sm:$0xf]
  %v676 = vld [vmem:[%s6 + $0x94] sm:$0xf]
  %v677 = vld [vmem:[%s6 + $0x98] sm:$0xf]
  %v678 = vld [vmem:[%s6 + $0x9c] sm:$0xf]
  %v679 = vld [vmem:[%s6 + $0xa0] sm:$0xf]
  %v680 = vld [vmem:[%s6 + $0xa4] sm:$0xf]
  %v681 = vld [vmem:[%s6 + $0xa8] sm:$0xf]
  %v682 = vld [vmem:[%s6 + $0xac] sm:$0xf]
  %v683 = vld [vmem:[%s6 + $0xb0] sm:$0xf]
  %v684 = vld [vmem:[%s6 + $0xb4] sm:$0xf]
  %v685 = vld [vmem:[%s6 + $0xb8] sm:$0xf]
  %v686 = vld [vmem:[%s6 + $0xbc] sm:$0xf]
  %v687 = vld [vmem:[%s6 + $0xc0] sm:$0xf]
  %v688 = vld [vmem:[%s6 + $0xc4] sm:$0xf]
  %v689 = vld [vmem:[%s6 + $0xc8] sm:$0xf]
  %v690 = vld [vmem:[%s6 + $0xcc] sm:$0xf]
  %v691 = vld [vmem:[%s6 + $0xd0] sm:$0xf]
  %v692 = vld [vmem:[%s6 + $0xd4] sm:$0xf]
  %v693 = vld [vmem:[%s6 + $0xd8] sm:$0xf]
  %v694 = vld [vmem:[%s6 + $0xdc] sm:$0xf]
  %v695 = vld [vmem:[%s6 + $0xe0] sm:$0xf]
  %v696 = vld [vmem:[%s6 + $0xe4] sm:$0xf]
  %v697 = vld [vmem:[%s6 + $0xe8] sm:$0xf]
  %v698 = vld [vmem:[%s6 + $0xec] sm:$0xf]
  %v699 = vld [vmem:[%s6 + $0xf0] sm:$0xf]
  %v700 = vld [vmem:[%s6 + $0xf4] sm:$0xf]
  %v701 = vld [vmem:[%s6 + $0xf8] sm:$0xf]
  %v702 = vld [vmem:[%s6 + $0xfc] sm:$0xf]
  %v709 = vunpack.c.l.b16 %v633
  %v710 = vunpack.c.h.b16 %v633
  %v711 = vunpack.c.l.b16 %v634
  %v712 = vunpack.c.h.b16 %v634
  %v713 = vunpack.c.l.b16 %v635
  %v714 = vunpack.c.h.b16 %v635
  %v715 = vunpack.c.l.b16 %v636
  %v716 = vunpack.c.h.b16 %v636
  %v717 = vunpack.c.l.b16 %v637
  %v718 = vunpack.c.h.b16 %v637
  %v719 = vunpack.c.l.b16 %v638
  %v720 = vunpack.c.h.b16 %v638
  %v721 = vpack.c.b16 %v713, %v709
  %v722 = vpack.c.b16 %v714, %v710
  %v723 = vpack.c.b16 %v715, %v711
  %v724 = vpack.c.b16 %v716, %v712
  %v725 = vpack.c.b16 %v717, %v717
  %v726 = vpack.c.b16 %v718, %v718
  %v727 = vpack.c.b16 %v719, %v719
  %v728 = vpack.c.b16 %v720, %v720
  %v801 = vunpack.c.l.b16 %v639
  %v802 = vunpack.c.l.b16 %v640
  %v803 = vunpack.c.l.b16 %v641
  %v804 = vunpack.c.l.b16 %v642
  %v805 = vunpack.c.l.b16 %v643
  %v806 = vunpack.c.l.b16 %v644
  %v807 = vunpack.c.l.b16 %v645
  %v808 = vunpack.c.l.b16 %v646
  %v809 = vunpack.c.l.b16 %v647
  %v810 = vunpack.c.l.b16 %v648
  %v811 = vunpack.c.l.b16 %v649
  %v812 = vunpack.c.l.b16 %v650
  %v813 = vunpack.c.l.b16 %v651
  %v814 = vunpack.c.l.b16 %v652
  %v815 = vunpack.c.l.b16 %v653
  %v816 = vunpack.c.l.b16 %v654
  %v817 = vunpack.c.l.b16 %v655
  %v818 = vunpack.c.l.b16 %v656
  %v819 = vunpack.c.l.b16 %v657
  %v820 = vunpack.c.l.b16 %v658
  %v821 = vunpack.c.l.b16 %v659
  %v822 = vunpack.c.l.b16 %v660
  %v823 = vunpack.c.l.b16 %v661
  %v824 = vunpack.c.l.b16 %v662
  %v825 = vunpack.c.l.b16 %v663
  %v826 = vunpack.c.l.b16 %v664
  %v827 = vunpack.c.l.b16 %v665
  %v828 = vunpack.c.l.b16 %v666
  %v829 = vunpack.c.l.b16 %v667
  %v830 = vunpack.c.l.b16 %v668
  %v831 = vunpack.c.l.b16 %v669
  %v832 = vunpack.c.l.b16 %v670
  %v833 = vunpack.c.l.b16 %v671
  %v834 = vunpack.c.l.b16 %v672
  %v835 = vunpack.c.l.b16 %v673
  %v836 = vunpack.c.l.b16 %v674
  %v837 = vunpack.c.l.b16 %v675
  %v838 = vunpack.c.l.b16 %v676
  %v839 = vunpack.c.l.b16 %v677
  %v840 = vunpack.c.l.b16 %v678
  %v841 = vunpack.c.l.b16 %v679
  %v842 = vunpack.c.l.b16 %v680
  %v843 = vunpack.c.l.b16 %v681
  %v844 = vunpack.c.l.b16 %v682
  %v845 = vunpack.c.l.b16 %v683
  %v846 = vunpack.c.l.b16 %v684
  %v847 = vunpack.c.l.b16 %v685
  %v848 = vunpack.c.l.b16 %v686
  %v849 = vunpack.c.l.b16 %v687
  %v850 = vunpack.c.l.b16 %v688
  %v851 = vunpack.c.l.b16 %v689
  %v852 = vunpack.c.l.b16 %v690
  %v853 = vunpack.c.l.b16 %v691
  %v854 = vunpack.c.l.b16 %v692
  %v855 = vunpack.c.l.b16 %v693
  %v856 = vunpack.c.l.b16 %v694
  %v857 = vunpack.c.l.b16 %v695
  %v858 = vunpack.c.l.b16 %v696
  %v859 = vunpack.c.l.b16 %v697
  %v860 = vunpack.c.l.b16 %v698
  %v861 = vunpack.c.l.b16 %v699
  %v862 = vunpack.c.l.b16 %v700
  %v863 = vunpack.c.l.b16 %v701
  %v864 = vunpack.c.l.b16 %v702
  %v865 = vpack.c.b16 %v802, %v801
  %v866 = vpack.c.b16 %v804, %v803
  %v867 = vpack.c.b16 %v806, %v805
  %v868 = vpack.c.b16 %v808, %v807
  %v869 = vpack.c.b16 %v810, %v809
  %v870 = vpack.c.b16 %v812, %v811
  %v871 = vpack.c.b16 %v814, %v813
  %v872 = vpack.c.b16 %v816, %v815
  %v873 = vpack.c.b16 %v818, %v817
  %v874 = vpack.c.b16 %v820, %v819
  %v875 = vpack.c.b16 %v822, %v821
  %v876 = vpack.c.b16 %v824, %v823
  %v877 = vpack.c.b16 %v826, %v825
  %v878 = vpack.c.b16 %v828, %v827
  %v879 = vpack.c.b16 %v830, %v829
  %v880 = vpack.c.b16 %v832, %v831
  %v881 = vpack.c.b16 %v834, %v833
  %v882 = vpack.c.b16 %v836, %v835
  %v883 = vpack.c.b16 %v838, %v837
  %v884 = vpack.c.b16 %v840, %v839
  %v885 = vpack.c.b16 %v842, %v841
  %v886 = vpack.c.b16 %v844, %v843
  %v887 = vpack.c.b16 %v846, %v845
  %v888 = vpack.c.b16 %v848, %v847
  %v889 = vpack.c.b16 %v850, %v849
  %v890 = vpack.c.b16 %v852, %v851
  %v891 = vpack.c.b16 %v854, %v853
  %v892 = vpack.c.b16 %v856, %v855
  %v893 = vpack.c.b16 %v858, %v857
  %v894 = vpack.c.b16 %v860, %v859
  %v895 = vpack.c.b16 %v862, %v861
  %v896 = vpack.c.b16 %v864, %v863
  %929 = vmatprep.subr.bf16.mxu0 0
  %930 = vmatpush1.bf16.msra.mxu0 %v865
  %931 = vmatprep.subr.bf16.mxu0 0
  %932 = vmatpush1.bf16.msra.mxu0 %v866
  %933 = vmatprep.subr.bf16.mxu0 0
  %934 = vmatpush1.bf16.msra.mxu0 %v867
  %935 = vmatprep.subr.bf16.mxu0 0
  %936 = vmatpush1.bf16.msra.mxu0 %v868
  %937 = vmatprep.subr.bf16.mxu0 0
  %938 = vmatpush1.bf16.msra.mxu0 %v869
  %939 = vmatprep.subr.bf16.mxu0 0
  %940 = vmatpush1.bf16.msra.mxu0 %v870
  %941 = vmatprep.subr.bf16.mxu0 0
  %942 = vmatpush1.bf16.msra.mxu0 %v871
  %943 = vmatprep.subr.bf16.mxu0 0
  %944 = vmatpush1.bf16.msra.mxu0 %v872
  %945 = vmatprep.subr.bf16.mxu0 0
  %946 = vmatpush1.bf16.msra.mxu0 %v873
  %947 = vmatprep.subr.bf16.mxu0 0
  %948 = vmatpush1.bf16.msra.mxu0 %v874
  %949 = vmatprep.subr.bf16.mxu0 0
  %950 = vmatpush1.bf16.msra.mxu0 %v875
  %951 = vmatprep.subr.bf16.mxu0 0
  %952 = vmatpush1.bf16.msra.mxu0 %v876
  %953 = vmatprep.subr.bf16.mxu0 0
  %954 = vmatpush1.bf16.msra.mxu0 %v877
  %955 = vmatprep.subr.bf16.mxu0 0
  %956 = vmatpush1.bf16.msra.mxu0 %v878
  %957 = vmatprep.subr.bf16.mxu0 0
  %958 = vmatpush1.bf16.msra.mxu0 %v879
  %959 = vmatprep.subr.bf16.mxu0 0
  %960 = vmatpush1.bf16.msra.mxu0 %v880
  %961 = vmatprep.mubr.bf16.mxu0 %v722
  %962 = vmatmul.mubr.bf16.gmra.mrb[0].mxu0 %v721
  %v963 = vpop.f32.mrb[0].mxu0
  %v964 = vadd.f32 0.0, %v963
  %v965 = vpop.f32.mrb[0].mxu0
  %v966 = vpop.f32.mrb[0].mxu0
  %v967 = vadd.f32 0.0, %v966
  %v968 = vpop.f32.mrb[0].mxu0
  %969 = vmatprep.mubr.bf16.mxu0 %v726
  %970 = vmatmul.mubr.bf16.gmra.mrb[0].mxu0 %v725
  %v971 = vpop.f32.mrb[0].mxu0
  %v972 = vadd.f32 0.0, %v971
  %v973 = vpop.f32.mrb[0].mxu0
  %v974 = vpop.f32.mrb[0].mxu0
  %v975 = vpop.f32.mrb[0].mxu0
  %976 = vdwg.mxu0
  %977 = vmatprep.subr.bf16.mxu0 0
  %978 = vmatpush1.bf16.msra.mxu0 %v881
  %979 = vmatprep.subr.bf16.mxu0 0
  %980 = vmatpush1.bf16.msra.mxu0 %v882
  %981 = vmatprep.subr.bf16.mxu0 0
  %982 = vmatpush1.bf16.msra.mxu0 %v883
  %983 = vmatprep.subr.bf16.mxu0 0
  %984 = vmatpush1.bf16.msra.mxu0 %v884
  %985 = vmatprep.subr.bf16.mxu0 0
  %986 = vmatpush1.bf16.msra.mxu0 %v885
  %987 = vmatprep.subr.bf16.mxu0 0
  %988 = vmatpush1.bf16.msra.mxu0 %v886
  %989 = vmatprep.subr.bf16.mxu0 0
  %990 = vmatpush1.bf16.msra.mxu0 %v887
  %991 = vmatprep.subr.bf16.mxu0 0
  %992 = vmatpush1.bf16.msra.mxu0 %v888
  %993 = vmatprep.subr.bf16.mxu0 0
  %994 = vmatpush1.bf16.msra.mxu0 %v889
  %995 = vmatprep.subr.bf16.mxu0 0
  %996 = vmatpush1.bf16.msra.mxu0 %v890
  %997 = vmatprep.subr.bf16.mxu0 0
  %998 = vmatpush1.bf16.msra.mxu0 %v891
  %999 = vmatprep.subr.bf16.mxu0 0
  %1000 = vmatpush1.bf16.msra.mxu0 %v892
  %1001 = vmatprep.subr.bf16.mxu0 0
  %1002 = vmatpush1.bf16.msra.mxu0 %v893
  %1003 = vmatprep.subr.bf16.mxu0 0
  %1004 = vmatpush1.bf16.msra.mxu0 %v894
  %1005 = vmatprep.subr.bf16.mxu0 0
  %1006 = vmatpush1.bf16.msra.mxu0 %v895
  %1007 = vmatprep.subr.bf16.mxu0 0
  %1008 = vmatpush1.bf16.msra.mxu0 %v896
  %1009 = vmatprep.mubr.bf16.mxu0 %v724
  %1010 = vmatmul.mubr.bf16.gmra.mrb[0].mxu0 %v723
  %v1011 = vpop.f32.mrb[0].mxu0
  %v1012 = vadd.f32 %v964, %v1011
  %v1013 = vpop.f32.mrb[0].mxu0
  %v1014 = vpop.f32.mrb[0].mxu0
  %v1015 = vadd.f32 %v967, %v1014
  %v1016 = vpop.f32.mrb[0].mxu0
  %1017 = vmatprep.mubr.bf16.mxu0 %v728
  %1018 = vmatmul.mubr.bf16.gmra.mrb[0].mxu0 %v727
  %v1019 = vpop.f32.mrb[0].mxu0
  %v1020 = vadd.f32 %v972, %v1019
  %v1021 = vpop.f32.mrb[0].mxu0
  %v1022 = vpop.f32.mrb[0].mxu0
  %v1023 = vpop.f32.mrb[0].mxu0
  %1024 = vdwg.mxu0
  %v1025 = vld [vmem:[%s3] sm:$0xff]
  %v1026 = vld [vmem:[%s3 + $0x8] sm:$0xff]
  %v1027 = vld [vmem:[%s3 + $0x10] sm:$0xff]
  %v1028 = vld [vmem:[%s3 + $0x18] sm:$0xff]
  %v1029 = vld [vmem:[%s3 + $0x20] sm:$0xff]
  %v1030 = vld [vmem:[%s3 + $0x28] sm:$0xff]
  %v1031 = vld [vmem:[%s3 + $0x30] sm:$0xff]
  %v1032 = vld [vmem:[%s3 + $0x38] sm:$0xff]
  %v1033 = vld [vmem:[%s3 + $0x40] sm:$0x11]
  %v1034 = vld [vmem:[%s3 + $0x48] sm:$0x11]
  %v1035 = vld [vmem:[%s3 + $0x50] sm:$0x11]
  %v1036 = vld [vmem:[%s3 + $0x58] sm:$0x11]
  %v1037 = vld [vmem:[%s7] sm:$0xf]
  %v1038 = vld [vmem:[%s7 + $0x4] sm:$0xf]
  %v1039 = vld [vmem:[%s7 + $0x8] sm:$0xf]
  %v1040 = vld [vmem:[%s7 + $0xc] sm:$0xf]
  %v1041 = vld [vmem:[%s7 + $0x10] sm:$0xf]
  %v1042 = vld [vmem:[%s7 + $0x14] sm:$0xf]
  %v1043 = vld [vmem:[%s7 + $0x18] sm:$0xf]
  %v1044 = vld [vmem:[%s7 + $0x1c] sm:$0xf]
  %v1045 = vld [vmem:[%s7 + $0x20] sm:$0xf]
  %v1046 = vld [vmem:[%s7 + $0x24] sm:$0xf]
  %v1047 = vld [vmem:[%s7 + $0x28] sm:$0xf]
  %v1048 = vld [vmem:[%s7 + $0x2c] sm:$0xf]
  %v1049 = vld [vmem:[%s7 + $0x30] sm:$0xf]
  %v1050 = vld [vmem:[%s7 + $0x34] sm:$0xf]
  %v1051 = vld [vmem:[%s7 + $0x38] sm:$0xf]
  %v1052 = vld [vmem:[%s7 + $0x3c] sm:$0xf]
  %v1053 = vld [vmem:[%s7 + $0x40] sm:$0xf]
  %v1054 = vld [vmem:[%s7 + $0x44] sm:$0xf]
  %v1055 = vld [vmem:[%s7 + $0x48] sm:$0xf]
  %v1056 = vld [vmem:[%s7 + $0x4c] sm:$0xf]
  %v1057 = vld [vmem:[%s7 + $0x50] sm:$0xf]
  %v1058 = vld [vmem:[%s7 + $0x54] sm:$0xf]
  %v1059 = vld [vmem:[%s7 + $0x58] sm:$0xf]
  %v1060 = vld [vmem:[%s7 + $0x5c] sm:$0xf]
  %v1061 = vld [vmem:[%s7 + $0x60] sm:$0xf]
  %v1062 = vld [vmem:[%s7 + $0x64] sm:$0xf]
  %v1063 = vld [vmem:[%s7 + $0x68] sm:$0xf]
  %v1064 = vld [vmem:[%s7 + $0x6c] sm:$0xf]
  %v1065 = vld [vmem:[%s7 + $0x70] sm:$0xf]
  %v1066 = vld [vmem:[%s7 + $0x74] sm:$0xf]
  %v1067 = vld [vmem:[%s7 + $0x78] sm:$0xf]
  %v1068 = vld [vmem:[%s7 + $0x7c] sm:$0xf]
  %v1069 = vld [vmem:[%s7 + $0x80] sm:$0xf]
  %v1070 = vld [vmem:[%s7 + $0x84] sm:$0xf]
  %v1071 = vld [vmem:[%s7 + $0x88] sm:$0xf]
  %v1072 = vld [vmem:[%s7 + $0x8c] sm:$0xf]
  %v1073 = vld [vmem:[%s7 + $0x90] sm:$0xf]
  %v1074 = vld [vmem:[%s7 + $0x94] sm:$0xf]
  %v1075 = vld [vmem:[%s7 + $0x98] sm:$0xf]
  %v1076 = vld [vmem:[%s7 + $0x9c] sm:$0xf]
  %v1077 = vld [vmem:[%s7 + $0xa0] sm:$0xf]
  %v1078 = vld [vmem:[%s7 + $0xa4] sm:$0xf]
  %v1079 = vld [vmem:[%s7 + $0xa8] sm:$0xf]
  %v1080 = vld [vmem:[%s7 + $0xac] sm:$0xf]
  %v1081 = vld [vmem:[%s7 + $0xb0] sm:$0xf]
  %v1082 = vld [vmem:[%s7 + $0xb4] sm:$0xf]
  %v1083 = vld [vmem:[%s7 + $0xb8] sm:$0xf]
  %v1084 = vld [vmem:[%s7 + $0xbc] sm:$0xf]
  %v1085 = vld [vmem:[%s7 + $0xc0] sm:$0xf]
  %v1086 = vld [vmem:[%s7 + $0xc4] sm:$0xf]
  %v1087 = vld [vmem:[%s7 + $0xc8] sm:$0xf]
  %v1088 = vld [vmem:[%s7 + $0xcc] sm:$0xf]
  %v1089 = vld [vmem:[%s7 + $0xd0] sm:$0xf]
  %v1090 = vld [vmem:[%s7 + $0xd4] sm:$0xf]
  %v1091 = vld [vmem:[%s7 + $0xd8] sm:$0xf]
  %v1092 = vld [vmem:[%s7 + $0xdc] sm:$0xf]
  %v1093 = vld [vmem:[%s7 + $0xe0] sm:$0xf]
  %v1094 = vld [vmem:[%s7 + $0xe4] sm:$0xf]
  %v1095 = vld [vmem:[%s7 + $0xe8] sm:$0xf]
  %v1096 = vld [vmem:[%s7 + $0xec] sm:$0xf]
  %v1097 = vld [vmem:[%s7 + $0xf0] sm:$0xf]
  %v1098 = vld [vmem:[%s7 + $0xf4] sm:$0xf]
  %v1099 = vld [vmem:[%s7 + $0xf8] sm:$0xf]
  %v1100 = vld [vmem:[%s7 + $0xfc] sm:$0xf]
  %v1101 = vld [vmem:[%s7 + $0x100] sm:$0xf]
  %v1102 = vld [vmem:[%s7 + $0x104] sm:$0xf]
  %v1103 = vld [vmem:[%s7 + $0x108] sm:$0xf]
  %v1104 = vld [vmem:[%s7 + $0x10c] sm:$0xf]
  %v1105 = vld [vmem:[%s7 + $0x110] sm:$0xf]
  %v1106 = vld [vmem:[%s7 + $0x114] sm:$0xf]
  %v1107 = vld [vmem:[%s7 + $0x118] sm:$0xf]
  %v1108 = vld [vmem:[%s7 + $0x11c] sm:$0xf]
  %v1109 = vld [vmem:[%s7 + $0x120] sm:$0xf]
  %v1110 = vld [vmem:[%s7 + $0x124] sm:$0xf]
  %v1111 = vld [vmem:[%s7 + $0x128] sm:$0xf]
  %v1112 = vld [vmem:[%s7 + $0x12c] sm:$0xf]
  %v1113 = vld [vmem:[%s7 + $0x130] sm:$0xf]
  %v1114 = vld [vmem:[%s7 + $0x134] sm:$0xf]
  %v1115 = vld [vmem:[%s7 + $0x138] sm:$0xf]
  %v1116 = vld [vmem:[%s7 + $0x13c] sm:$0xf]
  %v1117 = vld [vmem:[%s7 + $0x140] sm:$0xf]
  %v1118 = vld [vmem:[%s7 + $0x144] sm:$0xf]
  %v1119 = vld [vmem:[%s7 + $0x148] sm:$0xf]
  %v1120 = vld [vmem:[%s7 + $0x14c] sm:$0xf]
  %v1121 = vld [vmem:[%s7 + $0x150] sm:$0xf]
  %v1122 = vld [vmem:[%s7 + $0x154] sm:$0xf]
  %v1123 = vld [vmem:[%s7 + $0x158] sm:$0xf]
  %v1124 = vld [vmem:[%s7 + $0x15c] sm:$0xf]
  %v1125 = vld [vmem:[%s7 + $0x160] sm:$0xf]
  %v1126 = vld [vmem:[%s7 + $0x164] sm:$0xf]
  %v1127 = vld [vmem:[%s7 + $0x168] sm:$0xf]
  %v1128 = vld [vmem:[%s7 + $0x16c] sm:$0xf]
  %v1129 = vld [vmem:[%s7 + $0x170] sm:$0xf]
  %v1130 = vld [vmem:[%s7 + $0x174] sm:$0xf]
  %v1131 = vld [vmem:[%s7 + $0x178] sm:$0xf]
  %v1132 = vld [vmem:[%s7 + $0x17c] sm:$0xf]
  %v1133 = vld [vmem:[%s7 + $0x180] sm:$0xf]
  %v1134 = vld [vmem:[%s7 + $0x184] sm:$0xf]
  %v1135 = vld [vmem:[%s7 + $0x188] sm:$0xf]
  %v1136 = vld [vmem:[%s7 + $0x18c] sm:$0xf]
  %v1137 = vld [vmem:[%s7 + $0x190] sm:$0xf]
  %v1138 = vld [vmem:[%s7 + $0x194] sm:$0xf]
  %v1139 = vld [vmem:[%s7 + $0x198] sm:$0xf]
  %v1140 = vld [vmem:[%s7 + $0x19c] sm:$0xf]
  %v1141 = vld [vmem:[%s7 + $0x1a0] sm:$0xf]
  %v1142 = vld [vmem:[%s7 + $0x1a4] sm:$0xf]
  %v1143 = vld [vmem:[%s7 + $0x1a8] sm:$0xf]
  %v1144 = vld [vmem:[%s7 + $0x1ac] sm:$0xf]
  %v1145 = vld [vmem:[%s7 + $0x1b0] sm:$0xf]
  %v1146 = vld [vmem:[%s7 + $0x1b4] sm:$0xf]
  %v1147 = vld [vmem:[%s7 + $0x1b8] sm:$0xf]
  %v1148 = vld [vmem:[%s7 + $0x1bc] sm:$0xf]
  %v1149 = vld [vmem:[%s7 + $0x1c0] sm:$0xf]
  %v1150 = vld [vmem:[%s7 + $0x1c4] sm:$0xf]
  %v1151 = vld [vmem:[%s7 + $0x1c8] sm:$0xf]
  %v1152 = vld [vmem:[%s7 + $0x1cc] sm:$0xf]
  %v1153 = vld [vmem:[%s7 + $0x1d0] sm:$0xf]
  %v1154 = vld [vmem:[%s7 + $0x1d4] sm:$0xf]
  %v1155 = vld [vmem:[%s7 + $0x1d8] sm:$0xf]
  %v1156 = vld [vmem:[%s7 + $0x1dc] sm:$0xf]
  %v1157 = vld [vmem:[%s7 + $0x1e0] sm:$0xf]
  %v1158 = vld [vmem:[%s7 + $0x1e4] sm:$0xf]
  %v1159 = vld [vmem:[%s7 + $0x1e8] sm:$0xf]
  %v1160 = vld [vmem:[%s7 + $0x1ec] sm:$0xf]
  %v1161 = vld [vmem:[%s7 + $0x1f0] sm:$0xf]
  %v1162 = vld [vmem:[%s7 + $0x1f4] sm:$0xf]
  %v1163 = vld [vmem:[%s7 + $0x1f8] sm:$0xf]
  %v1164 = vld [vmem:[%s7 + $0x1fc] sm:$0xf]
  %v1177 = vunpack.c.l.b16 %v1025
  %v1178 = vunpack.c.h.b16 %v1025
  %v1179 = vunpack.c.l.b16 %v1026
  %v1180 = vunpack.c.h.b16 %v1026
  %v1181 = vunpack.c.l.b16 %v1027
  %v1182 = vunpack.c.h.b16 %v1027
  %v1183 = vunpack.c.l.b16 %v1028
  %v1184 = vunpack.c.h.b16 %v1028
  %v1185 = vunpack.c.l.b16 %v1029
  %v1186 = vunpack.c.h.b16 %v1029
  %v1187 = vunpack.c.l.b16 %v1030
  %v1188 = vunpack.c.h.b16 %v1030
  %v1189 = vunpack.c.l.b16 %v1031
  %v1190 = vunpack.c.h.b16 %v1031
  %v1191 = vunpack.c.l.b16 %v1032
  %v1192 = vunpack.c.h.b16 %v1032
  %v1193 = vunpack.c.l.b16 %v1033
  %v1194 = vunpack.c.h.b16 %v1033
  %v1195 = vunpack.c.l.b16 %v1034
  %v1196 = vunpack.c.h.b16 %v1034
  %v1197 = vunpack.c.l.b16 %v1035
  %v1198 = vunpack.c.h.b16 %v1035
  %v1199 = vunpack.c.l.b16 %v1036
  %v1200 = vunpack.c.h.b16 %v1036
  %v1201 = vpack.c.b16 %v1185, %v1177
  %v1202 = vpack.c.b16 %v1186, %v1178
  %v1203 = vpack.c.b16 %v1187, %v1179
  %v1204 = vpack.c.b16 %v1188, %v1180
  %v1205 = vpack.c.b16 %v1189, %v1181
  %v1206 = vpack.c.b16 %v1190, %v1182
  %v1207 = vpack.c.b16 %v1191, %v1183
  %v1208 = vpack.c.b16 %v1192, %v1184
  %v1209 = vpack.c.b16 %v1193, %v1193
  %v1210 = vpack.c.b16 %v1194, %v1194
  %v1211 = vpack.c.b16 %v1195, %v1195
  %v1212 = vpack.c.b16 %v1196, %v1196
  %v1213 = vpack.c.b16 %v1197, %v1197
  %v1214 = vpack.c.b16 %v1198, %v1198
  %v1215 = vpack.c.b16 %v1199, %v1199
  %v1216 = vpack.c.b16 %v1200, %v1200
  %v1361 = vunpack.c.l.b16 %v1037
  %v1362 = vunpack.c.l.b16 %v1038
  %v1363 = vunpack.c.l.b16 %v1039
  %v1364 = vunpack.c.l.b16 %v1040
  %v1365 = vunpack.c.l.b16 %v1041
  %v1366 = vunpack.c.l.b16 %v1042
  %v1367 = vunpack.c.l.b16 %v1043
  %v1368 = vunpack.c.l.b16 %v1044
  %v1369 = vunpack.c.l.b16 %v1045
  %v1370 = vunpack.c.l.b16 %v1046
  %v1371 = vunpack.c.l.b16 %v1047
  %v1372 = vunpack.c.l.b16 %v1048
  %v1373 = vunpack.c.l.b16 %v1049
  %v1374 = vunpack.c.l.b16 %v1050
  %v1375 = vunpack.c.l.b16 %v1051
  %v1376 = vunpack.c.l.b16 %v1052
  %v1377 = vunpack.c.l.b16 %v1053
  %v1378 = vunpack.c.l.b16 %v1054
  %v1379 = vunpack.c.l.b16 %v1055
  %v1380 = vunpack.c.l.b16 %v1056
  %v1381 = vunpack.c.l.b16 %v1057
  %v1382 = vunpack.c.l.b16 %v1058
  %v1383 = vunpack.c.l.b16 %v1059
  %v1384 = vunpack.c.l.b16 %v1060
  %v1385 = vunpack.c.l.b16 %v1061
  %v1386 = vunpack.c.l.b16 %v1062
  %v1387 = vunpack.c.l.b16 %v1063
  %v1388 = vunpack.c.l.b16 %v1064
  %v1389 = vunpack.c.l.b16 %v1065
  %v1390 = vunpack.c.l.b16 %v1066
  %v1391 = vunpack.c.l.b16 %v1067
  %v1392 = vunpack.c.l.b16 %v1068
  %v1393 = vunpack.c.l.b16 %v1069
  %v1394 = vunpack.c.l.b16 %v1070
  %v1395 = vunpack.c.l.b16 %v1071
  %v1396 = vunpack.c.l.b16 %v1072
  %v1397 = vunpack.c.l.b16 %v1073
  %v1398 = vunpack.c.l.b16 %v1074
  %v1399 = vunpack.c.l.b16 %v1075
  %v1400 = vunpack.c.l.b16 %v1076
  %v1401 = vunpack.c.l.b16 %v1077
  %v1402 = vunpack.c.l.b16 %v1078
  %v1403 = vunpack.c.l.b16 %v1079
  %v1404 = vunpack.c.l.b16 %v1080
  %v1405 = vunpack.c.l.b16 %v1081
  %v1406 = vunpack.c.l.b16 %v1082
  %v1407 = vunpack.c.l.b16 %v1083
  %v1408 = vunpack.c.l.b16 %v1084
  %v1409 = vunpack.c.l.b16 %v1085
  %v1410 = vunpack.c.l.b16 %v1086
  %v1411 = vunpack.c.l.b16 %v1087
  %v1412 = vunpack.c.l.b16 %v1088
  %v1413 = vunpack.c.l.b16 %v1089
  %v1414 = vunpack.c.l.b16 %v1090
  %v1415 = vunpack.c.l.b16 %v1091
  %v1416 = vunpack.c.l.b16 %v1092
  %v1417 = vunpack.c.l.b16 %v1093
  %v1418 = vunpack.c.l.b16 %v1094
  %v1419 = vunpack.c.l.b16 %v1095
  %v1420 = vunpack.c.l.b16 %v1096
  %v1421 = vunpack.c.l.b16 %v1097
  %v1422 = vunpack.c.l.b16 %v1098
  %v1423 = vunpack.c.l.b16 %v1099
  %v1424 = vunpack.c.l.b16 %v1100
  %v1425 = vunpack.c.l.b16 %v1101
  %v1426 = vunpack.c.l.b16 %v1102
  %v1427 = vunpack.c.l.b16 %v1103
  %v1428 = vunpack.c.l.b16 %v1104
  %v1429 = vunpack.c.l.b16 %v1105
  %v1430 = vunpack.c.l.b16 %v1106
  %v1431 = vunpack.c.l.b16 %v1107
  %v1432 = vunpack.c.l.b16 %v1108
  %v1433 = vunpack.c.l.b16 %v1109
  %v1434 = vunpack.c.l.b16 %v1110
  %v1435 = vunpack.c.l.b16 %v1111
  %v1436 = vunpack.c.l.b16 %v1112
  %v1437 = vunpack.c.l.b16 %v1113
  %v1438 = vunpack.c.l.b16 %v1114
  %v1439 = vunpack.c.l.b16 %v1115
  %v1440 = vunpack.c.l.b16 %v1116
  %v1441 = vunpack.c.l.b16 %v1117
  %v1442 = vunpack.c.l.b16 %v1118
  %v1443 = vunpack.c.l.b16 %v1119
  %v1444 = vunpack.c.l.b16 %v1120
  %v1445 = vunpack.c.l.b16 %v1121
  %v1446 = vunpack.c.l.b16 %v1122
  %v1447 = vunpack.c.l.b16 %v1123
  %v1448 = vunpack.c.l.b16 %v1124
  %v1449 = vunpack.c.l.b16 %v1125
  %v1450 = vunpack.c.l.b16 %v1126
  %v1451 = vunpack.c.l.b16 %v1127
  %v1452 = vunpack.c.l.b16 %v1128
  %v1453 = vunpack.c.l.b16 %v1129
  %v1454 = vunpack.c.l.b16 %v1130
  %v1455 = vunpack.c.l.b16 %v1131
  %v1456 = vunpack.c.l.b16 %v1132
  %v1457 = vunpack.c.l.b16 %v1133
  %v1458 = vunpack.c.l.b16 %v1134
  %v1459 = vunpack.c.l.b16 %v1135
  %v1460 = vunpack.c.l.b16 %v1136
  %v1461 = vunpack.c.l.b16 %v1137
  %v1462 = vunpack.c.l.b16 %v1138
  %v1463 = vunpack.c.l.b16 %v1139
  %v1464 = vunpack.c.l.b16 %v1140
  %v1465 = vunpack.c.l.b16 %v1141
  %v1466 = vunpack.c.l.b16 %v1142
  %v1467 = vunpack.c.l.b16 %v1143
  %v1468 = vunpack.c.l.b16 %v1144
  %v1469 = vunpack.c.l.b16 %v1145
  %v1470 = vunpack.c.l.b16 %v1146
  %v1471 = vunpack.c.l.b16 %v1147
  %v1472 = vunpack.c.l.b16 %v1148
  %v1473 = vunpack.c.l.b16 %v1149
  %v1474 = vunpack.c.l.b16 %v1150
  %v1475 = vunpack.c.l.b16 %v1151
  %v1476 = vunpack.c.l.b16 %v1152
  %v1477 = vunpack.c.l.b16 %v1153
  %v1478 = vunpack.c.l.b16 %v1154
  %v1479 = vunpack.c.l.b16 %v1155
  %v1480 = vunpack.c.l.b16 %v1156
  %v1481 = vunpack.c.l.b16 %v1157
  %v1482 = vunpack.c.l.b16 %v1158
  %v1483 = vunpack.c.l.b16 %v1159
  %v1484 = vunpack.c.l.b16 %v1160
  %v1485 = vunpack.c.l.b16 %v1161
  %v1486 = vunpack.c.l.b16 %v1162
  %v1487 = vunpack.c.l.b16 %v1163
  %v1488 = vunpack.c.l.b16 %v1164
  %v1489 = vpack.c.b16 %v1362, %v1361
  %v1490 = vpack.c.b16 %v1364, %v1363
  %v1491 = vpack.c.b16 %v1366, %v1365
  %v1492 = vpack.c.b16 %v1368, %v1367
  %v1493 = vpack.c.b16 %v1370, %v1369
  %v1494 = vpack.c.b16 %v1372, %v1371
  %v1495 = vpack.c.b16 %v1374, %v1373
  %v1496 = vpack.c.b16 %v1376, %v1375
  %v1497 = vpack.c.b16 %v1378, %v1377
  %v1498 = vpack.c.b16 %v1380, %v1379
  %v1499 = vpack.c.b16 %v1382, %v1381
  %v1500 = vpack.c.b16 %v1384, %v1383
  %v1501 = vpack.c.b16 %v1386, %v1385
  %v1502 = vpack.c.b16 %v1388, %v1387
  %v1503 = vpack.c.b16 %v1390, %v1389
  %v1504 = vpack.c.b16 %v1392, %v1391
  %v1505 = vpack.c.b16 %v1394, %v1393
  %v1506 = vpack.c.b16 %v1396, %v1395
  %v1507 = vpack.c.b16 %v1398, %v1397
  %v1508 = vpack.c.b16 %v1400, %v1399
  %v1509 = vpack.c.b16 %v1402, %v1401
  %v1510 = vpack.c.b16 %v1404, %v1403
  %v1511 = vpack.c.b16 %v1406, %v1405
  %v1512 = vpack.c.b16 %v1408, %v1407
  %v1513 = vpack.c.b16 %v1410, %v1409
  %v1514 = vpack.c.b16 %v1412, %v1411
  %v1515 = vpack.c.b16 %v1414, %v1413
  %v1516 = vpack.c.b16 %v1416, %v1415
  %v1517 = vpack.c.b16 %v1418, %v1417
  %v1518 = vpack.c.b16 %v1420, %v1419
  %v1519 = vpack.c.b16 %v1422, %v1421
  %v1520 = vpack.c.b16 %v1424, %v1423
  %v1521 = vpack.c.b16 %v1426, %v1425
  %v1522 = vpack.c.b16 %v1428, %v1427
  %v1523 = vpack.c.b16 %v1430, %v1429
  %v1524 = vpack.c.b16 %v1432, %v1431
  %v1525 = vpack.c.b16 %v1434, %v1433
  %v1526 = vpack.c.b16 %v1436, %v1435
  %v1527 = vpack.c.b16 %v1438, %v1437
  %v1528 = vpack.c.b16 %v1440, %v1439
  %v1529 = vpack.c.b16 %v1442, %v1441
  %v1530 = vpack.c.b16 %v1444, %v1443
  %v1531 = vpack.c.b16 %v1446, %v1445
  %v1532 = vpack.c.b16 %v1448, %v1447
  %v1533 = vpack.c.b16 %v1450, %v1449
  %v1534 = vpack.c.b16 %v1452, %v1451
  %v1535 = vpack.c.b16 %v1454, %v1453
  %v1536 = vpack.c.b16 %v1456, %v1455
  %v1537 = vpack.c.b16 %v1458, %v1457
  %v1538 = vpack.c.b16 %v1460, %v1459
  %v1539 = vpack.c.b16 %v1462, %v1461
  %v1540 = vpack.c.b16 %v1464, %v1463
  %v1541 = vpack.c.b16 %v1466, %v1465
  %v1542 = vpack.c.b16 %v1468, %v1467
  %v1543 = vpack.c.b16 %v1470, %v1469
  %v1544 = vpack.c.b16 %v1472, %v1471
  %v1545 = vpack.c.b16 %v1474, %v1473
  %v1546 = vpack.c.b16 %v1476, %v1475
  %v1547 = vpack.c.b16 %v1478, %v1477
  %v1548 = vpack.c.b16 %v1480, %v1479
  %v1549 = vpack.c.b16 %v1482, %v1481
  %v1550 = vpack.c.b16 %v1484, %v1483
  %v1551 = vpack.c.b16 %v1486, %v1485
  %v1552 = vpack.c.b16 %v1488, %v1487
  %1617 = vmatprep.subr.bf16.mxu0 0
  %1618 = vmatpush1.bf16.msra.mxu0 %v1489
  %1619 = vmatprep.subr.bf16.mxu0 0
  %1620 = vmatpush1.bf16.msra.mxu0 %v1490
  %1621 = vmatprep.subr.bf16.mxu0 0
  %1622 = vmatpush1.bf16.msra.mxu0 %v1491
  %1623 = vmatprep.subr.bf16.mxu0 0
  %1624 = vmatpush1.bf16.msra.mxu0 %v1492
  %1625 = vmatprep.subr.bf16.mxu0 0
  %1626 = vmatpush1.bf16.msra.mxu0 %v1493
  %1627 = vmatprep.subr.bf16.mxu0 0
  %1628 = vmatpush1.bf16.msra.mxu0 %v1494
  %1629 = vmatprep.subr.bf16.mxu0 0
  %1630 = vmatpush1.bf16.msra.mxu0 %v1495
  %1631 = vmatprep.subr.bf16.mxu0 0
  %1632 = vmatpush1.bf16.msra.mxu0 %v1496
  %1633 = vmatprep.subr.bf16.mxu0 0
  %1634 = vmatpush1.bf16.msra.mxu0 %v1497
  %1635 = vmatprep.subr.bf16.mxu0 0
  %1636 = vmatpush1.bf16.msra.mxu0 %v1498
  %1637 = vmatprep.subr.bf16.mxu0 0
  %1638 = vmatpush1.bf16.msra.mxu0 %v1499
  %1639 = vmatprep.subr.bf16.mxu0 0
  %1640 = vmatpush1.bf16.msra.mxu0 %v1500
  %1641 = vmatprep.subr.bf16.mxu0 0
  %1642 = vmatpush1.bf16.msra.mxu0 %v1501
  %1643 = vmatprep.subr.bf16.mxu0 0
  %1644 = vmatpush1.bf16.msra.mxu0 %v1502
  %1645 = vmatprep.subr.bf16.mxu0 0
  %1646 = vmatpush1.bf16.msra.mxu0 %v1503
  %1647 = vmatprep.subr.bf16.mxu0 0
  %1648 = vmatpush1.bf16.msra.mxu0 %v1504
  %1649 = vmatprep.mubr.bf16.mxu0 %v1202
  %1650 = vmatmul.mubr.bf16.gmra.mrb[0].mxu0 %v1201
  %v1651 = vpop.f32.mrb[0].mxu0
  %v1652 = vadd.f32 0.0, %v1651
  %v1653 = vpop.f32.mrb[0].mxu0
  %v1654 = vpop.f32.mrb[0].mxu0
  %v1655 = vadd.f32 0.0, %v1654
  %v1656 = vpop.f32.mrb[0].mxu0
  %1657 = vmatprep.mubr.bf16.mxu0 %v1210
  %1658 = vmatmul.mubr.bf16.gmra.mrb[0].mxu0 %v1209
  %v1659 = vpop.f32.mrb[0].mxu0
  %v1660 = vadd.f32 0.0, %v1659
  %v1661 = vpop.f32.mrb[0].mxu0
  %v1662 = vpop.f32.mrb[0].mxu0
  %v1663 = vpop.f32.mrb[0].mxu0
  %1664 = vdwg.mxu0
  %1665 = vmatprep.subr.bf16.mxu0 0
  %1666 = vmatpush1.bf16.msra.mxu0 %v1505
  %1667 = vmatprep.subr.bf16.mxu0 0
  %1668 = vmatpush1.bf16.msra.mxu0 %v1506
  %1669 = vmatprep.subr.bf16.mxu0 0
  %1670 = vmatpush1.bf16.msra.mxu0 %v1507
  %1671 = vmatprep.subr.bf16.mxu0 0
  %1672 = vmatpush1.bf16.msra.mxu0 %v1508
  %1673 = vmatprep.subr.bf16.mxu0 0
  %1674 = vmatpush1.bf16.msra.mxu0 %v1509
  %1675 = vmatprep.subr.bf16.mxu0 0
  %1676 = vmatpush1.bf16.msra.mxu0 %v1510
  %1677 = vmatprep.subr.bf16.mxu0 0
  %1678 = vmatpush1.bf16.msra.mxu0 %v1511
  %1679 = vmatprep.subr.bf16.mxu0 0
  %1680 = vmatpush1.bf16.msra.mxu0 %v1512
  %1681 = vmatprep.subr.bf16.mxu0 0
  %1682 = vmatpush1.bf16.msra.mxu0 %v1513
  %1683 = vmatprep.subr.bf16.mxu0 0
  %1684 = vmatpush1.bf16.msra.mxu0 %v1514
  %1685 = vmatprep.subr.bf16.mxu0 0
  %1686 = vmatpush1.bf16.msra.mxu0 %v1515
  %1687 = vmatprep.subr.bf16.mxu0 0
  %1688 = vmatpush1.bf16.msra.mxu0 %v1516
  %1689 = vmatprep.subr.bf16.mxu0 0
  %1690 = vmatpush1.bf16.msra.mxu0 %v1517
  %1691 = vmatprep.subr.bf16.mxu0 0
  %1692 = vmatpush1.bf16.msra.mxu0 %v1518
  %1693 = vmatprep.subr.bf16.mxu0 0
  %1694 = vmatpush1.bf16.msra.mxu0 %v1519
  %1695 = vmatprep.subr.bf16.mxu0 0
  %1696 = vmatpush1.bf16.msra.mxu0 %v1520
  %1697 = vmatprep.mubr.bf16.mxu0 %v1204
  %1698 = vmatmul.mubr.bf16.gmra.mrb[0].mxu0 %v1203
  %v1699 = vpop.f32.mrb[0].mxu0
  %v1700 = vadd.f32 %v1652, %v1699
  %v1701 = vpop.f32.mrb[0].mxu0
  %v1702 = vpop.f32.mrb[0].mxu0
  %v1703 = vadd.f32 %v1655, %v1702
  %v1704 = vpop.f32.mrb[0].mxu0
  %1705 = vmatprep.mubr.bf16.mxu0 %v1212
  %1706 = vmatmul.mubr.bf16.gmra.mrb[0].mxu0 %v1211
  %v1707 = vpop.f32.mrb[0].mxu0
  %v1708 = vadd.f32 %v1660, %v1707
  %v1709 = vpop.f32.mrb[0].mxu0
  %v1710 = vpop.f32.mrb[0].mxu0
  %v1711 = vpop.f32.mrb[0].mxu0
  %1712 = vdwg.mxu0
  %1713 = vmatprep.subr.bf16.mxu0 0
  %1714 = vmatpush1.bf16.msra.mxu0 %v1521
  %1715 = vmatprep.subr.bf16.mxu0 0
  %1716 = vmatpush1.bf16.msra.mxu0 %v1522
  %1717 = vmatprep.subr.bf16.mxu0 0
  %1718 = vmatpush1.bf16.msra.mxu0 %v1523
  %1719 = vmatprep.subr.bf16.mxu0 0
  %1720 = vmatpush1.bf16.msra.mxu0 %v1524
  %1721 = vmatprep.subr.bf16.mxu0 0
  %1722 = vmatpush1.bf16.msra.mxu0 %v1525
  %1723 = vmatprep.subr.bf16.mxu0 0
  %1724 = vmatpush1.bf16.msra.mxu0 %v1526
  %1725 = vmatprep.subr.bf16.mxu0 0
  %1726 = vmatpush1.bf16.msra.mxu0 %v1527
  %1727 = vmatprep.subr.bf16.mxu0 0
  %1728 = vmatpush1.bf16.msra.mxu0 %v1528
  %1729 = vmatprep.subr.bf16.mxu0 0
  %1730 = vmatpush1.bf16.msra.mxu0 %v1529
  %1731 = vmatprep.subr.bf16.mxu0 0
  %1732 = vmatpush1.bf16.msra.mxu0 %v1530
  %1733 = vmatprep.subr.bf16.mxu0 0
  %1734 = vmatpush1.bf16.msra.mxu0 %v1531
  %1735 = vmatprep.subr.bf16.mxu0 0
  %1736 = vmatpush1.bf16.msra.mxu0 %v1532
  %1737 = vmatprep.subr.bf16.mxu0 0
  %1738 = vmatpush1.bf16.msra.mxu0 %v1533
  %1739 = vmatprep.subr.bf16.mxu0 0
  %1740 = vmatpush1.bf16.msra.mxu0 %v1534
  %1741 = vmatprep.subr.bf16.mxu0 0
  %1742 = vmatpush1.bf16.msra.mxu0 %v1535
  %1743 = vmatprep.subr.bf16.mxu0 0
  %1744 = vmatpush1.bf16.msra.mxu0 %v1536
  %1745 = vmatprep.mubr.bf16.mxu0 %v1206
  %1746 = vmatmul.mubr.bf16.gmra.mrb[0].mxu0 %v1205
  %v1747 = vpop.f32.mrb[0].mxu0
  %v1748 = vadd.f32 %v1700, %v1747
  %v1749 = vpop.f32.mrb[0].mxu0
  %v1750 = vpop.f32.mrb[0].mxu0
  %v1751 = vadd.f32 %v1703, %v1750
  %v1752 = vpop.f32.mrb[0].mxu0
  %1753 = vmatprep.mubr.bf16.mxu0 %v1214
  %1754 = vmatmul.mubr.bf16.gmra.mrb[0].mxu0 %v1213
  %v1755 = vpop.f32.mrb[0].mxu0
  %v1756 = vadd.f32 %v1708, %v1755
  %v1757 = vpop.f32.mrb[0].mxu0
  %v1758 = vpop.f32.mrb[0].mxu0
  %v1759 = vpop.f32.mrb[0].mxu0
  %1760 = vdwg.mxu0
  %1761 = vmatprep.subr.bf16.mxu0 0
  %1762 = vmatpush1.bf16.msra.mxu0 %v1537
  %1763 = vmatprep.subr.bf16.mxu0 0
  %1764 = vmatpush1.bf16.msra.mxu0 %v1538
  %1765 = vmatprep.subr.bf16.mxu0 0
  %1766 = vmatpush1.bf16.msra.mxu0 %v1539
  %1767 = vmatprep.subr.bf16.mxu0 0
  %1768 = vmatpush1.bf16.msra.mxu0 %v1540
  %1769 = vmatprep.subr.bf16.mxu0 0
  %1770 = vmatpush1.bf16.msra.mxu0 %v1541
  %1771 = vmatprep.subr.bf16.mxu0 0
  %1772 = vmatpush1.bf16.msra.mxu0 %v1542
  %1773 = vmatprep.subr.bf16.mxu0 0
  %1774 = vmatpush1.bf16.msra.mxu0 %v1543
  %1775 = vmatprep.subr.bf16.mxu0 0
  %1776 = vmatpush1.bf16.msra.mxu0 %v1544
  %1777 = vmatprep.subr.bf16.mxu0 0
  %1778 = vmatpush1.bf16.msra.mxu0 %v1545
  %1779 = vmatprep.subr.bf16.mxu0 0
  %1780 = vmatpush1.bf16.msra.mxu0 %v1546
  %1781 = vmatprep.subr.bf16.mxu0 0
  %1782 = vmatpush1.bf16.msra.mxu0 %v1547
  %1783 = vmatprep.subr.bf16.mxu0 0
  %1784 = vmatpush1.bf16.msra.mxu0 %v1548
  %1785 = vmatprep.subr.bf16.mxu0 0
  %1786 = vmatpush1.bf16.msra.mxu0 %v1549
  %1787 = vmatprep.subr.bf16.mxu0 0
  %1788 = vmatpush1.bf16.msra.mxu0 %v1550
  %1789 = vmatprep.subr.bf16.mxu0 0
  %1790 = vmatpush1.bf16.msra.mxu0 %v1551
  %1791 = vmatprep.subr.bf16.mxu0 0
  %1792 = vmatpush1.bf16.msra.mxu0 %v1552
  %1793 = vmatprep.mubr.bf16.mxu0 %v1208
  %1794 = vmatmul.mubr.bf16.gmra.mrb[0].mxu0 %v1207
  %v1795 = vpop.f32.mrb[0].mxu0
  %v1796 = vadd.f32 %v1748, %v1795
  %v1797 = vpop.f32.mrb[0].mxu0
  %v1798 = vpop.f32.mrb[0].mxu0
  %v1799 = vadd.f32 %v1751, %v1798
  %v1800 = vpop.f32.mrb[0].mxu0
  %1801 = vmatprep.mubr.bf16.mxu0 %v1216
  %1802 = vmatmul.mubr.bf16.gmra.mrb[0].mxu0 %v1215
  %v1803 = vpop.f32.mrb[0].mxu0
  %v1804 = vadd.f32 %v1756, %v1803
  %v1805 = vpop.f32.mrb[0].mxu0
  %v1806 = vpop.f32.mrb[0].mxu0
  %v1807 = vpop.f32.mrb[0].mxu0
  %1808 = vdwg.mxu0
  %v1809 = vadd.f32 %v227, %v230
  %v1810 = vadd.f32 %v1809, %v235
  %v1811 = vadd.f32 %v1810, %v238
  %v1812 = vrot.slane %v1811, 4
  %v1813 = vadd.f32 %v1811, %v1812
  %v1814 = vrot.slane %v1813, 2
  %v1815 = vadd.f32 %v1813, %v1814
  %v1816 = vrot.slane %v1815, 1
  %v1817 = vadd.f32 %v1815, %v1816
  %v1818 = vadd.f32 %v1817, 0.0
  %v1819 = vadd.f32 %v620, %v623
  %v1820 = vadd.f32 %v1819, %v628
  %v1821 = vrot.slane %v1820, 4
  %v1822 = vadd.f32 %v1820, %v1821
  %v1823 = vrot.slane %v1822, 2
  %v1824 = vadd.f32 %v1822, %v1823
  %v1825 = vrot.slane %v1824, 1
  %v1826 = vadd.f32 %v1824, %v1825
  %v1827 = vadd.f32 %v1818, %v1826
  %v1828 = vadd.f32 %v1012, %v1015
  %v1829 = vadd.f32 %v1828, %v1020
  %v1830 = vrot.slane %v1829, 4
  %v1831 = vadd.f32 %v1829, %v1830
  %v1832 = vrot.slane %v1831, 2
  %v1833 = vadd.f32 %v1831, %v1832
  %v1834 = vrot.slane %v1833, 1
  %v1835 = vadd.f32 %v1833, %v1834
  %v1836 = vadd.f32 %v1827, %v1835
  %v1837 = vadd.f32 %v1796, %v1799
  %vm1838 = vcmask 1041408
  %v1839 = vsel %vm1838, %v1804, 0.0
  %v1840 = vadd.f32 %v1837, %v1839
  %v1841 = vrot.slane %v1840, 4
  %v1842 = vadd.f32 %v1840, %v1841
  %v1843 = vrot.slane %v1842, 2
  %v1844 = vadd.f32 %v1842, %v1843
  %v1845 = vrot.slane %v1844, 1
  %v1846 = vadd.f32 %v1844, %v1845
  %v1847 = vadd.f32 %v1836, %v1846
  %v1848 = vmul.f32 %v1847, 0.010204081
  %v1849 = vsub.f32 %v227, %v1848
  %v1850 = vsub.f32 %v230, %v1848
  %v1851 = vsub.f32 %v235, %v1848
  %v1852 = vsub.f32 %v238, %v1848
  %v1853 = vsub.f32 %v620, %v1848
  %v1854 = vsub.f32 %v623, %v1848
  %v1855 = vsub.f32 %v628, %v1848
  %v1856 = vsub.f32 %v1012, %v1848
  %v1857 = vsub.f32 %v1015, %v1848
  %v1858 = vsub.f32 %v1020, %v1848
  %v1859 = vsub.f32 %v1796, %v1848
  %v1860 = vsub.f32 %v1799, %v1848
  %v1861 = vsub.f32 %v1804, %v1848
  %v1862 = vmul.f32 %v1849, %v1849
  %v1863 = vmul.f32 %v1850, %v1850
  %v1864 = vmul.f32 %v1851, %v1851
  %v1865 = vmul.f32 %v1852, %v1852
  %v1866 = vadd.f32 %v1862, %v1863
  %v1867 = vadd.f32 %v1866, %v1864
  %v1868 = vadd.f32 %v1867, %v1865
  %v1869 = vrot.slane %v1868, 4
  %v1870 = vadd.f32 %v1868, %v1869
  %v1871 = vrot.slane %v1870, 2
  %v1872 = vadd.f32 %v1870, %v1871
  %v1873 = vrot.slane %v1872, 1
  %v1874 = vadd.f32 %v1872, %v1873
  %v1875 = vadd.f32 %v1874, 0.0
  %v1876 = vmul.f32 %v1853, %v1853
  %v1877 = vmul.f32 %v1854, %v1854
  %v1878 = vmul.f32 %v1855, %v1855
  %v1879 = vadd.f32 %v1876, %v1877
  %v1880 = vadd.f32 %v1879, %v1878
  %v1881 = vrot.slane %v1880, 4
  %v1882 = vadd.f32 %v1880, %v1881
  %v1883 = vrot.slane %v1882, 2
  %v1884 = vadd.f32 %v1882, %v1883
  %v1885 = vrot.slane %v1884, 1
  %v1886 = vadd.f32 %v1884, %v1885
  %v1887 = vadd.f32 %v1875, %v1886
  %v1888 = vmul.f32 %v1856, %v1856
  %v1889 = vmul.f32 %v1857, %v1857
  %v1890 = vmul.f32 %v1858, %v1858
  %v1891 = vadd.f32 %v1888, %v1889
  %v1892 = vadd.f32 %v1891, %v1890
  %v1893 = vrot.slane %v1892, 4
  %v1894 = vadd.f32 %v1892, %v1893
  %v1895 = vrot.slane %v1894, 2
  %v1896 = vadd.f32 %v1894, %v1895
  %v1897 = vrot.slane %v1896, 1
  %v1898 = vadd.f32 %v1896, %v1897
  %v1899 = vadd.f32 %v1887, %v1898
  %v1900 = vmul.f32 %v1859, %v1859
  %v1901 = vmul.f32 %v1860, %v1860
  %v1902 = vmul.f32 %v1861, %v1861
  %v1903 = vadd.f32 %v1900, %v1901
  %v1904 = vsel %vm1838, %v1902, 0.0
  %v1905 = vadd.f32 %v1903, %v1904
  %v1906 = vrot.slane %v1905, 4
  %v1907 = vadd.f32 %v1905, %v1906
  %v1908 = vrot.slane %v1907, 2
  %v1909 = vadd.f32 %v1907, %v1908
  %v1910 = vrot.slane %v1909, 1
  %v1911 = vadd.f32 %v1909, %v1910
  %v1912 = vadd.f32 %v1899, %v1911
  %v1913 = vmul.f32 %v1912, 0.010204081
  %v1914 = vld [vmem:[%s8] sm:$0x1]
  %v1915 = vadd.f32 %v1913, 1e-05
  %v1916 = vrsqrt.pop %v1915
  %v1917 = vmul.f32 %v1914, %v1916
  %v1918 = vld [vmem:[%s9] sm:$0x1]
  %v1920 = vlaneseq
  %v1921 = vshrl.u32 %v1920, 7
  %v1922 = vsub.s32 0, %v1921
  %v1923 = vrot.slane %v1917, %v1922
  %v1925 = vmul.f32 %v1849, %v1923
  %v1926 = vmul.f32 %v1850, %v1923
  %v1927 = vmul.f32 %v1851, %v1923
  %v1928 = vmul.f32 %v1852, %v1923
  %v1930 = vlaneseq
  %v1931 = vshrl.u32 %v1930, 7
  %v1932 = vsub.s32 0, %v1931
  %v1933 = vrot.slane %v1918, %v1932
  %v1935 = vadd.f32 %v1925, %v1933
  %v1936 = vadd.f32 %v1926, %v1933
  %v1937 = vadd.f32 %v1927, %v1933
  %v1938 = vadd.f32 %v1928, %v1933
  %v1939 = vmax.f32 %v1935, 0.0
  %v1940 = vmax.f32 %v1936, 0.0
  %v1941 = vmax.f32 %v1937, 0.0
  %v1942 = vmax.f32 %v1938, 0.0
  %v1943 = vpack.c.bf16 %v1940, %v1939
  %v1944 = vpack.c.bf16 %v1942, %v1941
  %v1947 = vunpack.c.l.b16 %v1943
  %v1948 = vunpack.c.h.b16 %v1943
  %v1949 = vunpack.c.l.b16 %v1944
  %v1950 = vunpack.c.h.b16 %v1944
  %v1951 = vpack.c.b16 %v1947, %v1947
  %v1952 = vpack.c.b16 %v1948, %v1948
  %v1953 = vpack.c.b16 %v1949, %v1949
  %v1954 = vpack.c.b16 %v1950, %v1950
  %1959 = vst [vmem:[%s10] sm:$0xf] %v1951
  %1960 = vst [vmem:[%s10 + $0x4] sm:$0xf] %v1952
  %1961 = vst [vmem:[%s10 + $0x8] sm:$0xf] %v1953
  %1962 = vst [vmem:[%s10 + $0xc] sm:$0xf] %v1954
  %v1963 = vmul.f32 %v1853, %v1923
  %v1964 = vmul.f32 %v1854, %v1923
  %v1965 = vmul.f32 %v1855, %v1923
  %v1966 = vadd.f32 %v1963, %v1933
  %v1967 = vadd.f32 %v1964, %v1933
  %v1968 = vadd.f32 %v1965, %v1933
  %v1969 = vmax.f32 %v1966, 0.0
  %v1970 = vmax.f32 %v1967, 0.0
  %v1971 = vmax.f32 %v1968, 0.0
  %v1972 = vpack.c.bf16 %v1970, %v1969
  %v1973 = vpack.c.bf16 %v1971, %v1971
  %v1976 = vunpack.c.l.b16 %v1972
  %v1977 = vunpack.c.h.b16 %v1972
  %v1978 = vunpack.c.l.b16 %v1973
  %v1979 = vpack.c.b16 %v1976, %v1976
  %v1980 = vpack.c.b16 %v1977, %v1977
  %v1981 = vpack.c.b16 %v1978, %v1978
  %1985 = vst [vmem:[%s11] sm:$0xf] %v1979
  %1986 = vst [vmem:[%s11 + $0x4] sm:$0xf] %v1980
  %1987 = vst [vmem:[%s11 + $0x8] sm:$0xf] %v1981
  %v1988 = vmul.f32 %v1856, %v1923
  %v1989 = vmul.f32 %v1857, %v1923
  %v1990 = vmul.f32 %v1858, %v1923
  %v1991 = vadd.f32 %v1988, %v1933
  %v1992 = vadd.f32 %v1989, %v1933
  %v1993 = vadd.f32 %v1990, %v1933
  %v1994 = vmax.f32 %v1991, 0.0
  %v1995 = vmax.f32 %v1992, 0.0
  %v1996 = vmax.f32 %v1993, 0.0
  %v1997 = vpack.c.bf16 %v1995, %v1994
  %v1998 = vpack.c.bf16 %v1996, %v1996
  %v2001 = vunpack.c.l.b16 %v1997
  %v2002 = vunpack.c.h.b16 %v1997
  %v2003 = vunpack.c.l.b16 %v1998
  %v2004 = vpack.c.b16 %v2001, %v2001
  %v2005 = vpack.c.b16 %v2002, %v2002
  %v2006 = vpack.c.b16 %v2003, %v2003
  %2010 = vst [vmem:[%s12] sm:$0xf] %v2004
  %2011 = vst [vmem:[%s12 + $0x4] sm:$0xf] %v2005
  %2012 = vst [vmem:[%s12 + $0x8] sm:$0xf] %v2006
  %v2013 = vmul.f32 %v1859, %v1923
  %v2014 = vmul.f32 %v1860, %v1923
  %v2015 = vmul.f32 %v1861, %v1923
  %v2016 = vadd.f32 %v2013, %v1933
  %v2017 = vadd.f32 %v2014, %v1933
  %v2018 = vadd.f32 %v2015, %v1933
  %v2019 = vmax.f32 %v2016, 0.0
  %v2020 = vmax.f32 %v2017, 0.0
  %v2021 = vmax.f32 %v2018, 0.0
  %v2022 = vpack.c.bf16 %v2020, %v2019
  %v2023 = vpack.c.bf16 %v2021, %v2021
  %v2026 = vunpack.c.l.b16 %v2022
  %v2027 = vunpack.c.h.b16 %v2022
  %v2028 = vunpack.c.l.b16 %v2023
  %v2029 = vpack.c.b16 %v2026, %v2026
  %v2030 = vpack.c.b16 %v2027, %v2027
  %v2031 = vpack.c.b16 %v2028, %v2028
  %2035 = vst [vmem:[%s13] sm:$0xf] %v2029
  %2036 = vst [vmem:[%s13 + $0x4] sm:$0xf] %v2030
  %2037 = vst [vmem:[%s13 + $0x8] sm:$0x1] %v2031
  // Predicated region
  $region42: #{generator_forward.5} parent=0 // pred_check
    _
  $region43: #{generator_forward.5} parent=0 // pred_check_branch
    %2039 = sbr.rel (0) target = $region45
  $region44: #{generator_forward.5} parent=0 // pred_region
    _
  $region45: #{generator_forward.5} parent=0 // pred_fallthru
    _
  // Predicated region
  $region46: #{generator_forward.5} parent=0 // pred_check
    _
  $region47: #{generator_forward.5} parent=0 // pred_check_branch
    %2041 = sbr.rel (0) target = $region49
  $region48: #{generator_forward.5} parent=0 // pred_region
    _
  $region49: #{generator_forward.5} parent=0 // pred_fallthru
    _
  // Predicated region
  $region50: #{generator_forward.5} parent=0 // pred_check
    _
  $region51: #{generator_forward.5} parent=0 // pred_check_branch
    %2043 = sbr.rel (0) target = $region53
  $region52: #{generator_forward.5} parent=0 // pred_region
    _
  $region53: #{generator_forward.5} parent=0 // pred_fallthru
    _
  // Predicated region
  $region54: #{generator_forward.5} parent=0 // pred_check
    _
  $region55: #{generator_forward.5} parent=0 // pred_check_branch
    %2045 = sbr.rel (0) target = $region57
  $region56: #{generator_forward.5} parent=0 // pred_region
    _
  $region57: #{generator_forward.5} parent=0 // pred_fallthru
    _
  // Predicated region
  $region58: #{generator_forward.5} parent=0 // pred_check
    _
  $region59: #{generator_forward.5} parent=0 // pred_check_branch
    %2047 = sbr.rel (0) target = $region61
  $region60: #{generator_forward.5} parent=0 // pred_region
    _
  $region61: #{generator_forward.5} parent=0 // pred_fallthru
    _
  // Predicated region
  $region62: #{generator_forward.5} parent=0 // pred_check
    _
  $region63: #{generator_forward.5} parent=0 // pred_check_branch
    %2049 = sbr.rel (0) target = $region65
  $region64: #{generator_forward.5} parent=0 // pred_region
    _
  $region65: #{generator_forward.5} parent=0 // pred_fallthru
    _
  // Predicated region
  $region66: #{generator_forward.5} parent=0 // pred_check
    _
  $region67: #{generator_forward.5} parent=0 // pred_check_branch
    %2051 = sbr.rel (0) target = $region69
  $region68: #{generator_forward.5} parent=0 // pred_region
    _
  $region69: #{generator_forward.5} parent=0 // pred_fallthru
    _
  // Predicated region
  $region70: #{generator_forward.5} parent=0 // pred_check
    _
  $region71: #{generator_forward.5} parent=0 // pred_check_branch
    %2053 = sbr.rel (0) target = $region73
  $region72: #{generator_forward.5} parent=0 // pred_region
    _
  $region73: #{generator_forward.5} parent=0 // pred_fallthru
    _

// kernel: generator_forward.6
$region0: #{generator_forward.6}
  #allocation0 [shape = 'u32[]', space=smem, size = 0x4, offset = 0x4, fixed_abs, tag = 'smem constant byte address 0x4 - core index']
  #allocation1 [shape = 'u32[144,128]{1,0:T(1,128)}', space=vmem, size = 0x12000, scoped, tag = 'internal scratch']
  %s0 = inlined_call_operand.vmem [shape: bf16[98,512], index: 0, kind: input, shape index: {}]
  %s1 = inlined_call_operand.vmem [shape: bf16[98,512], index: 1, kind: input, shape index: {}]
  %s2 = inlined_call_operand.vmem [shape: bf16[98,512], index: 2, kind: input, shape index: {}]
  %s3 = inlined_call_operand.vmem [shape: bf16[98,512], index: 3, kind: input, shape index: {}]
  %s4 = inlined_call_operand.vmem [shape: bf16[512,128], index: 4, kind: input, shape index: {}]
  %s5 = inlined_call_operand.vmem [shape: bf16[512,128], index: 5, kind: input, shape index: {}]
  %s6 = inlined_call_operand.vmem [shape: bf16[512,128], index: 6, kind: input, shape index: {}]
  %s7 = inlined_call_operand.vmem [shape: bf16[512,128], index: 7, kind: input, shape index: {}]
  %s8 = inlined_call_operand.vmem [shape: f32[1,128], index: 8, kind: input, shape index: {}]
  %s9 = inlined_call_operand.vmem [shape: f32[1,128], index: 9, kind: input, shape index: {}]
  %s10 = inlined_call_operand.vmem [shape: bf16[98,128], index: 10, kind: output, shape index: {0}]
  %s11 = inlined_call_operand.vmem [shape: bf16[98,128], index: 11, kind: output, shape index: {1}]
  %s12 = inlined_call_operand.vmem [shape: bf16[98,128], index: 12, kind: output, shape index: {2}]
  %s13 = inlined_call_operand.vmem [shape: bf16[98,128], index: 13, kind: output, shape index: {3}]
  %14 = xla_tuple %s10, %s11, %s12, %s13
  %s15 = sld [smem:[#allocation0]]
  $region74: #{generator_forward.6} parent=0
    _
  %s17 = ssub.s32 1, %s15
  %s18 = scalar_select 0, %s17, %s15
  // Predicated region
  $region2: #{generator_forward.6} parent=0 // pred_check
    _
  $region3: #{generator_forward.6} parent=0 // pred_check_branch
    %20 = sbr.rel (0) target = $region5
  $region4: #{generator_forward.6} parent=0 // pred_region
    _
  $region5: #{generator_forward.6} parent=0 // pred_fallthru
    _
  // Predicated region
  $region6: #{generator_forward.6} parent=0 // pred_check
    _
  $region7: #{generator_forward.6} parent=0 // pred_check_branch
    %22 = sbr.rel (0) target = $region9
  $region8: #{generator_forward.6} parent=0 // pred_region
    _
  $region9: #{generator_forward.6} parent=0 // pred_fallthru
    _
  // Predicated region
  $region10: #{generator_forward.6} parent=0 // pred_check
    _
  $region11: #{generator_forward.6} parent=0 // pred_check_branch
    %24 = sbr.rel (0) target = $region13
  $region12: #{generator_forward.6} parent=0 // pred_region
    _
  $region13: #{generator_forward.6} parent=0 // pred_fallthru
    _
  // Predicated region
  $region14: #{generator_forward.6} parent=0 // pred_check
    _
  $region15: #{generator_forward.6} parent=0 // pred_check_branch
    %26 = sbr.rel (0) target = $region17
  $region16: #{generator_forward.6} parent=0 // pred_region
    _
  $region17: #{generator_forward.6} parent=0 // pred_fallthru
    _
  // Predicated region
  $region18: #{generator_forward.6} parent=0 // pred_check
    _
  $region19: #{generator_forward.6} parent=0 // pred_check_branch
    %28 = sbr.rel (0) target = $region21
  $region20: #{generator_forward.6} parent=0 // pred_region
    _
  $region21: #{generator_forward.6} parent=0 // pred_fallthru
    _
  // Predicated region
  $region22: #{generator_forward.6} parent=0 // pred_check
    _
  $region23: #{generator_forward.6} parent=0 // pred_check_branch
    %30 = sbr.rel (0) target = $region25
  $region24: #{generator_forward.6} parent=0 // pred_region
    _
  $region25: #{generator_forward.6} parent=0 // pred_fallthru
    _
  // Predicated region
  $region26: #{generator_forward.6} parent=0 // pred_check
    _
  $region27: #{generator_forward.6} parent=0 // pred_check_branch
    %32 = sbr.rel (0) target = $region29
  $region28: #{generator_forward.6} parent=0 // pred_region
    _
  $region29: #{generator_forward.6} parent=0 // pred_fallthru
    _
  // Predicated region
  $region30: #{generator_forward.6} parent=0 // pred_check
    _
  $region31: #{generator_forward.6} parent=0 // pred_check_branch
    %34 = sbr.rel (0) target = $region33
  $region32: #{generator_forward.6} parent=0 // pred_region
    _
  $region33: #{generator_forward.6} parent=0 // pred_fallthru
    _
  // Predicated region
  $region34: #{generator_forward.6} parent=0 // pred_check
    _
  $region35: #{generator_forward.6} parent=0 // pred_check_branch
    %36 = sbr.rel (0) target = $region37
  $region36: #{generator_forward.6} parent=0 // pred_region
    _
  $region37: #{generator_forward.6} parent=0 // pred_fallthru
    _
  // Predicated region
  $region38: #{generator_forward.6} parent=0 // pred_check
    _
  $region39: #{generator_forward.6} parent=0 // pred_check_branch
    %38 = sbr.rel (0) target = $region41
  $region40: #{generator_forward.6} parent=0 // pred_region
    _
  $region41: #{generator_forward.6} parent=0 // pred_fallthru
    _
  %v40 = vld [vmem:[%s0] sm:$0xff]
  %v41 = vld [vmem:[%s0 + $0x8] sm:$0xff]
  %v42 = vld [vmem:[%s0 + $0x10] sm:$0xff]
  %v43 = vld [vmem:[%s0 + $0x18] sm:$0xff]
  %v44 = vld [vmem:[%s0 + $0x20] sm:$0xff]
  %v45 = vld [vmem:[%s0 + $0x28] sm:$0xff]
  %v46 = vld [vmem:[%s0 + $0x30] sm:$0xff]
  %v47 = vld [vmem:[%s0 + $0x38] sm:$0xff]
  %v48 = vld [vmem:[%s0 + $0x40] sm:$0xff]
  %v49 = vld [vmem:[%s0 + $0x48] sm:$0xff]
  %v50 = vld [vmem:[%s0 + $0x50] sm:$0xff]
  %v51 = vld [vmem:[%s0 + $0x58] sm:$0xff]
  %v52 = vld [vmem:[%s0 + $0x60] sm:$0xff]
  %v53 = vld [vmem:[%s0 + $0x68] sm:$0xff]
  %v54 = vld [vmem:[%s0 + $0x70] sm:$0xff]
  %v55 = vld [vmem:[%s0 + $0x78] sm:$0xff]
  %v56 = vld [vmem:[%s0 + $0x80] sm:$0xff]
  %v57 = vld [vmem:[%s0 + $0x88] sm:$0xff]
  %v58 = vld [vmem:[%s0 + $0x90] sm:$0xff]
  %v59 = vld [vmem:[%s0 + $0x98] sm:$0xff]
  %v60 = vld [vmem:[%s0 + $0xa0] sm:$0xff]
  %v61 = vld [vmem:[%s0 + $0xa8] sm:$0xff]
  %v62 = vld [vmem:[%s0 + $0xb0] sm:$0xff]
  %v63 = vld [vmem:[%s0 + $0xb8] sm:$0xff]
  %v64 = vld [vmem:[%s0 + $0xc0] sm:$0x11]
  %v65 = vld [vmem:[%s0 + $0xc8] sm:$0x11]
  %v66 = vld [vmem:[%s4] sm:$0xf]
  %v67 = vld [vmem:[%s4 + $0x4] sm:$0xf]
  %v68 = vld [vmem:[%s4 + $0x8] sm:$0xf]
  %v69 = vld [vmem:[%s4 + $0xc] sm:$0xf]
  %v70 = vld [vmem:[%s4 + $0x10] sm:$0xf]
  %v71 = vld [vmem:[%s4 + $0x14] sm:$0xf]
  %v72 = vld [vmem:[%s4 + $0x18] sm:$0xf]
  %v73 = vld [vmem:[%s4 + $0x1c] sm:$0xf]
  %v74 = vld [vmem:[%s4 + $0x20] sm:$0xf]
  %v75 = vld [vmem:[%s4 + $0x24] sm:$0xf]
  %v76 = vld [vmem:[%s4 + $0x28] sm:$0xf]
  %v77 = vld [vmem:[%s4 + $0x2c] sm:$0xf]
  %v78 = vld [vmem:[%s4 + $0x30] sm:$0xf]
  %v79 = vld [vmem:[%s4 + $0x34] sm:$0xf]
  %v80 = vld [vmem:[%s4 + $0x38] sm:$0xf]
  %v81 = vld [vmem:[%s4 + $0x3c] sm:$0xf]
  %v82 = vld [vmem:[%s4 + $0x40] sm:$0xf]
  %v83 = vld [vmem:[%s4 + $0x44] sm:$0xf]
  %v84 = vld [vmem:[%s4 + $0x48] sm:$0xf]
  %v85 = vld [vmem:[%s4 + $0x4c] sm:$0xf]
  %v86 = vld [vmem:[%s4 + $0x50] sm:$0xf]
  %v87 = vld [vmem:[%s4 + $0x54] sm:$0xf]
  %v88 = vld [vmem:[%s4 + $0x58] sm:$0xf]
  %v89 = vld [vmem:[%s4 + $0x5c] sm:$0xf]
  %v90 = vld [vmem:[%s4 + $0x60] sm:$0xf]
  %v91 = vld [vmem:[%s4 + $0x64] sm:$0xf]
  %v92 = vld [vmem:[%s4 + $0x68] sm:$0xf]
  %v93 = vld [vmem:[%s4 + $0x6c] sm:$0xf]
  %v94 = vld [vmem:[%s4 + $0x70] sm:$0xf]
  %v95 = vld [vmem:[%s4 + $0x74] sm:$0xf]
  %v96 = vld [vmem:[%s4 + $0x78] sm:$0xf]
  %v97 = vld [vmem:[%s4 + $0x7c] sm:$0xf]
  %v98 = vld [vmem:[%s4 + $0x80] sm:$0xf]
  %v99 = vld [vmem:[%s4 + $0x84] sm:$0xf]
  %v100 = vld [vmem:[%s4 + $0x88] sm:$0xf]
  %v101 = vld [vmem:[%s4 + $0x8c] sm:$0xf]
  %v102 = vld [vmem:[%s4 + $0x90] sm:$0xf]
  %v103 = vld [vmem:[%s4 + $0x94] sm:$0xf]
  %v104 = vld [vmem:[%s4 + $0x98] sm:$0xf]
  %v105 = vld [vmem:[%s4 + $0x9c] sm:$0xf]
  %v106 = vld [vmem:[%s4 + $0xa0] sm:$0xf]
  %v107 = vld [vmem:[%s4 + $0xa4] sm:$0xf]
  %v108 = vld [vmem:[%s4 + $0xa8] sm:$0xf]
  %v109 = vld [vmem:[%s4 + $0xac] sm:$0xf]
  %v110 = vld [vmem:[%s4 + $0xb0] sm:$0xf]
  %v111 = vld [vmem:[%s4 + $0xb4] sm:$0xf]
  %v112 = vld [vmem:[%s4 + $0xb8] sm:$0xf]
  %v113 = vld [vmem:[%s4 + $0xbc] sm:$0xf]
  %v114 = vld [vmem:[%s4 + $0xc0] sm:$0xf]
  %v115 = vld [vmem:[%s4 + $0xc4] sm:$0xf]
  %v116 = vld [vmem:[%s4 + $0xc8] sm:$0xf]
  %v117 = vld [vmem:[%s4 + $0xcc] sm:$0xf]
  %v118 = vld [vmem:[%s4 + $0xd0] sm:$0xf]
  %v119 = vld [vmem:[%s4 + $0xd4] sm:$0xf]
  %v120 = vld [vmem:[%s4 + $0xd8] sm:$0xf]
  %v121 = vld [vmem:[%s4 + $0xdc] sm:$0xf]
  %v122 = vld [vmem:[%s4 + $0xe0] sm:$0xf]
  %v123 = vld [vmem:[%s4 + $0xe4] sm:$0xf]
  %v124 = vld [vmem:[%s4 + $0xe8] sm:$0xf]
  %v125 = vld [vmem:[%s4 + $0xec] sm:$0xf]
  %v126 = vld [vmem:[%s4 + $0xf0] sm:$0xf]
  %v127 = vld [vmem:[%s4 + $0xf4] sm:$0xf]
  %v128 = vld [vmem:[%s4 + $0xf8] sm:$0xf]
  %v129 = vld [vmem:[%s4 + $0xfc] sm:$0xf]
  %v156 = vunpack.c.l.b16 %v40
  %v157 = vunpack.c.h.b16 %v40
  %v158 = vunpack.c.l.b16 %v41
  %v159 = vunpack.c.h.b16 %v41
  %v160 = vunpack.c.l.b16 %v42
  %v161 = vunpack.c.h.b16 %v42
  %v162 = vunpack.c.l.b16 %v43
  %v163 = vunpack.c.h.b16 %v43
  %v164 = vunpack.c.l.b16 %v44
  %v165 = vunpack.c.h.b16 %v44
  %v166 = vunpack.c.l.b16 %v45
  %v167 = vunpack.c.h.b16 %v45
  %v168 = vunpack.c.l.b16 %v46
  %v169 = vunpack.c.h.b16 %v46
  %v170 = vunpack.c.l.b16 %v47
  %v171 = vunpack.c.h.b16 %v47
  %v172 = vunpack.c.l.b16 %v48
  %v173 = vunpack.c.h.b16 %v48
  %v174 = vunpack.c.l.b16 %v49
  %v175 = vunpack.c.h.b16 %v49
  %v176 = vunpack.c.l.b16 %v50
  %v177 = vunpack.c.h.b16 %v50
  %v178 = vunpack.c.l.b16 %v51
  %v179 = vunpack.c.h.b16 %v51
  %v180 = vunpack.c.l.b16 %v52
  %v181 = vunpack.c.h.b16 %v52
  %v182 = vunpack.c.l.b16 %v53
  %v183 = vunpack.c.h.b16 %v53
  %v184 = vunpack.c.l.b16 %v54
  %v185 = vunpack.c.h.b16 %v54
  %v186 = vunpack.c.l.b16 %v55
  %v187 = vunpack.c.h.b16 %v55
  %v188 = vunpack.c.l.b16 %v56
  %v189 = vunpack.c.h.b16 %v56
  %v190 = vunpack.c.l.b16 %v57
  %v191 = vunpack.c.h.b16 %v57
  %v192 = vunpack.c.l.b16 %v58
  %v193 = vunpack.c.h.b16 %v58
  %v194 = vunpack.c.l.b16 %v59
  %v195 = vunpack.c.h.b16 %v59
  %v196 = vunpack.c.l.b16 %v60
  %v197 = vunpack.c.h.b16 %v60
  %v198 = vunpack.c.l.b16 %v61
  %v199 = vunpack.c.h.b16 %v61
  %v200 = vunpack.c.l.b16 %v62
  %v201 = vunpack.c.h.b16 %v62
  %v202 = vunpack.c.l.b16 %v63
  %v203 = vunpack.c.h.b16 %v63
  %v204 = vunpack.c.l.b16 %v64
  %v205 = vunpack.c.h.b16 %v64
  %v206 = vunpack.c.l.b16 %v65
  %v207 = vunpack.c.h.b16 %v65
  %v208 = vpack.c.b16 %v160, %v156
  %v209 = vpack.c.b16 %v161, %v157
  %v210 = vpack.c.b16 %v162, %v158
  %v211 = vpack.c.b16 %v163, %v159
  %v212 = vpack.c.b16 %v168, %v164
  %v213 = vpack.c.b16 %v169, %v165
  %v214 = vpack.c.b16 %v170, %v166
  %v215 = vpack.c.b16 %v171, %v167
  %v216 = vpack.c.b16 %v176, %v172
  %v217 = vpack.c.b16 %v177, %v173
  %v218 = vpack.c.b16 %v178, %v174
  %v219 = vpack.c.b16 %v179, %v175
  %v220 = vpack.c.b16 %v184, %v180
  %v221 = vpack.c.b16 %v185, %v181
  %v222 = vpack.c.b16 %v186, %v182
  %v223 = vpack.c.b16 %v187, %v183
  %v224 = vpack.c.b16 %v192, %v188
  %v225 = vpack.c.b16 %v193, %v189
  %v226 = vpack.c.b16 %v194, %v190
  %v227 = vpack.c.b16 %v195, %v191
  %v228 = vpack.c.b16 %v200, %v196
  %v229 = vpack.c.b16 %v201, %v197
  %v230 = vpack.c.b16 %v202, %v198
  %v231 = vpack.c.b16 %v203, %v199
  %v232 = vpack.c.b16 %v204, %v204
  %v233 = vpack.c.b16 %v205, %v205
  %v234 = vpack.c.b16 %v206, %v206
  %v235 = vpack.c.b16 %v207, %v207
  %v328 = vunpack.c.l.b16 %v66
  %v329 = vunpack.c.l.b16 %v67
  %v330 = vunpack.c.l.b16 %v68
  %v331 = vunpack.c.l.b16 %v69
  %v332 = vunpack.c.l.b16 %v70
  %v333 = vunpack.c.l.b16 %v71
  %v334 = vunpack.c.l.b16 %v72
  %v335 = vunpack.c.l.b16 %v73
  %v336 = vunpack.c.l.b16 %v74
  %v337 = vunpack.c.l.b16 %v75
  %v338 = vunpack.c.l.b16 %v76
  %v339 = vunpack.c.l.b16 %v77
  %v340 = vunpack.c.l.b16 %v78
  %v341 = vunpack.c.l.b16 %v79
  %v342 = vunpack.c.l.b16 %v80
  %v343 = vunpack.c.l.b16 %v81
  %v344 = vunpack.c.l.b16 %v82
  %v345 = vunpack.c.l.b16 %v83
  %v346 = vunpack.c.l.b16 %v84
  %v347 = vunpack.c.l.b16 %v85
  %v348 = vunpack.c.l.b16 %v86
  %v349 = vunpack.c.l.b16 %v87
  %v350 = vunpack.c.l.b16 %v88
  %v351 = vunpack.c.l.b16 %v89
  %v352 = vunpack.c.l.b16 %v90
  %v353 = vunpack.c.l.b16 %v91
  %v354 = vunpack.c.l.b16 %v92
  %v355 = vunpack.c.l.b16 %v93
  %v356 = vunpack.c.l.b16 %v94
  %v357 = vunpack.c.l.b16 %v95
  %v358 = vunpack.c.l.b16 %v96
  %v359 = vunpack.c.l.b16 %v97
  %v360 = vunpack.c.l.b16 %v98
  %v361 = vunpack.c.l.b16 %v99
  %v362 = vunpack.c.l.b16 %v100
  %v363 = vunpack.c.l.b16 %v101
  %v364 = vunpack.c.l.b16 %v102
  %v365 = vunpack.c.l.b16 %v103
  %v366 = vunpack.c.l.b16 %v104
  %v367 = vunpack.c.l.b16 %v105
  %v368 = vunpack.c.l.b16 %v106
  %v369 = vunpack.c.l.b16 %v107
  %v370 = vunpack.c.l.b16 %v108
  %v371 = vunpack.c.l.b16 %v109
  %v372 = vunpack.c.l.b16 %v110
  %v373 = vunpack.c.l.b16 %v111
  %v374 = vunpack.c.l.b16 %v112
  %v375 = vunpack.c.l.b16 %v113
  %v376 = vunpack.c.l.b16 %v114
  %v377 = vunpack.c.l.b16 %v115
  %v378 = vunpack.c.l.b16 %v116
  %v379 = vunpack.c.l.b16 %v117
  %v380 = vunpack.c.l.b16 %v118
  %v381 = vunpack.c.l.b16 %v119
  %v382 = vunpack.c.l.b16 %v120
  %v383 = vunpack.c.l.b16 %v121
  %v384 = vunpack.c.l.b16 %v122
  %v385 = vunpack.c.l.b16 %v123
  %v386 = vunpack.c.l.b16 %v124
  %v387 = vunpack.c.l.b16 %v125
  %v388 = vunpack.c.l.b16 %v126
  %v389 = vunpack.c.l.b16 %v127
  %v390 = vunpack.c.l.b16 %v128
  %v391 = vunpack.c.l.b16 %v129
  %v392 = vpack.c.b16 %v329, %v328
  %v393 = vpack.c.b16 %v331, %v330
  %v394 = vpack.c.b16 %v333, %v332
  %v395 = vpack.c.b16 %v335, %v334
  %v396 = vpack.c.b16 %v337, %v336
  %v397 = vpack.c.b16 %v339, %v338
  %v398 = vpack.c.b16 %v341, %v340
  %v399 = vpack.c.b16 %v343, %v342
  %v400 = vpack.c.b16 %v345, %v344
  %v401 = vpack.c.b16 %v347, %v346
  %v402 = vpack.c.b16 %v349, %v348
  %v403 = vpack.c.b16 %v351, %v350
  %v404 = vpack.c.b16 %v353, %v352
  %v405 = vpack.c.b16 %v355, %v354
  %v406 = vpack.c.b16 %v357, %v356
  %v407 = vpack.c.b16 %v359, %v358
  %v408 = vpack.c.b16 %v361, %v360
  %v409 = vpack.c.b16 %v363, %v362
  %v410 = vpack.c.b16 %v365, %v364
  %v411 = vpack.c.b16 %v367, %v366
  %v412 = vpack.c.b16 %v369, %v368
  %v413 = vpack.c.b16 %v371, %v370
  %v414 = vpack.c.b16 %v373, %v372
  %v415 = vpack.c.b16 %v375, %v374
  %v416 = vpack.c.b16 %v377, %v376
  %v417 = vpack.c.b16 %v379, %v378
  %v418 = vpack.c.b16 %v381, %v380
  %v419 = vpack.c.b16 %v383, %v382
  %v420 = vpack.c.b16 %v385, %v384
  %v421 = vpack.c.b16 %v387, %v386
  %v422 = vpack.c.b16 %v389, %v388
  %v423 = vpack.c.b16 %v391, %v390
  %456 = vmatprep.subr.bf16.mxu0 0
  %457 = vmatpush1.bf16.msra.mxu0 %v392
  %458 = vmatprep.subr.bf16.mxu0 0
  %459 = vmatpush1.bf16.msra.mxu0 %v393
  %460 = vmatprep.subr.bf16.mxu0 0
  %461 = vmatpush1.bf16.msra.mxu0 %v394
  %462 = vmatprep.subr.bf16.mxu0 0
  %463 = vmatpush1.bf16.msra.mxu0 %v395
  %464 = vmatprep.subr.bf16.mxu0 0
  %465 = vmatpush1.bf16.msra.mxu0 %v396
  %466 = vmatprep.subr.bf16.mxu0 0
  %467 = vmatpush1.bf16.msra.mxu0 %v397
  %468 = vmatprep.subr.bf16.mxu0 0
  %469 = vmatpush1.bf16.msra.mxu0 %v398
  %470 = vmatprep.subr.bf16.mxu0 0
  %471 = vmatpush1.bf16.msra.mxu0 %v399
  %472 = vmatprep.subr.bf16.mxu0 0
  %473 = vmatpush1.bf16.msra.mxu0 %v400
  %474 = vmatprep.subr.bf16.mxu0 0
  %475 = vmatpush1.bf16.msra.mxu0 %v401
  %476 = vmatprep.subr.bf16.mxu0 0
  %477 = vmatpush1.bf16.msra.mxu0 %v402
  %478 = vmatprep.subr.bf16.mxu0 0
  %479 = vmatpush1.bf16.msra.mxu0 %v403
  %480 = vmatprep.subr.bf16.mxu0 0
  %481 = vmatpush1.bf16.msra.mxu0 %v404
  %482 = vmatprep.subr.bf16.mxu0 0
  %483 = vmatpush1.bf16.msra.mxu0 %v405
  %484 = vmatprep.subr.bf16.mxu0 0
  %485 = vmatpush1.bf16.msra.mxu0 %v406
  %486 = vmatprep.subr.bf16.mxu0 0
  %487 = vmatpush1.bf16.msra.mxu0 %v407
  %488 = vmatprep.mubr.bf16.mxu0 %v209
  %489 = vmatmul.mubr.bf16.gmra.mrb[0].mxu0 %v208
  %v490 = vpop.f32.mrb[0].mxu0
  %v491 = vadd.f32 0.0, %v490
  %v492 = vpop.f32.mrb[0].mxu0
  %v493 = vpop.f32.mrb[0].mxu0
  %v494 = vadd.f32 0.0, %v493
  %v495 = vpop.f32.mrb[0].mxu0
  %496 = vmatprep.mubr.bf16.mxu0 %v213
  %497 = vmatmul.mubr.bf16.gmra.mrb[0].mxu0 %v212
  %v498 = vpop.f32.mrb[0].mxu0
  %v499 = vadd.f32 0.0, %v498
  %v500 = vpop.f32.mrb[0].mxu0
  %v501 = vpop.f32.mrb[0].mxu0
  %v502 = vadd.f32 0.0, %v501
  %v503 = vpop.f32.mrb[0].mxu0
  %504 = vmatprep.mubr.bf16.mxu0 %v217
  %505 = vmatmul.mubr.bf16.gmra.mrb[0].mxu0 %v216
  %v506 = vpop.f32.mrb[0].mxu0
  %v507 = vadd.f32 0.0, %v506
  %v508 = vpop.f32.mrb[0].mxu0
  %v509 = vpop.f32.mrb[0].mxu0
  %v510 = vadd.f32 0.0, %v509
  %v511 = vpop.f32.mrb[0].mxu0
  %512 = vmatprep.mubr.bf16.mxu0 %v221
  %513 = vmatmul.mubr.bf16.gmra.mrb[0].mxu0 %v220
  %v514 = vpop.f32.mrb[0].mxu0
  %v515 = vadd.f32 0.0, %v514
  %v516 = vpop.f32.mrb[0].mxu0
  %v517 = vpop.f32.mrb[0].mxu0
  %v518 = vadd.f32 0.0, %v517
  %v519 = vpop.f32.mrb[0].mxu0
  %520 = vmatprep.mubr.bf16.mxu0 %v225
  %521 = vmatmul.mubr.bf16.gmra.mrb[0].mxu0 %v224
  %v522 = vpop.f32.mrb[0].mxu0
  %v523 = vadd.f32 0.0, %v522
  %v524 = vpop.f32.mrb[0].mxu0
  %v525 = vpop.f32.mrb[0].mxu0
  %v526 = vadd.f32 0.0, %v525
  %v527 = vpop.f32.mrb[0].mxu0
  %528 = vmatprep.mubr.bf16.mxu0 %v229
  %529 = vmatmul.mubr.bf16.gmra.mrb[0].mxu0 %v228
  %v530 = vpop.f32.mrb[0].mxu0
  %v531 = vadd.f32 0.0, %v530
  %v532 = vpop.f32.mrb[0].mxu0
  %v533 = vpop.f32.mrb[0].mxu0
  %v534 = vadd.f32 0.0, %v533
  %v535 = vpop.f32.mrb[0].mxu0
  %536 = vmatprep.mubr.bf16.mxu0 %v233
  %537 = vmatmul.mubr.bf16.gmra.mrb[0].mxu0 %v232
  %v538 = vpop.f32.mrb[0].mxu0
  %v539 = vadd.f32 0.0, %v538
  %v540 = vpop.f32.mrb[0].mxu0
  %v541 = vpop.f32.mrb[0].mxu0
  %v542 = vpop.f32.mrb[0].mxu0
  %543 = vdwg.mxu0
  %544 = vmatprep.subr.bf16.mxu0 0
  %545 = vmatpush1.bf16.msra.mxu0 %v408
  %546 = vmatprep.subr.bf16.mxu0 0
  %547 = vmatpush1.bf16.msra.mxu0 %v409
  %548 = vmatprep.subr.bf16.mxu0 0
  %549 = vmatpush1.bf16.msra.mxu0 %v410
  %550 = vmatprep.subr.bf16.mxu0 0
  %551 = vmatpush1.bf16.msra.mxu0 %v411
  %552 = vmatprep.subr.bf16.mxu0 0
  %553 = vmatpush1.bf16.msra.mxu0 %v412
  %554 = vmatprep.subr.bf16.mxu0 0
  %555 = vmatpush1.bf16.msra.mxu0 %v413
  %556 = vmatprep.subr.bf16.mxu0 0
  %557 = vmatpush1.bf16.msra.mxu0 %v414
  %558 = vmatprep.subr.bf16.mxu0 0
  %559 = vmatpush1.bf16.msra.mxu0 %v415
  %560 = vmatprep.subr.bf16.mxu0 0
  %561 = vmatpush1.bf16.msra.mxu0 %v416
  %562 = vmatprep.subr.bf16.mxu0 0
  %563 = vmatpush1.bf16.msra.mxu0 %v417
  %564 = vmatprep.subr.bf16.mxu0 0
  %565 = vmatpush1.bf16.msra.mxu0 %v418
  %566 = vmatprep.subr.bf16.mxu0 0
  %567 = vmatpush1.bf16.msra.mxu0 %v419
  %568 = vmatprep.subr.bf16.mxu0 0
  %569 = vmatpush1.bf16.msra.mxu0 %v420
  %570 = vmatprep.subr.bf16.mxu0 0
  %571 = vmatpush1.bf16.msra.mxu0 %v421
  %572 = vmatprep.subr.bf16.mxu0 0
  %573 = vmatpush1.bf16.msra.mxu0 %v422
  %574 = vmatprep.subr.bf16.mxu0 0
  %575 = vmatpush1.bf16.msra.mxu0 %v423
  %576 = vmatprep.mubr.bf16.mxu0 %v211
  %577 = vmatmul.mubr.bf16.gmra.mrb[0].mxu0 %v210
  %v578 = vpop.f32.mrb[0].mxu0
  %v579 = vadd.f32 %v491, %v578
  %v580 = vpop.f32.mrb[0].mxu0
  %v581 = vpop.f32.mrb[0].mxu0
  %v582 = vadd.f32 %v494, %v581
  %v583 = vpop.f32.mrb[0].mxu0
  %584 = vmatprep.mubr.bf16.mxu0 %v215
  %585 = vmatmul.mubr.bf16.gmra.mrb[0].mxu0 %v214
  %v586 = vpop.f32.mrb[0].mxu0
  %v587 = vadd.f32 %v499, %v586
  %v588 = vpop.f32.mrb[0].mxu0
  %v589 = vpop.f32.mrb[0].mxu0
  %v590 = vadd.f32 %v502, %v589
  %v591 = vpop.f32.mrb[0].mxu0
  %592 = vmatprep.mubr.bf16.mxu0 %v219
  %593 = vmatmul.mubr.bf16.gmra.mrb[0].mxu0 %v218
  %v594 = vpop.f32.mrb[0].mxu0
  %v595 = vadd.f32 %v507, %v594
  %v596 = vpop.f32.mrb[0].mxu0
  %v597 = vpop.f32.mrb[0].mxu0
  %v598 = vadd.f32 %v510, %v597
  %v599 = vpop.f32.mrb[0].mxu0
  %600 = vmatprep.mubr.bf16.mxu0 %v223
  %601 = vmatmul.mubr.bf16.gmra.mrb[0].mxu0 %v222
  %v602 = vpop.f32.mrb[0].mxu0
  %v603 = vadd.f32 %v515, %v602
  %v604 = vpop.f32.mrb[0].mxu0
  %v605 = vpop.f32.mrb[0].mxu0
  %v606 = vadd.f32 %v518, %v605
  %v607 = vpop.f32.mrb[0].mxu0
  %608 = vmatprep.mubr.bf16.mxu0 %v227
  %609 = vmatmul.mubr.bf16.gmra.mrb[0].mxu0 %v226
  %v610 = vpop.f32.mrb[0].mxu0
  %v611 = vadd.f32 %v523, %v610
  %v612 = vpop.f32.mrb[0].mxu0
  %v613 = vpop.f32.mrb[0].mxu0
  %v614 = vadd.f32 %v526, %v613
  %v615 = vpop.f32.mrb[0].mxu0
  %616 = vmatprep.mubr.bf16.mxu0 %v231
  %617 = vmatmul.mubr.bf16.gmra.mrb[0].mxu0 %v230
  %v618 = vpop.f32.mrb[0].mxu0
  %v619 = vadd.f32 %v531, %v618
  %v620 = vpop.f32.mrb[0].mxu0
  %v621 = vpop.f32.mrb[0].mxu0
  %v622 = vadd.f32 %v534, %v621
  %v623 = vpop.f32.mrb[0].mxu0
  %624 = vmatprep.mubr.bf16.mxu0 %v235
  %625 = vmatmul.mubr.bf16.gmra.mrb[0].mxu0 %v234
  %v626 = vpop.f32.mrb[0].mxu0
  %v627 = vadd.f32 %v539, %v626
  %v628 = vpop.f32.mrb[0].mxu0
  %v629 = vpop.f32.mrb[0].mxu0
  %v630 = vpop.f32.mrb[0].mxu0
  %631 = vdwg.mxu0
  %v632 = vld [vmem:[%s1] sm:$0xff]
  %v633 = vld [vmem:[%s1 + $0x8] sm:$0xff]
  %v634 = vld [vmem:[%s1 + $0x10] sm:$0xff]
  %v635 = vld [vmem:[%s1 + $0x18] sm:$0xff]
  %v636 = vld [vmem:[%s1 + $0x20] sm:$0xff]
  %v637 = vld [vmem:[%s1 + $0x28] sm:$0xff]
  %v638 = vld [vmem:[%s1 + $0x30] sm:$0xff]
  %v639 = vld [vmem:[%s1 + $0x38] sm:$0xff]
  %v640 = vld [vmem:[%s1 + $0x40] sm:$0xff]
  %v641 = vld [vmem:[%s1 + $0x48] sm:$0xff]
  %v642 = vld [vmem:[%s1 + $0x50] sm:$0xff]
  %v643 = vld [vmem:[%s1 + $0x58] sm:$0xff]
  %v644 = vld [vmem:[%s1 + $0x60] sm:$0xff]
  %v645 = vld [vmem:[%s1 + $0x68] sm:$0xff]
  %v646 = vld [vmem:[%s1 + $0x70] sm:$0xff]
  %v647 = vld [vmem:[%s1 + $0x78] sm:$0xff]
  %v648 = vld [vmem:[%s1 + $0x80] sm:$0xff]
  %v649 = vld [vmem:[%s1 + $0x88] sm:$0xff]
  %v650 = vld [vmem:[%s1 + $0x90] sm:$0xff]
  %v651 = vld [vmem:[%s1 + $0x98] sm:$0xff]
  %v652 = vld [vmem:[%s1 + $0xa0] sm:$0xff]
  %v653 = vld [vmem:[%s1 + $0xa8] sm:$0xff]
  %v654 = vld [vmem:[%s1 + $0xb0] sm:$0xff]
  %v655 = vld [vmem:[%s1 + $0xb8] sm:$0xff]
  %v656 = vld [vmem:[%s1 + $0xc0] sm:$0x11]
  %v657 = vld [vmem:[%s1 + $0xc8] sm:$0x11]
  %v658 = vld [vmem:[%s5] sm:$0xf]
  %v659 = vld [vmem:[%s5 + $0x4] sm:$0xf]
  %v660 = vld [vmem:[%s5 + $0x8] sm:$0xf]
  %v661 = vld [vmem:[%s5 + $0xc] sm:$0xf]
  %v662 = vld [vmem:[%s5 + $0x10] sm:$0xf]
  %v663 = vld [vmem:[%s5 + $0x14] sm:$0xf]
  %v664 = vld [vmem:[%s5 + $0x18] sm:$0xf]
  %v665 = vld [vmem:[%s5 + $0x1c] sm:$0xf]
  %v666 = vld [vmem:[%s5 + $0x20] sm:$0xf]
  %v667 = vld [vmem:[%s5 + $0x24] sm:$0xf]
  %v668 = vld [vmem:[%s5 + $0x28] sm:$0xf]
  %v669 = vld [vmem:[%s5 + $0x2c] sm:$0xf]
  %v670 = vld [vmem:[%s5 + $0x30] sm:$0xf]
  %v671 = vld [vmem:[%s5 + $0x34] sm:$0xf]
  %v672 = vld [vmem:[%s5 + $0x38] sm:$0xf]
  %v673 = vld [vmem:[%s5 + $0x3c] sm:$0xf]
  %v674 = vld [vmem:[%s5 + $0x40] sm:$0xf]
  %v675 = vld [vmem:[%s5 + $0x44] sm:$0xf]
  %v676 = vld [vmem:[%s5 + $0x48] sm:$0xf]
  %v677 = vld [vmem:[%s5 + $0x4c] sm:$0xf]
  %v678 = vld [vmem:[%s5 + $0x50] sm:$0xf]
  %v679 = vld [vmem:[%s5 + $0x54] sm:$0xf]
  %v680 = vld [vmem:[%s5 + $0x58] sm:$0xf]
  %v681 = vld [vmem:[%s5 + $0x5c] sm:$0xf]
  %v682 = vld [vmem:[%s5 + $0x60] sm:$0xf]
  %v683 = vld [vmem:[%s5 + $0x64] sm:$0xf]
  %v684 = vld [vmem:[%s5 + $0x68] sm:$0xf]
  %v685 = vld [vmem:[%s5 + $0x6c] sm:$0xf]
  %v686 = vld [vmem:[%s5 + $0x70] sm:$0xf]
  %v687 = vld [vmem:[%s5 + $0x74] sm:$0xf]
  %v688 = vld [vmem:[%s5 + $0x78] sm:$0xf]
  %v689 = vld [vmem:[%s5 + $0x7c] sm:$0xf]
  %v690 = vld [vmem:[%s5 + $0x80] sm:$0xf]
  %v691 = vld [vmem:[%s5 + $0x84] sm:$0xf]
  %v692 = vld [vmem:[%s5 + $0x88] sm:$0xf]
  %v693 = vld [vmem:[%s5 + $0x8c] sm:$0xf]
  %v694 = vld [vmem:[%s5 + $0x90] sm:$0xf]
  %v695 = vld [vmem:[%s5 + $0x94] sm:$0xf]
  %v696 = vld [vmem:[%s5 + $0x98] sm:$0xf]
  %v697 = vld [vmem:[%s5 + $0x9c] sm:$0xf]
  %v698 = vld [vmem:[%s5 + $0xa0] sm:$0xf]
  %v699 = vld [vmem:[%s5 + $0xa4] sm:$0xf]
  %v700 = vld [vmem:[%s5 + $0xa8] sm:$0xf]
  %v701 = vld [vmem:[%s5 + $0xac] sm:$0xf]
  %v702 = vld [vmem:[%s5 + $0xb0] sm:$0xf]
  %v703 = vld [vmem:[%s5 + $0xb4] sm:$0xf]
  %v704 = vld [vmem:[%s5 + $0xb8] sm:$0xf]
  %v705 = vld [vmem:[%s5 + $0xbc] sm:$0xf]
  %v706 = vld [vmem:[%s5 + $0xc0] sm:$0xf]
  %v707 = vld [vmem:[%s5 + $0xc4] sm:$0xf]
  %v708 = vld [vmem:[%s5 + $0xc8] sm:$0xf]
  %v709 = vld [vmem:[%s5 + $0xcc] sm:$0xf]
  %v710 = vld [vmem:[%s5 + $0xd0] sm:$0xf]
  %v711 = vld [vmem:[%s5 + $0xd4] sm:$0xf]
  %v712 = vld [vmem:[%s5 + $0xd8] sm:$0xf]
  %v713 = vld [vmem:[%s5 + $0xdc] sm:$0xf]
  %v714 = vld [vmem:[%s5 + $0xe0] sm:$0xf]
  %v715 = vld [vmem:[%s5 + $0xe4] sm:$0xf]
  %v716 = vld [vmem:[%s5 + $0xe8] sm:$0xf]
  %v717 = vld [vmem:[%s5 + $0xec] sm:$0xf]
  %v718 = vld [vmem:[%s5 + $0xf0] sm:$0xf]
  %v719 = vld [vmem:[%s5 + $0xf4] sm:$0xf]
  %v720 = vld [vmem:[%s5 + $0xf8] sm:$0xf]
  %v721 = vld [vmem:[%s5 + $0xfc] sm:$0xf]
  %v748 = vunpack.c.l.b16 %v632
  %v749 = vunpack.c.h.b16 %v632
  %v750 = vunpack.c.l.b16 %v633
  %v751 = vunpack.c.h.b16 %v633
  %v752 = vunpack.c.l.b16 %v634
  %v753 = vunpack.c.h.b16 %v634
  %v754 = vunpack.c.l.b16 %v635
  %v755 = vunpack.c.h.b16 %v635
  %v756 = vunpack.c.l.b16 %v636
  %v757 = vunpack.c.h.b16 %v636
  %v758 = vunpack.c.l.b16 %v637
  %v759 = vunpack.c.h.b16 %v637
  %v760 = vunpack.c.l.b16 %v638
  %v761 = vunpack.c.h.b16 %v638
  %v762 = vunpack.c.l.b16 %v639
  %v763 = vunpack.c.h.b16 %v639
  %v764 = vunpack.c.l.b16 %v640
  %v765 = vunpack.c.h.b16 %v640
  %v766 = vunpack.c.l.b16 %v641
  %v767 = vunpack.c.h.b16 %v641
  %v768 = vunpack.c.l.b16 %v642
  %v769 = vunpack.c.h.b16 %v642
  %v770 = vunpack.c.l.b16 %v643
  %v771 = vunpack.c.h.b16 %v643
  %v772 = vunpack.c.l.b16 %v644
  %v773 = vunpack.c.h.b16 %v644
  %v774 = vunpack.c.l.b16 %v645
  %v775 = vunpack.c.h.b16 %v645
  %v776 = vunpack.c.l.b16 %v646
  %v777 = vunpack.c.h.b16 %v646
  %v778 = vunpack.c.l.b16 %v647
  %v779 = vunpack.c.h.b16 %v647
  %v780 = vunpack.c.l.b16 %v648
  %v781 = vunpack.c.h.b16 %v648
  %v782 = vunpack.c.l.b16 %v649
  %v783 = vunpack.c.h.b16 %v649
  %v784 = vunpack.c.l.b16 %v650
  %v785 = vunpack.c.h.b16 %v650
  %v786 = vunpack.c.l.b16 %v651
  %v787 = vunpack.c.h.b16 %v651
  %v788 = vunpack.c.l.b16 %v652
  %v789 = vunpack.c.h.b16 %v652
  %v790 = vunpack.c.l.b16 %v653
  %v791 = vunpack.c.h.b16 %v653
  %v792 = vunpack.c.l.b16 %v654
  %v793 = vunpack.c.h.b16 %v654
  %v794 = vunpack.c.l.b16 %v655
  %v795 = vunpack.c.h.b16 %v655
  %v796 = vunpack.c.l.b16 %v656
  %v797 = vunpack.c.h.b16 %v656
  %v798 = vunpack.c.l.b16 %v657
  %v799 = vunpack.c.h.b16 %v657
  %v800 = vpack.c.b16 %v752, %v748
  %v801 = vpack.c.b16 %v753, %v749
  %v802 = vpack.c.b16 %v754, %v750
  %v803 = vpack.c.b16 %v755, %v751
  %v804 = vpack.c.b16 %v760, %v756
  %v805 = vpack.c.b16 %v761, %v757
  %v806 = vpack.c.b16 %v762, %v758
  %v807 = vpack.c.b16 %v763, %v759
  %v808 = vpack.c.b16 %v768, %v764
  %v809 = vpack.c.b16 %v769, %v765
  %v810 = vpack.c.b16 %v770, %v766
  %v811 = vpack.c.b16 %v771, %v767
  %v812 = vpack.c.b16 %v776, %v772
  %v813 = vpack.c.b16 %v777, %v773
  %v814 = vpack.c.b16 %v778, %v774
  %v815 = vpack.c.b16 %v779, %v775
  %v816 = vpack.c.b16 %v784, %v780
  %v817 = vpack.c.b16 %v785, %v781
  %v818 = vpack.c.b16 %v786, %v782
  %v819 = vpack.c.b16 %v787, %v783
  %v820 = vpack.c.b16 %v792, %v788
  %v821 = vpack.c.b16 %v793, %v789
  %v822 = vpack.c.b16 %v794, %v790
  %v823 = vpack.c.b16 %v795, %v791
  %v824 = vpack.c.b16 %v796, %v796
  %v825 = vpack.c.b16 %v797, %v797
  %v826 = vpack.c.b16 %v798, %v798
  %v827 = vpack.c.b16 %v799, %v799
  %v920 = vunpack.c.l.b16 %v658
  %v921 = vunpack.c.l.b16 %v659
  %v922 = vunpack.c.l.b16 %v660
  %v923 = vunpack.c.l.b16 %v661
  %v924 = vunpack.c.l.b16 %v662
  %v925 = vunpack.c.l.b16 %v663
  %v926 = vunpack.c.l.b16 %v664
  %v927 = vunpack.c.l.b16 %v665
  %v928 = vunpack.c.l.b16 %v666
  %v929 = vunpack.c.l.b16 %v667
  %v930 = vunpack.c.l.b16 %v668
  %v931 = vunpack.c.l.b16 %v669
  %v932 = vunpack.c.l.b16 %v670
  %v933 = vunpack.c.l.b16 %v671
  %v934 = vunpack.c.l.b16 %v672
  %v935 = vunpack.c.l.b16 %v673
  %v936 = vunpack.c.l.b16 %v674
  %v937 = vunpack.c.l.b16 %v675
  %v938 = vunpack.c.l.b16 %v676
  %v939 = vunpack.c.l.b16 %v677
  %v940 = vunpack.c.l.b16 %v678
  %v941 = vunpack.c.l.b16 %v679
  %v942 = vunpack.c.l.b16 %v680
  %v943 = vunpack.c.l.b16 %v681
  %v944 = vunpack.c.l.b16 %v682
  %v945 = vunpack.c.l.b16 %v683
  %v946 = vunpack.c.l.b16 %v684
  %v947 = vunpack.c.l.b16 %v685
  %v948 = vunpack.c.l.b16 %v686
  %v949 = vunpack.c.l.b16 %v687
  %v950 = vunpack.c.l.b16 %v688
  %v951 = vunpack.c.l.b16 %v689
  %v952 = vunpack.c.l.b16 %v690
  %v953 = vunpack.c.l.b16 %v691
  %v954 = vunpack.c.l.b16 %v692
  %v955 = vunpack.c.l.b16 %v693
  %v956 = vunpack.c.l.b16 %v694
  %v957 = vunpack.c.l.b16 %v695
  %v958 = vunpack.c.l.b16 %v696
  %v959 = vunpack.c.l.b16 %v697
  %v960 = vunpack.c.l.b16 %v698
  %v961 = vunpack.c.l.b16 %v699
  %v962 = vunpack.c.l.b16 %v700
  %v963 = vunpack.c.l.b16 %v701
  %v964 = vunpack.c.l.b16 %v702
  %v965 = vunpack.c.l.b16 %v703
  %v966 = vunpack.c.l.b16 %v704
  %v967 = vunpack.c.l.b16 %v705
  %v968 = vunpack.c.l.b16 %v706
  %v969 = vunpack.c.l.b16 %v707
  %v970 = vunpack.c.l.b16 %v708
  %v971 = vunpack.c.l.b16 %v709
  %v972 = vunpack.c.l.b16 %v710
  %v973 = vunpack.c.l.b16 %v711
  %v974 = vunpack.c.l.b16 %v712
  %v975 = vunpack.c.l.b16 %v713
  %v976 = vunpack.c.l.b16 %v714
  %v977 = vunpack.c.l.b16 %v715
  %v978 = vunpack.c.l.b16 %v716
  %v979 = vunpack.c.l.b16 %v717
  %v980 = vunpack.c.l.b16 %v718
  %v981 = vunpack.c.l.b16 %v719
  %v982 = vunpack.c.l.b16 %v720
  %v983 = vunpack.c.l.b16 %v721
  %v984 = vpack.c.b16 %v921, %v920
  %v985 = vpack.c.b16 %v923, %v922
  %v986 = vpack.c.b16 %v925, %v924
  %v987 = vpack.c.b16 %v927, %v926
  %v988 = vpack.c.b16 %v929, %v928
  %v989 = vpack.c.b16 %v931, %v930
  %v990 = vpack.c.b16 %v933, %v932
  %v991 = vpack.c.b16 %v935, %v934
  %v992 = vpack.c.b16 %v937, %v936
  %v993 = vpack.c.b16 %v939, %v938
  %v994 = vpack.c.b16 %v941, %v940
  %v995 = vpack.c.b16 %v943, %v942
  %v996 = vpack.c.b16 %v945, %v944
  %v997 = vpack.c.b16 %v947, %v946
  %v998 = vpack.c.b16 %v949, %v948
  %v999 = vpack.c.b16 %v951, %v950
  %v1000 = vpack.c.b16 %v953, %v952
  %v1001 = vpack.c.b16 %v955, %v954
  %v1002 = vpack.c.b16 %v957, %v956
  %v1003 = vpack.c.b16 %v959, %v958
  %v1004 = vpack.c.b16 %v961, %v960
  %v1005 = vpack.c.b16 %v963, %v962
  %v1006 = vpack.c.b16 %v965, %v964
  %v1007 = vpack.c.b16 %v967, %v966
  %v1008 = vpack.c.b16 %v969, %v968
  %v1009 = vpack.c.b16 %v971, %v970
  %v1010 = vpack.c.b16 %v973, %v972
  %v1011 = vpack.c.b16 %v975, %v974
  %v1012 = vpack.c.b16 %v977, %v976
  %v1013 = vpack.c.b16 %v979, %v978
  %v1014 = vpack.c.b16 %v981, %v980
  %v1015 = vpack.c.b16 %v983, %v982
  %1048 = vmatprep.subr.bf16.mxu0 0
  %1049 = vmatpush1.bf16.msra.mxu0 %v984
  %1050 = vmatprep.subr.bf16.mxu0 0
  %1051 = vmatpush1.bf16.msra.mxu0 %v985
  %1052 = vmatprep.subr.bf16.mxu0 0
  %1053 = vmatpush1.bf16.msra.mxu0 %v986
  %1054 = vmatprep.subr.bf16.mxu0 0
  %1055 = vmatpush1.bf16.msra.mxu0 %v987
  %1056 = vmatprep.subr.bf16.mxu0 0
  %1057 = vmatpush1.bf16.msra.mxu0 %v988
  %1058 = vmatprep.subr.bf16.mxu0 0
  %1059 = vmatpush1.bf16.msra.mxu0 %v989
  %1060 = vmatprep.subr.bf16.mxu0 0
  %1061 = vmatpush1.bf16.msra.mxu0 %v990
  %1062 = vmatprep.subr.bf16.mxu0 0
  %1063 = vmatpush1.bf16.msra.mxu0 %v991
  %1064 = vmatprep.subr.bf16.mxu0 0
  %1065 = vmatpush1.bf16.msra.mxu0 %v992
  %1066 = vmatprep.subr.bf16.mxu0 0
  %1067 = vmatpush1.bf16.msra.mxu0 %v993
  %1068 = vmatprep.subr.bf16.mxu0 0
  %1069 = vmatpush1.bf16.msra.mxu0 %v994
  %1070 = vmatprep.subr.bf16.mxu0 0
  %1071 = vmatpush1.bf16.msra.mxu0 %v995
  %1072 = vmatprep.subr.bf16.mxu0 0
  %1073 = vmatpush1.bf16.msra.mxu0 %v996
  %1074 = vmatprep.subr.bf16.mxu0 0
  %1075 = vmatpush1.bf16.msra.mxu0 %v997
  %1076 = vmatprep.subr.bf16.mxu0 0
  %1077 = vmatpush1.bf16.msra.mxu0 %v998
  %1078 = vmatprep.subr.bf16.mxu0 0
  %1079 = vmatpush1.bf16.msra.mxu0 %v999
  %1080 = vmatprep.mubr.bf16.mxu0 %v801
  %1081 = vmatmul.mubr.bf16.gmra.mrb[0].mxu0 %v800
  %v1082 = vpop.f32.mrb[0].mxu0
  %v1083 = vadd.f32 0.0, %v1082
  %v1084 = vpop.f32.mrb[0].mxu0
  %v1085 = vpop.f32.mrb[0].mxu0
  %v1086 = vadd.f32 0.0, %v1085
  %v1087 = vpop.f32.mrb[0].mxu0
  %1088 = vmatprep.mubr.bf16.mxu0 %v805
  %1089 = vmatmul.mubr.bf16.gmra.mrb[0].mxu0 %v804
  %v1090 = vpop.f32.mrb[0].mxu0
  %v1091 = vadd.f32 0.0, %v1090
  %v1092 = vpop.f32.mrb[0].mxu0
  %v1093 = vpop.f32.mrb[0].mxu0
  %v1094 = vadd.f32 0.0, %v1093
  %v1095 = vpop.f32.mrb[0].mxu0
  %1096 = vmatprep.mubr.bf16.mxu0 %v809
  %1097 = vmatmul.mubr.bf16.gmra.mrb[0].mxu0 %v808
  %v1098 = vpop.f32.mrb[0].mxu0
  %v1099 = vadd.f32 0.0, %v1098
  %v1100 = vpop.f32.mrb[0].mxu0
  %v1101 = vpop.f32.mrb[0].mxu0
  %v1102 = vadd.f32 0.0, %v1101
  %v1103 = vpop.f32.mrb[0].mxu0
  %1104 = vmatprep.mubr.bf16.mxu0 %v813
  %1105 = vmatmul.mubr.bf16.gmra.mrb[0].mxu0 %v812
  %v1106 = vpop.f32.mrb[0].mxu0
  %v1107 = vadd.f32 0.0, %v1106
  %v1108 = vpop.f32.mrb[0].mxu0
  %v1109 = vpop.f32.mrb[0].mxu0
  %v1110 = vadd.f32 0.0, %v1109
  %v1111 = vpop.f32.mrb[0].mxu0
  %1112 = vmatprep.mubr.bf16.mxu0 %v817
  %1113 = vmatmul.mubr.bf16.gmra.mrb[0].mxu0 %v816
  %v1114 = vpop.f32.mrb[0].mxu0
  %v1115 = vadd.f32 0.0, %v1114
  %v1116 = vpop.f32.mrb[0].mxu0
  %v1117 = vpop.f32.mrb[0].mxu0
  %v1118 = vadd.f32 0.0, %v1117
  %v1119 = vpop.f32.mrb[0].mxu0
  %1120 = vmatprep.mubr.bf16.mxu0 %v821
  %1121 = vmatmul.mubr.bf16.gmra.mrb[0].mxu0 %v820
  %v1122 = vpop.f32.mrb[0].mxu0
  %v1123 = vadd.f32 0.0, %v1122
  %v1124 = vpop.f32.mrb[0].mxu0
  %v1125 = vpop.f32.mrb[0].mxu0
  %v1126 = vadd.f32 0.0, %v1125
  %v1127 = vpop.f32.mrb[0].mxu0
  %1128 = vmatprep.mubr.bf16.mxu0 %v825
  %1129 = vmatmul.mubr.bf16.gmra.mrb[0].mxu0 %v824
  %v1130 = vpop.f32.mrb[0].mxu0
  %v1131 = vadd.f32 0.0, %v1130
  %v1132 = vpop.f32.mrb[0].mxu0
  %v1133 = vpop.f32.mrb[0].mxu0
  %v1134 = vpop.f32.mrb[0].mxu0
  %1135 = vdwg.mxu0
  %1136 = vmatprep.subr.bf16.mxu0 0
  %1137 = vmatpush1.bf16.msra.mxu0 %v1000
  %1138 = vmatprep.subr.bf16.mxu0 0
  %1139 = vmatpush1.bf16.msra.mxu0 %v1001
  %1140 = vmatprep.subr.bf16.mxu0 0
  %1141 = vmatpush1.bf16.msra.mxu0 %v1002
  %1142 = vmatprep.subr.bf16.mxu0 0
  %1143 = vmatpush1.bf16.msra.mxu0 %v1003
  %1144 = vmatprep.subr.bf16.mxu0 0
  %1145 = vmatpush1.bf16.msra.mxu0 %v1004
  %1146 = vmatprep.subr.bf16.mxu0 0
  %1147 = vmatpush1.bf16.msra.mxu0 %v1005
  %1148 = vmatprep.subr.bf16.mxu0 0
  %1149 = vmatpush1.bf16.msra.mxu0 %v1006
  %1150 = vmatprep.subr.bf16.mxu0 0
  %1151 = vmatpush1.bf16.msra.mxu0 %v1007
  %1152 = vmatprep.subr.bf16.mxu0 0
  %1153 = vmatpush1.bf16.msra.mxu0 %v1008
  %1154 = vmatprep.subr.bf16.mxu0 0
  %1155 = vmatpush1.bf16.msra.mxu0 %v1009
  %1156 = vmatprep.subr.bf16.mxu0 0
  %1157 = vmatpush1.bf16.msra.mxu0 %v1010
  %1158 = vmatprep.subr.bf16.mxu0 0
  %1159 = vmatpush1.bf16.msra.mxu0 %v1011
  %1160 = vmatprep.subr.bf16.mxu0 0
  %1161 = vmatpush1.bf16.msra.mxu0 %v1012
  %1162 = vmatprep.subr.bf16.mxu0 0
  %1163 = vmatpush1.bf16.msra.mxu0 %v1013
  %1164 = vmatprep.subr.bf16.mxu0 0
  %1165 = vmatpush1.bf16.msra.mxu0 %v1014
  %1166 = vmatprep.subr.bf16.mxu0 0
  %1167 = vmatpush1.bf16.msra.mxu0 %v1015
  %1168 = vmatprep.mubr.bf16.mxu0 %v803
  %1169 = vmatmul.mubr.bf16.gmra.mrb[0].mxu0 %v802
  %v1170 = vpop.f32.mrb[0].mxu0
  %v1171 = vadd.f32 %v1083, %v1170
  %v1172 = vpop.f32.mrb[0].mxu0
  %v1173 = vpop.f32.mrb[0].mxu0
  %v1174 = vadd.f32 %v1086, %v1173
  %v1175 = vpop.f32.mrb[0].mxu0
  %1176 = vmatprep.mubr.bf16.mxu0 %v807
  %1177 = vmatmul.mubr.bf16.gmra.mrb[0].mxu0 %v806
  %v1178 = vpop.f32.mrb[0].mxu0
  %v1179 = vadd.f32 %v1091, %v1178
  %v1180 = vpop.f32.mrb[0].mxu0
  %v1181 = vpop.f32.mrb[0].mxu0
  %v1182 = vadd.f32 %v1094, %v1181
  %v1183 = vpop.f32.mrb[0].mxu0
  %1184 = vmatprep.mubr.bf16.mxu0 %v811
  %1185 = vmatmul.mubr.bf16.gmra.mrb[0].mxu0 %v810
  %v1186 = vpop.f32.mrb[0].mxu0
  %v1187 = vadd.f32 %v1099, %v1186
  %v1188 = vpop.f32.mrb[0].mxu0
  %v1189 = vpop.f32.mrb[0].mxu0
  %v1190 = vadd.f32 %v1102, %v1189
  %v1191 = vpop.f32.mrb[0].mxu0
  %1192 = vmatprep.mubr.bf16.mxu0 %v815
  %1193 = vmatmul.mubr.bf16.gmra.mrb[0].mxu0 %v814
  %v1194 = vpop.f32.mrb[0].mxu0
  %v1195 = vadd.f32 %v1107, %v1194
  %v1196 = vpop.f32.mrb[0].mxu0
  %v1197 = vpop.f32.mrb[0].mxu0
  %v1198 = vadd.f32 %v1110, %v1197
  %v1199 = vpop.f32.mrb[0].mxu0
  %1200 = vmatprep.mubr.bf16.mxu0 %v819
  %1201 = vmatmul.mubr.bf16.gmra.mrb[0].mxu0 %v818
  %v1202 = vpop.f32.mrb[0].mxu0
  %v1203 = vadd.f32 %v1115, %v1202
  %v1204 = vpop.f32.mrb[0].mxu0
  %v1205 = vpop.f32.mrb[0].mxu0
  %v1206 = vadd.f32 %v1118, %v1205
  %v1207 = vpop.f32.mrb[0].mxu0
  %1208 = vmatprep.mubr.bf16.mxu0 %v823
  %1209 = vmatmul.mubr.bf16.gmra.mrb[0].mxu0 %v822
  %v1210 = vpop.f32.mrb[0].mxu0
  %v1211 = vadd.f32 %v1123, %v1210
  %v1212 = vpop.f32.mrb[0].mxu0
  %v1213 = vpop.f32.mrb[0].mxu0
  %v1214 = vadd.f32 %v1126, %v1213
  %v1215 = vpop.f32.mrb[0].mxu0
  %1216 = vmatprep.mubr.bf16.mxu0 %v827
  %1217 = vmatmul.mubr.bf16.gmra.mrb[0].mxu0 %v826
  %v1218 = vpop.f32.mrb[0].mxu0
  %v1219 = vadd.f32 %v1131, %v1218
  %v1220 = vpop.f32.mrb[0].mxu0
  %v1221 = vpop.f32.mrb[0].mxu0
  %v1222 = vpop.f32.mrb[0].mxu0
  %1223 = vdwg.mxu0
  %v1224 = vld [vmem:[%s2] sm:$0xff]
  %v1225 = vld [vmem:[%s2 + $0x8] sm:$0xff]
  %v1226 = vld [vmem:[%s2 + $0x10] sm:$0xff]
  %v1227 = vld [vmem:[%s2 + $0x18] sm:$0xff]
  %v1228 = vld [vmem:[%s2 + $0x20] sm:$0xff]
  %v1229 = vld [vmem:[%s2 + $0x28] sm:$0xff]
  %v1230 = vld [vmem:[%s2 + $0x30] sm:$0xff]
  %v1231 = vld [vmem:[%s2 + $0x38] sm:$0xff]
  %v1232 = vld [vmem:[%s2 + $0x40] sm:$0xff]
  %v1233 = vld [vmem:[%s2 + $0x48] sm:$0xff]
  %v1234 = vld [vmem:[%s2 + $0x50] sm:$0xff]
  %v1235 = vld [vmem:[%s2 + $0x58] sm:$0xff]
  %v1236 = vld [vmem:[%s2 + $0x60] sm:$0xff]
  %v1237 = vld [vmem:[%s2 + $0x68] sm:$0xff]
  %v1238 = vld [vmem:[%s2 + $0x70] sm:$0xff]
  %v1239 = vld [vmem:[%s2 + $0x78] sm:$0xff]
  %v1240 = vld [vmem:[%s2 + $0x80] sm:$0xff]
  %v1241 = vld [vmem:[%s2 + $0x88] sm:$0xff]
  %v1242 = vld [vmem:[%s2 + $0x90] sm:$0xff]
  %v1243 = vld [vmem:[%s2 + $0x98] sm:$0xff]
  %v1244 = vld [vmem:[%s2 + $0xa0] sm:$0xff]
  %v1245 = vld [vmem:[%s2 + $0xa8] sm:$0xff]
  %v1246 = vld [vmem:[%s2 + $0xb0] sm:$0xff]
  %v1247 = vld [vmem:[%s2 + $0xb8] sm:$0xff]
  %v1248 = vld [vmem:[%s2 + $0xc0] sm:$0x11]
  %v1249 = vld [vmem:[%s2 + $0xc8] sm:$0x11]
  %v1250 = vld [vmem:[%s6] sm:$0xf]
  %v1251 = vld [vmem:[%s6 + $0x4] sm:$0xf]
  %v1252 = vld [vmem:[%s6 + $0x8] sm:$0xf]
  %v1253 = vld [vmem:[%s6 + $0xc] sm:$0xf]
  %v1254 = vld [vmem:[%s6 + $0x10] sm:$0xf]
  %v1255 = vld [vmem:[%s6 + $0x14] sm:$0xf]
  %v1256 = vld [vmem:[%s6 + $0x18] sm:$0xf]
  %v1257 = vld [vmem:[%s6 + $0x1c] sm:$0xf]
  %v1258 = vld [vmem:[%s6 + $0x20] sm:$0xf]
  %v1259 = vld [vmem:[%s6 + $0x24] sm:$0xf]
  %v1260 = vld [vmem:[%s6 + $0x28] sm:$0xf]
  %v1261 = vld [vmem:[%s6 + $0x2c] sm:$0xf]
  %v1262 = vld [vmem:[%s6 + $0x30] sm:$0xf]
  %v1263 = vld [vmem:[%s6 + $0x34] sm:$0xf]
  %v1264 = vld [vmem:[%s6 + $0x38] sm:$0xf]
  %v1265 = vld [vmem:[%s6 + $0x3c] sm:$0xf]
  %v1266 = vld [vmem:[%s6 + $0x40] sm:$0xf]
  %v1267 = vld [vmem:[%s6 + $0x44] sm:$0xf]
  %v1268 = vld [vmem:[%s6 + $0x48] sm:$0xf]
  %v1269 = vld [vmem:[%s6 + $0x4c] sm:$0xf]
  %v1270 = vld [vmem:[%s6 + $0x50] sm:$0xf]
  %v1271 = vld [vmem:[%s6 + $0x54] sm:$0xf]
  %v1272 = vld [vmem:[%s6 + $0x58] sm:$0xf]
  %v1273 = vld [vmem:[%s6 + $0x5c] sm:$0xf]
  %v1274 = vld [vmem:[%s6 + $0x60] sm:$0xf]
  %v1275 = vld [vmem:[%s6 + $0x64] sm:$0xf]
  %v1276 = vld [vmem:[%s6 + $0x68] sm:$0xf]
  %v1277 = vld [vmem:[%s6 + $0x6c] sm:$0xf]
  %v1278 = vld [vmem:[%s6 + $0x70] sm:$0xf]
  %v1279 = vld [vmem:[%s6 + $0x74] sm:$0xf]
  %v1280 = vld [vmem:[%s6 + $0x78] sm:$0xf]
  %v1281 = vld [vmem:[%s6 + $0x7c] sm:$0xf]
  %v1282 = vld [vmem:[%s6 + $0x80] sm:$0xf]
  %v1283 = vld [vmem:[%s6 + $0x84] sm:$0xf]
  %v1284 = vld [vmem:[%s6 + $0x88] sm:$0xf]
  %v1285 = vld [vmem:[%s6 + $0x8c] sm:$0xf]
  %v1286 = vld [vmem:[%s6 + $0x90] sm:$0xf]
  %v1287 = vld [vmem:[%s6 + $0x94] sm:$0xf]
  %v1288 = vld [vmem:[%s6 + $0x98] sm:$0xf]
  %v1289 = vld [vmem:[%s6 + $0x9c] sm:$0xf]
  %v1290 = vld [vmem:[%s6 + $0xa0] sm:$0xf]
  %v1291 = vld [vmem:[%s6 + $0xa4] sm:$0xf]
  %v1292 = vld [vmem:[%s6 + $0xa8] sm:$0xf]
  %v1293 = vld [vmem:[%s6 + $0xac] sm:$0xf]
  %v1294 = vld [vmem:[%s6 + $0xb0] sm:$0xf]
  %v1295 = vld [vmem:[%s6 + $0xb4] sm:$0xf]
  %v1296 = vld [vmem:[%s6 + $0xb8] sm:$0xf]
  %v1297 = vld [vmem:[%s6 + $0xbc] sm:$0xf]
  %v1298 = vld [vmem:[%s6 + $0xc0] sm:$0xf]
  %v1299 = vld [vmem:[%s6 + $0xc4] sm:$0xf]
  %v1300 = vld [vmem:[%s6 + $0xc8] sm:$0xf]
  %v1301 = vld [vmem:[%s6 + $0xcc] sm:$0xf]
  %v1302 = vld [vmem:[%s6 + $0xd0] sm:$0xf]
  %v1303 = vld [vmem:[%s6 + $0xd4] sm:$0xf]
  %v1304 = vld [vmem:[%s6 + $0xd8] sm:$0xf]
  %v1305 = vld [vmem:[%s6 + $0xdc] sm:$0xf]
  %v1306 = vld [vmem:[%s6 + $0xe0] sm:$0xf]
  %v1307 = vld [vmem:[%s6 + $0xe4] sm:$0xf]
  %v1308 = vld [vmem:[%s6 + $0xe8] sm:$0xf]
  %v1309 = vld [vmem:[%s6 + $0xec] sm:$0xf]
  %v1310 = vld [vmem:[%s6 + $0xf0] sm:$0xf]
  %v1311 = vld [vmem:[%s6 + $0xf4] sm:$0xf]
  %v1312 = vld [vmem:[%s6 + $0xf8] sm:$0xf]
  %v1313 = vld [vmem:[%s6 + $0xfc] sm:$0xf]
  %v1340 = vunpack.c.l.b16 %v1224
  %v1341 = vunpack.c.h.b16 %v1224
  %v1342 = vunpack.c.l.b16 %v1225
  %v1343 = vunpack.c.h.b16 %v1225
  %v1344 = vunpack.c.l.b16 %v1226
  %v1345 = vunpack.c.h.b16 %v1226
  %v1346 = vunpack.c.l.b16 %v1227
  %v1347 = vunpack.c.h.b16 %v1227
  %v1348 = vunpack.c.l.b16 %v1228
  %v1349 = vunpack.c.h.b16 %v1228
  %v1350 = vunpack.c.l.b16 %v1229
  %v1351 = vunpack.c.h.b16 %v1229
  %v1352 = vunpack.c.l.b16 %v1230
  %v1353 = vunpack.c.h.b16 %v1230
  %v1354 = vunpack.c.l.b16 %v1231
  %v1355 = vunpack.c.h.b16 %v1231
  %v1356 = vunpack.c.l.b16 %v1232
  %v1357 = vunpack.c.h.b16 %v1232
  %v1358 = vunpack.c.l.b16 %v1233
  %v1359 = vunpack.c.h.b16 %v1233
  %v1360 = vunpack.c.l.b16 %v1234
  %v1361 = vunpack.c.h.b16 %v1234
  %v1362 = vunpack.c.l.b16 %v1235
  %v1363 = vunpack.c.h.b16 %v1235
  %v1364 = vunpack.c.l.b16 %v1236
  %v1365 = vunpack.c.h.b16 %v1236
  %v1366 = vunpack.c.l.b16 %v1237
  %v1367 = vunpack.c.h.b16 %v1237
  %v1368 = vunpack.c.l.b16 %v1238
  %v1369 = vunpack.c.h.b16 %v1238
  %v1370 = vunpack.c.l.b16 %v1239
  %v1371 = vunpack.c.h.b16 %v1239
  %v1372 = vunpack.c.l.b16 %v1240
  %v1373 = vunpack.c.h.b16 %v1240
  %v1374 = vunpack.c.l.b16 %v1241
  %v1375 = vunpack.c.h.b16 %v1241
  %v1376 = vunpack.c.l.b16 %v1242
  %v1377 = vunpack.c.h.b16 %v1242
  %v1378 = vunpack.c.l.b16 %v1243
  %v1379 = vunpack.c.h.b16 %v1243
  %v1380 = vunpack.c.l.b16 %v1244
  %v1381 = vunpack.c.h.b16 %v1244
  %v1382 = vunpack.c.l.b16 %v1245
  %v1383 = vunpack.c.h.b16 %v1245
  %v1384 = vunpack.c.l.b16 %v1246
  %v1385 = vunpack.c.h.b16 %v1246
  %v1386 = vunpack.c.l.b16 %v1247
  %v1387 = vunpack.c.h.b16 %v1247
  %v1388 = vunpack.c.l.b16 %v1248
  %v1389 = vunpack.c.h.b16 %v1248
  %v1390 = vunpack.c.l.b16 %v1249
  %v1391 = vunpack.c.h.b16 %v1249
  %v1392 = vpack.c.b16 %v1344, %v1340
  %v1393 = vpack.c.b16 %v1345, %v1341
  %v1394 = vpack.c.b16 %v1346, %v1342
  %v1395 = vpack.c.b16 %v1347, %v1343
  %v1396 = vpack.c.b16 %v1352, %v1348
  %v1397 = vpack.c.b16 %v1353, %v1349
  %v1398 = vpack.c.b16 %v1354, %v1350
  %v1399 = vpack.c.b16 %v1355, %v1351
  %v1400 = vpack.c.b16 %v1360, %v1356
  %v1401 = vpack.c.b16 %v1361, %v1357
  %v1402 = vpack.c.b16 %v1362, %v1358
  %v1403 = vpack.c.b16 %v1363, %v1359
  %v1404 = vpack.c.b16 %v1368, %v1364
  %v1405 = vpack.c.b16 %v1369, %v1365
  %v1406 = vpack.c.b16 %v1370, %v1366
  %v1407 = vpack.c.b16 %v1371, %v1367
  %v1408 = vpack.c.b16 %v1376, %v1372
  %v1409 = vpack.c.b16 %v1377, %v1373
  %v1410 = vpack.c.b16 %v1378, %v1374
  %v1411 = vpack.c.b16 %v1379, %v1375
  %v1412 = vpack.c.b16 %v1384, %v1380
  %v1413 = vpack.c.b16 %v1385, %v1381
  %v1414 = vpack.c.b16 %v1386, %v1382
  %v1415 = vpack.c.b16 %v1387, %v1383
  %v1416 = vpack.c.b16 %v1388, %v1388
  %v1417 = vpack.c.b16 %v1389, %v1389
  %v1418 = vpack.c.b16 %v1390, %v1390
  %v1419 = vpack.c.b16 %v1391, %v1391
  %v1512 = vunpack.c.l.b16 %v1250
  %v1513 = vunpack.c.l.b16 %v1251
  %v1514 = vunpack.c.l.b16 %v1252
  %v1515 = vunpack.c.l.b16 %v1253
  %v1516 = vunpack.c.l.b16 %v1254
  %v1517 = vunpack.c.l.b16 %v1255
  %v1518 = vunpack.c.l.b16 %v1256
  %v1519 = vunpack.c.l.b16 %v1257
  %v1520 = vunpack.c.l.b16 %v1258
  %v1521 = vunpack.c.l.b16 %v1259
  %v1522 = vunpack.c.l.b16 %v1260
  %v1523 = vunpack.c.l.b16 %v1261
  %v1524 = vunpack.c.l.b16 %v1262
  %v1525 = vunpack.c.l.b16 %v1263
  %v1526 = vunpack.c.l.b16 %v1264
  %v1527 = vunpack.c.l.b16 %v1265
  %v1528 = vunpack.c.l.b16 %v1266
  %v1529 = vunpack.c.l.b16 %v1267
  %v1530 = vunpack.c.l.b16 %v1268
  %v1531 = vunpack.c.l.b16 %v1269
  %v1532 = vunpack.c.l.b16 %v1270
  %v1533 = vunpack.c.l.b16 %v1271
  %v1534 = vunpack.c.l.b16 %v1272
  %v1535 = vunpack.c.l.b16 %v1273
  %v1536 = vunpack.c.l.b16 %v1274
  %v1537 = vunpack.c.l.b16 %v1275
  %v1538 = vunpack.c.l.b16 %v1276
  %v1539 = vunpack.c.l.b16 %v1277
  %v1540 = vunpack.c.l.b16 %v1278
  %v1541 = vunpack.c.l.b16 %v1279
  %v1542 = vunpack.c.l.b16 %v1280
  %v1543 = vunpack.c.l.b16 %v1281
  %v1544 = vunpack.c.l.b16 %v1282
  %v1545 = vunpack.c.l.b16 %v1283
  %v1546 = vunpack.c.l.b16 %v1284
  %v1547 = vunpack.c.l.b16 %v1285
  %v1548 = vunpack.c.l.b16 %v1286
  %v1549 = vunpack.c.l.b16 %v1287
  %v1550 = vunpack.c.l.b16 %v1288
  %v1551 = vunpack.c.l.b16 %v1289
  %v1552 = vunpack.c.l.b16 %v1290
  %v1553 = vunpack.c.l.b16 %v1291
  %v1554 = vunpack.c.l.b16 %v1292
  %v1555 = vunpack.c.l.b16 %v1293
  %v1556 = vunpack.c.l.b16 %v1294
  %v1557 = vunpack.c.l.b16 %v1295
  %v1558 = vunpack.c.l.b16 %v1296
  %v1559 = vunpack.c.l.b16 %v1297
  %v1560 = vunpack.c.l.b16 %v1298
  %v1561 = vunpack.c.l.b16 %v1299
  %v1562 = vunpack.c.l.b16 %v1300
  %v1563 = vunpack.c.l.b16 %v1301
  %v1564 = vunpack.c.l.b16 %v1302
  %v1565 = vunpack.c.l.b16 %v1303
  %v1566 = vunpack.c.l.b16 %v1304
  %v1567 = vunpack.c.l.b16 %v1305
  %v1568 = vunpack.c.l.b16 %v1306
  %v1569 = vunpack.c.l.b16 %v1307
  %v1570 = vunpack.c.l.b16 %v1308
  %v1571 = vunpack.c.l.b16 %v1309
  %v1572 = vunpack.c.l.b16 %v1310
  %v1573 = vunpack.c.l.b16 %v1311
  %v1574 = vunpack.c.l.b16 %v1312
  %v1575 = vunpack.c.l.b16 %v1313
  %v1576 = vpack.c.b16 %v1513, %v1512
  %v1577 = vpack.c.b16 %v1515, %v1514
  %v1578 = vpack.c.b16 %v1517, %v1516
  %v1579 = vpack.c.b16 %v1519, %v1518
  %v1580 = vpack.c.b16 %v1521, %v1520
  %v1581 = vpack.c.b16 %v1523, %v1522
  %v1582 = vpack.c.b16 %v1525, %v1524
  %v1583 = vpack.c.b16 %v1527, %v1526
  %v1584 = vpack.c.b16 %v1529, %v1528
  %v1585 = vpack.c.b16 %v1531, %v1530
  %v1586 = vpack.c.b16 %v1533, %v1532
  %v1587 = vpack.c.b16 %v1535, %v1534
  %v1588 = vpack.c.b16 %v1537, %v1536
  %v1589 = vpack.c.b16 %v1539, %v1538
  %v1590 = vpack.c.b16 %v1541, %v1540
  %v1591 = vpack.c.b16 %v1543, %v1542
  %v1592 = vpack.c.b16 %v1545, %v1544
  %v1593 = vpack.c.b16 %v1547, %v1546
  %v1594 = vpack.c.b16 %v1549, %v1548
  %v1595 = vpack.c.b16 %v1551, %v1550
  %v1596 = vpack.c.b16 %v1553, %v1552
  %v1597 = vpack.c.b16 %v1555, %v1554
  %v1598 = vpack.c.b16 %v1557, %v1556
  %v1599 = vpack.c.b16 %v1559, %v1558
  %v1600 = vpack.c.b16 %v1561, %v1560
  %v1601 = vpack.c.b16 %v1563, %v1562
  %v1602 = vpack.c.b16 %v1565, %v1564
  %v1603 = vpack.c.b16 %v1567, %v1566
  %v1604 = vpack.c.b16 %v1569, %v1568
  %v1605 = vpack.c.b16 %v1571, %v1570
  %v1606 = vpack.c.b16 %v1573, %v1572
  %v1607 = vpack.c.b16 %v1575, %v1574
  %1640 = vmatprep.subr.bf16.mxu0 0
  %1641 = vmatpush1.bf16.msra.mxu0 %v1576
  %1642 = vmatprep.subr.bf16.mxu0 0
  %1643 = vmatpush1.bf16.msra.mxu0 %v1577
  %1644 = vmatprep.subr.bf16.mxu0 0
  %1645 = vmatpush1.bf16.msra.mxu0 %v1578
  %1646 = vmatprep.subr.bf16.mxu0 0
  %1647 = vmatpush1.bf16.msra.mxu0 %v1579
  %1648 = vmatprep.subr.bf16.mxu0 0
  %1649 = vmatpush1.bf16.msra.mxu0 %v1580
  %1650 = vmatprep.subr.bf16.mxu0 0
  %1651 = vmatpush1.bf16.msra.mxu0 %v1581
  %1652 = vmatprep.subr.bf16.mxu0 0
  %1653 = vmatpush1.bf16.msra.mxu0 %v1582
  %1654 = vmatprep.subr.bf16.mxu0 0
  %1655 = vmatpush1.bf16.msra.mxu0 %v1583
  %1656 = vmatprep.subr.bf16.mxu0 0
  %1657 = vmatpush1.bf16.msra.mxu0 %v1584
  %1658 = vmatprep.subr.bf16.mxu0 0
  %1659 = vmatpush1.bf16.msra.mxu0 %v1585
  %1660 = vmatprep.subr.bf16.mxu0 0
  %1661 = vmatpush1.bf16.msra.mxu0 %v1586
  %1662 = vmatprep.subr.bf16.mxu0 0
  %1663 = vmatpush1.bf16.msra.mxu0 %v1587
  %1664 = vmatprep.subr.bf16.mxu0 0
  %1665 = vmatpush1.bf16.msra.mxu0 %v1588
  %1666 = vmatprep.subr.bf16.mxu0 0
  %1667 = vmatpush1.bf16.msra.mxu0 %v1589
  %1668 = vmatprep.subr.bf16.mxu0 0
  %1669 = vmatpush1.bf16.msra.mxu0 %v1590
  %1670 = vmatprep.subr.bf16.mxu0 0
  %1671 = vmatpush1.bf16.msra.mxu0 %v1591
  %1672 = vmatprep.mubr.bf16.mxu0 %v1393
  %1673 = vmatmul.mubr.bf16.gmra.mrb[0].mxu0 %v1392
  %v1674 = vpop.f32.mrb[0].mxu0
  %v1675 = vadd.f32 0.0, %v1674
  %v1676 = vpop.f32.mrb[0].mxu0
  %v1677 = vpop.f32.mrb[0].mxu0
  %v1678 = vadd.f32 0.0, %v1677
  %v1679 = vpop.f32.mrb[0].mxu0
  %1680 = vmatprep.mubr.bf16.mxu0 %v1397
  %1681 = vmatmul.mubr.bf16.gmra.mrb[0].mxu0 %v1396
  %v1682 = vpop.f32.mrb[0].mxu0
  %v1683 = vadd.f32 0.0, %v1682
  %v1684 = vpop.f32.mrb[0].mxu0
  %v1685 = vpop.f32.mrb[0].mxu0
  %v1686 = vadd.f32 0.0, %v1685
  %v1687 = vpop.f32.mrb[0].mxu0
  %1688 = vmatprep.mubr.bf16.mxu0 %v1401
  %1689 = vmatmul.mubr.bf16.gmra.mrb[0].mxu0 %v1400
  %v1690 = vpop.f32.mrb[0].mxu0
  %v1691 = vadd.f32 0.0, %v1690
  %v1692 = vpop.f32.mrb[0].mxu0
  %v1693 = vpop.f32.mrb[0].mxu0
  %v1694 = vadd.f32 0.0, %v1693
  %v1695 = vpop.f32.mrb[0].mxu0
  %1696 = vmatprep.mubr.bf16.mxu0 %v1405
  %1697 = vmatmul.mubr.bf16.gmra.mrb[0].mxu0 %v1404
  %v1698 = vpop.f32.mrb[0].mxu0
  %v1699 = vadd.f32 0.0, %v1698
  %v1700 = vpop.f32.mrb[0].mxu0
  %v1701 = vpop.f32.mrb[0].mxu0
  %v1702 = vadd.f32 0.0, %v1701
  %v1703 = vpop.f32.mrb[0].mxu0
  %1704 = vmatprep.mubr.bf16.mxu0 %v1409
  %1705 = vmatmul.mubr.bf16.gmra.mrb[0].mxu0 %v1408
  %v1706 = vpop.f32.mrb[0].mxu0
  %v1707 = vadd.f32 0.0, %v1706
  %v1708 = vpop.f32.mrb[0].mxu0
  %v1709 = vpop.f32.mrb[0].mxu0
  %v1710 = vadd.f32 0.0, %v1709
  %v1711 = vpop.f32.mrb[0].mxu0
  %1712 = vmatprep.mubr.bf16.mxu0 %v1413
  %1713 = vmatmul.mubr.bf16.gmra.mrb[0].mxu0 %v1412
  %v1714 = vpop.f32.mrb[0].mxu0
  %v1715 = vadd.f32 0.0, %v1714
  %v1716 = vpop.f32.mrb[0].mxu0
  %v1717 = vpop.f32.mrb[0].mxu0
  %v1718 = vadd.f32 0.0, %v1717
  %v1719 = vpop.f32.mrb[0].mxu0
  %1720 = vmatprep.mubr.bf16.mxu0 %v1417
  %1721 = vmatmul.mubr.bf16.gmra.mrb[0].mxu0 %v1416
  %v1722 = vpop.f32.mrb[0].mxu0
  %v1723 = vadd.f32 0.0, %v1722
  %v1724 = vpop.f32.mrb[0].mxu0
  %v1725 = vpop.f32.mrb[0].mxu0
  %v1726 = vpop.f32.mrb[0].mxu0
  %1727 = vdwg.mxu0
  %1728 = vmatprep.subr.bf16.mxu0 0
  %1729 = vmatpush1.bf16.msra.mxu0 %v1592
  %1730 = vmatprep.subr.bf16.mxu0 0
  %1731 = vmatpush1.bf16.msra.mxu0 %v1593
  %1732 = vmatprep.subr.bf16.mxu0 0
  %1733 = vmatpush1.bf16.msra.mxu0 %v1594
  %1734 = vmatprep.subr.bf16.mxu0 0
  %1735 = vmatpush1.bf16.msra.mxu0 %v1595
  %1736 = vmatprep.subr.bf16.mxu0 0
  %1737 = vmatpush1.bf16.msra.mxu0 %v1596
  %1738 = vmatprep.subr.bf16.mxu0 0
  %1739 = vmatpush1.bf16.msra.mxu0 %v1597
  %1740 = vmatprep.subr.bf16.mxu0 0
  %1741 = vmatpush1.bf16.msra.mxu0 %v1598
  %1742 = vmatprep.subr.bf16.mxu0 0
  %1743 = vmatpush1.bf16.msra.mxu0 %v1599
  %1744 = vmatprep.subr.bf16.mxu0 0
  %1745 = vmatpush1.bf16.msra.mxu0 %v1600
  %1746 = vmatprep.subr.bf16.mxu0 0
  %1747 = vmatpush1.bf16.msra.mxu0 %v1601
  %1748 = vmatprep.subr.bf16.mxu0 0
  %1749 = vmatpush1.bf16.msra.mxu0 %v1602
  %1750 = vmatprep.subr.bf16.mxu0 0
  %1751 = vmatpush1.bf16.msra.mxu0 %v1603
  %1752 = vmatprep.subr.bf16.mxu0 0
  %1753 = vmatpush1.bf16.msra.mxu0 %v1604
  %1754 = vmatprep.subr.bf16.mxu0 0
  %1755 = vmatpush1.bf16.msra.mxu0 %v1605
  %1756 = vmatprep.subr.bf16.mxu0 0
  %1757 = vmatpush1.bf16.msra.mxu0 %v1606
  %1758 = vmatprep.subr.bf16.mxu0 0
  %1759 = vmatpush1.bf16.msra.mxu0 %v1607
  %1760 = vmatprep.mubr.bf16.mxu0 %v1395
  %1761 = vmatmul.mubr.bf16.gmra.mrb[0].mxu0 %v1394
  %v1762 = vpop.f32.mrb[0].mxu0
  %v1763 = vadd.f32 %v1675, %v1762
  %v1764 = vpop.f32.mrb[0].mxu0
  %v1765 = vpop.f32.mrb[0].mxu0
  %v1766 = vadd.f32 %v1678, %v1765
  %v1767 = vpop.f32.mrb[0].mxu0
  %1768 = vmatprep.mubr.bf16.mxu0 %v1399
  %1769 = vmatmul.mubr.bf16.gmra.mrb[0].mxu0 %v1398
  %v1770 = vpop.f32.mrb[0].mxu0
  %v1771 = vadd.f32 %v1683, %v1770
  %v1772 = vpop.f32.mrb[0].mxu0
  %v1773 = vpop.f32.mrb[0].mxu0
  %v1774 = vadd.f32 %v1686, %v1773
  %v1775 = vpop.f32.mrb[0].mxu0
  %1776 = vmatprep.mubr.bf16.mxu0 %v1403
  %1777 = vmatmul.mubr.bf16.gmra.mrb[0].mxu0 %v1402
  %v1778 = vpop.f32.mrb[0].mxu0
  %v1779 = vadd.f32 %v1691, %v1778
  %v1780 = vpop.f32.mrb[0].mxu0
  %v1781 = vpop.f32.mrb[0].mxu0
  %v1782 = vadd.f32 %v1694, %v1781
  %v1783 = vpop.f32.mrb[0].mxu0
  %1784 = vmatprep.mubr.bf16.mxu0 %v1407
  %1785 = vmatmul.mubr.bf16.gmra.mrb[0].mxu0 %v1406
  %v1786 = vpop.f32.mrb[0].mxu0
  %v1787 = vadd.f32 %v1699, %v1786
  %v1788 = vpop.f32.mrb[0].mxu0
  %v1789 = vpop.f32.mrb[0].mxu0
  %v1790 = vadd.f32 %v1702, %v1789
  %v1791 = vpop.f32.mrb[0].mxu0
  %1792 = vmatprep.mubr.bf16.mxu0 %v1411
  %1793 = vmatmul.mubr.bf16.gmra.mrb[0].mxu0 %v1410
  %v1794 = vpop.f32.mrb[0].mxu0
  %v1795 = vadd.f32 %v1707, %v1794
  %v1796 = vpop.f32.mrb[0].mxu0
  %v1797 = vpop.f32.mrb[0].mxu0
  %v1798 = vadd.f32 %v1710, %v1797
  %v1799 = vpop.f32.mrb[0].mxu0
  %1800 = vmatprep.mubr.bf16.mxu0 %v1415
  %1801 = vmatmul.mubr.bf16.gmra.mrb[0].mxu0 %v1414
  %v1802 = vpop.f32.mrb[0].mxu0
  %v1803 = vadd.f32 %v1715, %v1802
  %v1804 = vpop.f32.mrb[0].mxu0
  %v1805 = vpop.f32.mrb[0].mxu0
  %v1806 = vadd.f32 %v1718, %v1805
  %v1807 = vpop.f32.mrb[0].mxu0
  %1808 = vmatprep.mubr.bf16.mxu0 %v1419
  %1809 = vmatmul.mubr.bf16.gmra.mrb[0].mxu0 %v1418
  %v1810 = vpop.f32.mrb[0].mxu0
  %v1811 = vadd.f32 %v1723, %v1810
  %v1812 = vpop.f32.mrb[0].mxu0
  %v1813 = vpop.f32.mrb[0].mxu0
  %v1814 = vpop.f32.mrb[0].mxu0
  %1815 = vdwg.mxu0
  %v1816 = vld [vmem:[%s3] sm:$0xff]
  %v1817 = vld [vmem:[%s3 + $0x8] sm:$0xff]
  %v1818 = vld [vmem:[%s3 + $0x10] sm:$0xff]
  %v1819 = vld [vmem:[%s3 + $0x18] sm:$0xff]
  %v1820 = vld [vmem:[%s3 + $0x20] sm:$0xff]
  %v1821 = vld [vmem:[%s3 + $0x28] sm:$0xff]
  %v1822 = vld [vmem:[%s3 + $0x30] sm:$0xff]
  %v1823 = vld [vmem:[%s3 + $0x38] sm:$0xff]
  %v1824 = vld [vmem:[%s3 + $0x40] sm:$0xff]
  %v1825 = vld [vmem:[%s3 + $0x48] sm:$0xff]
  %v1826 = vld [vmem:[%s3 + $0x50] sm:$0xff]
  %v1827 = vld [vmem:[%s3 + $0x58] sm:$0xff]
  %v1828 = vld [vmem:[%s3 + $0x60] sm:$0xff]
  %v1829 = vld [vmem:[%s3 + $0x68] sm:$0xff]
  %v1830 = vld [vmem:[%s3 + $0x70] sm:$0xff]
  %v1831 = vld [vmem:[%s3 + $0x78] sm:$0xff]
  %v1832 = vld [vmem:[%s3 + $0x80] sm:$0xff]
  %v1833 = vld [vmem:[%s3 + $0x88] sm:$0xff]
  %v1834 = vld [vmem:[%s3 + $0x90] sm:$0xff]
  %v1835 = vld [vmem:[%s3 + $0x98] sm:$0xff]
  %v1836 = vld [vmem:[%s3 + $0xa0] sm:$0xff]
  %v1837 = vld [vmem:[%s3 + $0xa8] sm:$0xff]
  %v1838 = vld [vmem:[%s3 + $0xb0] sm:$0xff]
  %v1839 = vld [vmem:[%s3 + $0xb8] sm:$0xff]
  %v1840 = vld [vmem:[%s3 + $0xc0] sm:$0x11]
  %v1841 = vld [vmem:[%s3 + $0xc8] sm:$0x11]
  %v1842 = vld [vmem:[%s7] sm:$0xf]
  %v1843 = vld [vmem:[%s7 + $0x4] sm:$0xf]
  %v1844 = vld [vmem:[%s7 + $0x8] sm:$0xf]
  %v1845 = vld [vmem:[%s7 + $0xc] sm:$0xf]
  %v1846 = vld [vmem:[%s7 + $0x10] sm:$0xf]
  %v1847 = vld [vmem:[%s7 + $0x14] sm:$0xf]
  %v1848 = vld [vmem:[%s7 + $0x18] sm:$0xf]
  %v1849 = vld [vmem:[%s7 + $0x1c] sm:$0xf]
  %v1850 = vld [vmem:[%s7 + $0x20] sm:$0xf]
  %v1851 = vld [vmem:[%s7 + $0x24] sm:$0xf]
  %v1852 = vld [vmem:[%s7 + $0x28] sm:$0xf]
  %v1853 = vld [vmem:[%s7 + $0x2c] sm:$0xf]
  %v1854 = vld [vmem:[%s7 + $0x30] sm:$0xf]
  %v1855 = vld [vmem:[%s7 + $0x34] sm:$0xf]
  %v1856 = vld [vmem:[%s7 + $0x38] sm:$0xf]
  %v1857 = vld [vmem:[%s7 + $0x3c] sm:$0xf]
  %v1858 = vld [vmem:[%s7 + $0x40] sm:$0xf]
  %v1859 = vld [vmem:[%s7 + $0x44] sm:$0xf]
  %v1860 = vld [vmem:[%s7 + $0x48] sm:$0xf]
  %v1861 = vld [vmem:[%s7 + $0x4c] sm:$0xf]
  %v1862 = vld [vmem:[%s7 + $0x50] sm:$0xf]
  %v1863 = vld [vmem:[%s7 + $0x54] sm:$0xf]
  %v1864 = vld [vmem:[%s7 + $0x58] sm:$0xf]
  %v1865 = vld [vmem:[%s7 + $0x5c] sm:$0xf]
  %v1866 = vld [vmem:[%s7 + $0x60] sm:$0xf]
  %v1867 = vld [vmem:[%s7 + $0x64] sm:$0xf]
  %v1868 = vld [vmem:[%s7 + $0x68] sm:$0xf]
  %v1869 = vld [vmem:[%s7 + $0x6c] sm:$0xf]
  %v1870 = vld [vmem:[%s7 + $0x70] sm:$0xf]
  %v1871 = vld [vmem:[%s7 + $0x74] sm:$0xf]
  %v1872 = vld [vmem:[%s7 + $0x78] sm:$0xf]
  %v1873 = vld [vmem:[%s7 + $0x7c] sm:$0xf]
  %v1874 = vld [vmem:[%s7 + $0x80] sm:$0xf]
  %v1875 = vld [vmem:[%s7 + $0x84] sm:$0xf]
  %v1876 = vld [vmem:[%s7 + $0x88] sm:$0xf]
  %v1877 = vld [vmem:[%s7 + $0x8c] sm:$0xf]
  %v1878 = vld [vmem:[%s7 + $0x90] sm:$0xf]
  %v1879 = vld [vmem:[%s7 + $0x94] sm:$0xf]
  %v1880 = vld [vmem:[%s7 + $0x98] sm:$0xf]
  %v1881 = vld [vmem:[%s7 + $0x9c] sm:$0xf]
  %v1882 = vld [vmem:[%s7 + $0xa0] sm:$0xf]
  %v1883 = vld [vmem:[%s7 + $0xa4] sm:$0xf]
  %v1884 = vld [vmem:[%s7 + $0xa8] sm:$0xf]
  %v1885 = vld [vmem:[%s7 + $0xac] sm:$0xf]
  %v1886 = vld [vmem:[%s7 + $0xb0] sm:$0xf]
  %v1887 = vld [vmem:[%s7 + $0xb4] sm:$0xf]
  %v1888 = vld [vmem:[%s7 + $0xb8] sm:$0xf]
  %v1889 = vld [vmem:[%s7 + $0xbc] sm:$0xf]
  %v1890 = vld [vmem:[%s7 + $0xc0] sm:$0xf]
  %v1891 = vld [vmem:[%s7 + $0xc4] sm:$0xf]
  %v1892 = vld [vmem:[%s7 + $0xc8] sm:$0xf]
  %v1893 = vld [vmem:[%s7 + $0xcc] sm:$0xf]
  %v1894 = vld [vmem:[%s7 + $0xd0] sm:$0xf]
  %v1895 = vld [vmem:[%s7 + $0xd4] sm:$0xf]
  %v1896 = vld [vmem:[%s7 + $0xd8] sm:$0xf]
  %v1897 = vld [vmem:[%s7 + $0xdc] sm:$0xf]
  %v1898 = vld [vmem:[%s7 + $0xe0] sm:$0xf]
  %v1899 = vld [vmem:[%s7 + $0xe4] sm:$0xf]
  %v1900 = vld [vmem:[%s7 + $0xe8] sm:$0xf]
  %v1901 = vld [vmem:[%s7 + $0xec] sm:$0xf]
  %v1902 = vld [vmem:[%s7 + $0xf0] sm:$0xf]
  %v1903 = vld [vmem:[%s7 + $0xf4] sm:$0xf]
  %v1904 = vld [vmem:[%s7 + $0xf8] sm:$0xf]
  %v1905 = vld [vmem:[%s7 + $0xfc] sm:$0xf]
  %v1932 = vunpack.c.l.b16 %v1816
  %v1933 = vunpack.c.h.b16 %v1816
  %v1934 = vunpack.c.l.b16 %v1817
  %v1935 = vunpack.c.h.b16 %v1817
  %v1936 = vunpack.c.l.b16 %v1818
  %v1937 = vunpack.c.h.b16 %v1818
  %v1938 = vunpack.c.l.b16 %v1819
  %v1939 = vunpack.c.h.b16 %v1819
  %v1940 = vunpack.c.l.b16 %v1820
  %v1941 = vunpack.c.h.b16 %v1820
  %v1942 = vunpack.c.l.b16 %v1821
  %v1943 = vunpack.c.h.b16 %v1821
  %v1944 = vunpack.c.l.b16 %v1822
  %v1945 = vunpack.c.h.b16 %v1822
  %v1946 = vunpack.c.l.b16 %v1823
  %v1947 = vunpack.c.h.b16 %v1823
  %v1948 = vunpack.c.l.b16 %v1824
  %v1949 = vunpack.c.h.b16 %v1824
  %v1950 = vunpack.c.l.b16 %v1825
  %v1951 = vunpack.c.h.b16 %v1825
  %v1952 = vunpack.c.l.b16 %v1826
  %v1953 = vunpack.c.h.b16 %v1826
  %v1954 = vunpack.c.l.b16 %v1827
  %v1955 = vunpack.c.h.b16 %v1827
  %v1956 = vunpack.c.l.b16 %v1828
  %v1957 = vunpack.c.h.b16 %v1828
  %v1958 = vunpack.c.l.b16 %v1829
  %v1959 = vunpack.c.h.b16 %v1829
  %v1960 = vunpack.c.l.b16 %v1830
  %v1961 = vunpack.c.h.b16 %v1830
  %v1962 = vunpack.c.l.b16 %v1831
  %v1963 = vunpack.c.h.b16 %v1831
  %v1964 = vunpack.c.l.b16 %v1832
  %v1965 = vunpack.c.h.b16 %v1832
  %v1966 = vunpack.c.l.b16 %v1833
  %v1967 = vunpack.c.h.b16 %v1833
  %v1968 = vunpack.c.l.b16 %v1834
  %v1969 = vunpack.c.h.b16 %v1834
  %v1970 = vunpack.c.l.b16 %v1835
  %v1971 = vunpack.c.h.b16 %v1835
  %v1972 = vunpack.c.l.b16 %v1836
  %v1973 = vunpack.c.h.b16 %v1836
  %v1974 = vunpack.c.l.b16 %v1837
  %v1975 = vunpack.c.h.b16 %v1837
  %v1976 = vunpack.c.l.b16 %v1838
  %v1977 = vunpack.c.h.b16 %v1838
  %v1978 = vunpack.c.l.b16 %v1839
  %v1979 = vunpack.c.h.b16 %v1839
  %v1980 = vunpack.c.l.b16 %v1840
  %v1981 = vunpack.c.h.b16 %v1840
  %v1982 = vunpack.c.l.b16 %v1841
  %v1983 = vunpack.c.h.b16 %v1841
  %v1984 = vpack.c.b16 %v1936, %v1932
  %v1985 = vpack.c.b16 %v1937, %v1933
  %v1986 = vpack.c.b16 %v1938, %v1934
  %v1987 = vpack.c.b16 %v1939, %v1935
  %v1988 = vpack.c.b16 %v1944, %v1940
  %v1989 = vpack.c.b16 %v1945, %v1941
  %v1990 = vpack.c.b16 %v1946, %v1942
  %v1991 = vpack.c.b16 %v1947, %v1943
  %v1992 = vpack.c.b16 %v1952, %v1948
  %v1993 = vpack.c.b16 %v1953, %v1949
  %v1994 = vpack.c.b16 %v1954, %v1950
  %v1995 = vpack.c.b16 %v1955, %v1951
  %v1996 = vpack.c.b16 %v1960, %v1956
  %v1997 = vpack.c.b16 %v1961, %v1957
  %v1998 = vpack.c.b16 %v1962, %v1958
  %v1999 = vpack.c.b16 %v1963, %v1959
  %v2000 = vpack.c.b16 %v1968, %v1964
  %v2001 = vpack.c.b16 %v1969, %v1965
  %v2002 = vpack.c.b16 %v1970, %v1966
  %v2003 = vpack.c.b16 %v1971, %v1967
  %v2004 = vpack.c.b16 %v1976, %v1972
  %v2005 = vpack.c.b16 %v1977, %v1973
  %v2006 = vpack.c.b16 %v1978, %v1974
  %v2007 = vpack.c.b16 %v1979, %v1975
  %v2008 = vpack.c.b16 %v1980, %v1980
  %v2009 = vpack.c.b16 %v1981, %v1981
  %v2010 = vpack.c.b16 %v1982, %v1982
  %v2011 = vpack.c.b16 %v1983, %v1983
  %v2104 = vunpack.c.l.b16 %v1842
  %v2105 = vunpack.c.l.b16 %v1843
  %v2106 = vunpack.c.l.b16 %v1844
  %v2107 = vunpack.c.l.b16 %v1845
  %v2108 = vunpack.c.l.b16 %v1846
  %v2109 = vunpack.c.l.b16 %v1847
  %v2110 = vunpack.c.l.b16 %v1848
  %v2111 = vunpack.c.l.b16 %v1849
  %v2112 = vunpack.c.l.b16 %v1850
  %v2113 = vunpack.c.l.b16 %v1851
  %v2114 = vunpack.c.l.b16 %v1852
  %v2115 = vunpack.c.l.b16 %v1853
  %v2116 = vunpack.c.l.b16 %v1854
  %v2117 = vunpack.c.l.b16 %v1855
  %v2118 = vunpack.c.l.b16 %v1856
  %v2119 = vunpack.c.l.b16 %v1857
  %v2120 = vunpack.c.l.b16 %v1858
  %v2121 = vunpack.c.l.b16 %v1859
  %v2122 = vunpack.c.l.b16 %v1860
  %v2123 = vunpack.c.l.b16 %v1861
  %v2124 = vunpack.c.l.b16 %v1862
  %v2125 = vunpack.c.l.b16 %v1863
  %v2126 = vunpack.c.l.b16 %v1864
  %v2127 = vunpack.c.l.b16 %v1865
  %v2128 = vunpack.c.l.b16 %v1866
  %v2129 = vunpack.c.l.b16 %v1867
  %v2130 = vunpack.c.l.b16 %v1868
  %v2131 = vunpack.c.l.b16 %v1869
  %v2132 = vunpack.c.l.b16 %v1870
  %v2133 = vunpack.c.l.b16 %v1871
  %v2134 = vunpack.c.l.b16 %v1872
  %v2135 = vunpack.c.l.b16 %v1873
  %v2136 = vunpack.c.l.b16 %v1874
  %v2137 = vunpack.c.l.b16 %v1875
  %v2138 = vunpack.c.l.b16 %v1876
  %v2139 = vunpack.c.l.b16 %v1877
  %v2140 = vunpack.c.l.b16 %v1878
  %v2141 = vunpack.c.l.b16 %v1879
  %v2142 = vunpack.c.l.b16 %v1880
  %v2143 = vunpack.c.l.b16 %v1881
  %v2144 = vunpack.c.l.b16 %v1882
  %v2145 = vunpack.c.l.b16 %v1883
  %v2146 = vunpack.c.l.b16 %v1884
  %v2147 = vunpack.c.l.b16 %v1885
  %v2148 = vunpack.c.l.b16 %v1886
  %v2149 = vunpack.c.l.b16 %v1887
  %v2150 = vunpack.c.l.b16 %v1888
  %v2151 = vunpack.c.l.b16 %v1889
  %v2152 = vunpack.c.l.b16 %v1890
  %v2153 = vunpack.c.l.b16 %v1891
  %v2154 = vunpack.c.l.b16 %v1892
  %v2155 = vunpack.c.l.b16 %v1893
  %v2156 = vunpack.c.l.b16 %v1894
  %v2157 = vunpack.c.l.b16 %v1895
  %v2158 = vunpack.c.l.b16 %v1896
  %v2159 = vunpack.c.l.b16 %v1897
  %v2160 = vunpack.c.l.b16 %v1898
  %v2161 = vunpack.c.l.b16 %v1899
  %v2162 = vunpack.c.l.b16 %v1900
  %v2163 = vunpack.c.l.b16 %v1901
  %v2164 = vunpack.c.l.b16 %v1902
  %v2165 = vunpack.c.l.b16 %v1903
  %v2166 = vunpack.c.l.b16 %v1904
  %v2167 = vunpack.c.l.b16 %v1905
  %v2168 = vpack.c.b16 %v2105, %v2104
  %v2169 = vpack.c.b16 %v2107, %v2106
  %v2170 = vpack.c.b16 %v2109, %v2108
  %v2171 = vpack.c.b16 %v2111, %v2110
  %v2172 = vpack.c.b16 %v2113, %v2112
  %v2173 = vpack.c.b16 %v2115, %v2114
  %v2174 = vpack.c.b16 %v2117, %v2116
  %v2175 = vpack.c.b16 %v2119, %v2118
  %v2176 = vpack.c.b16 %v2121, %v2120
  %v2177 = vpack.c.b16 %v2123, %v2122
  %v2178 = vpack.c.b16 %v2125, %v2124
  %v2179 = vpack.c.b16 %v2127, %v2126
  %v2180 = vpack.c.b16 %v2129, %v2128
  %v2181 = vpack.c.b16 %v2131, %v2130
  %v2182 = vpack.c.b16 %v2133, %v2132
  %v2183 = vpack.c.b16 %v2135, %v2134
  %v2184 = vpack.c.b16 %v2137, %v2136
  %v2185 = vpack.c.b16 %v2139, %v2138
  %v2186 = vpack.c.b16 %v2141, %v2140
  %v2187 = vpack.c.b16 %v2143, %v2142
  %v2188 = vpack.c.b16 %v2145, %v2144
  %v2189 = vpack.c.b16 %v2147, %v2146
  %v2190 = vpack.c.b16 %v2149, %v2148
  %v2191 = vpack.c.b16 %v2151, %v2150
  %v2192 = vpack.c.b16 %v2153, %v2152
  %v2193 = vpack.c.b16 %v2155, %v2154
  %v2194 = vpack.c.b16 %v2157, %v2156
  %v2195 = vpack.c.b16 %v2159, %v2158
  %v2196 = vpack.c.b16 %v2161, %v2160
  %v2197 = vpack.c.b16 %v2163, %v2162
  %v2198 = vpack.c.b16 %v2165, %v2164
  %v2199 = vpack.c.b16 %v2167, %v2166
  %2232 = vmatprep.subr.bf16.mxu0 0
  %2233 = vmatpush1.bf16.msra.mxu0 %v2168
  %2234 = vmatprep.subr.bf16.mxu0 0
  %2235 = vmatpush1.bf16.msra.mxu0 %v2169
  %2236 = vmatprep.subr.bf16.mxu0 0
  %2237 = vmatpush1.bf16.msra.mxu0 %v2170
  %2238 = vmatprep.subr.bf16.mxu0 0
  %2239 = vmatpush1.bf16.msra.mxu0 %v2171
  %2240 = vmatprep.subr.bf16.mxu0 0
  %2241 = vmatpush1.bf16.msra.mxu0 %v2172
  %2242 = vmatprep.subr.bf16.mxu0 0
  %2243 = vmatpush1.bf16.msra.mxu0 %v2173
  %2244 = vmatprep.subr.bf16.mxu0 0
  %2245 = vmatpush1.bf16.msra.mxu0 %v2174
  %2246 = vmatprep.subr.bf16.mxu0 0
  %2247 = vmatpush1.bf16.msra.mxu0 %v2175
  %2248 = vmatprep.subr.bf16.mxu0 0
  %2249 = vmatpush1.bf16.msra.mxu0 %v2176
  %2250 = vmatprep.subr.bf16.mxu0 0
  %2251 = vmatpush1.bf16.msra.mxu0 %v2177
  %2252 = vmatprep.subr.bf16.mxu0 0
  %2253 = vmatpush1.bf16.msra.mxu0 %v2178
  %2254 = vmatprep.subr.bf16.mxu0 0
  %2255 = vmatpush1.bf16.msra.mxu0 %v2179
  %2256 = vmatprep.subr.bf16.mxu0 0
  %2257 = vmatpush1.bf16.msra.mxu0 %v2180
  %2258 = vmatprep.subr.bf16.mxu0 0
  %2259 = vmatpush1.bf16.msra.mxu0 %v2181
  %2260 = vmatprep.subr.bf16.mxu0 0
  %2261 = vmatpush1.bf16.msra.mxu0 %v2182
  %2262 = vmatprep.subr.bf16.mxu0 0
  %2263 = vmatpush1.bf16.msra.mxu0 %v2183
  %2264 = vmatprep.mubr.bf16.mxu0 %v1985
  %2265 = vmatmul.mubr.bf16.gmra.mrb[0].mxu0 %v1984
  %v2266 = vpop.f32.mrb[0].mxu0
  %v2267 = vadd.f32 0.0, %v2266
  %v2268 = vpop.f32.mrb[0].mxu0
  %v2269 = vpop.f32.mrb[0].mxu0
  %v2270 = vadd.f32 0.0, %v2269
  %v2271 = vpop.f32.mrb[0].mxu0
  %2272 = vmatprep.mubr.bf16.mxu0 %v1989
  %2273 = vmatmul.mubr.bf16.gmra.mrb[0].mxu0 %v1988
  %v2274 = vpop.f32.mrb[0].mxu0
  %v2275 = vadd.f32 0.0, %v2274
  %v2276 = vpop.f32.mrb[0].mxu0
  %v2277 = vpop.f32.mrb[0].mxu0
  %v2278 = vadd.f32 0.0, %v2277
  %v2279 = vpop.f32.mrb[0].mxu0
  %2280 = vmatprep.mubr.bf16.mxu0 %v1993
  %2281 = vmatmul.mubr.bf16.gmra.mrb[0].mxu0 %v1992
  %v2282 = vpop.f32.mrb[0].mxu0
  %v2283 = vadd.f32 0.0, %v2282
  %v2284 = vpop.f32.mrb[0].mxu0
  %v2285 = vpop.f32.mrb[0].mxu0
  %v2286 = vadd.f32 0.0, %v2285
  %v2287 = vpop.f32.mrb[0].mxu0
  %2288 = vmatprep.mubr.bf16.mxu0 %v1997
  %2289 = vmatmul.mubr.bf16.gmra.mrb[0].mxu0 %v1996
  %v2290 = vpop.f32.mrb[0].mxu0
  %v2291 = vadd.f32 0.0, %v2290
  %v2292 = vpop.f32.mrb[0].mxu0
  %v2293 = vpop.f32.mrb[0].mxu0
  %v2294 = vadd.f32 0.0, %v2293
  %v2295 = vpop.f32.mrb[0].mxu0
  %2296 = vmatprep.mubr.bf16.mxu0 %v2001
  %2297 = vmatmul.mubr.bf16.gmra.mrb[0].mxu0 %v2000
  %v2298 = vpop.f32.mrb[0].mxu0
  %v2299 = vadd.f32 0.0, %v2298
  %v2300 = vpop.f32.mrb[0].mxu0
  %v2301 = vpop.f32.mrb[0].mxu0
  %v2302 = vadd.f32 0.0, %v2301
  %v2303 = vpop.f32.mrb[0].mxu0
  %2304 = vmatprep.mubr.bf16.mxu0 %v2005
  %2305 = vmatmul.mubr.bf16.gmra.mrb[0].mxu0 %v2004
  %v2306 = vpop.f32.mrb[0].mxu0
  %v2307 = vadd.f32 0.0, %v2306
  %v2308 = vpop.f32.mrb[0].mxu0
  %v2309 = vpop.f32.mrb[0].mxu0
  %v2310 = vadd.f32 0.0, %v2309
  %v2311 = vpop.f32.mrb[0].mxu0
  %2312 = vmatprep.mubr.bf16.mxu0 %v2009
  %2313 = vmatmul.mubr.bf16.gmra.mrb[0].mxu0 %v2008
  %v2314 = vpop.f32.mrb[0].mxu0
  %v2315 = vadd.f32 0.0, %v2314
  %v2316 = vpop.f32.mrb[0].mxu0
  %v2317 = vpop.f32.mrb[0].mxu0
  %v2318 = vpop.f32.mrb[0].mxu0
  %2319 = vdwg.mxu0
  %2320 = vmatprep.subr.bf16.mxu0 0
  %2321 = vmatpush1.bf16.msra.mxu0 %v2184
  %2322 = vmatprep.subr.bf16.mxu0 0
  %2323 = vmatpush1.bf16.msra.mxu0 %v2185
  %2324 = vmatprep.subr.bf16.mxu0 0
  %2325 = vmatpush1.bf16.msra.mxu0 %v2186
  %2326 = vmatprep.subr.bf16.mxu0 0
  %2327 = vmatpush1.bf16.msra.mxu0 %v2187
  %2328 = vmatprep.subr.bf16.mxu0 0
  %2329 = vmatpush1.bf16.msra.mxu0 %v2188
  %2330 = vmatprep.subr.bf16.mxu0 0
  %2331 = vmatpush1.bf16.msra.mxu0 %v2189
  %2332 = vmatprep.subr.bf16.mxu0 0
  %2333 = vmatpush1.bf16.msra.mxu0 %v2190
  %2334 = vmatprep.subr.bf16.mxu0 0
  %2335 = vmatpush1.bf16.msra.mxu0 %v2191
  %2336 = vmatprep.subr.bf16.mxu0 0
  %2337 = vmatpush1.bf16.msra.mxu0 %v2192
  %2338 = vmatprep.subr.bf16.mxu0 0
  %2339 = vmatpush1.bf16.msra.mxu0 %v2193
  %2340 = vmatprep.subr.bf16.mxu0 0
  %2341 = vmatpush1.bf16.msra.mxu0 %v2194
  %2342 = vmatprep.subr.bf16.mxu0 0
  %2343 = vmatpush1.bf16.msra.mxu0 %v2195
  %2344 = vmatprep.subr.bf16.mxu0 0
  %2345 = vmatpush1.bf16.msra.mxu0 %v2196
  %2346 = vmatprep.subr.bf16.mxu0 0
  %2347 = vmatpush1.bf16.msra.mxu0 %v2197
  %2348 = vmatprep.subr.bf16.mxu0 0
  %2349 = vmatpush1.bf16.msra.mxu0 %v2198
  %2350 = vmatprep.subr.bf16.mxu0 0
  %2351 = vmatpush1.bf16.msra.mxu0 %v2199
  %2352 = vmatprep.mubr.bf16.mxu0 %v1987
  %2353 = vmatmul.mubr.bf16.gmra.mrb[0].mxu0 %v1986
  %v2354 = vpop.f32.mrb[0].mxu0
  %v2355 = vadd.f32 %v2267, %v2354
  %v2356 = vpop.f32.mrb[0].mxu0
  %v2357 = vpop.f32.mrb[0].mxu0
  %v2358 = vadd.f32 %v2270, %v2357
  %v2359 = vpop.f32.mrb[0].mxu0
  %2360 = vmatprep.mubr.bf16.mxu0 %v1991
  %2361 = vmatmul.mubr.bf16.gmra.mrb[0].mxu0 %v1990
  %v2362 = vpop.f32.mrb[0].mxu0
  %v2363 = vadd.f32 %v2275, %v2362
  %v2364 = vpop.f32.mrb[0].mxu0
  %v2365 = vpop.f32.mrb[0].mxu0
  %v2366 = vadd.f32 %v2278, %v2365
  %v2367 = vpop.f32.mrb[0].mxu0
  %2368 = vmatprep.mubr.bf16.mxu0 %v1995
  %2369 = vmatmul.mubr.bf16.gmra.mrb[0].mxu0 %v1994
  %v2370 = vpop.f32.mrb[0].mxu0
  %v2371 = vadd.f32 %v2283, %v2370
  %v2372 = vpop.f32.mrb[0].mxu0
  %v2373 = vpop.f32.mrb[0].mxu0
  %v2374 = vadd.f32 %v2286, %v2373
  %v2375 = vpop.f32.mrb[0].mxu0
  %2376 = vmatprep.mubr.bf16.mxu0 %v1999
  %2377 = vmatmul.mubr.bf16.gmra.mrb[0].mxu0 %v1998
  %v2378 = vpop.f32.mrb[0].mxu0
  %v2379 = vadd.f32 %v2291, %v2378
  %v2380 = vpop.f32.mrb[0].mxu0
  %v2381 = vpop.f32.mrb[0].mxu0
  %v2382 = vadd.f32 %v2294, %v2381
  %v2383 = vpop.f32.mrb[0].mxu0
  %2384 = vmatprep.mubr.bf16.mxu0 %v2003
  %2385 = vmatmul.mubr.bf16.gmra.mrb[0].mxu0 %v2002
  %v2386 = vpop.f32.mrb[0].mxu0
  %v2387 = vadd.f32 %v2299, %v2386
  %v2388 = vpop.f32.mrb[0].mxu0
  %v2389 = vpop.f32.mrb[0].mxu0
  %v2390 = vadd.f32 %v2302, %v2389
  %v2391 = vpop.f32.mrb[0].mxu0
  %2392 = vmatprep.mubr.bf16.mxu0 %v2007
  %2393 = vmatmul.mubr.bf16.gmra.mrb[0].mxu0 %v2006
  %v2394 = vpop.f32.mrb[0].mxu0
  %v2395 = vadd.f32 %v2307, %v2394
  %v2396 = vpop.f32.mrb[0].mxu0
  %v2397 = vpop.f32.mrb[0].mxu0
  %v2398 = vadd.f32 %v2310, %v2397
  %v2399 = vpop.f32.mrb[0].mxu0
  %2400 = vmatprep.mubr.bf16.mxu0 %v2011
  %2401 = vmatmul.mubr.bf16.gmra.mrb[0].mxu0 %v2010
  %v2402 = vpop.f32.mrb[0].mxu0
  %v2403 = vadd.f32 %v2315, %v2402
  %v2404 = vpop.f32.mrb[0].mxu0
  %v2405 = vpop.f32.mrb[0].mxu0
  %v2406 = vpop.f32.mrb[0].mxu0
  %2407 = vdwg.mxu0
  %v2408 = vadd.f32 %v579, %v582
  %v2409 = vadd.f32 %v2408, %v587
  %v2410 = vadd.f32 %v2409, %v590
  %v2411 = vadd.f32 %v2410, %v595
  %v2412 = vadd.f32 %v2411, %v598
  %v2413 = vadd.f32 %v2412, %v603
  %v2414 = vadd.f32 %v2413, %v606
  %v2415 = vadd.f32 %v2414, %v611
  %v2416 = vadd.f32 %v2415, %v614
  %v2417 = vadd.f32 %v2416, %v619
  %v2418 = vadd.f32 %v2417, %v622
  %vm2419 = vcmask 1041408
  %v2420 = vsel %vm2419, %v627, 0.0
  %v2421 = vadd.f32 %v2418, %v2420
  %v2422 = vrot.slane %v2421, 4
  %v2423 = vadd.f32 %v2421, %v2422
  %v2424 = vrot.slane %v2423, 2
  %v2425 = vadd.f32 %v2423, %v2424
  %v2426 = vrot.slane %v2425, 1
  %v2427 = vadd.f32 %v2425, %v2426
  %v2428 = vadd.f32 %v2427, 0.0
  %v2429 = vadd.f32 %v1171, %v1174
  %v2430 = vadd.f32 %v2429, %v1179
  %v2431 = vadd.f32 %v2430, %v1182
  %v2432 = vadd.f32 %v2431, %v1187
  %v2433 = vadd.f32 %v2432, %v1190
  %v2434 = vadd.f32 %v2433, %v1195
  %v2435 = vadd.f32 %v2434, %v1198
  %v2436 = vadd.f32 %v2435, %v1203
  %v2437 = vadd.f32 %v2436, %v1206
  %v2438 = vadd.f32 %v2437, %v1211
  %v2439 = vadd.f32 %v2438, %v1214
  %v2440 = vsel %vm2419, %v1219, 0.0
  %v2441 = vadd.f32 %v2439, %v2440
  %v2442 = vrot.slane %v2441, 4
  %v2443 = vadd.f32 %v2441, %v2442
  %v2444 = vrot.slane %v2443, 2
  %v2445 = vadd.f32 %v2443, %v2444
  %v2446 = vrot.slane %v2445, 1
  %v2447 = vadd.f32 %v2445, %v2446
  %v2448 = vadd.f32 %v2428, %v2447
  %v2449 = vadd.f32 %v1763, %v1766
  %v2450 = vadd.f32 %v2449, %v1771
  %v2451 = vadd.f32 %v2450, %v1774
  %v2452 = vadd.f32 %v2451, %v1779
  %v2453 = vadd.f32 %v2452, %v1782
  %v2454 = vadd.f32 %v2453, %v1787
  %v2455 = vadd.f32 %v2454, %v1790
  %v2456 = vadd.f32 %v2455, %v1795
  %v2457 = vadd.f32 %v2456, %v1798
  %v2458 = vadd.f32 %v2457, %v1803
  %v2459 = vadd.f32 %v2458, %v1806
  %v2460 = vsel %vm2419, %v1811, 0.0
  %v2461 = vadd.f32 %v2459, %v2460
  %v2462 = vrot.slane %v2461, 4
  %v2463 = vadd.f32 %v2461, %v2462
  %v2464 = vrot.slane %v2463, 2
  %v2465 = vadd.f32 %v2463, %v2464
  %v2466 = vrot.slane %v2465, 1
  %v2467 = vadd.f32 %v2465, %v2466
  %v2468 = vadd.f32 %v2448, %v2467
  %v2469 = vadd.f32 %v2355, %v2358
  %v2470 = vadd.f32 %v2469, %v2363
  %v2471 = vadd.f32 %v2470, %v2366
  %v2472 = vadd.f32 %v2471, %v2371
  %v2473 = vadd.f32 %v2472, %v2374
  %v2474 = vadd.f32 %v2473, %v2379
  %v2475 = vadd.f32 %v2474, %v2382
  %v2476 = vadd.f32 %v2475, %v2387
  %v2477 = vadd.f32 %v2476, %v2390
  %v2478 = vadd.f32 %v2477, %v2395
  %v2479 = vadd.f32 %v2478, %v2398
  %v2480 = vsel %vm2419, %v2403, 0.0
  %v2481 = vadd.f32 %v2479, %v2480
  %v2482 = vrot.slane %v2481, 4
  %v2483 = vadd.f32 %v2481, %v2482
  %v2484 = vrot.slane %v2483, 2
  %v2485 = vadd.f32 %v2483, %v2484
  %v2486 = vrot.slane %v2485, 1
  %v2487 = vadd.f32 %v2485, %v2486
  %v2488 = vadd.f32 %v2468, %v2487
  %v2489 = vmul.f32 %v2488, 0.0025510204
  %v2490 = vsub.f32 %v579, %v2489
  %v2491 = vsub.f32 %v582, %v2489
  %v2492 = vsub.f32 %v587, %v2489
  %v2493 = vsub.f32 %v590, %v2489
  %v2494 = vsub.f32 %v595, %v2489
  %v2495 = vsub.f32 %v598, %v2489
  %v2496 = vsub.f32 %v603, %v2489
  %v2497 = vsub.f32 %v606, %v2489
  %v2498 = vsub.f32 %v611, %v2489
  %v2499 = vsub.f32 %v614, %v2489
  %v2500 = vsub.f32 %v619, %v2489
  %v2501 = vsub.f32 %v622, %v2489
  %v2502 = vsub.f32 %v627, %v2489
  %v2503 = vsub.f32 %v1171, %v2489
  %v2504 = vsub.f32 %v1174, %v2489
  %v2505 = vsub.f32 %v1179, %v2489
  %v2506 = vsub.f32 %v1182, %v2489
  %v2507 = vsub.f32 %v1187, %v2489
  %v2508 = vsub.f32 %v1190, %v2489
  %v2509 = vsub.f32 %v1195, %v2489
  %v2510 = vsub.f32 %v1198, %v2489
  %v2511 = vsub.f32 %v1203, %v2489
  %v2512 = vsub.f32 %v1206, %v2489
  %v2513 = vsub.f32 %v1211, %v2489
  %v2514 = vsub.f32 %v1214, %v2489
  %v2515 = vsub.f32 %v1219, %v2489
  %v2516 = vsub.f32 %v1763, %v2489
  %v2517 = vsub.f32 %v1766, %v2489
  %v2518 = vsub.f32 %v1771, %v2489
  %v2519 = vsub.f32 %v1774, %v2489
  %v2520 = vsub.f32 %v1779, %v2489
  %v2521 = vsub.f32 %v1782, %v2489
  %v2522 = vsub.f32 %v1787, %v2489
  %v2523 = vsub.f32 %v1790, %v2489
  %v2524 = vsub.f32 %v1795, %v2489
  %v2525 = vsub.f32 %v1798, %v2489
  %v2526 = vsub.f32 %v1803, %v2489
  %v2527 = vsub.f32 %v1806, %v2489
  %v2528 = vsub.f32 %v1811, %v2489
  %v2529 = vsub.f32 %v2355, %v2489
  %v2530 = vsub.f32 %v2358, %v2489
  %v2531 = vsub.f32 %v2363, %v2489
  %v2532 = vsub.f32 %v2366, %v2489
  %v2533 = vsub.f32 %v2371, %v2489
  %v2534 = vsub.f32 %v2374, %v2489
  %v2535 = vsub.f32 %v2379, %v2489
  %v2536 = vsub.f32 %v2382, %v2489
  %v2537 = vsub.f32 %v2387, %v2489
  %v2538 = vsub.f32 %v2390, %v2489
  %v2539 = vsub.f32 %v2395, %v2489
  %v2540 = vsub.f32 %v2398, %v2489
  %v2541 = vsub.f32 %v2403, %v2489
  %v2542 = vmul.f32 %v2490, %v2490
  %v2543 = vmul.f32 %v2491, %v2491
  %v2544 = vmul.f32 %v2492, %v2492
  %v2545 = vmul.f32 %v2493, %v2493
  %v2546 = vmul.f32 %v2494, %v2494
  %v2547 = vmul.f32 %v2495, %v2495
  %v2548 = vmul.f32 %v2496, %v2496
  %v2549 = vmul.f32 %v2497, %v2497
  %v2550 = vmul.f32 %v2498, %v2498
  %v2551 = vmul.f32 %v2499, %v2499
  %v2552 = vmul.f32 %v2500, %v2500
  %v2553 = vmul.f32 %v2501, %v2501
  %v2554 = vmul.f32 %v2502, %v2502
  %v2555 = vadd.f32 %v2542, %v2543
  %v2556 = vadd.f32 %v2555, %v2544
  %v2557 = vadd.f32 %v2556, %v2545
  %v2558 = vadd.f32 %v2557, %v2546
  %v2559 = vadd.f32 %v2558, %v2547
  %v2560 = vadd.f32 %v2559, %v2548
  %v2561 = vadd.f32 %v2560, %v2549
  %v2562 = vadd.f32 %v2561, %v2550
  %v2563 = vadd.f32 %v2562, %v2551
  %v2564 = vadd.f32 %v2563, %v2552
  %v2565 = vadd.f32 %v2564, %v2553
  %v2566 = vsel %vm2419, %v2554, 0.0
  %v2567 = vadd.f32 %v2565, %v2566
  %v2568 = vrot.slane %v2567, 4
  %v2569 = vadd.f32 %v2567, %v2568
  %v2570 = vrot.slane %v2569, 2
  %v2571 = vadd.f32 %v2569, %v2570
  %v2572 = vrot.slane %v2571, 1
  %v2573 = vadd.f32 %v2571, %v2572
  %v2574 = vadd.f32 %v2573, 0.0
  %v2575 = vmul.f32 %v2503, %v2503
  %v2576 = vmul.f32 %v2504, %v2504
  %v2577 = vmul.f32 %v2505, %v2505
  %v2578 = vmul.f32 %v2506, %v2506
  %v2579 = vmul.f32 %v2507, %v2507
  %v2580 = vmul.f32 %v2508, %v2508
  %v2581 = vmul.f32 %v2509, %v2509
  %v2582 = vmul.f32 %v2510, %v2510
  %v2583 = vmul.f32 %v2511, %v2511
  %v2584 = vmul.f32 %v2512, %v2512
  %v2585 = vmul.f32 %v2513, %v2513
  %v2586 = vmul.f32 %v2514, %v2514
  %v2587 = vmul.f32 %v2515, %v2515
  %v2588 = vadd.f32 %v2575, %v2576
  %v2589 = vadd.f32 %v2588, %v2577
  %v2590 = vadd.f32 %v2589, %v2578
  %v2591 = vadd.f32 %v2590, %v2579
  %v2592 = vadd.f32 %v2591, %v2580
  %v2593 = vadd.f32 %v2592, %v2581
  %v2594 = vadd.f32 %v2593, %v2582
  %v2595 = vadd.f32 %v2594, %v2583
  %v2596 = vadd.f32 %v2595, %v2584
  %v2597 = vadd.f32 %v2596, %v2585
  %v2598 = vadd.f32 %v2597, %v2586
  %v2599 = vsel %vm2419, %v2587, 0.0
  %v2600 = vadd.f32 %v2598, %v2599
  %v2601 = vrot.slane %v2600, 4
  %v2602 = vadd.f32 %v2600, %v2601
  %v2603 = vrot.slane %v2602, 2
  %v2604 = vadd.f32 %v2602, %v2603
  %v2605 = vrot.slane %v2604, 1
  %v2606 = vadd.f32 %v2604, %v2605
  %v2607 = vadd.f32 %v2574, %v2606
  %v2608 = vmul.f32 %v2516, %v2516
  %v2609 = vmul.f32 %v2517, %v2517
  %v2610 = vmul.f32 %v2518, %v2518
  %v2611 = vmul.f32 %v2519, %v2519
  %v2612 = vmul.f32 %v2520, %v2520
  %v2613 = vmul.f32 %v2521, %v2521
  %v2614 = vmul.f32 %v2522, %v2522
  %v2615 = vmul.f32 %v2523, %v2523
  %v2616 = vmul.f32 %v2524, %v2524
  %v2617 = vmul.f32 %v2525, %v2525
  %v2618 = vmul.f32 %v2526, %v2526
  %v2619 = vmul.f32 %v2527, %v2527
  %v2620 = vmul.f32 %v2528, %v2528
  %v2621 = vadd.f32 %v2608, %v2609
  %v2622 = vadd.f32 %v2621, %v2610
  %v2623 = vadd.f32 %v2622, %v2611
  %v2624 = vadd.f32 %v2623, %v2612
  %v2625 = vadd.f32 %v2624, %v2613
  %v2626 = vadd.f32 %v2625, %v2614
  %v2627 = vadd.f32 %v2626, %v2615
  %v2628 = vadd.f32 %v2627, %v2616
  %v2629 = vadd.f32 %v2628, %v2617
  %v2630 = vadd.f32 %v2629, %v2618
  %v2631 = vadd.f32 %v2630, %v2619
  %v2632 = vsel %vm2419, %v2620, 0.0
  %v2633 = vadd.f32 %v2631, %v2632
  %v2634 = vrot.slane %v2633, 4
  %v2635 = vadd.f32 %v2633, %v2634
  %v2636 = vrot.slane %v2635, 2
  %v2637 = vadd.f32 %v2635, %v2636
  %v2638 = vrot.slane %v2637, 1
  %v2639 = vadd.f32 %v2637, %v2638
  %v2640 = vadd.f32 %v2607, %v2639
  %v2641 = vmul.f32 %v2529, %v2529
  %v2642 = vmul.f32 %v2530, %v2530
  %v2643 = vmul.f32 %v2531, %v2531
  %v2644 = vmul.f32 %v2532, %v2532
  %v2645 = vmul.f32 %v2533, %v2533
  %v2646 = vmul.f32 %v2534, %v2534
  %v2647 = vmul.f32 %v2535, %v2535
  %v2648 = vmul.f32 %v2536, %v2536
  %v2649 = vmul.f32 %v2537, %v2537
  %v2650 = vmul.f32 %v2538, %v2538
  %v2651 = vmul.f32 %v2539, %v2539
  %v2652 = vmul.f32 %v2540, %v2540
  %v2653 = vmul.f32 %v2541, %v2541
  %v2654 = vadd.f32 %v2641, %v2642
  %v2655 = vadd.f32 %v2654, %v2643
  %v2656 = vadd.f32 %v2655, %v2644
  %v2657 = vadd.f32 %v2656, %v2645
  %v2658 = vadd.f32 %v2657, %v2646
  %v2659 = vadd.f32 %v2658, %v2647
  %v2660 = vadd.f32 %v2659, %v2648
  %v2661 = vadd.f32 %v2660, %v2649
  %v2662 = vadd.f32 %v2661, %v2650
  %v2663 = vadd.f32 %v2662, %v2651
  %v2664 = vadd.f32 %v2663, %v2652
  %v2665 = vsel %vm2419, %v2653, 0.0
  %v2666 = vadd.f32 %v2664, %v2665
  %v2667 = vrot.slane %v2666, 4
  %v2668 = vadd.f32 %v2666, %v2667
  %v2669 = vrot.slane %v2668, 2
  %v2670 = vadd.f32 %v2668, %v2669
  %v2671 = vrot.slane %v2670, 1
  %v2672 = vadd.f32 %v2670, %v2671
  %v2673 = vadd.f32 %v2640, %v2672
  %v2674 = vmul.f32 %v2673, 0.0025510204
  %v2675 = vld [vmem:[%s8] sm:$0x1]
  %v2676 = vadd.f32 %v2674, 1e-05
  %v2677 = vrsqrt.pop %v2676
  %v2678 = vmul.f32 %v2675, %v2677
  %v2679 = vld [vmem:[%s9] sm:$0x1]
  %v2681 = vlaneseq
  %v2682 = vshrl.u32 %v2681, 7
  %v2683 = vsub.s32 0, %v2682
  %v2684 = vrot.slane %v2678, %v2683
  %v2686 = vmul.f32 %v2490, %v2684
  %v2687 = vmul.f32 %v2491, %v2684
  %v2688 = vmul.f32 %v2492, %v2684
  %v2689 = vmul.f32 %v2493, %v2684
  %v2690 = vmul.f32 %v2494, %v2684
  %v2691 = vmul.f32 %v2495, %v2684
  %v2692 = vmul.f32 %v2496, %v2684
  %v2693 = vmul.f32 %v2497, %v2684
  %v2694 = vmul.f32 %v2498, %v2684
  %v2695 = vmul.f32 %v2499, %v2684
  %v2696 = vmul.f32 %v2500, %v2684
  %v2697 = vmul.f32 %v2501, %v2684
  %v2698 = vmul.f32 %v2502, %v2684
  %v2700 = vlaneseq
  %v2701 = vshrl.u32 %v2700, 7
  %v2702 = vsub.s32 0, %v2701
  %v2703 = vrot.slane %v2679, %v2702
  %v2705 = vadd.f32 %v2686, %v2703
  %v2706 = vadd.f32 %v2687, %v2703
  %v2707 = vadd.f32 %v2688, %v2703
  %v2708 = vadd.f32 %v2689, %v2703
  %v2709 = vadd.f32 %v2690, %v2703
  %v2710 = vadd.f32 %v2691, %v2703
  %v2711 = vadd.f32 %v2692, %v2703
  %v2712 = vadd.f32 %v2693, %v2703
  %v2713 = vadd.f32 %v2694, %v2703
  %v2714 = vadd.f32 %v2695, %v2703
  %v2715 = vadd.f32 %v2696, %v2703
  %v2716 = vadd.f32 %v2697, %v2703
  %v2717 = vadd.f32 %v2698, %v2703
  %v2718 = vmax.f32 %v2705, 0.0
  %v2719 = vmax.f32 %v2706, 0.0
  %v2720 = vmax.f32 %v2707, 0.0
  %v2721 = vmax.f32 %v2708, 0.0
  %v2722 = vmax.f32 %v2709, 0.0
  %v2723 = vmax.f32 %v2710, 0.0
  %v2724 = vmax.f32 %v2711, 0.0
  %v2725 = vmax.f32 %v2712, 0.0
  %v2726 = vmax.f32 %v2713, 0.0
  %v2727 = vmax.f32 %v2714, 0.0
  %v2728 = vmax.f32 %v2715, 0.0
  %v2729 = vmax.f32 %v2716, 0.0
  %v2730 = vmax.f32 %v2717, 0.0
  %v2731 = vpack.c.bf16 %v2719, %v2718
  %v2732 = vpack.c.bf16 %v2721, %v2720
  %v2733 = vpack.c.bf16 %v2723, %v2722
  %v2734 = vpack.c.bf16 %v2725, %v2724
  %v2735 = vpack.c.bf16 %v2727, %v2726
  %v2736 = vpack.c.bf16 %v2729, %v2728
  %v2737 = vpack.c.bf16 %v2730, %v2730
  %v2745 = vunpack.c.l.b16 %v2731
  %v2746 = vunpack.c.h.b16 %v2731
  %v2747 = vunpack.c.l.b16 %v2732
  %v2748 = vunpack.c.h.b16 %v2732
  %v2749 = vunpack.c.l.b16 %v2733
  %v2750 = vunpack.c.h.b16 %v2733
  %v2751 = vunpack.c.l.b16 %v2734
  %v2752 = vunpack.c.h.b16 %v2734
  %v2753 = vunpack.c.l.b16 %v2735
  %v2754 = vunpack.c.h.b16 %v2735
  %v2755 = vunpack.c.l.b16 %v2736
  %v2756 = vunpack.c.h.b16 %v2736
  %v2757 = vunpack.c.l.b16 %v2737
  %v2758 = vpack.c.b16 %v2745, %v2745
  %v2759 = vpack.c.b16 %v2746, %v2746
  %v2760 = vpack.c.b16 %v2747, %v2747
  %v2761 = vpack.c.b16 %v2748, %v2748
  %v2762 = vpack.c.b16 %v2749, %v2749
  %v2763 = vpack.c.b16 %v2750, %v2750
  %v2764 = vpack.c.b16 %v2751, %v2751
  %v2765 = vpack.c.b16 %v2752, %v2752
  %v2766 = vpack.c.b16 %v2753, %v2753
  %v2767 = vpack.c.b16 %v2754, %v2754
  %v2768 = vpack.c.b16 %v2755, %v2755
  %v2769 = vpack.c.b16 %v2756, %v2756
  %v2770 = vpack.c.b16 %v2757, %v2757
  %2784 = vst [vmem:[%s10] sm:$0xf] %v2758
  %2785 = vst [vmem:[%s10 + $0x4] sm:$0xf] %v2759
  %2786 = vst [vmem:[%s10 + $0x8] sm:$0xf] %v2760
  %2787 = vst [vmem:[%s10 + $0xc] sm:$0xf] %v2761
  %2788 = vst [vmem:[%s10 + $0x10] sm:$0xf] %v2762
  %2789 = vst [vmem:[%s10 + $0x14] sm:$0xf] %v2763
  %2790 = vst [vmem:[%s10 + $0x18] sm:$0xf] %v2764
  %2791 = vst [vmem:[%s10 + $0x1c] sm:$0xf] %v2765
  %2792 = vst [vmem:[%s10 + $0x20] sm:$0xf] %v2766
  %2793 = vst [vmem:[%s10 + $0x24] sm:$0xf] %v2767
  %2794 = vst [vmem:[%s10 + $0x28] sm:$0xf] %v2768
  %2795 = vst [vmem:[%s10 + $0x2c] sm:$0xf] %v2769
  %2796 = vst [vmem:[%s10 + $0x30] sm:$0x1] %v2770
  %v2797 = vmul.f32 %v2503, %v2684
  %v2798 = vmul.f32 %v2504, %v2684
  %v2799 = vmul.f32 %v2505, %v2684
  %v2800 = vmul.f32 %v2506, %v2684
  %v2801 = vmul.f32 %v2507, %v2684
  %v2802 = vmul.f32 %v2508, %v2684
  %v2803 = vmul.f32 %v2509, %v2684
  %v2804 = vmul.f32 %v2510, %v2684
  %v2805 = vmul.f32 %v2511, %v2684
  %v2806 = vmul.f32 %v2512, %v2684
  %v2807 = vmul.f32 %v2513, %v2684
  %v2808 = vmul.f32 %v2514, %v2684
  %v2809 = vmul.f32 %v2515, %v2684
  %v2810 = vadd.f32 %v2797, %v2703
  %v2811 = vadd.f32 %v2798, %v2703
  %v2812 = vadd.f32 %v2799, %v2703
  %v2813 = vadd.f32 %v2800, %v2703
  %v2814 = vadd.f32 %v2801, %v2703
  %v2815 = vadd.f32 %v2802, %v2703
  %v2816 = vadd.f32 %v2803, %v2703
  %v2817 = vadd.f32 %v2804, %v2703
  %v2818 = vadd.f32 %v2805, %v2703
  %v2819 = vadd.f32 %v2806, %v2703
  %v2820 = vadd.f32 %v2807, %v2703
  %v2821 = vadd.f32 %v2808, %v2703
  %v2822 = vadd.f32 %v2809, %v2703
  %v2823 = vmax.f32 %v2810, 0.0
  %v2824 = vmax.f32 %v2811, 0.0
  %v2825 = vmax.f32 %v2812, 0.0
  %v2826 = vmax.f32 %v2813, 0.0
  %v2827 = vmax.f32 %v2814, 0.0
  %v2828 = vmax.f32 %v2815, 0.0
  %v2829 = vmax.f32 %v2816, 0.0
  %v2830 = vmax.f32 %v2817, 0.0
  %v2831 = vmax.f32 %v2818, 0.0
  %v2832 = vmax.f32 %v2819, 0.0
  %v2833 = vmax.f32 %v2820, 0.0
  %v2834 = vmax.f32 %v2821, 0.0
  %v2835 = vmax.f32 %v2822, 0.0
  %v2836 = vpack.c.bf16 %v2824, %v2823
  %v2837 = vpack.c.bf16 %v2826, %v2825
  %v2838 = vpack.c.bf16 %v2828, %v2827
  %v2839 = vpack.c.bf16 %v2830, %v2829
  %v2840 = vpack.c.bf16 %v2832, %v2831
  %v2841 = vpack.c.bf16 %v2834, %v2833
  %v2842 = vpack.c.bf16 %v2835, %v2835
  %v2850 = vunpack.c.l.b16 %v2836
  %v2851 = vunpack.c.h.b16 %v2836
  %v2852 = vunpack.c.l.b16 %v2837
  %v2853 = vunpack.c.h.b16 %v2837
  %v2854 = vunpack.c.l.b16 %v2838
  %v2855 = vunpack.c.h.b16 %v2838
  %v2856 = vunpack.c.l.b16 %v2839
  %v2857 = vunpack.c.h.b16 %v2839
  %v2858 = vunpack.c.l.b16 %v2840
  %v2859 = vunpack.c.h.b16 %v2840
  %v2860 = vunpack.c.l.b16 %v2841
  %v2861 = vunpack.c.h.b16 %v2841
  %v2862 = vunpack.c.l.b16 %v2842
  %v2863 = vpack.c.b16 %v2850, %v2850
  %v2864 = vpack.c.b16 %v2851, %v2851
  %v2865 = vpack.c.b16 %v2852, %v2852
  %v2866 = vpack.c.b16 %v2853, %v2853
  %v2867 = vpack.c.b16 %v2854, %v2854
  %v2868 = vpack.c.b16 %v2855, %v2855
  %v2869 = vpack.c.b16 %v2856, %v2856
  %v2870 = vpack.c.b16 %v2857, %v2857
  %v2871 = vpack.c.b16 %v2858, %v2858
  %v2872 = vpack.c.b16 %v2859, %v2859
  %v2873 = vpack.c.b16 %v2860, %v2860
  %v2874 = vpack.c.b16 %v2861, %v2861
  %v2875 = vpack.c.b16 %v2862, %v2862
  %2889 = vst [vmem:[%s11] sm:$0xf] %v2863
  %2890 = vst [vmem:[%s11 + $0x4] sm:$0xf] %v2864
  %2891 = vst [vmem:[%s11 + $0x8] sm:$0xf] %v2865
  %2892 = vst [vmem:[%s11 + $0xc] sm:$0xf] %v2866
  %2893 = vst [vmem:[%s11 + $0x10] sm:$0xf] %v2867
  %2894 = vst [vmem:[%s11 + $0x14] sm:$0xf] %v2868
  %2895 = vst [vmem:[%s11 + $0x18] sm:$0xf] %v2869
  %2896 = vst [vmem:[%s11 + $0x1c] sm:$0xf] %v2870
  %2897 = vst [vmem:[%s11 + $0x20] sm:$0xf] %v2871
  %2898 = vst [vmem:[%s11 + $0x24] sm:$0xf] %v2872
  %2899 = vst [vmem:[%s11 + $0x28] sm:$0xf] %v2873
  %2900 = vst [vmem:[%s11 + $0x2c] sm:$0xf] %v2874
  %2901 = vst [vmem:[%s11 + $0x30] sm:$0x1] %v2875
  %v2902 = vmul.f32 %v2516, %v2684
  %v2903 = vmul.f32 %v2517, %v2684
  %v2904 = vmul.f32 %v2518, %v2684
  %v2905 = vmul.f32 %v2519, %v2684
  %v2906 = vmul.f32 %v2520, %v2684
  %v2907 = vmul.f32 %v2521, %v2684
  %v2908 = vmul.f32 %v2522, %v2684
  %v2909 = vmul.f32 %v2523, %v2684
  %v2910 = vmul.f32 %v2524, %v2684
  %v2911 = vmul.f32 %v2525, %v2684
  %v2912 = vmul.f32 %v2526, %v2684
  %v2913 = vmul.f32 %v2527, %v2684
  %v2914 = vmul.f32 %v2528, %v2684
  %v2915 = vadd.f32 %v2902, %v2703
  %v2916 = vadd.f32 %v2903, %v2703
  %v2917 = vadd.f32 %v2904, %v2703
  %v2918 = vadd.f32 %v2905, %v2703
  %v2919 = vadd.f32 %v2906, %v2703
  %v2920 = vadd.f32 %v2907, %v2703
  %v2921 = vadd.f32 %v2908, %v2703
  %v2922 = vadd.f32 %v2909, %v2703
  %v2923 = vadd.f32 %v2910, %v2703
  %v2924 = vadd.f32 %v2911, %v2703
  %v2925 = vadd.f32 %v2912, %v2703
  %v2926 = vadd.f32 %v2913, %v2703
  %v2927 = vadd.f32 %v2914, %v2703
  %v2928 = vmax.f32 %v2915, 0.0
  %v2929 = vmax.f32 %v2916, 0.0
  %v2930 = vmax.f32 %v2917, 0.0
  %v2931 = vmax.f32 %v2918, 0.0
  %v2932 = vmax.f32 %v2919, 0.0
  %v2933 = vmax.f32 %v2920, 0.0
  %v2934 = vmax.f32 %v2921, 0.0
  %v2935 = vmax.f32 %v2922, 0.0
  %v2936 = vmax.f32 %v2923, 0.0
  %v2937 = vmax.f32 %v2924, 0.0
  %v2938 = vmax.f32 %v2925, 0.0
  %v2939 = vmax.f32 %v2926, 0.0
  %v2940 = vmax.f32 %v2927, 0.0
  %v2941 = vpack.c.bf16 %v2929, %v2928
  %v2942 = vpack.c.bf16 %v2931, %v2930
  %v2943 = vpack.c.bf16 %v2933, %v2932
  %v2944 = vpack.c.bf16 %v2935, %v2934
  %v2945 = vpack.c.bf16 %v2937, %v2936
  %v2946 = vpack.c.bf16 %v2939, %v2938
  %v2947 = vpack.c.bf16 %v2940, %v2940
  %v2955 = vunpack.c.l.b16 %v2941
  %v2956 = vunpack.c.h.b16 %v2941
  %v2957 = vunpack.c.l.b16 %v2942
  %v2958 = vunpack.c.h.b16 %v2942
  %v2959 = vunpack.c.l.b16 %v2943
  %v2960 = vunpack.c.h.b16 %v2943
  %v2961 = vunpack.c.l.b16 %v2944
  %v2962 = vunpack.c.h.b16 %v2944
  %v2963 = vunpack.c.l.b16 %v2945
  %v2964 = vunpack.c.h.b16 %v2945
  %v2965 = vunpack.c.l.b16 %v2946
  %v2966 = vunpack.c.h.b16 %v2946
  %v2967 = vunpack.c.l.b16 %v2947
  %v2968 = vpack.c.b16 %v2955, %v2955
  %v2969 = vpack.c.b16 %v2956, %v2956
  %v2970 = vpack.c.b16 %v2957, %v2957
  %v2971 = vpack.c.b16 %v2958, %v2958
  %v2972 = vpack.c.b16 %v2959, %v2959
  %v2973 = vpack.c.b16 %v2960, %v2960
  %v2974 = vpack.c.b16 %v2961, %v2961
  %v2975 = vpack.c.b16 %v2962, %v2962
  %v2976 = vpack.c.b16 %v2963, %v2963
  %v2977 = vpack.c.b16 %v2964, %v2964
  %v2978 = vpack.c.b16 %v2965, %v2965
  %v2979 = vpack.c.b16 %v2966, %v2966
  %v2980 = vpack.c.b16 %v2967, %v2967
  %2994 = vst [vmem:[%s12] sm:$0xf] %v2968
  %2995 = vst [vmem:[%s12 + $0x4] sm:$0xf] %v2969
  %2996 = vst [vmem:[%s12 + $0x8] sm:$0xf] %v2970
  %2997 = vst [vmem:[%s12 + $0xc] sm:$0xf] %v2971
  %2998 = vst [vmem:[%s12 + $0x10] sm:$0xf] %v2972
  %2999 = vst [vmem:[%s12 + $0x14] sm:$0xf] %v2973
  %3000 = vst [vmem:[%s12 + $0x18] sm:$0xf] %v2974
  %3001 = vst [vmem:[%s12 + $0x1c] sm:$0xf] %v2975
  %3002 = vst [vmem:[%s12 + $0x20] sm:$0xf] %v2976
  %3003 = vst [vmem:[%s12 + $0x24] sm:$0xf] %v2977
  %3004 = vst [vmem:[%s12 + $0x28] sm:$0xf] %v2978
  %3005 = vst [vmem:[%s12 + $0x2c] sm:$0xf] %v2979
  %3006 = vst [vmem:[%s12 + $0x30] sm:$0x1] %v2980
  %v3007 = vmul.f32 %v2529, %v2684
  %v3008 = vmul.f32 %v2530, %v2684
  %v3009 = vmul.f32 %v2531, %v2684
  %v3010 = vmul.f32 %v2532, %v2684
  %v3011 = vmul.f32 %v2533, %v2684
  %v3012 = vmul.f32 %v2534, %v2684
  %v3013 = vmul.f32 %v2535, %v2684
  %v3014 = vmul.f32 %v2536, %v2684
  %v3015 = vmul.f32 %v2537, %v2684
  %v3016 = vmul.f32 %v2538, %v2684
  %v3017 = vmul.f32 %v2539, %v2684
  %v3018 = vmul.f32 %v2540, %v2684
  %v3019 = vmul.f32 %v2541, %v2684
  %v3020 = vadd.f32 %v3007, %v2703
  %v3021 = vadd.f32 %v3008, %v2703
  %v3022 = vadd.f32 %v3009, %v2703
  %v3023 = vadd.f32 %v3010, %v2703
  %v3024 = vadd.f32 %v3011, %v2703
  %v3025 = vadd.f32 %v3012, %v2703
  %v3026 = vadd.f32 %v3013, %v2703
  %v3027 = vadd.f32 %v3014, %v2703
  %v3028 = vadd.f32 %v3015, %v2703
  %v3029 = vadd.f32 %v3016, %v2703
  %v3030 = vadd.f32 %v3017, %v2703
  %v3031 = vadd.f32 %v3018, %v2703
  %v3032 = vadd.f32 %v3019, %v2703
  %v3033 = vmax.f32 %v3020, 0.0
  %v3034 = vmax.f32 %v3021, 0.0
  %v3035 = vmax.f32 %v3022, 0.0
  %v3036 = vmax.f32 %v3023, 0.0
  %v3037 = vmax.f32 %v3024, 0.0
  %v3038 = vmax.f32 %v3025, 0.0
  %v3039 = vmax.f32 %v3026, 0.0
  %v3040 = vmax.f32 %v3027, 0.0
  %v3041 = vmax.f32 %v3028, 0.0
  %v3042 = vmax.f32 %v3029, 0.0
  %v3043 = vmax.f32 %v3030, 0.0
  %v3044 = vmax.f32 %v3031, 0.0
  %v3045 = vmax.f32 %v3032, 0.0
  %v3046 = vpack.c.bf16 %v3034, %v3033
  %v3047 = vpack.c.bf16 %v3036, %v3035
  %v3048 = vpack.c.bf16 %v3038, %v3037
  %v3049 = vpack.c.bf16 %v3040, %v3039
  %v3050 = vpack.c.bf16 %v3042, %v3041
  %v3051 = vpack.c.bf16 %v3044, %v3043
  %v3052 = vpack.c.bf16 %v3045, %v3045
  %v3060 = vunpack.c.l.b16 %v3046
  %v3061 = vunpack.c.h.b16 %v3046
  %v3062 = vunpack.c.l.b16 %v3047
  %v3063 = vunpack.c.h.b16 %v3047
  %v3064 = vunpack.c.l.b16 %v3048
  %v3065 = vunpack.c.h.b16 %v3048
  %v3066 = vunpack.c.l.b16 %v3049
  %v3067 = vunpack.c.h.b16 %v3049
  %v3068 = vunpack.c.l.b16 %v3050
  %v3069 = vunpack.c.h.b16 %v3050
  %v3070 = vunpack.c.l.b16 %v3051
  %v3071 = vunpack.c.h.b16 %v3051
  %v3072 = vunpack.c.l.b16 %v3052
  %v3073 = vpack.c.b16 %v3060, %v3060
  %v3074 = vpack.c.b16 %v3061, %v3061
  %v3075 = vpack.c.b16 %v3062, %v3062
  %v3076 = vpack.c.b16 %v3063, %v3063
  %v3077 = vpack.c.b16 %v3064, %v3064
  %v3078 = vpack.c.b16 %v3065, %v3065
  %v3079 = vpack.c.b16 %v3066, %v3066
  %v3080 = vpack.c.b16 %v3067, %v3067
  %v3081 = vpack.c.b16 %v3068, %v3068
  %v3082 = vpack.c.b16 %v3069, %v3069
  %v3083 = vpack.c.b16 %v3070, %v3070
  %v3084 = vpack.c.b16 %v3071, %v3071
  %v3085 = vpack.c.b16 %v3072, %v3072
  %3099 = vst [vmem:[%s13] sm:$0xf] %v3073
  %3100 = vst [vmem:[%s13 + $0x4] sm:$0xf] %v3074
  %3101 = vst [vmem:[%s13 + $0x8] sm:$0xf] %v3075
  %3102 = vst [vmem:[%s13 + $0xc] sm:$0xf] %v3076
  %3103 = vst [vmem:[%s13 + $0x10] sm:$0xf] %v3077
  %3104 = vst [vmem:[%s13 + $0x14] sm:$0xf] %v3078
  %3105 = vst [vmem:[%s13 + $0x18] sm:$0xf] %v3079
  %3106 = vst [vmem:[%s13 + $0x1c] sm:$0xf] %v3080
  %3107 = vst [vmem:[%s13 + $0x20] sm:$0xf] %v3081
  %3108 = vst [vmem:[%s13 + $0x24] sm:$0xf] %v3082
  %3109 = vst [vmem:[%s13 + $0x28] sm:$0xf] %v3083
  %3110 = vst [vmem:[%s13 + $0x2c] sm:$0xf] %v3084
  %3111 = vst [vmem:[%s13 + $0x30] sm:$0x1] %v3085
  // Predicated region
  $region42: #{generator_forward.6} parent=0 // pred_check
    _
  $region43: #{generator_forward.6} parent=0 // pred_check_branch
    %3113 = sbr.rel (0) target = $region45
  $region44: #{generator_forward.6} parent=0 // pred_region
    _
  $region45: #{generator_forward.6} parent=0 // pred_fallthru
    _
  // Predicated region
  $region46: #{generator_forward.6} parent=0 // pred_check
    _
  $region47: #{generator_forward.6} parent=0 // pred_check_branch
    %3115 = sbr.rel (0) target = $region49
  $region48: #{generator_forward.6} parent=0 // pred_region
    _
  $region49: #{generator_forward.6} parent=0 // pred_fallthru
    _
  // Predicated region
  $region50: #{generator_forward.6} parent=0 // pred_check
    _
  $region51: #{generator_forward.6} parent=0 // pred_check_branch
    %3117 = sbr.rel (0) target = $region53
  $region52: #{generator_forward.6} parent=0 // pred_region
    _
  $region53: #{generator_forward.6} parent=0 // pred_fallthru
    _
  // Predicated region
  $region54: #{generator_forward.6} parent=0 // pred_check
    _
  $region55: #{generator_forward.6} parent=0 // pred_check_branch
    %3119 = sbr.rel (0) target = $region57
  $region56: #{generator_forward.6} parent=0 // pred_region
    _
  $region57: #{generator_forward.6} parent=0 // pred_fallthru
    _
  // Predicated region
  $region58: #{generator_forward.6} parent=0 // pred_check
    _
  $region59: #{generator_forward.6} parent=0 // pred_check_branch
    %3121 = sbr.rel (0) target = $region61
  $region60: #{generator_forward.6} parent=0 // pred_region
    _
  $region61: #{generator_forward.6} parent=0 // pred_fallthru
    _
  // Predicated region
  $region62: #{generator_forward.6} parent=0 // pred_check
    _
  $region63: #{generator_forward.6} parent=0 // pred_check_branch
    %3123 = sbr.rel (0) target = $region65
  $region64: #{generator_forward.6} parent=0 // pred_region
    _
  $region65: #{generator_forward.6} parent=0 // pred_fallthru
    _
  // Predicated region
  $region66: #{generator_forward.6} parent=0 // pred_check
    _
  $region67: #{generator_forward.6} parent=0 // pred_check_branch
    %3125 = sbr.rel (0) target = $region69
  $region68: #{generator_forward.6} parent=0 // pred_region
    _
  $region69: #{generator_forward.6} parent=0 // pred_fallthru
    _
  // Predicated region
  $region70: #{generator_forward.6} parent=0 // pred_check
    _
  $region71: #{generator_forward.6} parent=0 // pred_check_branch
    %3127 = sbr.rel (0) target = $region73
  $region72: #{generator_forward.6} parent=0 // pred_region
    _
  $region73: #{generator_forward.6} parent=0 // pred_fallthru
    _

// kernel: generator_forward.7
$region0: #{generator_forward.7}
  #allocation0 [shape = 'u32[]', space=smem, size = 0x4, offset = 0x4, fixed_abs, tag = 'smem constant byte address 0x4 - core index']
  #allocation1 [shape = 'u32[144,128]{1,0:T(1,128)}', space=vmem, size = 0x12000, scoped, tag = 'internal scratch']
  %s0 = inlined_call_operand.vmem [shape: bf16[392,256], index: 0, kind: input, shape index: {}]
  %s1 = inlined_call_operand.vmem [shape: bf16[392,256], index: 1, kind: input, shape index: {}]
  %s2 = inlined_call_operand.vmem [shape: bf16[392,256], index: 2, kind: input, shape index: {}]
  %s3 = inlined_call_operand.vmem [shape: bf16[392,256], index: 3, kind: input, shape index: {}]
  %s4 = inlined_call_operand.vmem [shape: bf16[256,128], index: 4, kind: input, shape index: {}]
  %s5 = inlined_call_operand.vmem [shape: bf16[256,128], index: 5, kind: input, shape index: {}]
  %s6 = inlined_call_operand.vmem [shape: bf16[256,128], index: 6, kind: input, shape index: {}]
  %s7 = inlined_call_operand.vmem [shape: bf16[256,128], index: 7, kind: input, shape index: {}]
  %s8 = inlined_call_operand.vmem [shape: bf16[392,128], index: 8, kind: output, shape index: {0}]
  %s9 = inlined_call_operand.vmem [shape: bf16[392,128], index: 9, kind: output, shape index: {1}]
  %s10 = inlined_call_operand.vmem [shape: bf16[392,128], index: 10, kind: output, shape index: {2}]
  %s11 = inlined_call_operand.vmem [shape: bf16[392,128], index: 11, kind: output, shape index: {3}]
  %12 = xla_tuple %s8, %s9, %s10, %s11
  %s13 = sld [smem:[#allocation0]]
  $region66: #{generator_forward.7} parent=0
    _
  %s15 = ssub.s32 1, %s13
  %s16 = scalar_select 0, %s15, %s13
  // Predicated region
  $region2: #{generator_forward.7} parent=0 // pred_check
    _
  $region3: #{generator_forward.7} parent=0 // pred_check_branch
    %18 = sbr.rel (0) target = $region5
  $region4: #{generator_forward.7} parent=0 // pred_region
    _
  $region5: #{generator_forward.7} parent=0 // pred_fallthru
    _
  // Predicated region
  $region6: #{generator_forward.7} parent=0 // pred_check
    _
  $region7: #{generator_forward.7} parent=0 // pred_check_branch
    %20 = sbr.rel (0) target = $region9
  $region8: #{generator_forward.7} parent=0 // pred_region
    _
  $region9: #{generator_forward.7} parent=0 // pred_fallthru
    _
  // Predicated region
  $region10: #{generator_forward.7} parent=0 // pred_check
    _
  $region11: #{generator_forward.7} parent=0 // pred_check_branch
    %22 = sbr.rel (0) target = $region13
  $region12: #{generator_forward.7} parent=0 // pred_region
    _
  $region13: #{generator_forward.7} parent=0 // pred_fallthru
    _
  // Predicated region
  $region14: #{generator_forward.7} parent=0 // pred_check
    _
  $region15: #{generator_forward.7} parent=0 // pred_check_branch
    %24 = sbr.rel (0) target = $region17
  $region16: #{generator_forward.7} parent=0 // pred_region
    _
  $region17: #{generator_forward.7} parent=0 // pred_fallthru
    _
  // Predicated region
  $region18: #{generator_forward.7} parent=0 // pred_check
    _
  $region19: #{generator_forward.7} parent=0 // pred_check_branch
    %26 = sbr.rel (0) target = $region21
  $region20: #{generator_forward.7} parent=0 // pred_region
    _
  $region21: #{generator_forward.7} parent=0 // pred_fallthru
    _
  // Predicated region
  $region22: #{generator_forward.7} parent=0 // pred_check
    _
  $region23: #{generator_forward.7} parent=0 // pred_check_branch
    %28 = sbr.rel (0) target = $region25
  $region24: #{generator_forward.7} parent=0 // pred_region
    _
  $region25: #{generator_forward.7} parent=0 // pred_fallthru
    _
  // Predicated region
  $region26: #{generator_forward.7} parent=0 // pred_check
    _
  $region27: #{generator_forward.7} parent=0 // pred_check_branch
    %30 = sbr.rel (0) target = $region29
  $region28: #{generator_forward.7} parent=0 // pred_region
    _
  $region29: #{generator_forward.7} parent=0 // pred_fallthru
    _
  // Predicated region
  $region30: #{generator_forward.7} parent=0 // pred_check
    _
  $region31: #{generator_forward.7} parent=0 // pred_check_branch
    %32 = sbr.rel (0) target = $region33
  $region32: #{generator_forward.7} parent=0 // pred_region
    _
  $region33: #{generator_forward.7} parent=0 // pred_fallthru
    _
  %v34 = vld [vmem:[%s0] sm:$0xff]
  %v35 = vld [vmem:[%s0 + $0x8] sm:$0xff]
  %v36 = vld [vmem:[%s0 + $0x10] sm:$0xff]
  %v37 = vld [vmem:[%s0 + $0x18] sm:$0xff]
  %v38 = vld [vmem:[%s0 + $0x20] sm:$0xff]
  %v39 = vld [vmem:[%s0 + $0x28] sm:$0xff]
  %v40 = vld [vmem:[%s0 + $0x30] sm:$0xff]
  %v41 = vld [vmem:[%s0 + $0x38] sm:$0xff]
  %v42 = vld [vmem:[%s0 + $0x40] sm:$0xff]
  %v43 = vld [vmem:[%s0 + $0x48] sm:$0xff]
  %v44 = vld [vmem:[%s0 + $0x50] sm:$0xff]
  %v45 = vld [vmem:[%s0 + $0x58] sm:$0xff]
  %v46 = vld [vmem:[%s0 + $0x60] sm:$0xff]
  %v47 = vld [vmem:[%s0 + $0x68] sm:$0xff]
  %v48 = vld [vmem:[%s0 + $0x70] sm:$0xff]
  %v49 = vld [vmem:[%s0 + $0x78] sm:$0xff]
  %v50 = vld [vmem:[%s0 + $0x80] sm:$0xff]
  %v51 = vld [vmem:[%s0 + $0x88] sm:$0xff]
  %v52 = vld [vmem:[%s0 + $0x90] sm:$0xff]
  %v53 = vld [vmem:[%s0 + $0x98] sm:$0xff]
  %v54 = vld [vmem:[%s0 + $0xa0] sm:$0xff]
  %v55 = vld [vmem:[%s0 + $0xa8] sm:$0xff]
  %v56 = vld [vmem:[%s0 + $0xb0] sm:$0xff]
  %v57 = vld [vmem:[%s0 + $0xb8] sm:$0xff]
  %v58 = vld [vmem:[%s0 + $0xc0] sm:$0xff]
  %v59 = vld [vmem:[%s0 + $0xc8] sm:$0xff]
  %v60 = vld [vmem:[%s0 + $0xd0] sm:$0xff]
  %v61 = vld [vmem:[%s0 + $0xd8] sm:$0xff]
  %v62 = vld [vmem:[%s0 + $0xe0] sm:$0xff]
  %v63 = vld [vmem:[%s0 + $0xe8] sm:$0xff]
  %v64 = vld [vmem:[%s0 + $0xf0] sm:$0xff]
  %v65 = vld [vmem:[%s0 + $0xf8] sm:$0xff]
  %v66 = vld [vmem:[%s0 + $0x100] sm:$0xff]
  %v67 = vld [vmem:[%s0 + $0x108] sm:$0xff]
  %v68 = vld [vmem:[%s0 + $0x110] sm:$0xff]
  %v69 = vld [vmem:[%s0 + $0x118] sm:$0xff]
  %v70 = vld [vmem:[%s0 + $0x120] sm:$0xff]
  %v71 = vld [vmem:[%s0 + $0x128] sm:$0xff]
  %v72 = vld [vmem:[%s0 + $0x130] sm:$0xff]
  %v73 = vld [vmem:[%s0 + $0x138] sm:$0xff]
  %v74 = vld [vmem:[%s0 + $0x140] sm:$0xff]
  %v75 = vld [vmem:[%s0 + $0x148] sm:$0xff]
  %v76 = vld [vmem:[%s0 + $0x150] sm:$0xff]
  %v77 = vld [vmem:[%s0 + $0x158] sm:$0xff]
  %v78 = vld [vmem:[%s0 + $0x160] sm:$0xff]
  %v79 = vld [vmem:[%s0 + $0x168] sm:$0xff]
  %v80 = vld [vmem:[%s0 + $0x170] sm:$0xff]
  %v81 = vld [vmem:[%s0 + $0x178] sm:$0xff]
  %v82 = vld [vmem:[%s0 + $0x180] sm:$0xff]
  %v83 = vld [vmem:[%s4] sm:$0xf]
  %v84 = vld [vmem:[%s4 + $0x4] sm:$0xf]
  %v85 = vld [vmem:[%s4 + $0x8] sm:$0xf]
  %v86 = vld [vmem:[%s4 + $0xc] sm:$0xf]
  %v87 = vld [vmem:[%s4 + $0x10] sm:$0xf]
  %v88 = vld [vmem:[%s4 + $0x14] sm:$0xf]
  %v89 = vld [vmem:[%s4 + $0x18] sm:$0xf]
  %v90 = vld [vmem:[%s4 + $0x1c] sm:$0xf]
  %v91 = vld [vmem:[%s4 + $0x20] sm:$0xf]
  %v92 = vld [vmem:[%s4 + $0x24] sm:$0xf]
  %v93 = vld [vmem:[%s4 + $0x28] sm:$0xf]
  %v94 = vld [vmem:[%s4 + $0x2c] sm:$0xf]
  %v95 = vld [vmem:[%s4 + $0x30] sm:$0xf]
  %v96 = vld [vmem:[%s4 + $0x34] sm:$0xf]
  %v97 = vld [vmem:[%s4 + $0x38] sm:$0xf]
  %v98 = vld [vmem:[%s4 + $0x3c] sm:$0xf]
  %v99 = vld [vmem:[%s4 + $0x40] sm:$0xf]
  %v100 = vld [vmem:[%s4 + $0x44] sm:$0xf]
  %v101 = vld [vmem:[%s4 + $0x48] sm:$0xf]
  %v102 = vld [vmem:[%s4 + $0x4c] sm:$0xf]
  %v103 = vld [vmem:[%s4 + $0x50] sm:$0xf]
  %v104 = vld [vmem:[%s4 + $0x54] sm:$0xf]
  %v105 = vld [vmem:[%s4 + $0x58] sm:$0xf]
  %v106 = vld [vmem:[%s4 + $0x5c] sm:$0xf]
  %v107 = vld [vmem:[%s4 + $0x60] sm:$0xf]
  %v108 = vld [vmem:[%s4 + $0x64] sm:$0xf]
  %v109 = vld [vmem:[%s4 + $0x68] sm:$0xf]
  %v110 = vld [vmem:[%s4 + $0x6c] sm:$0xf]
  %v111 = vld [vmem:[%s4 + $0x70] sm:$0xf]
  %v112 = vld [vmem:[%s4 + $0x74] sm:$0xf]
  %v113 = vld [vmem:[%s4 + $0x78] sm:$0xf]
  %v114 = vld [vmem:[%s4 + $0x7c] sm:$0xf]
  %v164 = vunpack.c.l.b16 %v34
  %v165 = vunpack.c.h.b16 %v34
  %v166 = vunpack.c.l.b16 %v35
  %v167 = vunpack.c.h.b16 %v35
  %v168 = vunpack.c.l.b16 %v36
  %v169 = vunpack.c.h.b16 %v36
  %v170 = vunpack.c.l.b16 %v37
  %v171 = vunpack.c.h.b16 %v37
  %v172 = vunpack.c.l.b16 %v38
  %v173 = vunpack.c.h.b16 %v38
  %v174 = vunpack.c.l.b16 %v39
  %v175 = vunpack.c.h.b16 %v39
  %v176 = vunpack.c.l.b16 %v40
  %v177 = vunpack.c.h.b16 %v40
  %v178 = vunpack.c.l.b16 %v41
  %v179 = vunpack.c.h.b16 %v41
  %v180 = vunpack.c.l.b16 %v42
  %v181 = vunpack.c.h.b16 %v42
  %v182 = vunpack.c.l.b16 %v43
  %v183 = vunpack.c.h.b16 %v43
  %v184 = vunpack.c.l.b16 %v44
  %v185 = vunpack.c.h.b16 %v44
  %v186 = vunpack.c.l.b16 %v45
  %v187 = vunpack.c.h.b16 %v45
  %v188 = vunpack.c.l.b16 %v46
  %v189 = vunpack.c.h.b16 %v46
  %v190 = vunpack.c.l.b16 %v47
  %v191 = vunpack.c.h.b16 %v47
  %v192 = vunpack.c.l.b16 %v48
  %v193 = vunpack.c.h.b16 %v48
  %v194 = vunpack.c.l.b16 %v49
  %v195 = vunpack.c.h.b16 %v49
  %v196 = vunpack.c.l.b16 %v50
  %v197 = vunpack.c.h.b16 %v50
  %v198 = vunpack.c.l.b16 %v51
  %v199 = vunpack.c.h.b16 %v51
  %v200 = vunpack.c.l.b16 %v52
  %v201 = vunpack.c.h.b16 %v52
  %v202 = vunpack.c.l.b16 %v53
  %v203 = vunpack.c.h.b16 %v53
  %v204 = vunpack.c.l.b16 %v54
  %v205 = vunpack.c.h.b16 %v54
  %v206 = vunpack.c.l.b16 %v55
  %v207 = vunpack.c.h.b16 %v55
  %v208 = vunpack.c.l.b16 %v56
  %v209 = vunpack.c.h.b16 %v56
  %v210 = vunpack.c.l.b16 %v57
  %v211 = vunpack.c.h.b16 %v57
  %v212 = vunpack.c.l.b16 %v58
  %v213 = vunpack.c.h.b16 %v58
  %v214 = vunpack.c.l.b16 %v59
  %v215 = vunpack.c.h.b16 %v59
  %v216 = vunpack.c.l.b16 %v60
  %v217 = vunpack.c.h.b16 %v60
  %v218 = vunpack.c.l.b16 %v61
  %v219 = vunpack.c.h.b16 %v61
  %v220 = vunpack.c.l.b16 %v62
  %v221 = vunpack.c.h.b16 %v62
  %v222 = vunpack.c.l.b16 %v63
  %v223 = vunpack.c.h.b16 %v63
  %v224 = vunpack.c.l.b16 %v64
  %v225 = vunpack.c.h.b16 %v64
  %v226 = vunpack.c.l.b16 %v65
  %v227 = vunpack.c.h.b16 %v65
  %v228 = vunpack.c.l.b16 %v66
  %v229 = vunpack.c.h.b16 %v66
  %v230 = vunpack.c.l.b16 %v67
  %v231 = vunpack.c.h.b16 %v67
  %v232 = vunpack.c.l.b16 %v68
  %v233 = vunpack.c.h.b16 %v68
  %v234 = vunpack.c.l.b16 %v69
  %v235 = vunpack.c.h.b16 %v69
  %v236 = vunpack.c.l.b16 %v70
  %v237 = vunpack.c.h.b16 %v70
  %v238 = vunpack.c.l.b16 %v71
  %v239 = vunpack.c.h.b16 %v71
  %v240 = vunpack.c.l.b16 %v72
  %v241 = vunpack.c.h.b16 %v72
  %v242 = vunpack.c.l.b16 %v73
  %v243 = vunpack.c.h.b16 %v73
  %v244 = vunpack.c.l.b16 %v74
  %v245 = vunpack.c.h.b16 %v74
  %v246 = vunpack.c.l.b16 %v75
  %v247 = vunpack.c.h.b16 %v75
  %v248 = vunpack.c.l.b16 %v76
  %v249 = vunpack.c.h.b16 %v76
  %v250 = vunpack.c.l.b16 %v77
  %v251 = vunpack.c.h.b16 %v77
  %v252 = vunpack.c.l.b16 %v78
  %v253 = vunpack.c.h.b16 %v78
  %v254 = vunpack.c.l.b16 %v79
  %v255 = vunpack.c.h.b16 %v79
  %v256 = vunpack.c.l.b16 %v80
  %v257 = vunpack.c.h.b16 %v80
  %v258 = vunpack.c.l.b16 %v81
  %v259 = vunpack.c.h.b16 %v81
  %v260 = vunpack.c.l.b16 %v82
  %v261 = vunpack.c.h.b16 %v82
  %v262 = vpack.c.b16 %v166, %v164
  %v263 = vpack.c.b16 %v167, %v165
  %v264 = vpack.c.b16 %v170, %v168
  %v265 = vpack.c.b16 %v171, %v169
  %v266 = vpack.c.b16 %v174, %v172
  %v267 = vpack.c.b16 %v175, %v173
  %v268 = vpack.c.b16 %v178, %v176
  %v269 = vpack.c.b16 %v179, %v177
  %v270 = vpack.c.b16 %v182, %v180
  %v271 = vpack.c.b16 %v183, %v181
  %v272 = vpack.c.b16 %v186, %v184
  %v273 = vpack.c.b16 %v187, %v185
  %v274 = vpack.c.b16 %v190, %v188
  %v275 = vpack.c.b16 %v191, %v189
  %v276 = vpack.c.b16 %v194, %v192
  %v277 = vpack.c.b16 %v195, %v193
  %v278 = vpack.c.b16 %v198, %v196
  %v279 = vpack.c.b16 %v199, %v197
  %v280 = vpack.c.b16 %v202, %v200
  %v281 = vpack.c.b16 %v203, %v201
  %v282 = vpack.c.b16 %v206, %v204
  %v283 = vpack.c.b16 %v207, %v205
  %v284 = vpack.c.b16 %v210, %v208
  %v285 = vpack.c.b16 %v211, %v209
  %v286 = vpack.c.b16 %v214, %v212
  %v287 = vpack.c.b16 %v215, %v213
  %v288 = vpack.c.b16 %v218, %v216
  %v289 = vpack.c.b16 %v219, %v217
  %v290 = vpack.c.b16 %v222, %v220
  %v291 = vpack.c.b16 %v223, %v221
  %v292 = vpack.c.b16 %v226, %v224
  %v293 = vpack.c.b16 %v227, %v225
  %v294 = vpack.c.b16 %v230, %v228
  %v295 = vpack.c.b16 %v231, %v229
  %v296 = vpack.c.b16 %v234, %v232
  %v297 = vpack.c.b16 %v235, %v233
  %v298 = vpack.c.b16 %v238, %v236
  %v299 = vpack.c.b16 %v239, %v237
  %v300 = vpack.c.b16 %v242, %v240
  %v301 = vpack.c.b16 %v243, %v241
  %v302 = vpack.c.b16 %v246, %v244
  %v303 = vpack.c.b16 %v247, %v245
  %v304 = vpack.c.b16 %v250, %v248
  %v305 = vpack.c.b16 %v251, %v249
  %v306 = vpack.c.b16 %v254, %v252
  %v307 = vpack.c.b16 %v255, %v253
  %v308 = vpack.c.b16 %v258, %v256
  %v309 = vpack.c.b16 %v259, %v257
  %v310 = vpack.c.b16 %v260, %v260
  %v311 = vpack.c.b16 %v261, %v261
  %v394 = vunpack.c.l.b16 %v83
  %v395 = vunpack.c.l.b16 %v84
  %v396 = vunpack.c.l.b16 %v85
  %v397 = vunpack.c.l.b16 %v86
  %v398 = vunpack.c.l.b16 %v87
  %v399 = vunpack.c.l.b16 %v88
  %v400 = vunpack.c.l.b16 %v89
  %v401 = vunpack.c.l.b16 %v90
  %v402 = vunpack.c.l.b16 %v91
  %v403 = vunpack.c.l.b16 %v92
  %v404 = vunpack.c.l.b16 %v93
  %v405 = vunpack.c.l.b16 %v94
  %v406 = vunpack.c.l.b16 %v95
  %v407 = vunpack.c.l.b16 %v96
  %v408 = vunpack.c.l.b16 %v97
  %v409 = vunpack.c.l.b16 %v98
  %v410 = vunpack.c.l.b16 %v99
  %v411 = vunpack.c.l.b16 %v100
  %v412 = vunpack.c.l.b16 %v101
  %v413 = vunpack.c.l.b16 %v102
  %v414 = vunpack.c.l.b16 %v103
  %v415 = vunpack.c.l.b16 %v104
  %v416 = vunpack.c.l.b16 %v105
  %v417 = vunpack.c.l.b16 %v106
  %v418 = vunpack.c.l.b16 %v107
  %v419 = vunpack.c.l.b16 %v108
  %v420 = vunpack.c.l.b16 %v109
  %v421 = vunpack.c.l.b16 %v110
  %v422 = vunpack.c.l.b16 %v111
  %v423 = vunpack.c.l.b16 %v112
  %v424 = vunpack.c.l.b16 %v113
  %v425 = vunpack.c.l.b16 %v114
  %v426 = vpack.c.b16 %v395, %v394
  %v427 = vpack.c.b16 %v397, %v396
  %v428 = vpack.c.b16 %v399, %v398
  %v429 = vpack.c.b16 %v401, %v400
  %v430 = vpack.c.b16 %v403, %v402
  %v431 = vpack.c.b16 %v405, %v404
  %v432 = vpack.c.b16 %v407, %v406
  %v433 = vpack.c.b16 %v409, %v408
  %v434 = vpack.c.b16 %v411, %v410
  %v435 = vpack.c.b16 %v413, %v412
  %v436 = vpack.c.b16 %v415, %v414
  %v437 = vpack.c.b16 %v417, %v416
  %v438 = vpack.c.b16 %v419, %v418
  %v439 = vpack.c.b16 %v421, %v420
  %v440 = vpack.c.b16 %v423, %v422
  %v441 = vpack.c.b16 %v425, %v424
  %458 = vmatprep.subr.bf16.mxu0 0
  %459 = vmatpush1.bf16.msra.mxu0 %v426
  %460 = vmatprep.subr.bf16.mxu0 0
  %461 = vmatpush1.bf16.msra.mxu0 %v427
  %462 = vmatprep.subr.bf16.mxu0 0
  %463 = vmatpush1.bf16.msra.mxu0 %v428
  %464 = vmatprep.subr.bf16.mxu0 0
  %465 = vmatpush1.bf16.msra.mxu0 %v429
  %466 = vmatprep.subr.bf16.mxu0 0
  %467 = vmatpush1.bf16.msra.mxu0 %v430
  %468 = vmatprep.subr.bf16.mxu0 0
  %469 = vmatpush1.bf16.msra.mxu0 %v431
  %470 = vmatprep.subr.bf16.mxu0 0
  %471 = vmatpush1.bf16.msra.mxu0 %v432
  %472 = vmatprep.subr.bf16.mxu0 0
  %473 = vmatpush1.bf16.msra.mxu0 %v433
  %474 = vmatprep.subr.bf16.mxu0 0
  %475 = vmatpush1.bf16.msra.mxu0 %v434
  %476 = vmatprep.subr.bf16.mxu0 0
  %477 = vmatpush1.bf16.msra.mxu0 %v435
  %478 = vmatprep.subr.bf16.mxu0 0
  %479 = vmatpush1.bf16.msra.mxu0 %v436
  %480 = vmatprep.subr.bf16.mxu0 0
  %481 = vmatpush1.bf16.msra.mxu0 %v437
  %482 = vmatprep.subr.bf16.mxu0 0
  %483 = vmatpush1.bf16.msra.mxu0 %v438
  %484 = vmatprep.subr.bf16.mxu0 0
  %485 = vmatpush1.bf16.msra.mxu0 %v439
  %486 = vmatprep.subr.bf16.mxu0 0
  %487 = vmatpush1.bf16.msra.mxu0 %v440
  %488 = vmatprep.subr.bf16.mxu0 0
  %489 = vmatpush1.bf16.msra.mxu0 %v441
  %490 = vmatprep.mubr.bf16.mxu0 %v263
  %491 = vmatmul.mubr.bf16.gmra.mrb[0].mxu0 %v262
  %v492 = vpop.f32.mrb[0].mxu0
  %v493 = vadd.f32 0.0, %v492
  %v494 = vpop.f32.mrb[0].mxu0
  %v495 = vpop.f32.mrb[0].mxu0
  %v496 = vadd.f32 0.0, %v495
  %v497 = vpop.f32.mrb[0].mxu0
  %498 = vmatprep.mubr.bf16.mxu0 %v265
  %499 = vmatmul.mubr.bf16.gmra.mrb[0].mxu0 %v264
  %v500 = vpop.f32.mrb[0].mxu0
  %v501 = vadd.f32 0.0, %v500
  %v502 = vpop.f32.mrb[0].mxu0
  %v503 = vpop.f32.mrb[0].mxu0
  %v504 = vadd.f32 0.0, %v503
  %v505 = vpop.f32.mrb[0].mxu0
  %506 = vmatprep.mubr.bf16.mxu0 %v267
  %507 = vmatmul.mubr.bf16.gmra.mrb[0].mxu0 %v266
  %v508 = vpop.f32.mrb[0].mxu0
  %v509 = vadd.f32 0.0, %v508
  %v510 = vpop.f32.mrb[0].mxu0
  %v511 = vpop.f32.mrb[0].mxu0
  %v512 = vadd.f32 0.0, %v511
  %v513 = vpop.f32.mrb[0].mxu0
  %514 = vmatprep.mubr.bf16.mxu0 %v269
  %515 = vmatmul.mubr.bf16.gmra.mrb[0].mxu0 %v268
  %v516 = vpop.f32.mrb[0].mxu0
  %v517 = vadd.f32 0.0, %v516
  %v518 = vpop.f32.mrb[0].mxu0
  %v519 = vpop.f32.mrb[0].mxu0
  %v520 = vadd.f32 0.0, %v519
  %v521 = vpop.f32.mrb[0].mxu0
  %522 = vmatprep.mubr.bf16.mxu0 %v271
  %523 = vmatmul.mubr.bf16.gmra.mrb[0].mxu0 %v270
  %v524 = vpop.f32.mrb[0].mxu0
  %v525 = vadd.f32 0.0, %v524
  %v526 = vpop.f32.mrb[0].mxu0
  %v527 = vpop.f32.mrb[0].mxu0
  %v528 = vadd.f32 0.0, %v527
  %v529 = vpop.f32.mrb[0].mxu0
  %530 = vmatprep.mubr.bf16.mxu0 %v273
  %531 = vmatmul.mubr.bf16.gmra.mrb[0].mxu0 %v272
  %v532 = vpop.f32.mrb[0].mxu0
  %v533 = vadd.f32 0.0, %v532
  %v534 = vpop.f32.mrb[0].mxu0
  %v535 = vpop.f32.mrb[0].mxu0
  %v536 = vadd.f32 0.0, %v535
  %v537 = vpop.f32.mrb[0].mxu0
  %538 = vmatprep.mubr.bf16.mxu0 %v275
  %539 = vmatmul.mubr.bf16.gmra.mrb[0].mxu0 %v274
  %v540 = vpop.f32.mrb[0].mxu0
  %v541 = vadd.f32 0.0, %v540
  %v542 = vpop.f32.mrb[0].mxu0
  %v543 = vpop.f32.mrb[0].mxu0
  %v544 = vadd.f32 0.0, %v543
  %v545 = vpop.f32.mrb[0].mxu0
  %546 = vmatprep.mubr.bf16.mxu0 %v277
  %547 = vmatmul.mubr.bf16.gmra.mrb[0].mxu0 %v276
  %v548 = vpop.f32.mrb[0].mxu0
  %v549 = vadd.f32 0.0, %v548
  %v550 = vpop.f32.mrb[0].mxu0
  %v551 = vpop.f32.mrb[0].mxu0
  %v552 = vadd.f32 0.0, %v551
  %v553 = vpop.f32.mrb[0].mxu0
  %554 = vmatprep.mubr.bf16.mxu0 %v279
  %555 = vmatmul.mubr.bf16.gmra.mrb[0].mxu0 %v278
  %v556 = vpop.f32.mrb[0].mxu0
  %v557 = vadd.f32 0.0, %v556
  %v558 = vpop.f32.mrb[0].mxu0
  %v559 = vpop.f32.mrb[0].mxu0
  %v560 = vadd.f32 0.0, %v559
  %v561 = vpop.f32.mrb[0].mxu0
  %562 = vmatprep.mubr.bf16.mxu0 %v281
  %563 = vmatmul.mubr.bf16.gmra.mrb[0].mxu0 %v280
  %v564 = vpop.f32.mrb[0].mxu0
  %v565 = vadd.f32 0.0, %v564
  %v566 = vpop.f32.mrb[0].mxu0
  %v567 = vpop.f32.mrb[0].mxu0
  %v568 = vadd.f32 0.0, %v567
  %v569 = vpop.f32.mrb[0].mxu0
  %570 = vmatprep.mubr.bf16.mxu0 %v283
  %571 = vmatmul.mubr.bf16.gmra.mrb[0].mxu0 %v282
  %v572 = vpop.f32.mrb[0].mxu0
  %v573 = vadd.f32 0.0, %v572
  %v574 = vpop.f32.mrb[0].mxu0
  %v575 = vpop.f32.mrb[0].mxu0
  %v576 = vadd.f32 0.0, %v575
  %v577 = vpop.f32.mrb[0].mxu0
  %578 = vmatprep.mubr.bf16.mxu0 %v285
  %579 = vmatmul.mubr.bf16.gmra.mrb[0].mxu0 %v284
  %v580 = vpop.f32.mrb[0].mxu0
  %v581 = vadd.f32 0.0, %v580
  %v582 = vpop.f32.mrb[0].mxu0
  %v583 = vpop.f32.mrb[0].mxu0
  %v584 = vadd.f32 0.0, %v583
  %v585 = vpop.f32.mrb[0].mxu0
  %586 = vmatprep.mubr.bf16.mxu0 %v287
  %587 = vmatmul.mubr.bf16.gmra.mrb[0].mxu0 %v286
  %v588 = vpop.f32.mrb[0].mxu0
  %v589 = vadd.f32 0.0, %v588
  %v590 = vpop.f32.mrb[0].mxu0
  %v591 = vpop.f32.mrb[0].mxu0
  %v592 = vadd.f32 0.0, %v591
  %v593 = vpop.f32.mrb[0].mxu0
  %594 = vmatprep.mubr.bf16.mxu0 %v289
  %595 = vmatmul.mubr.bf16.gmra.mrb[0].mxu0 %v288
  %v596 = vpop.f32.mrb[0].mxu0
  %v597 = vadd.f32 0.0, %v596
  %v598 = vpop.f32.mrb[0].mxu0
  %v599 = vpop.f32.mrb[0].mxu0
  %v600 = vadd.f32 0.0, %v599
  %v601 = vpop.f32.mrb[0].mxu0
  %602 = vmatprep.mubr.bf16.mxu0 %v291
  %603 = vmatmul.mubr.bf16.gmra.mrb[0].mxu0 %v290
  %v604 = vpop.f32.mrb[0].mxu0
  %v605 = vadd.f32 0.0, %v604
  %v606 = vpop.f32.mrb[0].mxu0
  %v607 = vpop.f32.mrb[0].mxu0
  %v608 = vadd.f32 0.0, %v607
  %v609 = vpop.f32.mrb[0].mxu0
  %610 = vmatprep.mubr.bf16.mxu0 %v293
  %611 = vmatmul.mubr.bf16.gmra.mrb[0].mxu0 %v292
  %v612 = vpop.f32.mrb[0].mxu0
  %v613 = vadd.f32 0.0, %v612
  %v614 = vpop.f32.mrb[0].mxu0
  %v615 = vpop.f32.mrb[0].mxu0
  %v616 = vadd.f32 0.0, %v615
  %v617 = vpop.f32.mrb[0].mxu0
  %618 = vmatprep.mubr.bf16.mxu0 %v295
  %619 = vmatmul.mubr.bf16.gmra.mrb[0].mxu0 %v294
  %v620 = vpop.f32.mrb[0].mxu0
  %v621 = vadd.f32 0.0, %v620
  %v622 = vpop.f32.mrb[0].mxu0
  %v623 = vpop.f32.mrb[0].mxu0
  %v624 = vadd.f32 0.0, %v623
  %v625 = vpop.f32.mrb[0].mxu0
  %626 = vmatprep.mubr.bf16.mxu0 %v297
  %627 = vmatmul.mubr.bf16.gmra.mrb[0].mxu0 %v296
  %v628 = vpop.f32.mrb[0].mxu0
  %v629 = vadd.f32 0.0, %v628
  %v630 = vpop.f32.mrb[0].mxu0
  %v631 = vpop.f32.mrb[0].mxu0
  %v632 = vadd.f32 0.0, %v631
  %v633 = vpop.f32.mrb[0].mxu0
  %634 = vmatprep.mubr.bf16.mxu0 %v299
  %635 = vmatmul.mubr.bf16.gmra.mrb[0].mxu0 %v298
  %v636 = vpop.f32.mrb[0].mxu0
  %v637 = vadd.f32 0.0, %v636
  %v638 = vpop.f32.mrb[0].mxu0
  %v639 = vpop.f32.mrb[0].mxu0
  %v640 = vadd.f32 0.0, %v639
  %v641 = vpop.f32.mrb[0].mxu0
  %642 = vmatprep.mubr.bf16.mxu0 %v301
  %643 = vmatmul.mubr.bf16.gmra.mrb[0].mxu0 %v300
  %v644 = vpop.f32.mrb[0].mxu0
  %v645 = vadd.f32 0.0, %v644
  %v646 = vpop.f32.mrb[0].mxu0
  %v647 = vpop.f32.mrb[0].mxu0
  %v648 = vadd.f32 0.0, %v647
  %v649 = vpop.f32.mrb[0].mxu0
  %650 = vmatprep.mubr.bf16.mxu0 %v303
  %651 = vmatmul.mubr.bf16.gmra.mrb[0].mxu0 %v302
  %v652 = vpop.f32.mrb[0].mxu0
  %v653 = vadd.f32 0.0, %v652
  %v654 = vpop.f32.mrb[0].mxu0
  %v655 = vpop.f32.mrb[0].mxu0
  %v656 = vadd.f32 0.0, %v655
  %v657 = vpop.f32.mrb[0].mxu0
  %658 = vmatprep.mubr.bf16.mxu0 %v305
  %659 = vmatmul.mubr.bf16.gmra.mrb[0].mxu0 %v304
  %v660 = vpop.f32.mrb[0].mxu0
  %v661 = vadd.f32 0.0, %v660
  %v662 = vpop.f32.mrb[0].mxu0
  %v663 = vpop.f32.mrb[0].mxu0
  %v664 = vadd.f32 0.0, %v663
  %v665 = vpop.f32.mrb[0].mxu0
  %666 = vmatprep.mubr.bf16.mxu0 %v307
  %667 = vmatmul.mubr.bf16.gmra.mrb[0].mxu0 %v306
  %v668 = vpop.f32.mrb[0].mxu0
  %v669 = vadd.f32 0.0, %v668
  %v670 = vpop.f32.mrb[0].mxu0
  %v671 = vpop.f32.mrb[0].mxu0
  %v672 = vadd.f32 0.0, %v671
  %v673 = vpop.f32.mrb[0].mxu0
  %674 = vmatprep.mubr.bf16.mxu0 %v309
  %675 = vmatmul.mubr.bf16.gmra.mrb[0].mxu0 %v308
  %v676 = vpop.f32.mrb[0].mxu0
  %v677 = vadd.f32 0.0, %v676
  %v678 = vpop.f32.mrb[0].mxu0
  %v679 = vpop.f32.mrb[0].mxu0
  %v680 = vadd.f32 0.0, %v679
  %v681 = vpop.f32.mrb[0].mxu0
  %682 = vmatprep.mubr.bf16.mxu0 %v311
  %683 = vmatmul.mubr.bf16.gmra.mrb[0].mxu0 %v310
  %v684 = vpop.f32.mrb[0].mxu0
  %v685 = vadd.f32 0.0, %v684
  %v686 = vpop.f32.mrb[0].mxu0
  %v687 = vpop.f32.mrb[0].mxu0
  %v688 = vpop.f32.mrb[0].mxu0
  %689 = vdwg.mxu0
  %v690 = vtanh.pop %v493
  %v691 = vtanh.pop %v496
  %v692 = vtanh.pop %v501
  %v693 = vtanh.pop %v504
  %v694 = vtanh.pop %v509
  %v695 = vtanh.pop %v512
  %v696 = vtanh.pop %v517
  %v697 = vtanh.pop %v520
  %v698 = vtanh.pop %v525
  %v699 = vtanh.pop %v528
  %v700 = vtanh.pop %v533
  %v701 = vtanh.pop %v536
  %v702 = vtanh.pop %v541
  %v703 = vtanh.pop %v544
  %v704 = vtanh.pop %v549
  %v705 = vtanh.pop %v552
  %v706 = vtanh.pop %v557
  %v707 = vtanh.pop %v560
  %v708 = vtanh.pop %v565
  %v709 = vtanh.pop %v568
  %v710 = vtanh.pop %v573
  %v711 = vtanh.pop %v576
  %v712 = vtanh.pop %v581
  %v713 = vtanh.pop %v584
  %v714 = vtanh.pop %v589
  %v715 = vtanh.pop %v592
  %v716 = vtanh.pop %v597
  %v717 = vtanh.pop %v600
  %v718 = vtanh.pop %v605
  %v719 = vtanh.pop %v608
  %v720 = vtanh.pop %v613
  %v721 = vtanh.pop %v616
  %v722 = vtanh.pop %v621
  %v723 = vtanh.pop %v624
  %v724 = vtanh.pop %v629
  %v725 = vtanh.pop %v632
  %v726 = vtanh.pop %v637
  %v727 = vtanh.pop %v640
  %v728 = vtanh.pop %v645
  %v729 = vtanh.pop %v648
  %v730 = vtanh.pop %v653
  %v731 = vtanh.pop %v656
  %v732 = vtanh.pop %v661
  %v733 = vtanh.pop %v664
  %v734 = vtanh.pop %v669
  %v735 = vtanh.pop %v672
  %v736 = vtanh.pop %v677
  %v737 = vtanh.pop %v680
  %v738 = vtanh.pop %v685
  %v739 = vpack.c.bf16 %v691, %v690
  %v740 = vpack.c.bf16 %v693, %v692
  %v741 = vpack.c.bf16 %v695, %v694
  %v742 = vpack.c.bf16 %v697, %v696
  %v743 = vpack.c.bf16 %v699, %v698
  %v744 = vpack.c.bf16 %v701, %v700
  %v745 = vpack.c.bf16 %v703, %v702
  %v746 = vpack.c.bf16 %v705, %v704
  %v747 = vpack.c.bf16 %v707, %v706
  %v748 = vpack.c.bf16 %v709, %v708
  %v749 = vpack.c.bf16 %v711, %v710
  %v750 = vpack.c.bf16 %v713, %v712
  %v751 = vpack.c.bf16 %v715, %v714
  %v752 = vpack.c.bf16 %v717, %v716
  %v753 = vpack.c.bf16 %v719, %v718
  %v754 = vpack.c.bf16 %v721, %v720
  %v755 = vpack.c.bf16 %v723, %v722
  %v756 = vpack.c.bf16 %v725, %v724
  %v757 = vpack.c.bf16 %v727, %v726
  %v758 = vpack.c.bf16 %v729, %v728
  %v759 = vpack.c.bf16 %v731, %v730
  %v760 = vpack.c.bf16 %v733, %v732
  %v761 = vpack.c.bf16 %v735, %v734
  %v762 = vpack.c.bf16 %v737, %v736
  %v763 = vpack.c.bf16 %v738, %v738
  %v789 = vunpack.c.l.b16 %v739
  %v790 = vunpack.c.h.b16 %v739
  %v791 = vunpack.c.l.b16 %v740
  %v792 = vunpack.c.h.b16 %v740
  %v793 = vunpack.c.l.b16 %v741
  %v794 = vunpack.c.h.b16 %v741
  %v795 = vunpack.c.l.b16 %v742
  %v796 = vunpack.c.h.b16 %v742
  %v797 = vunpack.c.l.b16 %v743
  %v798 = vunpack.c.h.b16 %v743
  %v799 = vunpack.c.l.b16 %v744
  %v800 = vunpack.c.h.b16 %v744
  %v801 = vunpack.c.l.b16 %v745
  %v802 = vunpack.c.h.b16 %v745
  %v803 = vunpack.c.l.b16 %v746
  %v804 = vunpack.c.h.b16 %v746
  %v805 = vunpack.c.l.b16 %v747
  %v806 = vunpack.c.h.b16 %v747
  %v807 = vunpack.c.l.b16 %v748
  %v808 = vunpack.c.h.b16 %v748
  %v809 = vunpack.c.l.b16 %v749
  %v810 = vunpack.c.h.b16 %v749
  %v811 = vunpack.c.l.b16 %v750
  %v812 = vunpack.c.h.b16 %v750
  %v813 = vunpack.c.l.b16 %v751
  %v814 = vunpack.c.h.b16 %v751
  %v815 = vunpack.c.l.b16 %v752
  %v816 = vunpack.c.h.b16 %v752
  %v817 = vunpack.c.l.b16 %v753
  %v818 = vunpack.c.h.b16 %v753
  %v819 = vunpack.c.l.b16 %v754
  %v820 = vunpack.c.h.b16 %v754
  %v821 = vunpack.c.l.b16 %v755
  %v822 = vunpack.c.h.b16 %v755
  %v823 = vunpack.c.l.b16 %v756
  %v824 = vunpack.c.h.b16 %v756
  %v825 = vunpack.c.l.b16 %v757
  %v826 = vunpack.c.h.b16 %v757
  %v827 = vunpack.c.l.b16 %v758
  %v828 = vunpack.c.h.b16 %v758
  %v829 = vunpack.c.l.b16 %v759
  %v830 = vunpack.c.h.b16 %v759
  %v831 = vunpack.c.l.b16 %v760
  %v832 = vunpack.c.h.b16 %v760
  %v833 = vunpack.c.l.b16 %v761
  %v834 = vunpack.c.h.b16 %v761
  %v835 = vunpack.c.l.b16 %v762
  %v836 = vunpack.c.h.b16 %v762
  %v837 = vunpack.c.l.b16 %v763
  %v838 = vpack.c.b16 %v789, %v789
  %v839 = vpack.c.b16 %v790, %v790
  %v840 = vpack.c.b16 %v791, %v791
  %v841 = vpack.c.b16 %v792, %v792
  %v842 = vpack.c.b16 %v793, %v793
  %v843 = vpack.c.b16 %v794, %v794
  %v844 = vpack.c.b16 %v795, %v795
  %v845 = vpack.c.b16 %v796, %v796
  %v846 = vpack.c.b16 %v797, %v797
  %v847 = vpack.c.b16 %v798, %v798
  %v848 = vpack.c.b16 %v799, %v799
  %v849 = vpack.c.b16 %v800, %v800
  %v850 = vpack.c.b16 %v801, %v801
  %v851 = vpack.c.b16 %v802, %v802
  %v852 = vpack.c.b16 %v803, %v803
  %v853 = vpack.c.b16 %v804, %v804
  %v854 = vpack.c.b16 %v805, %v805
  %v855 = vpack.c.b16 %v806, %v806
  %v856 = vpack.c.b16 %v807, %v807
  %v857 = vpack.c.b16 %v808, %v808
  %v858 = vpack.c.b16 %v809, %v809
  %v859 = vpack.c.b16 %v810, %v810
  %v860 = vpack.c.b16 %v811, %v811
  %v861 = vpack.c.b16 %v812, %v812
  %v862 = vpack.c.b16 %v813, %v813
  %v863 = vpack.c.b16 %v814, %v814
  %v864 = vpack.c.b16 %v815, %v815
  %v865 = vpack.c.b16 %v816, %v816
  %v866 = vpack.c.b16 %v817, %v817
  %v867 = vpack.c.b16 %v818, %v818
  %v868 = vpack.c.b16 %v819, %v819
  %v869 = vpack.c.b16 %v820, %v820
  %v870 = vpack.c.b16 %v821, %v821
  %v871 = vpack.c.b16 %v822, %v822
  %v872 = vpack.c.b16 %v823, %v823
  %v873 = vpack.c.b16 %v824, %v824
  %v874 = vpack.c.b16 %v825, %v825
  %v875 = vpack.c.b16 %v826, %v826
  %v876 = vpack.c.b16 %v827, %v827
  %v877 = vpack.c.b16 %v828, %v828
  %v878 = vpack.c.b16 %v829, %v829
  %v879 = vpack.c.b16 %v830, %v830
  %v880 = vpack.c.b16 %v831, %v831
  %v881 = vpack.c.b16 %v832, %v832
  %v882 = vpack.c.b16 %v833, %v833
  %v883 = vpack.c.b16 %v834, %v834
  %v884 = vpack.c.b16 %v835, %v835
  %v885 = vpack.c.b16 %v836, %v836
  %v886 = vpack.c.b16 %v837, %v837
  %936 = vst [vmem:[%s8] sm:$0xf] %v838
  %937 = vst [vmem:[%s8 + $0x4] sm:$0xf] %v839
  %938 = vst [vmem:[%s8 + $0x8] sm:$0xf] %v840
  %939 = vst [vmem:[%s8 + $0xc] sm:$0xf] %v841
  %940 = vst [vmem:[%s8 + $0x10] sm:$0xf] %v842
  %941 = vst [vmem:[%s8 + $0x14] sm:$0xf] %v843
  %942 = vst [vmem:[%s8 + $0x18] sm:$0xf] %v844
  %943 = vst [vmem:[%s8 + $0x1c] sm:$0xf] %v845
  %944 = vst [vmem:[%s8 + $0x20] sm:$0xf] %v846
  %945 = vst [vmem:[%s8 + $0x24] sm:$0xf] %v847
  %946 = vst [vmem:[%s8 + $0x28] sm:$0xf] %v848
  %947 = vst [vmem:[%s8 + $0x2c] sm:$0xf] %v849
  %948 = vst [vmem:[%s8 + $0x30] sm:$0xf] %v850
  %949 = vst [vmem:[%s8 + $0x34] sm:$0xf] %v851
  %950 = vst [vmem:[%s8 + $0x38] sm:$0xf] %v852
  %951 = vst [vmem:[%s8 + $0x3c] sm:$0xf] %v853
  %952 = vst [vmem:[%s8 + $0x40] sm:$0xf] %v854
  %953 = vst [vmem:[%s8 + $0x44] sm:$0xf] %v855
  %954 = vst [vmem:[%s8 + $0x48] sm:$0xf] %v856
  %955 = vst [vmem:[%s8 + $0x4c] sm:$0xf] %v857
  %956 = vst [vmem:[%s8 + $0x50] sm:$0xf] %v858
  %957 = vst [vmem:[%s8 + $0x54] sm:$0xf] %v859
  %958 = vst [vmem:[%s8 + $0x58] sm:$0xf] %v860
  %959 = vst [vmem:[%s8 + $0x5c] sm:$0xf] %v861
  %960 = vst [vmem:[%s8 + $0x60] sm:$0xf] %v862
  %961 = vst [vmem:[%s8 + $0x64] sm:$0xf] %v863
  %962 = vst [vmem:[%s8 + $0x68] sm:$0xf] %v864
  %963 = vst [vmem:[%s8 + $0x6c] sm:$0xf] %v865
  %964 = vst [vmem:[%s8 + $0x70] sm:$0xf] %v866
  %965 = vst [vmem:[%s8 + $0x74] sm:$0xf] %v867
  %966 = vst [vmem:[%s8 + $0x78] sm:$0xf] %v868
  %967 = vst [vmem:[%s8 + $0x7c] sm:$0xf] %v869
  %968 = vst [vmem:[%s8 + $0x80] sm:$0xf] %v870
  %969 = vst [vmem:[%s8 + $0x84] sm:$0xf] %v871
  %970 = vst [vmem:[%s8 + $0x88] sm:$0xf] %v872
  %971 = vst [vmem:[%s8 + $0x8c] sm:$0xf] %v873
  %972 = vst [vmem:[%s8 + $0x90] sm:$0xf] %v874
  %973 = vst [vmem:[%s8 + $0x94] sm:$0xf] %v875
  %974 = vst [vmem:[%s8 + $0x98] sm:$0xf] %v876
  %975 = vst [vmem:[%s8 + $0x9c] sm:$0xf] %v877
  %976 = vst [vmem:[%s8 + $0xa0] sm:$0xf] %v878
  %977 = vst [vmem:[%s8 + $0xa4] sm:$0xf] %v879
  %978 = vst [vmem:[%s8 + $0xa8] sm:$0xf] %v880
  %979 = vst [vmem:[%s8 + $0xac] sm:$0xf] %v881
  %980 = vst [vmem:[%s8 + $0xb0] sm:$0xf] %v882
  %981 = vst [vmem:[%s8 + $0xb4] sm:$0xf] %v883
  %982 = vst [vmem:[%s8 + $0xb8] sm:$0xf] %v884
  %983 = vst [vmem:[%s8 + $0xbc] sm:$0xf] %v885
  %984 = vst [vmem:[%s8 + $0xc0] sm:$0xf] %v886
  %v985 = vld [vmem:[%s1] sm:$0xff]
  %v986 = vld [vmem:[%s1 + $0x8] sm:$0xff]
  %v987 = vld [vmem:[%s1 + $0x10] sm:$0xff]
  %v988 = vld [vmem:[%s1 + $0x18] sm:$0xff]
  %v989 = vld [vmem:[%s1 + $0x20] sm:$0xff]
  %v990 = vld [vmem:[%s1 + $0x28] sm:$0xff]
  %v991 = vld [vmem:[%s1 + $0x30] sm:$0xff]
  %v992 = vld [vmem:[%s1 + $0x38] sm:$0xff]
  %v993 = vld [vmem:[%s1 + $0x40] sm:$0xff]
  %v994 = vld [vmem:[%s1 + $0x48] sm:$0xff]
  %v995 = vld [vmem:[%s1 + $0x50] sm:$0xff]
  %v996 = vld [vmem:[%s1 + $0x58] sm:$0xff]
  %v997 = vld [vmem:[%s1 + $0x60] sm:$0xff]
  %v998 = vld [vmem:[%s1 + $0x68] sm:$0xff]
  %v999 = vld [vmem:[%s1 + $0x70] sm:$0xff]
  %v1000 = vld [vmem:[%s1 + $0x78] sm:$0xff]
  %v1001 = vld [vmem:[%s1 + $0x80] sm:$0xff]
  %v1002 = vld [vmem:[%s1 + $0x88] sm:$0xff]
  %v1003 = vld [vmem:[%s1 + $0x90] sm:$0xff]
  %v1004 = vld [vmem:[%s1 + $0x98] sm:$0xff]
  %v1005 = vld [vmem:[%s1 + $0xa0] sm:$0xff]
  %v1006 = vld [vmem:[%s1 + $0xa8] sm:$0xff]
  %v1007 = vld [vmem:[%s1 + $0xb0] sm:$0xff]
  %v1008 = vld [vmem:[%s1 + $0xb8] sm:$0xff]
  %v1009 = vld [vmem:[%s1 + $0xc0] sm:$0xff]
  %v1010 = vld [vmem:[%s1 + $0xc8] sm:$0xff]
  %v1011 = vld [vmem:[%s1 + $0xd0] sm:$0xff]
  %v1012 = vld [vmem:[%s1 + $0xd8] sm:$0xff]
  %v1013 = vld [vmem:[%s1 + $0xe0] sm:$0xff]
  %v1014 = vld [vmem:[%s1 + $0xe8] sm:$0xff]
  %v1015 = vld [vmem:[%s1 + $0xf0] sm:$0xff]
  %v1016 = vld [vmem:[%s1 + $0xf8] sm:$0xff]
  %v1017 = vld [vmem:[%s1 + $0x100] sm:$0xff]
  %v1018 = vld [vmem:[%s1 + $0x108] sm:$0xff]
  %v1019 = vld [vmem:[%s1 + $0x110] sm:$0xff]
  %v1020 = vld [vmem:[%s1 + $0x118] sm:$0xff]
  %v1021 = vld [vmem:[%s1 + $0x120] sm:$0xff]
  %v1022 = vld [vmem:[%s1 + $0x128] sm:$0xff]
  %v1023 = vld [vmem:[%s1 + $0x130] sm:$0xff]
  %v1024 = vld [vmem:[%s1 + $0x138] sm:$0xff]
  %v1025 = vld [vmem:[%s1 + $0x140] sm:$0xff]
  %v1026 = vld [vmem:[%s1 + $0x148] sm:$0xff]
  %v1027 = vld [vmem:[%s1 + $0x150] sm:$0xff]
  %v1028 = vld [vmem:[%s1 + $0x158] sm:$0xff]
  %v1029 = vld [vmem:[%s1 + $0x160] sm:$0xff]
  %v1030 = vld [vmem:[%s1 + $0x168] sm:$0xff]
  %v1031 = vld [vmem:[%s1 + $0x170] sm:$0xff]
  %v1032 = vld [vmem:[%s1 + $0x178] sm:$0xff]
  %v1033 = vld [vmem:[%s1 + $0x180] sm:$0xff]
  %v1034 = vld [vmem:[%s5] sm:$0xf]
  %v1035 = vld [vmem:[%s5 + $0x4] sm:$0xf]
  %v1036 = vld [vmem:[%s5 + $0x8] sm:$0xf]
  %v1037 = vld [vmem:[%s5 + $0xc] sm:$0xf]
  %v1038 = vld [vmem:[%s5 + $0x10] sm:$0xf]
  %v1039 = vld [vmem:[%s5 + $0x14] sm:$0xf]
  %v1040 = vld [vmem:[%s5 + $0x18] sm:$0xf]
  %v1041 = vld [vmem:[%s5 + $0x1c] sm:$0xf]
  %v1042 = vld [vmem:[%s5 + $0x20] sm:$0xf]
  %v1043 = vld [vmem:[%s5 + $0x24] sm:$0xf]
  %v1044 = vld [vmem:[%s5 + $0x28] sm:$0xf]
  %v1045 = vld [vmem:[%s5 + $0x2c] sm:$0xf]
  %v1046 = vld [vmem:[%s5 + $0x30] sm:$0xf]
  %v1047 = vld [vmem:[%s5 + $0x34] sm:$0xf]
  %v1048 = vld [vmem:[%s5 + $0x38] sm:$0xf]
  %v1049 = vld [vmem:[%s5 + $0x3c] sm:$0xf]
  %v1050 = vld [vmem:[%s5 + $0x40] sm:$0xf]
  %v1051 = vld [vmem:[%s5 + $0x44] sm:$0xf]
  %v1052 = vld [vmem:[%s5 + $0x48] sm:$0xf]
  %v1053 = vld [vmem:[%s5 + $0x4c] sm:$0xf]
  %v1054 = vld [vmem:[%s5 + $0x50] sm:$0xf]
  %v1055 = vld [vmem:[%s5 + $0x54] sm:$0xf]
  %v1056 = vld [vmem:[%s5 + $0x58] sm:$0xf]
  %v1057 = vld [vmem:[%s5 + $0x5c] sm:$0xf]
  %v1058 = vld [vmem:[%s5 + $0x60] sm:$0xf]
  %v1059 = vld [vmem:[%s5 + $0x64] sm:$0xf]
  %v1060 = vld [vmem:[%s5 + $0x68] sm:$0xf]
  %v1061 = vld [vmem:[%s5 + $0x6c] sm:$0xf]
  %v1062 = vld [vmem:[%s5 + $0x70] sm:$0xf]
  %v1063 = vld [vmem:[%s5 + $0x74] sm:$0xf]
  %v1064 = vld [vmem:[%s5 + $0x78] sm:$0xf]
  %v1065 = vld [vmem:[%s5 + $0x7c] sm:$0xf]
  %v1115 = vunpack.c.l.b16 %v985
  %v1116 = vunpack.c.h.b16 %v985
  %v1117 = vunpack.c.l.b16 %v986
  %v1118 = vunpack.c.h.b16 %v986
  %v1119 = vunpack.c.l.b16 %v987
  %v1120 = vunpack.c.h.b16 %v987
  %v1121 = vunpack.c.l.b16 %v988
  %v1122 = vunpack.c.h.b16 %v988
  %v1123 = vunpack.c.l.b16 %v989
  %v1124 = vunpack.c.h.b16 %v989
  %v1125 = vunpack.c.l.b16 %v990
  %v1126 = vunpack.c.h.b16 %v990
  %v1127 = vunpack.c.l.b16 %v991
  %v1128 = vunpack.c.h.b16 %v991
  %v1129 = vunpack.c.l.b16 %v992
  %v1130 = vunpack.c.h.b16 %v992
  %v1131 = vunpack.c.l.b16 %v993
  %v1132 = vunpack.c.h.b16 %v993
  %v1133 = vunpack.c.l.b16 %v994
  %v1134 = vunpack.c.h.b16 %v994
  %v1135 = vunpack.c.l.b16 %v995
  %v1136 = vunpack.c.h.b16 %v995
  %v1137 = vunpack.c.l.b16 %v996
  %v1138 = vunpack.c.h.b16 %v996
  %v1139 = vunpack.c.l.b16 %v997
  %v1140 = vunpack.c.h.b16 %v997
  %v1141 = vunpack.c.l.b16 %v998
  %v1142 = vunpack.c.h.b16 %v998
  %v1143 = vunpack.c.l.b16 %v999
  %v1144 = vunpack.c.h.b16 %v999
  %v1145 = vunpack.c.l.b16 %v1000
  %v1146 = vunpack.c.h.b16 %v1000
  %v1147 = vunpack.c.l.b16 %v1001
  %v1148 = vunpack.c.h.b16 %v1001
  %v1149 = vunpack.c.l.b16 %v1002
  %v1150 = vunpack.c.h.b16 %v1002
  %v1151 = vunpack.c.l.b16 %v1003
  %v1152 = vunpack.c.h.b16 %v1003
  %v1153 = vunpack.c.l.b16 %v1004
  %v1154 = vunpack.c.h.b16 %v1004
  %v1155 = vunpack.c.l.b16 %v1005
  %v1156 = vunpack.c.h.b16 %v1005
  %v1157 = vunpack.c.l.b16 %v1006
  %v1158 = vunpack.c.h.b16 %v1006
  %v1159 = vunpack.c.l.b16 %v1007
  %v1160 = vunpack.c.h.b16 %v1007
  %v1161 = vunpack.c.l.b16 %v1008
  %v1162 = vunpack.c.h.b16 %v1008
  %v1163 = vunpack.c.l.b16 %v1009
  %v1164 = vunpack.c.h.b16 %v1009
  %v1165 = vunpack.c.l.b16 %v1010
  %v1166 = vunpack.c.h.b16 %v1010
  %v1167 = vunpack.c.l.b16 %v1011
  %v1168 = vunpack.c.h.b16 %v1011
  %v1169 = vunpack.c.l.b16 %v1012
  %v1170 = vunpack.c.h.b16 %v1012
  %v1171 = vunpack.c.l.b16 %v1013
  %v1172 = vunpack.c.h.b16 %v1013
  %v1173 = vunpack.c.l.b16 %v1014
  %v1174 = vunpack.c.h.b16 %v1014
  %v1175 = vunpack.c.l.b16 %v1015
  %v1176 = vunpack.c.h.b16 %v1015
  %v1177 = vunpack.c.l.b16 %v1016
  %v1178 = vunpack.c.h.b16 %v1016
  %v1179 = vunpack.c.l.b16 %v1017
  %v1180 = vunpack.c.h.b16 %v1017
  %v1181 = vunpack.c.l.b16 %v1018
  %v1182 = vunpack.c.h.b16 %v1018
  %v1183 = vunpack.c.l.b16 %v1019
  %v1184 = vunpack.c.h.b16 %v1019
  %v1185 = vunpack.c.l.b16 %v1020
  %v1186 = vunpack.c.h.b16 %v1020
  %v1187 = vunpack.c.l.b16 %v1021
  %v1188 = vunpack.c.h.b16 %v1021
  %v1189 = vunpack.c.l.b16 %v1022
  %v1190 = vunpack.c.h.b16 %v1022
  %v1191 = vunpack.c.l.b16 %v1023
  %v1192 = vunpack.c.h.b16 %v1023
  %v1193 = vunpack.c.l.b16 %v1024
  %v1194 = vunpack.c.h.b16 %v1024
  %v1195 = vunpack.c.l.b16 %v1025
  %v1196 = vunpack.c.h.b16 %v1025
  %v1197 = vunpack.c.l.b16 %v1026
  %v1198 = vunpack.c.h.b16 %v1026
  %v1199 = vunpack.c.l.b16 %v1027
  %v1200 = vunpack.c.h.b16 %v1027
  %v1201 = vunpack.c.l.b16 %v1028
  %v1202 = vunpack.c.h.b16 %v1028
  %v1203 = vunpack.c.l.b16 %v1029
  %v1204 = vunpack.c.h.b16 %v1029
  %v1205 = vunpack.c.l.b16 %v1030
  %v1206 = vunpack.c.h.b16 %v1030
  %v1207 = vunpack.c.l.b16 %v1031
  %v1208 = vunpack.c.h.b16 %v1031
  %v1209 = vunpack.c.l.b16 %v1032
  %v1210 = vunpack.c.h.b16 %v1032
  %v1211 = vunpack.c.l.b16 %v1033
  %v1212 = vunpack.c.h.b16 %v1033
  %v1213 = vpack.c.b16 %v1117, %v1115
  %v1214 = vpack.c.b16 %v1118, %v1116
  %v1215 = vpack.c.b16 %v1121, %v1119
  %v1216 = vpack.c.b16 %v1122, %v1120
  %v1217 = vpack.c.b16 %v1125, %v1123
  %v1218 = vpack.c.b16 %v1126, %v1124
  %v1219 = vpack.c.b16 %v1129, %v1127
  %v1220 = vpack.c.b16 %v1130, %v1128
  %v1221 = vpack.c.b16 %v1133, %v1131
  %v1222 = vpack.c.b16 %v1134, %v1132
  %v1223 = vpack.c.b16 %v1137, %v1135
  %v1224 = vpack.c.b16 %v1138, %v1136
  %v1225 = vpack.c.b16 %v1141, %v1139
  %v1226 = vpack.c.b16 %v1142, %v1140
  %v1227 = vpack.c.b16 %v1145, %v1143
  %v1228 = vpack.c.b16 %v1146, %v1144
  %v1229 = vpack.c.b16 %v1149, %v1147
  %v1230 = vpack.c.b16 %v1150, %v1148
  %v1231 = vpack.c.b16 %v1153, %v1151
  %v1232 = vpack.c.b16 %v1154, %v1152
  %v1233 = vpack.c.b16 %v1157, %v1155
  %v1234 = vpack.c.b16 %v1158, %v1156
  %v1235 = vpack.c.b16 %v1161, %v1159
  %v1236 = vpack.c.b16 %v1162, %v1160
  %v1237 = vpack.c.b16 %v1165, %v1163
  %v1238 = vpack.c.b16 %v1166, %v1164
  %v1239 = vpack.c.b16 %v1169, %v1167
  %v1240 = vpack.c.b16 %v1170, %v1168
  %v1241 = vpack.c.b16 %v1173, %v1171
  %v1242 = vpack.c.b16 %v1174, %v1172
  %v1243 = vpack.c.b16 %v1177, %v1175
  %v1244 = vpack.c.b16 %v1178, %v1176
  %v1245 = vpack.c.b16 %v1181, %v1179
  %v1246 = vpack.c.b16 %v1182, %v1180
  %v1247 = vpack.c.b16 %v1185, %v1183
  %v1248 = vpack.c.b16 %v1186, %v1184
  %v1249 = vpack.c.b16 %v1189, %v1187
  %v1250 = vpack.c.b16 %v1190, %v1188
  %v1251 = vpack.c.b16 %v1193, %v1191
  %v1252 = vpack.c.b16 %v1194, %v1192
  %v1253 = vpack.c.b16 %v1197, %v1195
  %v1254 = vpack.c.b16 %v1198, %v1196
  %v1255 = vpack.c.b16 %v1201, %v1199
  %v1256 = vpack.c.b16 %v1202, %v1200
  %v1257 = vpack.c.b16 %v1205, %v1203
  %v1258 = vpack.c.b16 %v1206, %v1204
  %v1259 = vpack.c.b16 %v1209, %v1207
  %v1260 = vpack.c.b16 %v1210, %v1208
  %v1261 = vpack.c.b16 %v1211, %v1211
  %v1262 = vpack.c.b16 %v1212, %v1212
  %v1345 = vunpack.c.l.b16 %v1034
  %v1346 = vunpack.c.l.b16 %v1035
  %v1347 = vunpack.c.l.b16 %v1036
  %v1348 = vunpack.c.l.b16 %v1037
  %v1349 = vunpack.c.l.b16 %v1038
  %v1350 = vunpack.c.l.b16 %v1039
  %v1351 = vunpack.c.l.b16 %v1040
  %v1352 = vunpack.c.l.b16 %v1041
  %v1353 = vunpack.c.l.b16 %v1042
  %v1354 = vunpack.c.l.b16 %v1043
  %v1355 = vunpack.c.l.b16 %v1044
  %v1356 = vunpack.c.l.b16 %v1045
  %v1357 = vunpack.c.l.b16 %v1046
  %v1358 = vunpack.c.l.b16 %v1047
  %v1359 = vunpack.c.l.b16 %v1048
  %v1360 = vunpack.c.l.b16 %v1049
  %v1361 = vunpack.c.l.b16 %v1050
  %v1362 = vunpack.c.l.b16 %v1051
  %v1363 = vunpack.c.l.b16 %v1052
  %v1364 = vunpack.c.l.b16 %v1053
  %v1365 = vunpack.c.l.b16 %v1054
  %v1366 = vunpack.c.l.b16 %v1055
  %v1367 = vunpack.c.l.b16 %v1056
  %v1368 = vunpack.c.l.b16 %v1057
  %v1369 = vunpack.c.l.b16 %v1058
  %v1370 = vunpack.c.l.b16 %v1059
  %v1371 = vunpack.c.l.b16 %v1060
  %v1372 = vunpack.c.l.b16 %v1061
  %v1373 = vunpack.c.l.b16 %v1062
  %v1374 = vunpack.c.l.b16 %v1063
  %v1375 = vunpack.c.l.b16 %v1064
  %v1376 = vunpack.c.l.b16 %v1065
  %v1377 = vpack.c.b16 %v1346, %v1345
  %v1378 = vpack.c.b16 %v1348, %v1347
  %v1379 = vpack.c.b16 %v1350, %v1349
  %v1380 = vpack.c.b16 %v1352, %v1351
  %v1381 = vpack.c.b16 %v1354, %v1353
  %v1382 = vpack.c.b16 %v1356, %v1355
  %v1383 = vpack.c.b16 %v1358, %v1357
  %v1384 = vpack.c.b16 %v1360, %v1359
  %v1385 = vpack.c.b16 %v1362, %v1361
  %v1386 = vpack.c.b16 %v1364, %v1363
  %v1387 = vpack.c.b16 %v1366, %v1365
  %v1388 = vpack.c.b16 %v1368, %v1367
  %v1389 = vpack.c.b16 %v1370, %v1369
  %v1390 = vpack.c.b16 %v1372, %v1371
  %v1391 = vpack.c.b16 %v1374, %v1373
  %v1392 = vpack.c.b16 %v1376, %v1375
  %1409 = vmatprep.subr.bf16.mxu0 0
  %1410 = vmatpush1.bf16.msra.mxu0 %v1377
  %1411 = vmatprep.subr.bf16.mxu0 0
  %1412 = vmatpush1.bf16.msra.mxu0 %v1378
  %1413 = vmatprep.subr.bf16.mxu0 0
  %1414 = vmatpush1.bf16.msra.mxu0 %v1379
  %1415 = vmatprep.subr.bf16.mxu0 0
  %1416 = vmatpush1.bf16.msra.mxu0 %v1380
  %1417 = vmatprep.subr.bf16.mxu0 0
  %1418 = vmatpush1.bf16.msra.mxu0 %v1381
  %1419 = vmatprep.subr.bf16.mxu0 0
  %1420 = vmatpush1.bf16.msra.mxu0 %v1382
  %1421 = vmatprep.subr.bf16.mxu0 0
  %1422 = vmatpush1.bf16.msra.mxu0 %v1383
  %1423 = vmatprep.subr.bf16.mxu0 0
  %1424 = vmatpush1.bf16.msra.mxu0 %v1384
  %1425 = vmatprep.subr.bf16.mxu0 0
  %1426 = vmatpush1.bf16.msra.mxu0 %v1385
  %1427 = vmatprep.subr.bf16.mxu0 0
  %1428 = vmatpush1.bf16.msra.mxu0 %v1386
  %1429 = vmatprep.subr.bf16.mxu0 0
  %1430 = vmatpush1.bf16.msra.mxu0 %v1387
  %1431 = vmatprep.subr.bf16.mxu0 0
  %1432 = vmatpush1.bf16.msra.mxu0 %v1388
  %1433 = vmatprep.subr.bf16.mxu0 0
  %1434 = vmatpush1.bf16.msra.mxu0 %v1389
  %1435 = vmatprep.subr.bf16.mxu0 0
  %1436 = vmatpush1.bf16.msra.mxu0 %v1390
  %1437 = vmatprep.subr.bf16.mxu0 0
  %1438 = vmatpush1.bf16.msra.mxu0 %v1391
  %1439 = vmatprep.subr.bf16.mxu0 0
  %1440 = vmatpush1.bf16.msra.mxu0 %v1392
  %1441 = vmatprep.mubr.bf16.mxu0 %v1214
  %1442 = vmatmul.mubr.bf16.gmra.mrb[0].mxu0 %v1213
  %v1443 = vpop.f32.mrb[0].mxu0
  %v1444 = vadd.f32 0.0, %v1443
  %v1445 = vpop.f32.mrb[0].mxu0
  %v1446 = vpop.f32.mrb[0].mxu0
  %v1447 = vadd.f32 0.0, %v1446
  %v1448 = vpop.f32.mrb[0].mxu0
  %1449 = vmatprep.mubr.bf16.mxu0 %v1216
  %1450 = vmatmul.mubr.bf16.gmra.mrb[0].mxu0 %v1215
  %v1451 = vpop.f32.mrb[0].mxu0
  %v1452 = vadd.f32 0.0, %v1451
  %v1453 = vpop.f32.mrb[0].mxu0
  %v1454 = vpop.f32.mrb[0].mxu0
  %v1455 = vadd.f32 0.0, %v1454
  %v1456 = vpop.f32.mrb[0].mxu0
  %1457 = vmatprep.mubr.bf16.mxu0 %v1218
  %1458 = vmatmul.mubr.bf16.gmra.mrb[0].mxu0 %v1217
  %v1459 = vpop.f32.mrb[0].mxu0
  %v1460 = vadd.f32 0.0, %v1459
  %v1461 = vpop.f32.mrb[0].mxu0
  %v1462 = vpop.f32.mrb[0].mxu0
  %v1463 = vadd.f32 0.0, %v1462
  %v1464 = vpop.f32.mrb[0].mxu0
  %1465 = vmatprep.mubr.bf16.mxu0 %v1220
  %1466 = vmatmul.mubr.bf16.gmra.mrb[0].mxu0 %v1219
  %v1467 = vpop.f32.mrb[0].mxu0
  %v1468 = vadd.f32 0.0, %v1467
  %v1469 = vpop.f32.mrb[0].mxu0
  %v1470 = vpop.f32.mrb[0].mxu0
  %v1471 = vadd.f32 0.0, %v1470
  %v1472 = vpop.f32.mrb[0].mxu0
  %1473 = vmatprep.mubr.bf16.mxu0 %v1222
  %1474 = vmatmul.mubr.bf16.gmra.mrb[0].mxu0 %v1221
  %v1475 = vpop.f32.mrb[0].mxu0
  %v1476 = vadd.f32 0.0, %v1475
  %v1477 = vpop.f32.mrb[0].mxu0
  %v1478 = vpop.f32.mrb[0].mxu0
  %v1479 = vadd.f32 0.0, %v1478
  %v1480 = vpop.f32.mrb[0].mxu0
  %1481 = vmatprep.mubr.bf16.mxu0 %v1224
  %1482 = vmatmul.mubr.bf16.gmra.mrb[0].mxu0 %v1223
  %v1483 = vpop.f32.mrb[0].mxu0
  %v1484 = vadd.f32 0.0, %v1483
  %v1485 = vpop.f32.mrb[0].mxu0
  %v1486 = vpop.f32.mrb[0].mxu0
  %v1487 = vadd.f32 0.0, %v1486
  %v1488 = vpop.f32.mrb[0].mxu0
  %1489 = vmatprep.mubr.bf16.mxu0 %v1226
  %1490 = vmatmul.mubr.bf16.gmra.mrb[0].mxu0 %v1225
  %v1491 = vpop.f32.mrb[0].mxu0
  %v1492 = vadd.f32 0.0, %v1491
  %v1493 = vpop.f32.mrb[0].mxu0
  %v1494 = vpop.f32.mrb[0].mxu0
  %v1495 = vadd.f32 0.0, %v1494
  %v1496 = vpop.f32.mrb[0].mxu0
  %1497 = vmatprep.mubr.bf16.mxu0 %v1228
  %1498 = vmatmul.mubr.bf16.gmra.mrb[0].mxu0 %v1227
  %v1499 = vpop.f32.mrb[0].mxu0
  %v1500 = vadd.f32 0.0, %v1499
  %v1501 = vpop.f32.mrb[0].mxu0
  %v1502 = vpop.f32.mrb[0].mxu0
  %v1503 = vadd.f32 0.0, %v1502
  %v1504 = vpop.f32.mrb[0].mxu0
  %1505 = vmatprep.mubr.bf16.mxu0 %v1230
  %1506 = vmatmul.mubr.bf16.gmra.mrb[0].mxu0 %v1229
  %v1507 = vpop.f32.mrb[0].mxu0
  %v1508 = vadd.f32 0.0, %v1507
  %v1509 = vpop.f32.mrb[0].mxu0
  %v1510 = vpop.f32.mrb[0].mxu0
  %v1511 = vadd.f32 0.0, %v1510
  %v1512 = vpop.f32.mrb[0].mxu0
  %1513 = vmatprep.mubr.bf16.mxu0 %v1232
  %1514 = vmatmul.mubr.bf16.gmra.mrb[0].mxu0 %v1231
  %v1515 = vpop.f32.mrb[0].mxu0
  %v1516 = vadd.f32 0.0, %v1515
  %v1517 = vpop.f32.mrb[0].mxu0
  %v1518 = vpop.f32.mrb[0].mxu0
  %v1519 = vadd.f32 0.0, %v1518
  %v1520 = vpop.f32.mrb[0].mxu0
  %1521 = vmatprep.mubr.bf16.mxu0 %v1234
  %1522 = vmatmul.mubr.bf16.gmra.mrb[0].mxu0 %v1233
  %v1523 = vpop.f32.mrb[0].mxu0
  %v1524 = vadd.f32 0.0, %v1523
  %v1525 = vpop.f32.mrb[0].mxu0
  %v1526 = vpop.f32.mrb[0].mxu0
  %v1527 = vadd.f32 0.0, %v1526
  %v1528 = vpop.f32.mrb[0].mxu0
  %1529 = vmatprep.mubr.bf16.mxu0 %v1236
  %1530 = vmatmul.mubr.bf16.gmra.mrb[0].mxu0 %v1235
  %v1531 = vpop.f32.mrb[0].mxu0
  %v1532 = vadd.f32 0.0, %v1531
  %v1533 = vpop.f32.mrb[0].mxu0
  %v1534 = vpop.f32.mrb[0].mxu0
  %v1535 = vadd.f32 0.0, %v1534
  %v1536 = vpop.f32.mrb[0].mxu0
  %1537 = vmatprep.mubr.bf16.mxu0 %v1238
  %1538 = vmatmul.mubr.bf16.gmra.mrb[0].mxu0 %v1237
  %v1539 = vpop.f32.mrb[0].mxu0
  %v1540 = vadd.f32 0.0, %v1539
  %v1541 = vpop.f32.mrb[0].mxu0
  %v1542 = vpop.f32.mrb[0].mxu0
  %v1543 = vadd.f32 0.0, %v1542
  %v1544 = vpop.f32.mrb[0].mxu0
  %1545 = vmatprep.mubr.bf16.mxu0 %v1240
  %1546 = vmatmul.mubr.bf16.gmra.mrb[0].mxu0 %v1239
  %v1547 = vpop.f32.mrb[0].mxu0
  %v1548 = vadd.f32 0.0, %v1547
  %v1549 = vpop.f32.mrb[0].mxu0
  %v1550 = vpop.f32.mrb[0].mxu0
  %v1551 = vadd.f32 0.0, %v1550
  %v1552 = vpop.f32.mrb[0].mxu0
  %1553 = vmatprep.mubr.bf16.mxu0 %v1242
  %1554 = vmatmul.mubr.bf16.gmra.mrb[0].mxu0 %v1241
  %v1555 = vpop.f32.mrb[0].mxu0
  %v1556 = vadd.f32 0.0, %v1555
  %v1557 = vpop.f32.mrb[0].mxu0
  %v1558 = vpop.f32.mrb[0].mxu0
  %v1559 = vadd.f32 0.0, %v1558
  %v1560 = vpop.f32.mrb[0].mxu0
  %1561 = vmatprep.mubr.bf16.mxu0 %v1244
  %1562 = vmatmul.mubr.bf16.gmra.mrb[0].mxu0 %v1243
  %v1563 = vpop.f32.mrb[0].mxu0
  %v1564 = vadd.f32 0.0, %v1563
  %v1565 = vpop.f32.mrb[0].mxu0
  %v1566 = vpop.f32.mrb[0].mxu0
  %v1567 = vadd.f32 0.0, %v1566
  %v1568 = vpop.f32.mrb[0].mxu0
  %1569 = vmatprep.mubr.bf16.mxu0 %v1246
  %1570 = vmatmul.mubr.bf16.gmra.mrb[0].mxu0 %v1245
  %v1571 = vpop.f32.mrb[0].mxu0
  %v1572 = vadd.f32 0.0, %v1571
  %v1573 = vpop.f32.mrb[0].mxu0
  %v1574 = vpop.f32.mrb[0].mxu0
  %v1575 = vadd.f32 0.0, %v1574
  %v1576 = vpop.f32.mrb[0].mxu0
  %1577 = vmatprep.mubr.bf16.mxu0 %v1248
  %1578 = vmatmul.mubr.bf16.gmra.mrb[0].mxu0 %v1247
  %v1579 = vpop.f32.mrb[0].mxu0
  %v1580 = vadd.f32 0.0, %v1579
  %v1581 = vpop.f32.mrb[0].mxu0
  %v1582 = vpop.f32.mrb[0].mxu0
  %v1583 = vadd.f32 0.0, %v1582
  %v1584 = vpop.f32.mrb[0].mxu0
  %1585 = vmatprep.mubr.bf16.mxu0 %v1250
  %1586 = vmatmul.mubr.bf16.gmra.mrb[0].mxu0 %v1249
  %v1587 = vpop.f32.mrb[0].mxu0
  %v1588 = vadd.f32 0.0, %v1587
  %v1589 = vpop.f32.mrb[0].mxu0
  %v1590 = vpop.f32.mrb[0].mxu0
  %v1591 = vadd.f32 0.0, %v1590
  %v1592 = vpop.f32.mrb[0].mxu0
  %1593 = vmatprep.mubr.bf16.mxu0 %v1252
  %1594 = vmatmul.mubr.bf16.gmra.mrb[0].mxu0 %v1251
  %v1595 = vpop.f32.mrb[0].mxu0
  %v1596 = vadd.f32 0.0, %v1595
  %v1597 = vpop.f32.mrb[0].mxu0
  %v1598 = vpop.f32.mrb[0].mxu0
  %v1599 = vadd.f32 0.0, %v1598
  %v1600 = vpop.f32.mrb[0].mxu0
  %1601 = vmatprep.mubr.bf16.mxu0 %v1254
  %1602 = vmatmul.mubr.bf16.gmra.mrb[0].mxu0 %v1253
  %v1603 = vpop.f32.mrb[0].mxu0
  %v1604 = vadd.f32 0.0, %v1603
  %v1605 = vpop.f32.mrb[0].mxu0
  %v1606 = vpop.f32.mrb[0].mxu0
  %v1607 = vadd.f32 0.0, %v1606
  %v1608 = vpop.f32.mrb[0].mxu0
  %1609 = vmatprep.mubr.bf16.mxu0 %v1256
  %1610 = vmatmul.mubr.bf16.gmra.mrb[0].mxu0 %v1255
  %v1611 = vpop.f32.mrb[0].mxu0
  %v1612 = vadd.f32 0.0, %v1611
  %v1613 = vpop.f32.mrb[0].mxu0
  %v1614 = vpop.f32.mrb[0].mxu0
  %v1615 = vadd.f32 0.0, %v1614
  %v1616 = vpop.f32.mrb[0].mxu0
  %1617 = vmatprep.mubr.bf16.mxu0 %v1258
  %1618 = vmatmul.mubr.bf16.gmra.mrb[0].mxu0 %v1257
  %v1619 = vpop.f32.mrb[0].mxu0
  %v1620 = vadd.f32 0.0, %v1619
  %v1621 = vpop.f32.mrb[0].mxu0
  %v1622 = vpop.f32.mrb[0].mxu0
  %v1623 = vadd.f32 0.0, %v1622
  %v1624 = vpop.f32.mrb[0].mxu0
  %1625 = vmatprep.mubr.bf16.mxu0 %v1260
  %1626 = vmatmul.mubr.bf16.gmra.mrb[0].mxu0 %v1259
  %v1627 = vpop.f32.mrb[0].mxu0
  %v1628 = vadd.f32 0.0, %v1627
  %v1629 = vpop.f32.mrb[0].mxu0
  %v1630 = vpop.f32.mrb[0].mxu0
  %v1631 = vadd.f32 0.0, %v1630
  %v1632 = vpop.f32.mrb[0].mxu0
  %1633 = vmatprep.mubr.bf16.mxu0 %v1262
  %1634 = vmatmul.mubr.bf16.gmra.mrb[0].mxu0 %v1261
  %v1635 = vpop.f32.mrb[0].mxu0
  %v1636 = vadd.f32 0.0, %v1635
  %v1637 = vpop.f32.mrb[0].mxu0
  %v1638 = vpop.f32.mrb[0].mxu0
  %v1639 = vpop.f32.mrb[0].mxu0
  %1640 = vdwg.mxu0
  %v1641 = vtanh.pop %v1444
  %v1642 = vtanh.pop %v1447
  %v1643 = vtanh.pop %v1452
  %v1644 = vtanh.pop %v1455
  %v1645 = vtanh.pop %v1460
  %v1646 = vtanh.pop %v1463
  %v1647 = vtanh.pop %v1468
  %v1648 = vtanh.pop %v1471
  %v1649 = vtanh.pop %v1476
  %v1650 = vtanh.pop %v1479
  %v1651 = vtanh.pop %v1484
  %v1652 = vtanh.pop %v1487
  %v1653 = vtanh.pop %v1492
  %v1654 = vtanh.pop %v1495
  %v1655 = vtanh.pop %v1500
  %v1656 = vtanh.pop %v1503
  %v1657 = vtanh.pop %v1508
  %v1658 = vtanh.pop %v1511
  %v1659 = vtanh.pop %v1516
  %v1660 = vtanh.pop %v1519
  %v1661 = vtanh.pop %v1524
  %v1662 = vtanh.pop %v1527
  %v1663 = vtanh.pop %v1532
  %v1664 = vtanh.pop %v1535
  %v1665 = vtanh.pop %v1540
  %v1666 = vtanh.pop %v1543
  %v1667 = vtanh.pop %v1548
  %v1668 = vtanh.pop %v1551
  %v1669 = vtanh.pop %v1556
  %v1670 = vtanh.pop %v1559
  %v1671 = vtanh.pop %v1564
  %v1672 = vtanh.pop %v1567
  %v1673 = vtanh.pop %v1572
  %v1674 = vtanh.pop %v1575
  %v1675 = vtanh.pop %v1580
  %v1676 = vtanh.pop %v1583
  %v1677 = vtanh.pop %v1588
  %v1678 = vtanh.pop %v1591
  %v1679 = vtanh.pop %v1596
  %v1680 = vtanh.pop %v1599
  %v1681 = vtanh.pop %v1604
  %v1682 = vtanh.pop %v1607
  %v1683 = vtanh.pop %v1612
  %v1684 = vtanh.pop %v1615
  %v1685 = vtanh.pop %v1620
  %v1686 = vtanh.pop %v1623
  %v1687 = vtanh.pop %v1628
  %v1688 = vtanh.pop %v1631
  %v1689 = vtanh.pop %v1636
  %v1690 = vpack.c.bf16 %v1642, %v1641
  %v1691 = vpack.c.bf16 %v1644, %v1643
  %v1692 = vpack.c.bf16 %v1646, %v1645
  %v1693 = vpack.c.bf16 %v1648, %v1647
  %v1694 = vpack.c.bf16 %v1650, %v1649
  %v1695 = vpack.c.bf16 %v1652, %v1651
  %v1696 = vpack.c.bf16 %v1654, %v1653
  %v1697 = vpack.c.bf16 %v1656, %v1655
  %v1698 = vpack.c.bf16 %v1658, %v1657
  %v1699 = vpack.c.bf16 %v1660, %v1659
  %v1700 = vpack.c.bf16 %v1662, %v1661
  %v1701 = vpack.c.bf16 %v1664, %v1663
  %v1702 = vpack.c.bf16 %v1666, %v1665
  %v1703 = vpack.c.bf16 %v1668, %v1667
  %v1704 = vpack.c.bf16 %v1670, %v1669
  %v1705 = vpack.c.bf16 %v1672, %v1671
  %v1706 = vpack.c.bf16 %v1674, %v1673
  %v1707 = vpack.c.bf16 %v1676, %v1675
  %v1708 = vpack.c.bf16 %v1678, %v1677
  %v1709 = vpack.c.bf16 %v1680, %v1679
  %v1710 = vpack.c.bf16 %v1682, %v1681
  %v1711 = vpack.c.bf16 %v1684, %v1683
  %v1712 = vpack.c.bf16 %v1686, %v1685
  %v1713 = vpack.c.bf16 %v1688, %v1687
  %v1714 = vpack.c.bf16 %v1689, %v1689
  %v1740 = vunpack.c.l.b16 %v1690
  %v1741 = vunpack.c.h.b16 %v1690
  %v1742 = vunpack.c.l.b16 %v1691
  %v1743 = vunpack.c.h.b16 %v1691
  %v1744 = vunpack.c.l.b16 %v1692
  %v1745 = vunpack.c.h.b16 %v1692
  %v1746 = vunpack.c.l.b16 %v1693
  %v1747 = vunpack.c.h.b16 %v1693
  %v1748 = vunpack.c.l.b16 %v1694
  %v1749 = vunpack.c.h.b16 %v1694
  %v1750 = vunpack.c.l.b16 %v1695
  %v1751 = vunpack.c.h.b16 %v1695
  %v1752 = vunpack.c.l.b16 %v1696
  %v1753 = vunpack.c.h.b16 %v1696
  %v1754 = vunpack.c.l.b16 %v1697
  %v1755 = vunpack.c.h.b16 %v1697
  %v1756 = vunpack.c.l.b16 %v1698
  %v1757 = vunpack.c.h.b16 %v1698
  %v1758 = vunpack.c.l.b16 %v1699
  %v1759 = vunpack.c.h.b16 %v1699
  %v1760 = vunpack.c.l.b16 %v1700
  %v1761 = vunpack.c.h.b16 %v1700
  %v1762 = vunpack.c.l.b16 %v1701
  %v1763 = vunpack.c.h.b16 %v1701
  %v1764 = vunpack.c.l.b16 %v1702
  %v1765 = vunpack.c.h.b16 %v1702
  %v1766 = vunpack.c.l.b16 %v1703
  %v1767 = vunpack.c.h.b16 %v1703
  %v1768 = vunpack.c.l.b16 %v1704
  %v1769 = vunpack.c.h.b16 %v1704
  %v1770 = vunpack.c.l.b16 %v1705
  %v1771 = vunpack.c.h.b16 %v1705
  %v1772 = vunpack.c.l.b16 %v1706
  %v1773 = vunpack.c.h.b16 %v1706
  %v1774 = vunpack.c.l.b16 %v1707
  %v1775 = vunpack.c.h.b16 %v1707
  %v1776 = vunpack.c.l.b16 %v1708
  %v1777 = vunpack.c.h.b16 %v1708
  %v1778 = vunpack.c.l.b16 %v1709
  %v1779 = vunpack.c.h.b16 %v1709
  %v1780 = vunpack.c.l.b16 %v1710
  %v1781 = vunpack.c.h.b16 %v1710
  %v1782 = vunpack.c.l.b16 %v1711
  %v1783 = vunpack.c.h.b16 %v1711
  %v1784 = vunpack.c.l.b16 %v1712
  %v1785 = vunpack.c.h.b16 %v1712
  %v1786 = vunpack.c.l.b16 %v1713
  %v1787 = vunpack.c.h.b16 %v1713
  %v1788 = vunpack.c.l.b16 %v1714
  %v1789 = vpack.c.b16 %v1740, %v1740
  %v1790 = vpack.c.b16 %v1741, %v1741
  %v1791 = vpack.c.b16 %v1742, %v1742
  %v1792 = vpack.c.b16 %v1743, %v1743
  %v1793 = vpack.c.b16 %v1744, %v1744
  %v1794 = vpack.c.b16 %v1745, %v1745
  %v1795 = vpack.c.b16 %v1746, %v1746
  %v1796 = vpack.c.b16 %v1747, %v1747
  %v1797 = vpack.c.b16 %v1748, %v1748
  %v1798 = vpack.c.b16 %v1749, %v1749
  %v1799 = vpack.c.b16 %v1750, %v1750
  %v1800 = vpack.c.b16 %v1751, %v1751
  %v1801 = vpack.c.b16 %v1752, %v1752
  %v1802 = vpack.c.b16 %v1753, %v1753
  %v1803 = vpack.c.b16 %v1754, %v1754
  %v1804 = vpack.c.b16 %v1755, %v1755
  %v1805 = vpack.c.b16 %v1756, %v1756
  %v1806 = vpack.c.b16 %v1757, %v1757
  %v1807 = vpack.c.b16 %v1758, %v1758
  %v1808 = vpack.c.b16 %v1759, %v1759
  %v1809 = vpack.c.b16 %v1760, %v1760
  %v1810 = vpack.c.b16 %v1761, %v1761
  %v1811 = vpack.c.b16 %v1762, %v1762
  %v1812 = vpack.c.b16 %v1763, %v1763
  %v1813 = vpack.c.b16 %v1764, %v1764
  %v1814 = vpack.c.b16 %v1765, %v1765
  %v1815 = vpack.c.b16 %v1766, %v1766
  %v1816 = vpack.c.b16 %v1767, %v1767
  %v1817 = vpack.c.b16 %v1768, %v1768
  %v1818 = vpack.c.b16 %v1769, %v1769
  %v1819 = vpack.c.b16 %v1770, %v1770
  %v1820 = vpack.c.b16 %v1771, %v1771
  %v1821 = vpack.c.b16 %v1772, %v1772
  %v1822 = vpack.c.b16 %v1773, %v1773
  %v1823 = vpack.c.b16 %v1774, %v1774
  %v1824 = vpack.c.b16 %v1775, %v1775
  %v1825 = vpack.c.b16 %v1776, %v1776
  %v1826 = vpack.c.b16 %v1777, %v1777
  %v1827 = vpack.c.b16 %v1778, %v1778
  %v1828 = vpack.c.b16 %v1779, %v1779
  %v1829 = vpack.c.b16 %v1780, %v1780
  %v1830 = vpack.c.b16 %v1781, %v1781
  %v1831 = vpack.c.b16 %v1782, %v1782
  %v1832 = vpack.c.b16 %v1783, %v1783
  %v1833 = vpack.c.b16 %v1784, %v1784
  %v1834 = vpack.c.b16 %v1785, %v1785
  %v1835 = vpack.c.b16 %v1786, %v1786
  %v1836 = vpack.c.b16 %v1787, %v1787
  %v1837 = vpack.c.b16 %v1788, %v1788
  %1887 = vst [vmem:[%s9] sm:$0xf] %v1789
  %1888 = vst [vmem:[%s9 + $0x4] sm:$0xf] %v1790
  %1889 = vst [vmem:[%s9 + $0x8] sm:$0xf] %v1791
  %1890 = vst [vmem:[%s9 + $0xc] sm:$0xf] %v1792
  %1891 = vst [vmem:[%s9 + $0x10] sm:$0xf] %v1793
  %1892 = vst [vmem:[%s9 + $0x14] sm:$0xf] %v1794
  %1893 = vst [vmem:[%s9 + $0x18] sm:$0xf] %v1795
  %1894 = vst [vmem:[%s9 + $0x1c] sm:$0xf] %v1796
  %1895 = vst [vmem:[%s9 + $0x20] sm:$0xf] %v1797
  %1896 = vst [vmem:[%s9 + $0x24] sm:$0xf] %v1798
  %1897 = vst [vmem:[%s9 + $0x28] sm:$0xf] %v1799
  %1898 = vst [vmem:[%s9 + $0x2c] sm:$0xf] %v1800
  %1899 = vst [vmem:[%s9 + $0x30] sm:$0xf] %v1801
  %1900 = vst [vmem:[%s9 + $0x34] sm:$0xf] %v1802
  %1901 = vst [vmem:[%s9 + $0x38] sm:$0xf] %v1803
  %1902 = vst [vmem:[%s9 + $0x3c] sm:$0xf] %v1804
  %1903 = vst [vmem:[%s9 + $0x40] sm:$0xf] %v1805
  %1904 = vst [vmem:[%s9 + $0x44] sm:$0xf] %v1806
  %1905 = vst [vmem:[%s9 + $0x48] sm:$0xf] %v1807
  %1906 = vst [vmem:[%s9 + $0x4c] sm:$0xf] %v1808
  %1907 = vst [vmem:[%s9 + $0x50] sm:$0xf] %v1809
  %1908 = vst [vmem:[%s9 + $0x54] sm:$0xf] %v1810
  %1909 = vst [vmem:[%s9 + $0x58] sm:$0xf] %v1811
  %1910 = vst [vmem:[%s9 + $0x5c] sm:$0xf] %v1812
  %1911 = vst [vmem:[%s9 + $0x60] sm:$0xf] %v1813
  %1912 = vst [vmem:[%s9 + $0x64] sm:$0xf] %v1814
  %1913 = vst [vmem:[%s9 + $0x68] sm:$0xf] %v1815
  %1914 = vst [vmem:[%s9 + $0x6c] sm:$0xf] %v1816
  %1915 = vst [vmem:[%s9 + $0x70] sm:$0xf] %v1817
  %1916 = vst [vmem:[%s9 + $0x74] sm:$0xf] %v1818
  %1917 = vst [vmem:[%s9 + $0x78] sm:$0xf] %v1819
  %1918 = vst [vmem:[%s9 + $0x7c] sm:$0xf] %v1820
  %1919 = vst [vmem:[%s9 + $0x80] sm:$0xf] %v1821
  %1920 = vst [vmem:[%s9 + $0x84] sm:$0xf] %v1822
  %1921 = vst [vmem:[%s9 + $0x88] sm:$0xf] %v1823
  %1922 = vst [vmem:[%s9 + $0x8c] sm:$0xf] %v1824
  %1923 = vst [vmem:[%s9 + $0x90] sm:$0xf] %v1825
  %1924 = vst [vmem:[%s9 + $0x94] sm:$0xf] %v1826
  %1925 = vst [vmem:[%s9 + $0x98] sm:$0xf] %v1827
  %1926 = vst [vmem:[%s9 + $0x9c] sm:$0xf] %v1828
  %1927 = vst [vmem:[%s9 + $0xa0] sm:$0xf] %v1829
  %1928 = vst [vmem:[%s9 + $0xa4] sm:$0xf] %v1830
  %1929 = vst [vmem:[%s9 + $0xa8] sm:$0xf] %v1831
  %1930 = vst [vmem:[%s9 + $0xac] sm:$0xf] %v1832
  %1931 = vst [vmem:[%s9 + $0xb0] sm:$0xf] %v1833
  %1932 = vst [vmem:[%s9 + $0xb4] sm:$0xf] %v1834
  %1933 = vst [vmem:[%s9 + $0xb8] sm:$0xf] %v1835
  %1934 = vst [vmem:[%s9 + $0xbc] sm:$0xf] %v1836
  %1935 = vst [vmem:[%s9 + $0xc0] sm:$0xf] %v1837
  %v1936 = vld [vmem:[%s2] sm:$0xff]
  %v1937 = vld [vmem:[%s2 + $0x8] sm:$0xff]
  %v1938 = vld [vmem:[%s2 + $0x10] sm:$0xff]
  %v1939 = vld [vmem:[%s2 + $0x18] sm:$0xff]
  %v1940 = vld [vmem:[%s2 + $0x20] sm:$0xff]
  %v1941 = vld [vmem:[%s2 + $0x28] sm:$0xff]
  %v1942 = vld [vmem:[%s2 + $0x30] sm:$0xff]
  %v1943 = vld [vmem:[%s2 + $0x38] sm:$0xff]
  %v1944 = vld [vmem:[%s2 + $0x40] sm:$0xff]
  %v1945 = vld [vmem:[%s2 + $0x48] sm:$0xff]
  %v1946 = vld [vmem:[%s2 + $0x50] sm:$0xff]
  %v1947 = vld [vmem:[%s2 + $0x58] sm:$0xff]
  %v1948 = vld [vmem:[%s2 + $0x60] sm:$0xff]
  %v1949 = vld [vmem:[%s2 + $0x68] sm:$0xff]
  %v1950 = vld [vmem:[%s2 + $0x70] sm:$0xff]
  %v1951 = vld [vmem:[%s2 + $0x78] sm:$0xff]
  %v1952 = vld [vmem:[%s2 + $0x80] sm:$0xff]
  %v1953 = vld [vmem:[%s2 + $0x88] sm:$0xff]
  %v1954 = vld [vmem:[%s2 + $0x90] sm:$0xff]
  %v1955 = vld [vmem:[%s2 + $0x98] sm:$0xff]
  %v1956 = vld [vmem:[%s2 + $0xa0] sm:$0xff]
  %v1957 = vld [vmem:[%s2 + $0xa8] sm:$0xff]
  %v1958 = vld [vmem:[%s2 + $0xb0] sm:$0xff]
  %v1959 = vld [vmem:[%s2 + $0xb8] sm:$0xff]
  %v1960 = vld [vmem:[%s2 + $0xc0] sm:$0xff]
  %v1961 = vld [vmem:[%s2 + $0xc8] sm:$0xff]
  %v1962 = vld [vmem:[%s2 + $0xd0] sm:$0xff]
  %v1963 = vld [vmem:[%s2 + $0xd8] sm:$0xff]
  %v1964 = vld [vmem:[%s2 + $0xe0] sm:$0xff]
  %v1965 = vld [vmem:[%s2 + $0xe8] sm:$0xff]
  %v1966 = vld [vmem:[%s2 + $0xf0] sm:$0xff]
  %v1967 = vld [vmem:[%s2 + $0xf8] sm:$0xff]
  %v1968 = vld [vmem:[%s2 + $0x100] sm:$0xff]
  %v1969 = vld [vmem:[%s2 + $0x108] sm:$0xff]
  %v1970 = vld [vmem:[%s2 + $0x110] sm:$0xff]
  %v1971 = vld [vmem:[%s2 + $0x118] sm:$0xff]
  %v1972 = vld [vmem:[%s2 + $0x120] sm:$0xff]
  %v1973 = vld [vmem:[%s2 + $0x128] sm:$0xff]
  %v1974 = vld [vmem:[%s2 + $0x130] sm:$0xff]
  %v1975 = vld [vmem:[%s2 + $0x138] sm:$0xff]
  %v1976 = vld [vmem:[%s2 + $0x140] sm:$0xff]
  %v1977 = vld [vmem:[%s2 + $0x148] sm:$0xff]
  %v1978 = vld [vmem:[%s2 + $0x150] sm:$0xff]
  %v1979 = vld [vmem:[%s2 + $0x158] sm:$0xff]
  %v1980 = vld [vmem:[%s2 + $0x160] sm:$0xff]
  %v1981 = vld [vmem:[%s2 + $0x168] sm:$0xff]
  %v1982 = vld [vmem:[%s2 + $0x170] sm:$0xff]
  %v1983 = vld [vmem:[%s2 + $0x178] sm:$0xff]
  %v1984 = vld [vmem:[%s2 + $0x180] sm:$0xff]
  %v1985 = vld [vmem:[%s6] sm:$0xf]
  %v1986 = vld [vmem:[%s6 + $0x4] sm:$0xf]
  %v1987 = vld [vmem:[%s6 + $0x8] sm:$0xf]
  %v1988 = vld [vmem:[%s6 + $0xc] sm:$0xf]
  %v1989 = vld [vmem:[%s6 + $0x10] sm:$0xf]
  %v1990 = vld [vmem:[%s6 + $0x14] sm:$0xf]
  %v1991 = vld [vmem:[%s6 + $0x18] sm:$0xf]
  %v1992 = vld [vmem:[%s6 + $0x1c] sm:$0xf]
  %v1993 = vld [vmem:[%s6 + $0x20] sm:$0xf]
  %v1994 = vld [vmem:[%s6 + $0x24] sm:$0xf]
  %v1995 = vld [vmem:[%s6 + $0x28] sm:$0xf]
  %v1996 = vld [vmem:[%s6 + $0x2c] sm:$0xf]
  %v1997 = vld [vmem:[%s6 + $0x30] sm:$0xf]
  %v1998 = vld [vmem:[%s6 + $0x34] sm:$0xf]
  %v1999 = vld [vmem:[%s6 + $0x38] sm:$0xf]
  %v2000 = vld [vmem:[%s6 + $0x3c] sm:$0xf]
  %v2001 = vld [vmem:[%s6 + $0x40] sm:$0xf]
  %v2002 = vld [vmem:[%s6 + $0x44] sm:$0xf]
  %v2003 = vld [vmem:[%s6 + $0x48] sm:$0xf]
  %v2004 = vld [vmem:[%s6 + $0x4c] sm:$0xf]
  %v2005 = vld [vmem:[%s6 + $0x50] sm:$0xf]
  %v2006 = vld [vmem:[%s6 + $0x54] sm:$0xf]
  %v2007 = vld [vmem:[%s6 + $0x58] sm:$0xf]
  %v2008 = vld [vmem:[%s6 + $0x5c] sm:$0xf]
  %v2009 = vld [vmem:[%s6 + $0x60] sm:$0xf]
  %v2010 = vld [vmem:[%s6 + $0x64] sm:$0xf]
  %v2011 = vld [vmem:[%s6 + $0x68] sm:$0xf]
  %v2012 = vld [vmem:[%s6 + $0x6c] sm:$0xf]
  %v2013 = vld [vmem:[%s6 + $0x70] sm:$0xf]
  %v2014 = vld [vmem:[%s6 + $0x74] sm:$0xf]
  %v2015 = vld [vmem:[%s6 + $0x78] sm:$0xf]
  %v2016 = vld [vmem:[%s6 + $0x7c] sm:$0xf]
  %v2066 = vunpack.c.l.b16 %v1936
  %v2067 = vunpack.c.h.b16 %v1936
  %v2068 = vunpack.c.l.b16 %v1937
  %v2069 = vunpack.c.h.b16 %v1937
  %v2070 = vunpack.c.l.b16 %v1938
  %v2071 = vunpack.c.h.b16 %v1938
  %v2072 = vunpack.c.l.b16 %v1939
  %v2073 = vunpack.c.h.b16 %v1939
  %v2074 = vunpack.c.l.b16 %v1940
  %v2075 = vunpack.c.h.b16 %v1940
  %v2076 = vunpack.c.l.b16 %v1941
  %v2077 = vunpack.c.h.b16 %v1941
  %v2078 = vunpack.c.l.b16 %v1942
  %v2079 = vunpack.c.h.b16 %v1942
  %v2080 = vunpack.c.l.b16 %v1943
  %v2081 = vunpack.c.h.b16 %v1943
  %v2082 = vunpack.c.l.b16 %v1944
  %v2083 = vunpack.c.h.b16 %v1944
  %v2084 = vunpack.c.l.b16 %v1945
  %v2085 = vunpack.c.h.b16 %v1945
  %v2086 = vunpack.c.l.b16 %v1946
  %v2087 = vunpack.c.h.b16 %v1946
  %v2088 = vunpack.c.l.b16 %v1947
  %v2089 = vunpack.c.h.b16 %v1947
  %v2090 = vunpack.c.l.b16 %v1948
  %v2091 = vunpack.c.h.b16 %v1948
  %v2092 = vunpack.c.l.b16 %v1949
  %v2093 = vunpack.c.h.b16 %v1949
  %v2094 = vunpack.c.l.b16 %v1950
  %v2095 = vunpack.c.h.b16 %v1950
  %v2096 = vunpack.c.l.b16 %v1951
  %v2097 = vunpack.c.h.b16 %v1951
  %v2098 = vunpack.c.l.b16 %v1952
  %v2099 = vunpack.c.h.b16 %v1952
  %v2100 = vunpack.c.l.b16 %v1953
  %v2101 = vunpack.c.h.b16 %v1953
  %v2102 = vunpack.c.l.b16 %v1954
  %v2103 = vunpack.c.h.b16 %v1954
  %v2104 = vunpack.c.l.b16 %v1955
  %v2105 = vunpack.c.h.b16 %v1955
  %v2106 = vunpack.c.l.b16 %v1956
  %v2107 = vunpack.c.h.b16 %v1956
  %v2108 = vunpack.c.l.b16 %v1957
  %v2109 = vunpack.c.h.b16 %v1957
  %v2110 = vunpack.c.l.b16 %v1958
  %v2111 = vunpack.c.h.b16 %v1958
  %v2112 = vunpack.c.l.b16 %v1959
  %v2113 = vunpack.c.h.b16 %v1959
  %v2114 = vunpack.c.l.b16 %v1960
  %v2115 = vunpack.c.h.b16 %v1960
  %v2116 = vunpack.c.l.b16 %v1961
  %v2117 = vunpack.c.h.b16 %v1961
  %v2118 = vunpack.c.l.b16 %v1962
  %v2119 = vunpack.c.h.b16 %v1962
  %v2120 = vunpack.c.l.b16 %v1963
  %v2121 = vunpack.c.h.b16 %v1963
  %v2122 = vunpack.c.l.b16 %v1964
  %v2123 = vunpack.c.h.b16 %v1964
  %v2124 = vunpack.c.l.b16 %v1965
  %v2125 = vunpack.c.h.b16 %v1965
  %v2126 = vunpack.c.l.b16 %v1966
  %v2127 = vunpack.c.h.b16 %v1966
  %v2128 = vunpack.c.l.b16 %v1967
  %v2129 = vunpack.c.h.b16 %v1967
  %v2130 = vunpack.c.l.b16 %v1968
  %v2131 = vunpack.c.h.b16 %v1968
  %v2132 = vunpack.c.l.b16 %v1969
  %v2133 = vunpack.c.h.b16 %v1969
  %v2134 = vunpack.c.l.b16 %v1970
  %v2135 = vunpack.c.h.b16 %v1970
  %v2136 = vunpack.c.l.b16 %v1971
  %v2137 = vunpack.c.h.b16 %v1971
  %v2138 = vunpack.c.l.b16 %v1972
  %v2139 = vunpack.c.h.b16 %v1972
  %v2140 = vunpack.c.l.b16 %v1973
  %v2141 = vunpack.c.h.b16 %v1973
  %v2142 = vunpack.c.l.b16 %v1974
  %v2143 = vunpack.c.h.b16 %v1974
  %v2144 = vunpack.c.l.b16 %v1975
  %v2145 = vunpack.c.h.b16 %v1975
  %v2146 = vunpack.c.l.b16 %v1976
  %v2147 = vunpack.c.h.b16 %v1976
  %v2148 = vunpack.c.l.b16 %v1977
  %v2149 = vunpack.c.h.b16 %v1977
  %v2150 = vunpack.c.l.b16 %v1978
  %v2151 = vunpack.c.h.b16 %v1978
  %v2152 = vunpack.c.l.b16 %v1979
  %v2153 = vunpack.c.h.b16 %v1979
  %v2154 = vunpack.c.l.b16 %v1980
  %v2155 = vunpack.c.h.b16 %v1980
  %v2156 = vunpack.c.l.b16 %v1981
  %v2157 = vunpack.c.h.b16 %v1981
  %v2158 = vunpack.c.l.b16 %v1982
  %v2159 = vunpack.c.h.b16 %v1982
  %v2160 = vunpack.c.l.b16 %v1983
  %v2161 = vunpack.c.h.b16 %v1983
  %v2162 = vunpack.c.l.b16 %v1984
  %v2163 = vunpack.c.h.b16 %v1984
  %v2164 = vpack.c.b16 %v2068, %v2066
  %v2165 = vpack.c.b16 %v2069, %v2067
  %v2166 = vpack.c.b16 %v2072, %v2070
  %v2167 = vpack.c.b16 %v2073, %v2071
  %v2168 = vpack.c.b16 %v2076, %v2074
  %v2169 = vpack.c.b16 %v2077, %v2075
  %v2170 = vpack.c.b16 %v2080, %v2078
  %v2171 = vpack.c.b16 %v2081, %v2079
  %v2172 = vpack.c.b16 %v2084, %v2082
  %v2173 = vpack.c.b16 %v2085, %v2083
  %v2174 = vpack.c.b16 %v2088, %v2086
  %v2175 = vpack.c.b16 %v2089, %v2087
  %v2176 = vpack.c.b16 %v2092, %v2090
  %v2177 = vpack.c.b16 %v2093, %v2091
  %v2178 = vpack.c.b16 %v2096, %v2094
  %v2179 = vpack.c.b16 %v2097, %v2095
  %v2180 = vpack.c.b16 %v2100, %v2098
  %v2181 = vpack.c.b16 %v2101, %v2099
  %v2182 = vpack.c.b16 %v2104, %v2102
  %v2183 = vpack.c.b16 %v2105, %v2103
  %v2184 = vpack.c.b16 %v2108, %v2106
  %v2185 = vpack.c.b16 %v2109, %v2107
  %v2186 = vpack.c.b16 %v2112, %v2110
  %v2187 = vpack.c.b16 %v2113, %v2111
  %v2188 = vpack.c.b16 %v2116, %v2114
  %v2189 = vpack.c.b16 %v2117, %v2115
  %v2190 = vpack.c.b16 %v2120, %v2118
  %v2191 = vpack.c.b16 %v2121, %v2119
  %v2192 = vpack.c.b16 %v2124, %v2122
  %v2193 = vpack.c.b16 %v2125, %v2123
  %v2194 = vpack.c.b16 %v2128, %v2126
  %v2195 = vpack.c.b16 %v2129, %v2127
  %v2196 = vpack.c.b16 %v2132, %v2130
  %v2197 = vpack.c.b16 %v2133, %v2131
  %v2198 = vpack.c.b16 %v2136, %v2134
  %v2199 = vpack.c.b16 %v2137, %v2135
  %v2200 = vpack.c.b16 %v2140, %v2138
  %v2201 = vpack.c.b16 %v2141, %v2139
  %v2202 = vpack.c.b16 %v2144, %v2142
  %v2203 = vpack.c.b16 %v2145, %v2143
  %v2204 = vpack.c.b16 %v2148, %v2146
  %v2205 = vpack.c.b16 %v2149, %v2147
  %v2206 = vpack.c.b16 %v2152, %v2150
  %v2207 = vpack.c.b16 %v2153, %v2151
  %v2208 = vpack.c.b16 %v2156, %v2154
  %v2209 = vpack.c.b16 %v2157, %v2155
  %v2210 = vpack.c.b16 %v2160, %v2158
  %v2211 = vpack.c.b16 %v2161, %v2159
  %v2212 = vpack.c.b16 %v2162, %v2162
  %v2213 = vpack.c.b16 %v2163, %v2163
  %v2296 = vunpack.c.l.b16 %v1985
  %v2297 = vunpack.c.l.b16 %v1986
  %v2298 = vunpack.c.l.b16 %v1987
  %v2299 = vunpack.c.l.b16 %v1988
  %v2300 = vunpack.c.l.b16 %v1989
  %v2301 = vunpack.c.l.b16 %v1990
  %v2302 = vunpack.c.l.b16 %v1991
  %v2303 = vunpack.c.l.b16 %v1992
  %v2304 = vunpack.c.l.b16 %v1993
  %v2305 = vunpack.c.l.b16 %v1994
  %v2306 = vunpack.c.l.b16 %v1995
  %v2307 = vunpack.c.l.b16 %v1996
  %v2308 = vunpack.c.l.b16 %v1997
  %v2309 = vunpack.c.l.b16 %v1998
  %v2310 = vunpack.c.l.b16 %v1999
  %v2311 = vunpack.c.l.b16 %v2000
  %v2312 = vunpack.c.l.b16 %v2001
  %v2313 = vunpack.c.l.b16 %v2002
  %v2314 = vunpack.c.l.b16 %v2003
  %v2315 = vunpack.c.l.b16 %v2004
  %v2316 = vunpack.c.l.b16 %v2005
  %v2317 = vunpack.c.l.b16 %v2006
  %v2318 = vunpack.c.l.b16 %v2007
  %v2319 = vunpack.c.l.b16 %v2008
  %v2320 = vunpack.c.l.b16 %v2009
  %v2321 = vunpack.c.l.b16 %v2010
  %v2322 = vunpack.c.l.b16 %v2011
  %v2323 = vunpack.c.l.b16 %v2012
  %v2324 = vunpack.c.l.b16 %v2013
  %v2325 = vunpack.c.l.b16 %v2014
  %v2326 = vunpack.c.l.b16 %v2015
  %v2327 = vunpack.c.l.b16 %v2016
  %v2328 = vpack.c.b16 %v2297, %v2296
  %v2329 = vpack.c.b16 %v2299, %v2298
  %v2330 = vpack.c.b16 %v2301, %v2300
  %v2331 = vpack.c.b16 %v2303, %v2302
  %v2332 = vpack.c.b16 %v2305, %v2304
  %v2333 = vpack.c.b16 %v2307, %v2306
  %v2334 = vpack.c.b16 %v2309, %v2308
  %v2335 = vpack.c.b16 %v2311, %v2310
  %v2336 = vpack.c.b16 %v2313, %v2312
  %v2337 = vpack.c.b16 %v2315, %v2314
  %v2338 = vpack.c.b16 %v2317, %v2316
  %v2339 = vpack.c.b16 %v2319, %v2318
  %v2340 = vpack.c.b16 %v2321, %v2320
  %v2341 = vpack.c.b16 %v2323, %v2322
  %v2342 = vpack.c.b16 %v2325, %v2324
  %v2343 = vpack.c.b16 %v2327, %v2326
  %2360 = vmatprep.subr.bf16.mxu0 0
  %2361 = vmatpush1.bf16.msra.mxu0 %v2328
  %2362 = vmatprep.subr.bf16.mxu0 0
  %2363 = vmatpush1.bf16.msra.mxu0 %v2329
  %2364 = vmatprep.subr.bf16.mxu0 0
  %2365 = vmatpush1.bf16.msra.mxu0 %v2330
  %2366 = vmatprep.subr.bf16.mxu0 0
  %2367 = vmatpush1.bf16.msra.mxu0 %v2331
  %2368 = vmatprep.subr.bf16.mxu0 0
  %2369 = vmatpush1.bf16.msra.mxu0 %v2332
  %2370 = vmatprep.subr.bf16.mxu0 0
  %2371 = vmatpush1.bf16.msra.mxu0 %v2333
  %2372 = vmatprep.subr.bf16.mxu0 0
  %2373 = vmatpush1.bf16.msra.mxu0 %v2334
  %2374 = vmatprep.subr.bf16.mxu0 0
  %2375 = vmatpush1.bf16.msra.mxu0 %v2335
  %2376 = vmatprep.subr.bf16.mxu0 0
  %2377 = vmatpush1.bf16.msra.mxu0 %v2336
  %2378 = vmatprep.subr.bf16.mxu0 0
  %2379 = vmatpush1.bf16.msra.mxu0 %v2337
  %2380 = vmatprep.subr.bf16.mxu0 0
  %2381 = vmatpush1.bf16.msra.mxu0 %v2338
  %2382 = vmatprep.subr.bf16.mxu0 0
  %2383 = vmatpush1.bf16.msra.mxu0 %v2339
  %2384 = vmatprep.subr.bf16.mxu0 0
  %2385 = vmatpush1.bf16.msra.mxu0 %v2340
  %2386 = vmatprep.subr.bf16.mxu0 0
  %2387 = vmatpush1.bf16.msra.mxu0 %v2341
  %2388 = vmatprep.subr.bf16.mxu0 0
  %2389 = vmatpush1.bf16.msra.mxu0 %v2342
  %2390 = vmatprep.subr.bf16.mxu0 0
  %2391 = vmatpush1.bf16.msra.mxu0 %v2343
  %2392 = vmatprep.mubr.bf16.mxu0 %v2165
  %2393 = vmatmul.mubr.bf16.gmra.mrb[0].mxu0 %v2164
  %v2394 = vpop.f32.mrb[0].mxu0
  %v2395 = vadd.f32 0.0, %v2394
  %v2396 = vpop.f32.mrb[0].mxu0
  %v2397 = vpop.f32.mrb[0].mxu0
  %v2398 = vadd.f32 0.0, %v2397
  %v2399 = vpop.f32.mrb[0].mxu0
  %2400 = vmatprep.mubr.bf16.mxu0 %v2167
  %2401 = vmatmul.mubr.bf16.gmra.mrb[0].mxu0 %v2166
  %v2402 = vpop.f32.mrb[0].mxu0
  %v2403 = vadd.f32 0.0, %v2402
  %v2404 = vpop.f32.mrb[0].mxu0
  %v2405 = vpop.f32.mrb[0].mxu0
  %v2406 = vadd.f32 0.0, %v2405
  %v2407 = vpop.f32.mrb[0].mxu0
  %2408 = vmatprep.mubr.bf16.mxu0 %v2169
  %2409 = vmatmul.mubr.bf16.gmra.mrb[0].mxu0 %v2168
  %v2410 = vpop.f32.mrb[0].mxu0
  %v2411 = vadd.f32 0.0, %v2410
  %v2412 = vpop.f32.mrb[0].mxu0
  %v2413 = vpop.f32.mrb[0].mxu0
  %v2414 = vadd.f32 0.0, %v2413
  %v2415 = vpop.f32.mrb[0].mxu0
  %2416 = vmatprep.mubr.bf16.mxu0 %v2171
  %2417 = vmatmul.mubr.bf16.gmra.mrb[0].mxu0 %v2170
  %v2418 = vpop.f32.mrb[0].mxu0
  %v2419 = vadd.f32 0.0, %v2418
  %v2420 = vpop.f32.mrb[0].mxu0
  %v2421 = vpop.f32.mrb[0].mxu0
  %v2422 = vadd.f32 0.0, %v2421
  %v2423 = vpop.f32.mrb[0].mxu0
  %2424 = vmatprep.mubr.bf16.mxu0 %v2173
  %2425 = vmatmul.mubr.bf16.gmra.mrb[0].mxu0 %v2172
  %v2426 = vpop.f32.mrb[0].mxu0
  %v2427 = vadd.f32 0.0, %v2426
  %v2428 = vpop.f32.mrb[0].mxu0
  %v2429 = vpop.f32.mrb[0].mxu0
  %v2430 = vadd.f32 0.0, %v2429
  %v2431 = vpop.f32.mrb[0].mxu0
  %2432 = vmatprep.mubr.bf16.mxu0 %v2175
  %2433 = vmatmul.mubr.bf16.gmra.mrb[0].mxu0 %v2174
  %v2434 = vpop.f32.mrb[0].mxu0
  %v2435 = vadd.f32 0.0, %v2434
  %v2436 = vpop.f32.mrb[0].mxu0
  %v2437 = vpop.f32.mrb[0].mxu0
  %v2438 = vadd.f32 0.0, %v2437
  %v2439 = vpop.f32.mrb[0].mxu0
  %2440 = vmatprep.mubr.bf16.mxu0 %v2177
  %2441 = vmatmul.mubr.bf16.gmra.mrb[0].mxu0 %v2176
  %v2442 = vpop.f32.mrb[0].mxu0
  %v2443 = vadd.f32 0.0, %v2442
  %v2444 = vpop.f32.mrb[0].mxu0
  %v2445 = vpop.f32.mrb[0].mxu0
  %v2446 = vadd.f32 0.0, %v2445
  %v2447 = vpop.f32.mrb[0].mxu0
  %2448 = vmatprep.mubr.bf16.mxu0 %v2179
  %2449 = vmatmul.mubr.bf16.gmra.mrb[0].mxu0 %v2178
  %v2450 = vpop.f32.mrb[0].mxu0
  %v2451 = vadd.f32 0.0, %v2450
  %v2452 = vpop.f32.mrb[0].mxu0
  %v2453 = vpop.f32.mrb[0].mxu0
  %v2454 = vadd.f32 0.0, %v2453
  %v2455 = vpop.f32.mrb[0].mxu0
  %2456 = vmatprep.mubr.bf16.mxu0 %v2181
  %2457 = vmatmul.mubr.bf16.gmra.mrb[0].mxu0 %v2180
  %v2458 = vpop.f32.mrb[0].mxu0
  %v2459 = vadd.f32 0.0, %v2458
  %v2460 = vpop.f32.mrb[0].mxu0
  %v2461 = vpop.f32.mrb[0].mxu0
  %v2462 = vadd.f32 0.0, %v2461
  %v2463 = vpop.f32.mrb[0].mxu0
  %2464 = vmatprep.mubr.bf16.mxu0 %v2183
  %2465 = vmatmul.mubr.bf16.gmra.mrb[0].mxu0 %v2182
  %v2466 = vpop.f32.mrb[0].mxu0
  %v2467 = vadd.f32 0.0, %v2466
  %v2468 = vpop.f32.mrb[0].mxu0
  %v2469 = vpop.f32.mrb[0].mxu0
  %v2470 = vadd.f32 0.0, %v2469
  %v2471 = vpop.f32.mrb[0].mxu0
  %2472 = vmatprep.mubr.bf16.mxu0 %v2185
  %2473 = vmatmul.mubr.bf16.gmra.mrb[0].mxu0 %v2184
  %v2474 = vpop.f32.mrb[0].mxu0
  %v2475 = vadd.f32 0.0, %v2474
  %v2476 = vpop.f32.mrb[0].mxu0
  %v2477 = vpop.f32.mrb[0].mxu0
  %v2478 = vadd.f32 0.0, %v2477
  %v2479 = vpop.f32.mrb[0].mxu0
  %2480 = vmatprep.mubr.bf16.mxu0 %v2187
  %2481 = vmatmul.mubr.bf16.gmra.mrb[0].mxu0 %v2186
  %v2482 = vpop.f32.mrb[0].mxu0
  %v2483 = vadd.f32 0.0, %v2482
  %v2484 = vpop.f32.mrb[0].mxu0
  %v2485 = vpop.f32.mrb[0].mxu0
  %v2486 = vadd.f32 0.0, %v2485
  %v2487 = vpop.f32.mrb[0].mxu0
  %2488 = vmatprep.mubr.bf16.mxu0 %v2189
  %2489 = vmatmul.mubr.bf16.gmra.mrb[0].mxu0 %v2188
  %v2490 = vpop.f32.mrb[0].mxu0
  %v2491 = vadd.f32 0.0, %v2490
  %v2492 = vpop.f32.mrb[0].mxu0
  %v2493 = vpop.f32.mrb[0].mxu0
  %v2494 = vadd.f32 0.0, %v2493
  %v2495 = vpop.f32.mrb[0].mxu0
  %2496 = vmatprep.mubr.bf16.mxu0 %v2191
  %2497 = vmatmul.mubr.bf16.gmra.mrb[0].mxu0 %v2190
  %v2498 = vpop.f32.mrb[0].mxu0
  %v2499 = vadd.f32 0.0, %v2498
  %v2500 = vpop.f32.mrb[0].mxu0
  %v2501 = vpop.f32.mrb[0].mxu0
  %v2502 = vadd.f32 0.0, %v2501
  %v2503 = vpop.f32.mrb[0].mxu0
  %2504 = vmatprep.mubr.bf16.mxu0 %v2193
  %2505 = vmatmul.mubr.bf16.gmra.mrb[0].mxu0 %v2192
  %v2506 = vpop.f32.mrb[0].mxu0
  %v2507 = vadd.f32 0.0, %v2506
  %v2508 = vpop.f32.mrb[0].mxu0
  %v2509 = vpop.f32.mrb[0].mxu0
  %v2510 = vadd.f32 0.0, %v2509
  %v2511 = vpop.f32.mrb[0].mxu0
  %2512 = vmatprep.mubr.bf16.mxu0 %v2195
  %2513 = vmatmul.mubr.bf16.gmra.mrb[0].mxu0 %v2194
  %v2514 = vpop.f32.mrb[0].mxu0
  %v2515 = vadd.f32 0.0, %v2514
  %v2516 = vpop.f32.mrb[0].mxu0
  %v2517 = vpop.f32.mrb[0].mxu0
  %v2518 = vadd.f32 0.0, %v2517
  %v2519 = vpop.f32.mrb[0].mxu0
  %2520 = vmatprep.mubr.bf16.mxu0 %v2197
  %2521 = vmatmul.mubr.bf16.gmra.mrb[0].mxu0 %v2196
  %v2522 = vpop.f32.mrb[0].mxu0
  %v2523 = vadd.f32 0.0, %v2522
  %v2524 = vpop.f32.mrb[0].mxu0
  %v2525 = vpop.f32.mrb[0].mxu0
  %v2526 = vadd.f32 0.0, %v2525
  %v2527 = vpop.f32.mrb[0].mxu0
  %2528 = vmatprep.mubr.bf16.mxu0 %v2199
  %2529 = vmatmul.mubr.bf16.gmra.mrb[0].mxu0 %v2198
  %v2530 = vpop.f32.mrb[0].mxu0
  %v2531 = vadd.f32 0.0, %v2530
  %v2532 = vpop.f32.mrb[0].mxu0
  %v2533 = vpop.f32.mrb[0].mxu0
  %v2534 = vadd.f32 0.0, %v2533
  %v2535 = vpop.f32.mrb[0].mxu0
  %2536 = vmatprep.mubr.bf16.mxu0 %v2201
  %2537 = vmatmul.mubr.bf16.gmra.mrb[0].mxu0 %v2200
  %v2538 = vpop.f32.mrb[0].mxu0
  %v2539 = vadd.f32 0.0, %v2538
  %v2540 = vpop.f32.mrb[0].mxu0
  %v2541 = vpop.f32.mrb[0].mxu0
  %v2542 = vadd.f32 0.0, %v2541
  %v2543 = vpop.f32.mrb[0].mxu0
  %2544 = vmatprep.mubr.bf16.mxu0 %v2203
  %2545 = vmatmul.mubr.bf16.gmra.mrb[0].mxu0 %v2202
  %v2546 = vpop.f32.mrb[0].mxu0
  %v2547 = vadd.f32 0.0, %v2546
  %v2548 = vpop.f32.mrb[0].mxu0
  %v2549 = vpop.f32.mrb[0].mxu0
  %v2550 = vadd.f32 0.0, %v2549
  %v2551 = vpop.f32.mrb[0].mxu0
  %2552 = vmatprep.mubr.bf16.mxu0 %v2205
  %2553 = vmatmul.mubr.bf16.gmra.mrb[0].mxu0 %v2204
  %v2554 = vpop.f32.mrb[0].mxu0
  %v2555 = vadd.f32 0.0, %v2554
  %v2556 = vpop.f32.mrb[0].mxu0
  %v2557 = vpop.f32.mrb[0].mxu0
  %v2558 = vadd.f32 0.0, %v2557
  %v2559 = vpop.f32.mrb[0].mxu0
  %2560 = vmatprep.mubr.bf16.mxu0 %v2207
  %2561 = vmatmul.mubr.bf16.gmra.mrb[0].mxu0 %v2206
  %v2562 = vpop.f32.mrb[0].mxu0
  %v2563 = vadd.f32 0.0, %v2562
  %v2564 = vpop.f32.mrb[0].mxu0
  %v2565 = vpop.f32.mrb[0].mxu0
  %v2566 = vadd.f32 0.0, %v2565
  %v2567 = vpop.f32.mrb[0].mxu0
  %2568 = vmatprep.mubr.bf16.mxu0 %v2209
  %2569 = vmatmul.mubr.bf16.gmra.mrb[0].mxu0 %v2208
  %v2570 = vpop.f32.mrb[0].mxu0
  %v2571 = vadd.f32 0.0, %v2570
  %v2572 = vpop.f32.mrb[0].mxu0
  %v2573 = vpop.f32.mrb[0].mxu0
  %v2574 = vadd.f32 0.0, %v2573
  %v2575 = vpop.f32.mrb[0].mxu0
  %2576 = vmatprep.mubr.bf16.mxu0 %v2211
  %2577 = vmatmul.mubr.bf16.gmra.mrb[0].mxu0 %v2210
  %v2578 = vpop.f32.mrb[0].mxu0
  %v2579 = vadd.f32 0.0, %v2578
  %v2580 = vpop.f32.mrb[0].mxu0
  %v2581 = vpop.f32.mrb[0].mxu0
  %v2582 = vadd.f32 0.0, %v2581
  %v2583 = vpop.f32.mrb[0].mxu0
  %2584 = vmatprep.mubr.bf16.mxu0 %v2213
  %2585 = vmatmul.mubr.bf16.gmra.mrb[0].mxu0 %v2212
  %v2586 = vpop.f32.mrb[0].mxu0
  %v2587 = vadd.f32 0.0, %v2586
  %v2588 = vpop.f32.mrb[0].mxu0
  %v2589 = vpop.f32.mrb[0].mxu0
  %v2590 = vpop.f32.mrb[0].mxu0
  %2591 = vdwg.mxu0
  %v2592 = vtanh.pop %v2395
  %v2593 = vtanh.pop %v2398
  %v2594 = vtanh.pop %v2403
  %v2595 = vtanh.pop %v2406
  %v2596 = vtanh.pop %v2411
  %v2597 = vtanh.pop %v2414
  %v2598 = vtanh.pop %v2419
  %v2599 = vtanh.pop %v2422
  %v2600 = vtanh.pop %v2427
  %v2601 = vtanh.pop %v2430
  %v2602 = vtanh.pop %v2435
  %v2603 = vtanh.pop %v2438
  %v2604 = vtanh.pop %v2443
  %v2605 = vtanh.pop %v2446
  %v2606 = vtanh.pop %v2451
  %v2607 = vtanh.pop %v2454
  %v2608 = vtanh.pop %v2459
  %v2609 = vtanh.pop %v2462
  %v2610 = vtanh.pop %v2467
  %v2611 = vtanh.pop %v2470
  %v2612 = vtanh.pop %v2475
  %v2613 = vtanh.pop %v2478
  %v2614 = vtanh.pop %v2483
  %v2615 = vtanh.pop %v2486
  %v2616 = vtanh.pop %v2491
  %v2617 = vtanh.pop %v2494
  %v2618 = vtanh.pop %v2499
  %v2619 = vtanh.pop %v2502
  %v2620 = vtanh.pop %v2507
  %v2621 = vtanh.pop %v2510
  %v2622 = vtanh.pop %v2515
  %v2623 = vtanh.pop %v2518
  %v2624 = vtanh.pop %v2523
  %v2625 = vtanh.pop %v2526
  %v2626 = vtanh.pop %v2531
  %v2627 = vtanh.pop %v2534
  %v2628 = vtanh.pop %v2539
  %v2629 = vtanh.pop %v2542
  %v2630 = vtanh.pop %v2547
  %v2631 = vtanh.pop %v2550
  %v2632 = vtanh.pop %v2555
  %v2633 = vtanh.pop %v2558
  %v2634 = vtanh.pop %v2563
  %v2635 = vtanh.pop %v2566
  %v2636 = vtanh.pop %v2571
  %v2637 = vtanh.pop %v2574
  %v2638 = vtanh.pop %v2579
  %v2639 = vtanh.pop %v2582
  %v2640 = vtanh.pop %v2587
  %v2641 = vpack.c.bf16 %v2593, %v2592
  %v2642 = vpack.c.bf16 %v2595, %v2594
  %v2643 = vpack.c.bf16 %v2597, %v2596
  %v2644 = vpack.c.bf16 %v2599, %v2598
  %v2645 = vpack.c.bf16 %v2601, %v2600
  %v2646 = vpack.c.bf16 %v2603, %v2602
  %v2647 = vpack.c.bf16 %v2605, %v2604
  %v2648 = vpack.c.bf16 %v2607, %v2606
  %v2649 = vpack.c.bf16 %v2609, %v2608
  %v2650 = vpack.c.bf16 %v2611, %v2610
  %v2651 = vpack.c.bf16 %v2613, %v2612
  %v2652 = vpack.c.bf16 %v2615, %v2614
  %v2653 = vpack.c.bf16 %v2617, %v2616
  %v2654 = vpack.c.bf16 %v2619, %v2618
  %v2655 = vpack.c.bf16 %v2621, %v2620
  %v2656 = vpack.c.bf16 %v2623, %v2622
  %v2657 = vpack.c.bf16 %v2625, %v2624
  %v2658 = vpack.c.bf16 %v2627, %v2626
  %v2659 = vpack.c.bf16 %v2629, %v2628
  %v2660 = vpack.c.bf16 %v2631, %v2630
  %v2661 = vpack.c.bf16 %v2633, %v2632
  %v2662 = vpack.c.bf16 %v2635, %v2634
  %v2663 = vpack.c.bf16 %v2637, %v2636
  %v2664 = vpack.c.bf16 %v2639, %v2638
  %v2665 = vpack.c.bf16 %v2640, %v2640
  %v2691 = vunpack.c.l.b16 %v2641
  %v2692 = vunpack.c.h.b16 %v2641
  %v2693 = vunpack.c.l.b16 %v2642
  %v2694 = vunpack.c.h.b16 %v2642
  %v2695 = vunpack.c.l.b16 %v2643
  %v2696 = vunpack.c.h.b16 %v2643
  %v2697 = vunpack.c.l.b16 %v2644
  %v2698 = vunpack.c.h.b16 %v2644
  %v2699 = vunpack.c.l.b16 %v2645
  %v2700 = vunpack.c.h.b16 %v2645
  %v2701 = vunpack.c.l.b16 %v2646
  %v2702 = vunpack.c.h.b16 %v2646
  %v2703 = vunpack.c.l.b16 %v2647
  %v2704 = vunpack.c.h.b16 %v2647
  %v2705 = vunpack.c.l.b16 %v2648
  %v2706 = vunpack.c.h.b16 %v2648
  %v2707 = vunpack.c.l.b16 %v2649
  %v2708 = vunpack.c.h.b16 %v2649
  %v2709 = vunpack.c.l.b16 %v2650
  %v2710 = vunpack.c.h.b16 %v2650
  %v2711 = vunpack.c.l.b16 %v2651
  %v2712 = vunpack.c.h.b16 %v2651
  %v2713 = vunpack.c.l.b16 %v2652
  %v2714 = vunpack.c.h.b16 %v2652
  %v2715 = vunpack.c.l.b16 %v2653
  %v2716 = vunpack.c.h.b16 %v2653
  %v2717 = vunpack.c.l.b16 %v2654
  %v2718 = vunpack.c.h.b16 %v2654
  %v2719 = vunpack.c.l.b16 %v2655
  %v2720 = vunpack.c.h.b16 %v2655
  %v2721 = vunpack.c.l.b16 %v2656
  %v2722 = vunpack.c.h.b16 %v2656
  %v2723 = vunpack.c.l.b16 %v2657
  %v2724 = vunpack.c.h.b16 %v2657
  %v2725 = vunpack.c.l.b16 %v2658
  %v2726 = vunpack.c.h.b16 %v2658
  %v2727 = vunpack.c.l.b16 %v2659
  %v2728 = vunpack.c.h.b16 %v2659
  %v2729 = vunpack.c.l.b16 %v2660
  %v2730 = vunpack.c.h.b16 %v2660
  %v2731 = vunpack.c.l.b16 %v2661
  %v2732 = vunpack.c.h.b16 %v2661
  %v2733 = vunpack.c.l.b16 %v2662
  %v2734 = vunpack.c.h.b16 %v2662
  %v2735 = vunpack.c.l.b16 %v2663
  %v2736 = vunpack.c.h.b16 %v2663
  %v2737 = vunpack.c.l.b16 %v2664
  %v2738 = vunpack.c.h.b16 %v2664
  %v2739 = vunpack.c.l.b16 %v2665
  %v2740 = vpack.c.b16 %v2691, %v2691
  %v2741 = vpack.c.b16 %v2692, %v2692
  %v2742 = vpack.c.b16 %v2693, %v2693
  %v2743 = vpack.c.b16 %v2694, %v2694
  %v2744 = vpack.c.b16 %v2695, %v2695
  %v2745 = vpack.c.b16 %v2696, %v2696
  %v2746 = vpack.c.b16 %v2697, %v2697
  %v2747 = vpack.c.b16 %v2698, %v2698
  %v2748 = vpack.c.b16 %v2699, %v2699
  %v2749 = vpack.c.b16 %v2700, %v2700
  %v2750 = vpack.c.b16 %v2701, %v2701
  %v2751 = vpack.c.b16 %v2702, %v2702
  %v2752 = vpack.c.b16 %v2703, %v2703
  %v2753 = vpack.c.b16 %v2704, %v2704
  %v2754 = vpack.c.b16 %v2705, %v2705
  %v2755 = vpack.c.b16 %v2706, %v2706
  %v2756 = vpack.c.b16 %v2707, %v2707
  %v2757 = vpack.c.b16 %v2708, %v2708
  %v2758 = vpack.c.b16 %v2709, %v2709
  %v2759 = vpack.c.b16 %v2710, %v2710
  %v2760 = vpack.c.b16 %v2711, %v2711
  %v2761 = vpack.c.b16 %v2712, %v2712
  %v2762 = vpack.c.b16 %v2713, %v2713
  %v2763 = vpack.c.b16 %v2714, %v2714
  %v2764 = vpack.c.b16 %v2715, %v2715
  %v2765 = vpack.c.b16 %v2716, %v2716
  %v2766 = vpack.c.b16 %v2717, %v2717
  %v2767 = vpack.c.b16 %v2718, %v2718
  %v2768 = vpack.c.b16 %v2719, %v2719
  %v2769 = vpack.c.b16 %v2720, %v2720
  %v2770 = vpack.c.b16 %v2721, %v2721
  %v2771 = vpack.c.b16 %v2722, %v2722
  %v2772 = vpack.c.b16 %v2723, %v2723
  %v2773 = vpack.c.b16 %v2724, %v2724
  %v2774 = vpack.c.b16 %v2725, %v2725
  %v2775 = vpack.c.b16 %v2726, %v2726
  %v2776 = vpack.c.b16 %v2727, %v2727
  %v2777 = vpack.c.b16 %v2728, %v2728
  %v2778 = vpack.c.b16 %v2729, %v2729
  %v2779 = vpack.c.b16 %v2730, %v2730
  %v2780 = vpack.c.b16 %v2731, %v2731
  %v2781 = vpack.c.b16 %v2732, %v2732
  %v2782 = vpack.c.b16 %v2733, %v2733
  %v2783 = vpack.c.b16 %v2734, %v2734
  %v2784 = vpack.c.b16 %v2735, %v2735
  %v2785 = vpack.c.b16 %v2736, %v2736
  %v2786 = vpack.c.b16 %v2737, %v2737
  %v2787 = vpack.c.b16 %v2738, %v2738
  %v2788 = vpack.c.b16 %v2739, %v2739
  %2838 = vst [vmem:[%s10] sm:$0xf] %v2740
  %2839 = vst [vmem:[%s10 + $0x4] sm:$0xf] %v2741
  %2840 = vst [vmem:[%s10 + $0x8] sm:$0xf] %v2742
  %2841 = vst [vmem:[%s10 + $0xc] sm:$0xf] %v2743
  %2842 = vst [vmem:[%s10 + $0x10] sm:$0xf] %v2744
  %2843 = vst [vmem:[%s10 + $0x14] sm:$0xf] %v2745
  %2844 = vst [vmem:[%s10 + $0x18] sm:$0xf] %v2746
  %2845 = vst [vmem:[%s10 + $0x1c] sm:$0xf] %v2747
  %2846 = vst [vmem:[%s10 + $0x20] sm:$0xf] %v2748
  %2847 = vst [vmem:[%s10 + $0x24] sm:$0xf] %v2749
  %2848 = vst [vmem:[%s10 + $0x28] sm:$0xf] %v2750
  %2849 = vst [vmem:[%s10 + $0x2c] sm:$0xf] %v2751
  %2850 = vst [vmem:[%s10 + $0x30] sm:$0xf] %v2752
  %2851 = vst [vmem:[%s10 + $0x34] sm:$0xf] %v2753
  %2852 = vst [vmem:[%s10 + $0x38] sm:$0xf] %v2754
  %2853 = vst [vmem:[%s10 + $0x3c] sm:$0xf] %v2755
  %2854 = vst [vmem:[%s10 + $0x40] sm:$0xf] %v2756
  %2855 = vst [vmem:[%s10 + $0x44] sm:$0xf] %v2757
  %2856 = vst [vmem:[%s10 + $0x48] sm:$0xf] %v2758
  %2857 = vst [vmem:[%s10 + $0x4c] sm:$0xf] %v2759
  %2858 = vst [vmem:[%s10 + $0x50] sm:$0xf] %v2760
  %2859 = vst [vmem:[%s10 + $0x54] sm:$0xf] %v2761
  %2860 = vst [vmem:[%s10 + $0x58] sm:$0xf] %v2762
  %2861 = vst [vmem:[%s10 + $0x5c] sm:$0xf] %v2763
  %2862 = vst [vmem:[%s10 + $0x60] sm:$0xf] %v2764
  %2863 = vst [vmem:[%s10 + $0x64] sm:$0xf] %v2765
  %2864 = vst [vmem:[%s10 + $0x68] sm:$0xf] %v2766
  %2865 = vst [vmem:[%s10 + $0x6c] sm:$0xf] %v2767
  %2866 = vst [vmem:[%s10 + $0x70] sm:$0xf] %v2768
  %2867 = vst [vmem:[%s10 + $0x74] sm:$0xf] %v2769
  %2868 = vst [vmem:[%s10 + $0x78] sm:$0xf] %v2770
  %2869 = vst [vmem:[%s10 + $0x7c] sm:$0xf] %v2771
  %2870 = vst [vmem:[%s10 + $0x80] sm:$0xf] %v2772
  %2871 = vst [vmem:[%s10 + $0x84] sm:$0xf] %v2773
  %2872 = vst [vmem:[%s10 + $0x88] sm:$0xf] %v2774
  %2873 = vst [vmem:[%s10 + $0x8c] sm:$0xf] %v2775
  %2874 = vst [vmem:[%s10 + $0x90] sm:$0xf] %v2776
  %2875 = vst [vmem:[%s10 + $0x94] sm:$0xf] %v2777
  %2876 = vst [vmem:[%s10 + $0x98] sm:$0xf] %v2778
  %2877 = vst [vmem:[%s10 + $0x9c] sm:$0xf] %v2779
  %2878 = vst [vmem:[%s10 + $0xa0] sm:$0xf] %v2780
  %2879 = vst [vmem:[%s10 + $0xa4] sm:$0xf] %v2781
  %2880 = vst [vmem:[%s10 + $0xa8] sm:$0xf] %v2782
  %2881 = vst [vmem:[%s10 + $0xac] sm:$0xf] %v2783
  %2882 = vst [vmem:[%s10 + $0xb0] sm:$0xf] %v2784
  %2883 = vst [vmem:[%s10 + $0xb4] sm:$0xf] %v2785
  %2884 = vst [vmem:[%s10 + $0xb8] sm:$0xf] %v2786
  %2885 = vst [vmem:[%s10 + $0xbc] sm:$0xf] %v2787
  %2886 = vst [vmem:[%s10 + $0xc0] sm:$0xf] %v2788
  %v2887 = vld [vmem:[%s3] sm:$0xff]
  %v2888 = vld [vmem:[%s3 + $0x8] sm:$0xff]
  %v2889 = vld [vmem:[%s3 + $0x10] sm:$0xff]
  %v2890 = vld [vmem:[%s3 + $0x18] sm:$0xff]
  %v2891 = vld [vmem:[%s3 + $0x20] sm:$0xff]
  %v2892 = vld [vmem:[%s3 + $0x28] sm:$0xff]
  %v2893 = vld [vmem:[%s3 + $0x30] sm:$0xff]
  %v2894 = vld [vmem:[%s3 + $0x38] sm:$0xff]
  %v2895 = vld [vmem:[%s3 + $0x40] sm:$0xff]
  %v2896 = vld [vmem:[%s3 + $0x48] sm:$0xff]
  %v2897 = vld [vmem:[%s3 + $0x50] sm:$0xff]
  %v2898 = vld [vmem:[%s3 + $0x58] sm:$0xff]
  %v2899 = vld [vmem:[%s3 + $0x60] sm:$0xff]
  %v2900 = vld [vmem:[%s3 + $0x68] sm:$0xff]
  %v2901 = vld [vmem:[%s3 + $0x70] sm:$0xff]
  %v2902 = vld [vmem:[%s3 + $0x78] sm:$0xff]
  %v2903 = vld [vmem:[%s3 + $0x80] sm:$0xff]
  %v2904 = vld [vmem:[%s3 + $0x88] sm:$0xff]
  %v2905 = vld [vmem:[%s3 + $0x90] sm:$0xff]
  %v2906 = vld [vmem:[%s3 + $0x98] sm:$0xff]
  %v2907 = vld [vmem:[%s3 + $0xa0] sm:$0xff]
  %v2908 = vld [vmem:[%s3 + $0xa8] sm:$0xff]
  %v2909 = vld [vmem:[%s3 + $0xb0] sm:$0xff]
  %v2910 = vld [vmem:[%s3 + $0xb8] sm:$0xff]
  %v2911 = vld [vmem:[%s3 + $0xc0] sm:$0xff]
  %v2912 = vld [vmem:[%s3 + $0xc8] sm:$0xff]
  %v2913 = vld [vmem:[%s3 + $0xd0] sm:$0xff]
  %v2914 = vld [vmem:[%s3 + $0xd8] sm:$0xff]
  %v2915 = vld [vmem:[%s3 + $0xe0] sm:$0xff]
  %v2916 = vld [vmem:[%s3 + $0xe8] sm:$0xff]
  %v2917 = vld [vmem:[%s3 + $0xf0] sm:$0xff]
  %v2918 = vld [vmem:[%s3 + $0xf8] sm:$0xff]
  %v2919 = vld [vmem:[%s3 + $0x100] sm:$0xff]
  %v2920 = vld [vmem:[%s3 + $0x108] sm:$0xff]
  %v2921 = vld [vmem:[%s3 + $0x110] sm:$0xff]
  %v2922 = vld [vmem:[%s3 + $0x118] sm:$0xff]
  %v2923 = vld [vmem:[%s3 + $0x120] sm:$0xff]
  %v2924 = vld [vmem:[%s3 + $0x128] sm:$0xff]
  %v2925 = vld [vmem:[%s3 + $0x130] sm:$0xff]
  %v2926 = vld [vmem:[%s3 + $0x138] sm:$0xff]
  %v2927 = vld [vmem:[%s3 + $0x140] sm:$0xff]
  %v2928 = vld [vmem:[%s3 + $0x148] sm:$0xff]
  %v2929 = vld [vmem:[%s3 + $0x150] sm:$0xff]
  %v2930 = vld [vmem:[%s3 + $0x158] sm:$0xff]
  %v2931 = vld [vmem:[%s3 + $0x160] sm:$0xff]
  %v2932 = vld [vmem:[%s3 + $0x168] sm:$0xff]
  %v2933 = vld [vmem:[%s3 + $0x170] sm:$0xff]
  %v2934 = vld [vmem:[%s3 + $0x178] sm:$0xff]
  %v2935 = vld [vmem:[%s3 + $0x180] sm:$0xff]
  %v2936 = vld [vmem:[%s7] sm:$0xf]
  %v2937 = vld [vmem:[%s7 + $0x4] sm:$0xf]
  %v2938 = vld [vmem:[%s7 + $0x8] sm:$0xf]
  %v2939 = vld [vmem:[%s7 + $0xc] sm:$0xf]
  %v2940 = vld [vmem:[%s7 + $0x10] sm:$0xf]
  %v2941 = vld [vmem:[%s7 + $0x14] sm:$0xf]
  %v2942 = vld [vmem:[%s7 + $0x18] sm:$0xf]
  %v2943 = vld [vmem:[%s7 + $0x1c] sm:$0xf]
  %v2944 = vld [vmem:[%s7 + $0x20] sm:$0xf]
  %v2945 = vld [vmem:[%s7 + $0x24] sm:$0xf]
  %v2946 = vld [vmem:[%s7 + $0x28] sm:$0xf]
  %v2947 = vld [vmem:[%s7 + $0x2c] sm:$0xf]
  %v2948 = vld [vmem:[%s7 + $0x30] sm:$0xf]
  %v2949 = vld [vmem:[%s7 + $0x34] sm:$0xf]
  %v2950 = vld [vmem:[%s7 + $0x38] sm:$0xf]
  %v2951 = vld [vmem:[%s7 + $0x3c] sm:$0xf]
  %v2952 = vld [vmem:[%s7 + $0x40] sm:$0xf]
  %v2953 = vld [vmem:[%s7 + $0x44] sm:$0xf]
  %v2954 = vld [vmem:[%s7 + $0x48] sm:$0xf]
  %v2955 = vld [vmem:[%s7 + $0x4c] sm:$0xf]
  %v2956 = vld [vmem:[%s7 + $0x50] sm:$0xf]
  %v2957 = vld [vmem:[%s7 + $0x54] sm:$0xf]
  %v2958 = vld [vmem:[%s7 + $0x58] sm:$0xf]
  %v2959 = vld [vmem:[%s7 + $0x5c] sm:$0xf]
  %v2960 = vld [vmem:[%s7 + $0x60] sm:$0xf]
  %v2961 = vld [vmem:[%s7 + $0x64] sm:$0xf]
  %v2962 = vld [vmem:[%s7 + $0x68] sm:$0xf]
  %v2963 = vld [vmem:[%s7 + $0x6c] sm:$0xf]
  %v2964 = vld [vmem:[%s7 + $0x70] sm:$0xf]
  %v2965 = vld [vmem:[%s7 + $0x74] sm:$0xf]
  %v2966 = vld [vmem:[%s7 + $0x78] sm:$0xf]
  %v2967 = vld [vmem:[%s7 + $0x7c] sm:$0xf]
  %v3017 = vunpack.c.l.b16 %v2887
  %v3018 = vunpack.c.h.b16 %v2887
  %v3019 = vunpack.c.l.b16 %v2888
  %v3020 = vunpack.c.h.b16 %v2888
  %v3021 = vunpack.c.l.b16 %v2889
  %v3022 = vunpack.c.h.b16 %v2889
  %v3023 = vunpack.c.l.b16 %v2890
  %v3024 = vunpack.c.h.b16 %v2890
  %v3025 = vunpack.c.l.b16 %v2891
  %v3026 = vunpack.c.h.b16 %v2891
  %v3027 = vunpack.c.l.b16 %v2892
  %v3028 = vunpack.c.h.b16 %v2892
  %v3029 = vunpack.c.l.b16 %v2893
  %v3030 = vunpack.c.h.b16 %v2893
  %v3031 = vunpack.c.l.b16 %v2894
  %v3032 = vunpack.c.h.b16 %v2894
  %v3033 = vunpack.c.l.b16 %v2895
  %v3034 = vunpack.c.h.b16 %v2895
  %v3035 = vunpack.c.l.b16 %v2896
  %v3036 = vunpack.c.h.b16 %v2896
  %v3037 = vunpack.c.l.b16 %v2897
  %v3038 = vunpack.c.h.b16 %v2897
  %v3039 = vunpack.c.l.b16 %v2898
  %v3040 = vunpack.c.h.b16 %v2898
  %v3041 = vunpack.c.l.b16 %v2899
  %v3042 = vunpack.c.h.b16 %v2899
  %v3043 = vunpack.c.l.b16 %v2900
  %v3044 = vunpack.c.h.b16 %v2900
  %v3045 = vunpack.c.l.b16 %v2901
  %v3046 = vunpack.c.h.b16 %v2901
  %v3047 = vunpack.c.l.b16 %v2902
  %v3048 = vunpack.c.h.b16 %v2902
  %v3049 = vunpack.c.l.b16 %v2903
  %v3050 = vunpack.c.h.b16 %v2903
  %v3051 = vunpack.c.l.b16 %v2904
  %v3052 = vunpack.c.h.b16 %v2904
  %v3053 = vunpack.c.l.b16 %v2905
  %v3054 = vunpack.c.h.b16 %v2905
  %v3055 = vunpack.c.l.b16 %v2906
  %v3056 = vunpack.c.h.b16 %v2906
  %v3057 = vunpack.c.l.b16 %v2907
  %v3058 = vunpack.c.h.b16 %v2907
  %v3059 = vunpack.c.l.b16 %v2908
  %v3060 = vunpack.c.h.b16 %v2908
  %v3061 = vunpack.c.l.b16 %v2909
  %v3062 = vunpack.c.h.b16 %v2909
  %v3063 = vunpack.c.l.b16 %v2910
  %v3064 = vunpack.c.h.b16 %v2910
  %v3065 = vunpack.c.l.b16 %v2911
  %v3066 = vunpack.c.h.b16 %v2911
  %v3067 = vunpack.c.l.b16 %v2912
  %v3068 = vunpack.c.h.b16 %v2912
  %v3069 = vunpack.c.l.b16 %v2913
  %v3070 = vunpack.c.h.b16 %v2913
  %v3071 = vunpack.c.l.b16 %v2914
  %v3072 = vunpack.c.h.b16 %v2914
  %v3073 = vunpack.c.l.b16 %v2915
  %v3074 = vunpack.c.h.b16 %v2915
  %v3075 = vunpack.c.l.b16 %v2916
  %v3076 = vunpack.c.h.b16 %v2916
  %v3077 = vunpack.c.l.b16 %v2917
  %v3078 = vunpack.c.h.b16 %v2917
  %v3079 = vunpack.c.l.b16 %v2918
  %v3080 = vunpack.c.h.b16 %v2918
  %v3081 = vunpack.c.l.b16 %v2919
  %v3082 = vunpack.c.h.b16 %v2919
  %v3083 = vunpack.c.l.b16 %v2920
  %v3084 = vunpack.c.h.b16 %v2920
  %v3085 = vunpack.c.l.b16 %v2921
  %v3086 = vunpack.c.h.b16 %v2921
  %v3087 = vunpack.c.l.b16 %v2922
  %v3088 = vunpack.c.h.b16 %v2922
  %v3089 = vunpack.c.l.b16 %v2923
  %v3090 = vunpack.c.h.b16 %v2923
  %v3091 = vunpack.c.l.b16 %v2924
  %v3092 = vunpack.c.h.b16 %v2924
  %v3093 = vunpack.c.l.b16 %v2925
  %v3094 = vunpack.c.h.b16 %v2925
  %v3095 = vunpack.c.l.b16 %v2926
  %v3096 = vunpack.c.h.b16 %v2926
  %v3097 = vunpack.c.l.b16 %v2927
  %v3098 = vunpack.c.h.b16 %v2927
  %v3099 = vunpack.c.l.b16 %v2928
  %v3100 = vunpack.c.h.b16 %v2928
  %v3101 = vunpack.c.l.b16 %v2929
  %v3102 = vunpack.c.h.b16 %v2929
  %v3103 = vunpack.c.l.b16 %v2930
  %v3104 = vunpack.c.h.b16 %v2930
  %v3105 = vunpack.c.l.b16 %v2931
  %v3106 = vunpack.c.h.b16 %v2931
  %v3107 = vunpack.c.l.b16 %v2932
  %v3108 = vunpack.c.h.b16 %v2932
  %v3109 = vunpack.c.l.b16 %v2933
  %v3110 = vunpack.c.h.b16 %v2933
  %v3111 = vunpack.c.l.b16 %v2934
  %v3112 = vunpack.c.h.b16 %v2934
  %v3113 = vunpack.c.l.b16 %v2935
  %v3114 = vunpack.c.h.b16 %v2935
  %v3115 = vpack.c.b16 %v3019, %v3017
  %v3116 = vpack.c.b16 %v3020, %v3018
  %v3117 = vpack.c.b16 %v3023, %v3021
  %v3118 = vpack.c.b16 %v3024, %v3022
  %v3119 = vpack.c.b16 %v3027, %v3025
  %v3120 = vpack.c.b16 %v3028, %v3026
  %v3121 = vpack.c.b16 %v3031, %v3029
  %v3122 = vpack.c.b16 %v3032, %v3030
  %v3123 = vpack.c.b16 %v3035, %v3033
  %v3124 = vpack.c.b16 %v3036, %v3034
  %v3125 = vpack.c.b16 %v3039, %v3037
  %v3126 = vpack.c.b16 %v3040, %v3038
  %v3127 = vpack.c.b16 %v3043, %v3041
  %v3128 = vpack.c.b16 %v3044, %v3042
  %v3129 = vpack.c.b16 %v3047, %v3045
  %v3130 = vpack.c.b16 %v3048, %v3046
  %v3131 = vpack.c.b16 %v3051, %v3049
  %v3132 = vpack.c.b16 %v3052, %v3050
  %v3133 = vpack.c.b16 %v3055, %v3053
  %v3134 = vpack.c.b16 %v3056, %v3054
  %v3135 = vpack.c.b16 %v3059, %v3057
  %v3136 = vpack.c.b16 %v3060, %v3058
  %v3137 = vpack.c.b16 %v3063, %v3061
  %v3138 = vpack.c.b16 %v3064, %v3062
  %v3139 = vpack.c.b16 %v3067, %v3065
  %v3140 = vpack.c.b16 %v3068, %v3066
  %v3141 = vpack.c.b16 %v3071, %v3069
  %v3142 = vpack.c.b16 %v3072, %v3070
  %v3143 = vpack.c.b16 %v3075, %v3073
  %v3144 = vpack.c.b16 %v3076, %v3074
  %v3145 = vpack.c.b16 %v3079, %v3077
  %v3146 = vpack.c.b16 %v3080, %v3078
  %v3147 = vpack.c.b16 %v3083, %v3081
  %v3148 = vpack.c.b16 %v3084, %v3082
  %v3149 = vpack.c.b16 %v3087, %v3085
  %v3150 = vpack.c.b16 %v3088, %v3086
  %v3151 = vpack.c.b16 %v3091, %v3089
  %v3152 = vpack.c.b16 %v3092, %v3090
  %v3153 = vpack.c.b16 %v3095, %v3093
  %v3154 = vpack.c.b16 %v3096, %v3094
  %v3155 = vpack.c.b16 %v3099, %v3097
  %v3156 = vpack.c.b16 %v3100, %v3098
  %v3157 = vpack.c.b16 %v3103, %v3101
  %v3158 = vpack.c.b16 %v3104, %v3102
  %v3159 = vpack.c.b16 %v3107, %v3105
  %v3160 = vpack.c.b16 %v3108, %v3106
  %v3161 = vpack.c.b16 %v3111, %v3109
  %v3162 = vpack.c.b16 %v3112, %v3110
  %v3163 = vpack.c.b16 %v3113, %v3113
  %v3164 = vpack.c.b16 %v3114, %v3114
  %v3247 = vunpack.c.l.b16 %v2936
  %v3248 = vunpack.c.l.b16 %v2937
  %v3249 = vunpack.c.l.b16 %v2938
  %v3250 = vunpack.c.l.b16 %v2939
  %v3251 = vunpack.c.l.b16 %v2940
  %v3252 = vunpack.c.l.b16 %v2941
  %v3253 = vunpack.c.l.b16 %v2942
  %v3254 = vunpack.c.l.b16 %v2943
  %v3255 = vunpack.c.l.b16 %v2944
  %v3256 = vunpack.c.l.b16 %v2945
  %v3257 = vunpack.c.l.b16 %v2946
  %v3258 = vunpack.c.l.b16 %v2947
  %v3259 = vunpack.c.l.b16 %v2948
  %v3260 = vunpack.c.l.b16 %v2949
  %v3261 = vunpack.c.l.b16 %v2950
  %v3262 = vunpack.c.l.b16 %v2951
  %v3263 = vunpack.c.l.b16 %v2952
  %v3264 = vunpack.c.l.b16 %v2953
  %v3265 = vunpack.c.l.b16 %v2954
  %v3266 = vunpack.c.l.b16 %v2955
  %v3267 = vunpack.c.l.b16 %v2956
  %v3268 = vunpack.c.l.b16 %v2957
  %v3269 = vunpack.c.l.b16 %v2958
  %v3270 = vunpack.c.l.b16 %v2959
  %v3271 = vunpack.c.l.b16 %v2960
  %v3272 = vunpack.c.l.b16 %v2961
  %v3273 = vunpack.c.l.b16 %v2962
  %v3274 = vunpack.c.l.b16 %v2963
  %v3275 = vunpack.c.l.b16 %v2964
  %v3276 = vunpack.c.l.b16 %v2965
  %v3277 = vunpack.c.l.b16 %v2966
  %v3278 = vunpack.c.l.b16 %v2967
  %v3279 = vpack.c.b16 %v3248, %v3247
  %v3280 = vpack.c.b16 %v3250, %v3249
  %v3281 = vpack.c.b16 %v3252, %v3251
  %v3282 = vpack.c.b16 %v3254, %v3253
  %v3283 = vpack.c.b16 %v3256, %v3255
  %v3284 = vpack.c.b16 %v3258, %v3257
  %v3285 = vpack.c.b16 %v3260, %v3259
  %v3286 = vpack.c.b16 %v3262, %v3261
  %v3287 = vpack.c.b16 %v3264, %v3263
  %v3288 = vpack.c.b16 %v3266, %v3265
  %v3289 = vpack.c.b16 %v3268, %v3267
  %v3290 = vpack.c.b16 %v3270, %v3269
  %v3291 = vpack.c.b16 %v3272, %v3271
  %v3292 = vpack.c.b16 %v3274, %v3273
  %v3293 = vpack.c.b16 %v3276, %v3275
  %v3294 = vpack.c.b16 %v3278, %v3277
  %3311 = vmatprep.subr.bf16.mxu0 0
  %3312 = vmatpush1.bf16.msra.mxu0 %v3279
  %3313 = vmatprep.subr.bf16.mxu0 0
  %3314 = vmatpush1.bf16.msra.mxu0 %v3280
  %3315 = vmatprep.subr.bf16.mxu0 0
  %3316 = vmatpush1.bf16.msra.mxu0 %v3281
  %3317 = vmatprep.subr.bf16.mxu0 0
  %3318 = vmatpush1.bf16.msra.mxu0 %v3282
  %3319 = vmatprep.subr.bf16.mxu0 0
  %3320 = vmatpush1.bf16.msra.mxu0 %v3283
  %3321 = vmatprep.subr.bf16.mxu0 0
  %3322 = vmatpush1.bf16.msra.mxu0 %v3284
  %3323 = vmatprep.subr.bf16.mxu0 0
  %3324 = vmatpush1.bf16.msra.mxu0 %v3285
  %3325 = vmatprep.subr.bf16.mxu0 0
  %3326 = vmatpush1.bf16.msra.mxu0 %v3286
  %3327 = vmatprep.subr.bf16.mxu0 0
  %3328 = vmatpush1.bf16.msra.mxu0 %v3287
  %3329 = vmatprep.subr.bf16.mxu0 0
  %3330 = vmatpush1.bf16.msra.mxu0 %v3288
  %3331 = vmatprep.subr.bf16.mxu0 0
  %3332 = vmatpush1.bf16.msra.mxu0 %v3289
  %3333 = vmatprep.subr.bf16.mxu0 0
  %3334 = vmatpush1.bf16.msra.mxu0 %v3290
  %3335 = vmatprep.subr.bf16.mxu0 0
  %3336 = vmatpush1.bf16.msra.mxu0 %v3291
  %3337 = vmatprep.subr.bf16.mxu0 0
  %3338 = vmatpush1.bf16.msra.mxu0 %v3292
  %3339 = vmatprep.subr.bf16.mxu0 0
  %3340 = vmatpush1.bf16.msra.mxu0 %v3293
  %3341 = vmatprep.subr.bf16.mxu0 0
  %3342 = vmatpush1.bf16.msra.mxu0 %v3294
  %3343 = vmatprep.mubr.bf16.mxu0 %v3116
  %3344 = vmatmul.mubr.bf16.gmra.mrb[0].mxu0 %v3115
  %v3345 = vpop.f32.mrb[0].mxu0
  %v3346 = vadd.f32 0.0, %v3345
  %v3347 = vpop.f32.mrb[0].mxu0
  %v3348 = vpop.f32.mrb[0].mxu0
  %v3349 = vadd.f32 0.0, %v3348
  %v3350 = vpop.f32.mrb[0].mxu0
  %3351 = vmatprep.mubr.bf16.mxu0 %v3118
  %3352 = vmatmul.mubr.bf16.gmra.mrb[0].mxu0 %v3117
  %v3353 = vpop.f32.mrb[0].mxu0
  %v3354 = vadd.f32 0.0, %v3353
  %v3355 = vpop.f32.mrb[0].mxu0
  %v3356 = vpop.f32.mrb[0].mxu0
  %v3357 = vadd.f32 0.0, %v3356
  %v3358 = vpop.f32.mrb[0].mxu0
  %3359 = vmatprep.mubr.bf16.mxu0 %v3120
  %3360 = vmatmul.mubr.bf16.gmra.mrb[0].mxu0 %v3119
  %v3361 = vpop.f32.mrb[0].mxu0
  %v3362 = vadd.f32 0.0, %v3361
  %v3363 = vpop.f32.mrb[0].mxu0
  %v3364 = vpop.f32.mrb[0].mxu0
  %v3365 = vadd.f32 0.0, %v3364
  %v3366 = vpop.f32.mrb[0].mxu0
  %3367 = vmatprep.mubr.bf16.mxu0 %v3122
  %3368 = vmatmul.mubr.bf16.gmra.mrb[0].mxu0 %v3121
  %v3369 = vpop.f32.mrb[0].mxu0
  %v3370 = vadd.f32 0.0, %v3369
  %v3371 = vpop.f32.mrb[0].mxu0
  %v3372 = vpop.f32.mrb[0].mxu0
  %v3373 = vadd.f32 0.0, %v3372
  %v3374 = vpop.f32.mrb[0].mxu0
  %3375 = vmatprep.mubr.bf16.mxu0 %v3124
  %3376 = vmatmul.mubr.bf16.gmra.mrb[0].mxu0 %v3123
  %v3377 = vpop.f32.mrb[0].mxu0
  %v3378 = vadd.f32 0.0, %v3377
  %v3379 = vpop.f32.mrb[0].mxu0
  %v3380 = vpop.f32.mrb[0].mxu0
  %v3381 = vadd.f32 0.0, %v3380
  %v3382 = vpop.f32.mrb[0].mxu0
  %3383 = vmatprep.mubr.bf16.mxu0 %v3126
  %3384 = vmatmul.mubr.bf16.gmra.mrb[0].mxu0 %v3125
  %v3385 = vpop.f32.mrb[0].mxu0
  %v3386 = vadd.f32 0.0, %v3385
  %v3387 = vpop.f32.mrb[0].mxu0
  %v3388 = vpop.f32.mrb[0].mxu0
  %v3389 = vadd.f32 0.0, %v3388
  %v3390 = vpop.f32.mrb[0].mxu0
  %3391 = vmatprep.mubr.bf16.mxu0 %v3128
  %3392 = vmatmul.mubr.bf16.gmra.mrb[0].mxu0 %v3127
  %v3393 = vpop.f32.mrb[0].mxu0
  %v3394 = vadd.f32 0.0, %v3393
  %v3395 = vpop.f32.mrb[0].mxu0
  %v3396 = vpop.f32.mrb[0].mxu0
  %v3397 = vadd.f32 0.0, %v3396
  %v3398 = vpop.f32.mrb[0].mxu0
  %3399 = vmatprep.mubr.bf16.mxu0 %v3130
  %3400 = vmatmul.mubr.bf16.gmra.mrb[0].mxu0 %v3129
  %v3401 = vpop.f32.mrb[0].mxu0
  %v3402 = vadd.f32 0.0, %v3401
  %v3403 = vpop.f32.mrb[0].mxu0
  %v3404 = vpop.f32.mrb[0].mxu0
  %v3405 = vadd.f32 0.0, %v3404
  %v3406 = vpop.f32.mrb[0].mxu0
  %3407 = vmatprep.mubr.bf16.mxu0 %v3132
  %3408 = vmatmul.mubr.bf16.gmra.mrb[0].mxu0 %v3131
  %v3409 = vpop.f32.mrb[0].mxu0
  %v3410 = vadd.f32 0.0, %v3409
  %v3411 = vpop.f32.mrb[0].mxu0
  %v3412 = vpop.f32.mrb[0].mxu0
  %v3413 = vadd.f32 0.0, %v3412
  %v3414 = vpop.f32.mrb[0].mxu0
  %3415 = vmatprep.mubr.bf16.mxu0 %v3134
  %3416 = vmatmul.mubr.bf16.gmra.mrb[0].mxu0 %v3133
  %v3417 = vpop.f32.mrb[0].mxu0
  %v3418 = vadd.f32 0.0, %v3417
  %v3419 = vpop.f32.mrb[0].mxu0
  %v3420 = vpop.f32.mrb[0].mxu0
  %v3421 = vadd.f32 0.0, %v3420
  %v3422 = vpop.f32.mrb[0].mxu0
  %3423 = vmatprep.mubr.bf16.mxu0 %v3136
  %3424 = vmatmul.mubr.bf16.gmra.mrb[0].mxu0 %v3135
  %v3425 = vpop.f32.mrb[0].mxu0
  %v3426 = vadd.f32 0.0, %v3425
  %v3427 = vpop.f32.mrb[0].mxu0
  %v3428 = vpop.f32.mrb[0].mxu0
  %v3429 = vadd.f32 0.0, %v3428
  %v3430 = vpop.f32.mrb[0].mxu0
  %3431 = vmatprep.mubr.bf16.mxu0 %v3138
  %3432 = vmatmul.mubr.bf16.gmra.mrb[0].mxu0 %v3137
  %v3433 = vpop.f32.mrb[0].mxu0
  %v3434 = vadd.f32 0.0, %v3433
  %v3435 = vpop.f32.mrb[0].mxu0
  %v3436 = vpop.f32.mrb[0].mxu0
  %v3437 = vadd.f32 0.0, %v3436
  %v3438 = vpop.f32.mrb[0].mxu0
  %3439 = vmatprep.mubr.bf16.mxu0 %v3140
  %3440 = vmatmul.mubr.bf16.gmra.mrb[0].mxu0 %v3139
  %v3441 = vpop.f32.mrb[0].mxu0
  %v3442 = vadd.f32 0.0, %v3441
  %v3443 = vpop.f32.mrb[0].mxu0
  %v3444 = vpop.f32.mrb[0].mxu0
  %v3445 = vadd.f32 0.0, %v3444
  %v3446 = vpop.f32.mrb[0].mxu0
  %3447 = vmatprep.mubr.bf16.mxu0 %v3142
  %3448 = vmatmul.mubr.bf16.gmra.mrb[0].mxu0 %v3141
  %v3449 = vpop.f32.mrb[0].mxu0
  %v3450 = vadd.f32 0.0, %v3449
  %v3451 = vpop.f32.mrb[0].mxu0
  %v3452 = vpop.f32.mrb[0].mxu0
  %v3453 = vadd.f32 0.0, %v3452
  %v3454 = vpop.f32.mrb[0].mxu0
  %3455 = vmatprep.mubr.bf16.mxu0 %v3144
  %3456 = vmatmul.mubr.bf16.gmra.mrb[0].mxu0 %v3143
  %v3457 = vpop.f32.mrb[0].mxu0
  %v3458 = vadd.f32 0.0, %v3457
  %v3459 = vpop.f32.mrb[0].mxu0
  %v3460 = vpop.f32.mrb[0].mxu0
  %v3461 = vadd.f32 0.0, %v3460
  %v3462 = vpop.f32.mrb[0].mxu0
  %3463 = vmatprep.mubr.bf16.mxu0 %v3146
  %3464 = vmatmul.mubr.bf16.gmra.mrb[0].mxu0 %v3145
  %v3465 = vpop.f32.mrb[0].mxu0
  %v3466 = vadd.f32 0.0, %v3465
  %v3467 = vpop.f32.mrb[0].mxu0
  %v3468 = vpop.f32.mrb[0].mxu0
  %v3469 = vadd.f32 0.0, %v3468
  %v3470 = vpop.f32.mrb[0].mxu0
  %3471 = vmatprep.mubr.bf16.mxu0 %v3148
  %3472 = vmatmul.mubr.bf16.gmra.mrb[0].mxu0 %v3147
  %v3473 = vpop.f32.mrb[0].mxu0
  %v3474 = vadd.f32 0.0, %v3473
  %v3475 = vpop.f32.mrb[0].mxu0
  %v3476 = vpop.f32.mrb[0].mxu0
  %v3477 = vadd.f32 0.0, %v3476
  %v3478 = vpop.f32.mrb[0].mxu0
  %3479 = vmatprep.mubr.bf16.mxu0 %v3150
  %3480 = vmatmul.mubr.bf16.gmra.mrb[0].mxu0 %v3149
  %v3481 = vpop.f32.mrb[0].mxu0
  %v3482 = vadd.f32 0.0, %v3481
  %v3483 = vpop.f32.mrb[0].mxu0
  %v3484 = vpop.f32.mrb[0].mxu0
  %v3485 = vadd.f32 0.0, %v3484
  %v3486 = vpop.f32.mrb[0].mxu0
  %3487 = vmatprep.mubr.bf16.mxu0 %v3152
  %3488 = vmatmul.mubr.bf16.gmra.mrb[0].mxu0 %v3151
  %v3489 = vpop.f32.mrb[0].mxu0
  %v3490 = vadd.f32 0.0, %v3489
  %v3491 = vpop.f32.mrb[0].mxu0
  %v3492 = vpop.f32.mrb[0].mxu0
  %v3493 = vadd.f32 0.0, %v3492
  %v3494 = vpop.f32.mrb[0].mxu0
  %3495 = vmatprep.mubr.bf16.mxu0 %v3154
  %3496 = vmatmul.mubr.bf16.gmra.mrb[0].mxu0 %v3153
  %v3497 = vpop.f32.mrb[0].mxu0
  %v3498 = vadd.f32 0.0, %v3497
  %v3499 = vpop.f32.mrb[0].mxu0
  %v3500 = vpop.f32.mrb[0].mxu0
  %v3501 = vadd.f32 0.0, %v3500
  %v3502 = vpop.f32.mrb[0].mxu0
  %3503 = vmatprep.mubr.bf16.mxu0 %v3156
  %3504 = vmatmul.mubr.bf16.gmra.mrb[0].mxu0 %v3155
  %v3505 = vpop.f32.mrb[0].mxu0
  %v3506 = vadd.f32 0.0, %v3505
  %v3507 = vpop.f32.mrb[0].mxu0
  %v3508 = vpop.f32.mrb[0].mxu0
  %v3509 = vadd.f32 0.0, %v3508
  %v3510 = vpop.f32.mrb[0].mxu0
  %3511 = vmatprep.mubr.bf16.mxu0 %v3158
  %3512 = vmatmul.mubr.bf16.gmra.mrb[0].mxu0 %v3157
  %v3513 = vpop.f32.mrb[0].mxu0
  %v3514 = vadd.f32 0.0, %v3513
  %v3515 = vpop.f32.mrb[0].mxu0
  %v3516 = vpop.f32.mrb[0].mxu0
  %v3517 = vadd.f32 0.0, %v3516
  %v3518 = vpop.f32.mrb[0].mxu0
  %3519 = vmatprep.mubr.bf16.mxu0 %v3160
  %3520 = vmatmul.mubr.bf16.gmra.mrb[0].mxu0 %v3159
  %v3521 = vpop.f32.mrb[0].mxu0
  %v3522 = vadd.f32 0.0, %v3521
  %v3523 = vpop.f32.mrb[0].mxu0
  %v3524 = vpop.f32.mrb[0].mxu0
  %v3525 = vadd.f32 0.0, %v3524
  %v3526 = vpop.f32.mrb[0].mxu0
  %3527 = vmatprep.mubr.bf16.mxu0 %v3162
  %3528 = vmatmul.mubr.bf16.gmra.mrb[0].mxu0 %v3161
  %v3529 = vpop.f32.mrb[0].mxu0
  %v3530 = vadd.f32 0.0, %v3529
  %v3531 = vpop.f32.mrb[0].mxu0
  %v3532 = vpop.f32.mrb[0].mxu0
  %v3533 = vadd.f32 0.0, %v3532
  %v3534 = vpop.f32.mrb[0].mxu0
  %3535 = vmatprep.mubr.bf16.mxu0 %v3164
  %3536 = vmatmul.mubr.bf16.gmra.mrb[0].mxu0 %v3163
  %v3537 = vpop.f32.mrb[0].mxu0
  %v3538 = vadd.f32 0.0, %v3537
  %v3539 = vpop.f32.mrb[0].mxu0
  %v3540 = vpop.f32.mrb[0].mxu0
  %v3541 = vpop.f32.mrb[0].mxu0
  %3542 = vdwg.mxu0
  %v3543 = vtanh.pop %v3346
  %v3544 = vtanh.pop %v3349
  %v3545 = vtanh.pop %v3354
  %v3546 = vtanh.pop %v3357
  %v3547 = vtanh.pop %v3362
  %v3548 = vtanh.pop %v3365
  %v3549 = vtanh.pop %v3370
  %v3550 = vtanh.pop %v3373
  %v3551 = vtanh.pop %v3378
  %v3552 = vtanh.pop %v3381
  %v3553 = vtanh.pop %v3386
  %v3554 = vtanh.pop %v3389
  %v3555 = vtanh.pop %v3394
  %v3556 = vtanh.pop %v3397
  %v3557 = vtanh.pop %v3402
  %v3558 = vtanh.pop %v3405
  %v3559 = vtanh.pop %v3410
  %v3560 = vtanh.pop %v3413
  %v3561 = vtanh.pop %v3418
  %v3562 = vtanh.pop %v3421
  %v3563 = vtanh.pop %v3426
  %v3564 = vtanh.pop %v3429
  %v3565 = vtanh.pop %v3434
  %v3566 = vtanh.pop %v3437
  %v3567 = vtanh.pop %v3442
  %v3568 = vtanh.pop %v3445
  %v3569 = vtanh.pop %v3450
  %v3570 = vtanh.pop %v3453
  %v3571 = vtanh.pop %v3458
  %v3572 = vtanh.pop %v3461
  %v3573 = vtanh.pop %v3466
  %v3574 = vtanh.pop %v3469
  %v3575 = vtanh.pop %v3474
  %v3576 = vtanh.pop %v3477
  %v3577 = vtanh.pop %v3482
  %v3578 = vtanh.pop %v3485
  %v3579 = vtanh.pop %v3490
  %v3580 = vtanh.pop %v3493
  %v3581 = vtanh.pop %v3498
  %v3582 = vtanh.pop %v3501
  %v3583 = vtanh.pop %v3506
  %v3584 = vtanh.pop %v3509
  %v3585 = vtanh.pop %v3514
  %v3586 = vtanh.pop %v3517
  %v3587 = vtanh.pop %v3522
  %v3588 = vtanh.pop %v3525
  %v3589 = vtanh.pop %v3530
  %v3590 = vtanh.pop %v3533
  %v3591 = vtanh.pop %v3538
  %v3592 = vpack.c.bf16 %v3544, %v3543
  %v3593 = vpack.c.bf16 %v3546, %v3545
  %v3594 = vpack.c.bf16 %v3548, %v3547
  %v3595 = vpack.c.bf16 %v3550, %v3549
  %v3596 = vpack.c.bf16 %v3552, %v3551
  %v3597 = vpack.c.bf16 %v3554, %v3553
  %v3598 = vpack.c.bf16 %v3556, %v3555
  %v3599 = vpack.c.bf16 %v3558, %v3557
  %v3600 = vpack.c.bf16 %v3560, %v3559
  %v3601 = vpack.c.bf16 %v3562, %v3561
  %v3602 = vpack.c.bf16 %v3564, %v3563
  %v3603 = vpack.c.bf16 %v3566, %v3565
  %v3604 = vpack.c.bf16 %v3568, %v3567
  %v3605 = vpack.c.bf16 %v3570, %v3569
  %v3606 = vpack.c.bf16 %v3572, %v3571
  %v3607 = vpack.c.bf16 %v3574, %v3573
  %v3608 = vpack.c.bf16 %v3576, %v3575
  %v3609 = vpack.c.bf16 %v3578, %v3577
  %v3610 = vpack.c.bf16 %v3580, %v3579
  %v3611 = vpack.c.bf16 %v3582, %v3581
  %v3612 = vpack.c.bf16 %v3584, %v3583
  %v3613 = vpack.c.bf16 %v3586, %v3585
  %v3614 = vpack.c.bf16 %v3588, %v3587
  %v3615 = vpack.c.bf16 %v3590, %v3589
  %v3616 = vpack.c.bf16 %v3591, %v3591
  %v3642 = vunpack.c.l.b16 %v3592
  %v3643 = vunpack.c.h.b16 %v3592
  %v3644 = vunpack.c.l.b16 %v3593
  %v3645 = vunpack.c.h.b16 %v3593
  %v3646 = vunpack.c.l.b16 %v3594
  %v3647 = vunpack.c.h.b16 %v3594
  %v3648 = vunpack.c.l.b16 %v3595
  %v3649 = vunpack.c.h.b16 %v3595
  %v3650 = vunpack.c.l.b16 %v3596
  %v3651 = vunpack.c.h.b16 %v3596
  %v3652 = vunpack.c.l.b16 %v3597
  %v3653 = vunpack.c.h.b16 %v3597
  %v3654 = vunpack.c.l.b16 %v3598
  %v3655 = vunpack.c.h.b16 %v3598
  %v3656 = vunpack.c.l.b16 %v3599
  %v3657 = vunpack.c.h.b16 %v3599
  %v3658 = vunpack.c.l.b16 %v3600
  %v3659 = vunpack.c.h.b16 %v3600
  %v3660 = vunpack.c.l.b16 %v3601
  %v3661 = vunpack.c.h.b16 %v3601
  %v3662 = vunpack.c.l.b16 %v3602
  %v3663 = vunpack.c.h.b16 %v3602
  %v3664 = vunpack.c.l.b16 %v3603
  %v3665 = vunpack.c.h.b16 %v3603
  %v3666 = vunpack.c.l.b16 %v3604
  %v3667 = vunpack.c.h.b16 %v3604
  %v3668 = vunpack.c.l.b16 %v3605
  %v3669 = vunpack.c.h.b16 %v3605
  %v3670 = vunpack.c.l.b16 %v3606
  %v3671 = vunpack.c.h.b16 %v3606
  %v3672 = vunpack.c.l.b16 %v3607
  %v3673 = vunpack.c.h.b16 %v3607
  %v3674 = vunpack.c.l.b16 %v3608
  %v3675 = vunpack.c.h.b16 %v3608
  %v3676 = vunpack.c.l.b16 %v3609
  %v3677 = vunpack.c.h.b16 %v3609
  %v3678 = vunpack.c.l.b16 %v3610
  %v3679 = vunpack.c.h.b16 %v3610
  %v3680 = vunpack.c.l.b16 %v3611
  %v3681 = vunpack.c.h.b16 %v3611
  %v3682 = vunpack.c.l.b16 %v3612
  %v3683 = vunpack.c.h.b16 %v3612
  %v3684 = vunpack.c.l.b16 %v3613
  %v3685 = vunpack.c.h.b16 %v3613
  %v3686 = vunpack.c.l.b16 %v3614
  %v3687 = vunpack.c.h.b16 %v3614
  %v3688 = vunpack.c.l.b16 %v3615
  %v3689 = vunpack.c.h.b16 %v3615
  %v3690 = vunpack.c.l.b16 %v3616
  %v3691 = vpack.c.b16 %v3642, %v3642
  %v3692 = vpack.c.b16 %v3643, %v3643
  %v3693 = vpack.c.b16 %v3644, %v3644
  %v3694 = vpack.c.b16 %v3645, %v3645
  %v3695 = vpack.c.b16 %v3646, %v3646
  %v3696 = vpack.c.b16 %v3647, %v3647
  %v3697 = vpack.c.b16 %v3648, %v3648
  %v3698 = vpack.c.b16 %v3649, %v3649
  %v3699 = vpack.c.b16 %v3650, %v3650
  %v3700 = vpack.c.b16 %v3651, %v3651
  %v3701 = vpack.c.b16 %v3652, %v3652
  %v3702 = vpack.c.b16 %v3653, %v3653
  %v3703 = vpack.c.b16 %v3654, %v3654
  %v3704 = vpack.c.b16 %v3655, %v3655
  %v3705 = vpack.c.b16 %v3656, %v3656
  %v3706 = vpack.c.b16 %v3657, %v3657
  %v3707 = vpack.c.b16 %v3658, %v3658
  %v3708 = vpack.c.b16 %v3659, %v3659
  %v3709 = vpack.c.b16 %v3660, %v3660
  %v3710 = vpack.c.b16 %v3661, %v3661
  %v3711 = vpack.c.b16 %v3662, %v3662
  %v3712 = vpack.c.b16 %v3663, %v3663
  %v3713 = vpack.c.b16 %v3664, %v3664
  %v3714 = vpack.c.b16 %v3665, %v3665
  %v3715 = vpack.c.b16 %v3666, %v3666
  %v3716 = vpack.c.b16 %v3667, %v3667
  %v3717 = vpack.c.b16 %v3668, %v3668
  %v3718 = vpack.c.b16 %v3669, %v3669
  %v3719 = vpack.c.b16 %v3670, %v3670
  %v3720 = vpack.c.b16 %v3671, %v3671
  %v3721 = vpack.c.b16 %v3672, %v3672
  %v3722 = vpack.c.b16 %v3673, %v3673
  %v3723 = vpack.c.b16 %v3674, %v3674
  %v3724 = vpack.c.b16 %v3675, %v3675
  %v3725 = vpack.c.b16 %v3676, %v3676
  %v3726 = vpack.c.b16 %v3677, %v3677
  %v3727 = vpack.c.b16 %v3678, %v3678
  %v3728 = vpack.c.b16 %v3679, %v3679
  %v3729 = vpack.c.b16 %v3680, %v3680
  %v3730 = vpack.c.b16 %v3681, %v3681
  %v3731 = vpack.c.b16 %v3682, %v3682
  %v3732 = vpack.c.b16 %v3683, %v3683
  %v3733 = vpack.c.b16 %v3684, %v3684
  %v3734 = vpack.c.b16 %v3685, %v3685
  %v3735 = vpack.c.b16 %v3686, %v3686
  %v3736 = vpack.c.b16 %v3687, %v3687
  %v3737 = vpack.c.b16 %v3688, %v3688
  %v3738 = vpack.c.b16 %v3689, %v3689
  %v3739 = vpack.c.b16 %v3690, %v3690
  %3789 = vst [vmem:[%s11] sm:$0xf] %v3691
  %3790 = vst [vmem:[%s11 + $0x4] sm:$0xf] %v3692
  %3791 = vst [vmem:[%s11 + $0x8] sm:$0xf] %v3693
  %3792 = vst [vmem:[%s11 + $0xc] sm:$0xf] %v3694
  %3793 = vst [vmem:[%s11 + $0x10] sm:$0xf] %v3695
  %3794 = vst [vmem:[%s11 + $0x14] sm:$0xf] %v3696
  %3795 = vst [vmem:[%s11 + $0x18] sm:$0xf] %v3697
  %3796 = vst [vmem:[%s11 + $0x1c] sm:$0xf] %v3698
  %3797 = vst [vmem:[%s11 + $0x20] sm:$0xf] %v3699
  %3798 = vst [vmem:[%s11 + $0x24] sm:$0xf] %v3700
  %3799 = vst [vmem:[%s11 + $0x28] sm:$0xf] %v3701
  %3800 = vst [vmem:[%s11 + $0x2c] sm:$0xf] %v3702
  %3801 = vst [vmem:[%s11 + $0x30] sm:$0xf] %v3703
  %3802 = vst [vmem:[%s11 + $0x34] sm:$0xf] %v3704
  %3803 = vst [vmem:[%s11 + $0x38] sm:$0xf] %v3705
  %3804 = vst [vmem:[%s11 + $0x3c] sm:$0xf] %v3706
  %3805 = vst [vmem:[%s11 + $0x40] sm:$0xf] %v3707
  %3806 = vst [vmem:[%s11 + $0x44] sm:$0xf] %v3708
  %3807 = vst [vmem:[%s11 + $0x48] sm:$0xf] %v3709
  %3808 = vst [vmem:[%s11 + $0x4c] sm:$0xf] %v3710
  %3809 = vst [vmem:[%s11 + $0x50] sm:$0xf] %v3711
  %3810 = vst [vmem:[%s11 + $0x54] sm:$0xf] %v3712
  %3811 = vst [vmem:[%s11 + $0x58] sm:$0xf] %v3713
  %3812 = vst [vmem:[%s11 + $0x5c] sm:$0xf] %v3714
  %3813 = vst [vmem:[%s11 + $0x60] sm:$0xf] %v3715
  %3814 = vst [vmem:[%s11 + $0x64] sm:$0xf] %v3716
  %3815 = vst [vmem:[%s11 + $0x68] sm:$0xf] %v3717
  %3816 = vst [vmem:[%s11 + $0x6c] sm:$0xf] %v3718
  %3817 = vst [vmem:[%s11 + $0x70] sm:$0xf] %v3719
  %3818 = vst [vmem:[%s11 + $0x74] sm:$0xf] %v3720
  %3819 = vst [vmem:[%s11 + $0x78] sm:$0xf] %v3721
  %3820 = vst [vmem:[%s11 + $0x7c] sm:$0xf] %v3722
  %3821 = vst [vmem:[%s11 + $0x80] sm:$0xf] %v3723
  %3822 = vst [vmem:[%s11 + $0x84] sm:$0xf] %v3724
  %3823 = vst [vmem:[%s11 + $0x88] sm:$0xf] %v3725
  %3824 = vst [vmem:[%s11 + $0x8c] sm:$0xf] %v3726
  %3825 = vst [vmem:[%s11 + $0x90] sm:$0xf] %v3727
  %3826 = vst [vmem:[%s11 + $0x94] sm:$0xf] %v3728
  %3827 = vst [vmem:[%s11 + $0x98] sm:$0xf] %v3729
  %3828 = vst [vmem:[%s11 + $0x9c] sm:$0xf] %v3730
  %3829 = vst [vmem:[%s11 + $0xa0] sm:$0xf] %v3731
  %3830 = vst [vmem:[%s11 + $0xa4] sm:$0xf] %v3732
  %3831 = vst [vmem:[%s11 + $0xa8] sm:$0xf] %v3733
  %3832 = vst [vmem:[%s11 + $0xac] sm:$0xf] %v3734
  %3833 = vst [vmem:[%s11 + $0xb0] sm:$0xf] %v3735
  %3834 = vst [vmem:[%s11 + $0xb4] sm:$0xf] %v3736
  %3835 = vst [vmem:[%s11 + $0xb8] sm:$0xf] %v3737
  %3836 = vst [vmem:[%s11 + $0xbc] sm:$0xf] %v3738
  %3837 = vst [vmem:[%s11 + $0xc0] sm:$0xf] %v3739
  // Predicated region
  $region34: #{generator_forward.7} parent=0 // pred_check
    _
  $region35: #{generator_forward.7} parent=0 // pred_check_branch
    %3839 = sbr.rel (0) target = $region37
  $region36: #{generator_forward.7} parent=0 // pred_region
    _
  $region37: #{generator_forward.7} parent=0 // pred_fallthru
    _
  // Predicated region
  $region38: #{generator_forward.7} parent=0 // pred_check
    _
  $region39: #{generator_forward.7} parent=0 // pred_check_branch
    %3841 = sbr.rel (0) target = $region41
  $region40: #{generator_forward.7} parent=0 // pred_region
    _
  $region41: #{generator_forward.7} parent=0 // pred_fallthru
    _
  // Predicated region
  $region42: #{generator_forward.7} parent=0 // pred_check
    _
  $region43: #{generator_forward.7} parent=0 // pred_check_branch
    %3843 = sbr.rel (0) target = $region45
  $region44: #{generator_forward.7} parent=0 // pred_region
    _
  $region45: #{generator_forward.7} parent=0 // pred_fallthru
    _
  // Predicated region
  $region46: #{generator_forward.7} parent=0 // pred_check
    _
  $region47: #{generator_forward.7} parent=0 // pred_check_branch
    %3845 = sbr.rel (0) target = $region49
  $region48: #{generator_forward.7} parent=0 // pred_region
    _
  $region49: #{generator_forward.7} parent=0 // pred_fallthru
    _
  // Predicated region
  $region50: #{generator_forward.7} parent=0 // pred_check
    _
  $region51: #{generator_forward.7} parent=0 // pred_check_branch
    %3847 = sbr.rel (0) target = $region53
  $region52: #{generator_forward.7} parent=0 // pred_region
    _
  $region53: #{generator_forward.7} parent=0 // pred_fallthru
    _
  // Predicated region
  $region54: #{generator_forward.7} parent=0 // pred_check
    _
  $region55: #{generator_forward.7} parent=0 // pred_check_branch
    %3849 = sbr.rel (0) target = $region57
  $region56: #{generator_forward.7} parent=0 // pred_region
    _
  $region57: #{generator_forward.7} parent=0 // pred_fallthru
    _
  // Predicated region
  $region58: #{generator_forward.7} parent=0 // pred_check
    _
  $region59: #{generator_forward.7} parent=0 // pred_check_branch
    %3851 = sbr.rel (0) target = $region61
  $region60: #{generator_forward.7} parent=0 // pred_region
    _
  $region61: #{generator_forward.7} parent=0 // pred_fallthru
    _
  // Predicated region
  $region62: #{generator_forward.7} parent=0 // pred_check
    _
  $region63: #{generator_forward.7} parent=0 // pred_check_branch
    %3853 = sbr.rel (0) target = $region65
  $region64: #{generator_forward.7} parent=0 // pred_region
    _
  $region65: #{generator_forward.7} parent=0 // pred_fallthru
    _

</llo_original>
